<compile_context>
chip_gen: v5e
topology: v5e:2x2
jax: 0.10.0
libtpu: 0.0.40
codegen_flags: <defaults>
</compile_context>

<pallas_src>
import jax
import jax.numpy as jnp
from jax.experimental import pallas as pl
from jax.experimental.pallas import tpu as pltpu


# ---------------------------------------------------------------------------
# Fused Pallas kernel: one grid step == B images, everything VMEM-resident
# ---------------------------------------------------------------------------

def _net1_kernel(x_ref,
                 mw1_ref, b1_ref, mw2_ref, b2_ref,
                 mt_ref, bt_ref, hcomp_ref,
                 mw3a_ref, b3a_ref, mw3b_ref, b3b_ref, mw3c_ref, b3c_ref,
                 hsum_ref, hw_ref,
                 o_ref, pad2_ref):
    f32 = jnp.float32
    bf16 = jnp.bfloat16
    rows1 = x_ref.shape[0]                 # B * 32
    B = rows1 // 32

    def conv_rows(x, mw_ref, b_ref):
        # 3x3 conv along the stacked-H axis of a (R, Win*Cin) ref/value via
        # three row-shifted matmuls against the banded (W-handled) weights.
        r_out = x.shape[0] - 2
        n_out = mw_ref.shape[2]
        acc = jnp.zeros((r_out, n_out), f32)
        for kh in range(3):
            lhs = x[kh:kh + r_out, :].astype(bf16)
            acc = acc + jnp.dot(lhs, mw_ref[kh], preferred_element_type=f32)
        return jnp.maximum(acc + b_ref[...], 0.0)

    # --- convblock1: 1 -> 8, 3x3, "same" (H pad done in wrapper, W in band) --
    a1 = conv_rows(x_ref, mw1_ref, b1_ref)                 # (B*32-2, 224) f32
    # image b's 28 output rows sit at rows b*32 .. b*32+27 of a1

    # --- re-pad H for convblock2: per-image copy into zero-bordered scratch --
    zrow1 = jnp.zeros((1, 224), f32)
    zrow3 = jnp.zeros((3, 224), f32)
    for b in range(B):
        r0 = b * 32
        pad2_ref[r0:r0 + 1, :] = zrow1                     # top zero pad
        pad2_ref[r0 + 1:r0 + 29, :] = a1[r0:r0 + 28, :]    # data rows
        pad2_ref[r0 + 29:r0 + 32, :] = zrow3               # bottom pad / gap

    # --- convblock2: 8 -> 16, 3x3, "same" ------------------------------------
    a2 = conv_rows(pad2_ref, mw2_ref, b2_ref)              # (B*32-2, 448) f32
    # image b's 28 output rows at b*32 .. b*32+27

    # --- MaxPool2d(2,2) -------------------------------------------------------
    # H direction: shifted-row max (valid pooled rows end up at b*32 + 2k).
    r2 = a2.shape[0]
    mm = jnp.maximum(a2[0:r2 - 1, :], a2[1:r2, :])         # (B*32-3, 448)
    # W direction: 16-lane-shifted max; pooled value for output column wo
    # lives at lane 32*wo + ci (compaction folded into the trans1 weights).
    pw = jnp.maximum(mm[:, 0:432], mm[:, 16:448])          # (B*32-3, 432)

    # --- trans1: 16 -> 4, 1x1 conv (+ W-pool compaction) + H-row compaction --
    tfull = jnp.dot(pw.astype(bf16), mt_ref[...],
                    preferred_element_type=f32)            # (B*32-3, 56)
    tc = jnp.dot(hcomp_ref[...], tfull.astype(bf16),
                 preferred_element_type=f32)               # (B*16, 56)
    t = jnp.maximum(tc + bt_ref[...], 0.0)
    # image b's 14 rows at b*16 .. b*16+13 (rows 14,15 are zeros -> relu(bias))

    # --- convblock3: three valid 3x3 convs ------------------------------------
    c = conv_rows(t, mw3a_ref, b3a_ref)                    # (B*16-2, 96)
    c = conv_rows(c, mw3b_ref, b3b_ref)                    # (B*16-4, 160)
    c = conv_rows(c, mw3c_ref, b3c_ref)                    # (B*16-6, 128)
    # image b's 8 valid rows at b*16 .. b*16+7

    # --- head: AvgPool2d(8) (H via 0/1 matmul, W folded into hw) + 1x1 conv ---
    s = jnp.dot(hsum_ref[...], c.astype(bf16),
                preferred_element_type=f32)                # (B, 128)
    logits = jnp.dot(s.astype(bf16), hw_ref[...],
                     preferred_element_type=f32)           # (B, 10)
    z = logits - jnp.max(logits, axis=-1, keepdims=True)
    o_ref[...] = z - jnp.log(jnp.sum(jnp.exp(z), axis=-1, keepdims=True))


# ---------------------------------------------------------------------------
# Wrapper-side operand preparation (pure XLA glue, tiny, traced once)
# ---------------------------------------------------------------------------

def _band_weights(w, w_in, w_out, pad):
    """Per-kh banded weight matrix for a conv along W with channels interleaved.

    w: (KH, KW, Cin, Cout) already BN-folded.
    Returns (KH, W_in*Cin, W_out*Cout) with
      M[kh, (wo+kw-pad)*Cin + ci, wo*Cout + co] = w[kh, kw, ci, co]
    (only where 0 <= wo+kw-pad < W_in; out-of-range taps == zero padding).
    """
    kh_, kw_, cin, cout = w.shape
    wi = jnp.arange(w_in)
    wo = jnp.arange(w_out)
    kw = jnp.arange(kw_)
    ind = (wi[None, :, None] == (wo[None, None, :] + kw[:, None, None] - pad)
           ).astype(w.dtype)                               # (KW, W_in, W_out)
    m = jnp.einsum('kiw,hkcd->hicwd', ind, w)              # (KH, Win, Cin, Wout, Cout)
    return m.reshape(kh_, w_in * cin, w_out * cout)


def _tile_bias(bias, w_out):
    return jnp.tile(bias, w_out).reshape(1, -1).astype(jnp.float32)


def _prepare_operands(params, B):
    f32 = jnp.float32
    bf16 = jnp.bfloat16

    def fold(p):                            # fold BN scale into conv weights
        return p["w"] * p["scale"][None, None, None, :]

    ops = []
    # convblock1: 1 -> 8, same, W=28
    ops += [_band_weights(fold(params["conv1"]), 28, 28, 1).astype(bf16),
            _tile_bias(params["conv1"]["bias"], 28)]
    # convblock2: 8 -> 16, same, W=28
    ops += [_band_weights(fold(params["conv2"]), 28, 28, 1).astype(bf16),
            _tile_bias(params["conv2"]["bias"], 28)]
    # trans1 (16 -> 4, 1x1) fused with max-pool W-column compaction:
    # row 32*wo + ci (ci < 16) of the pooled-but-uncompacted activation maps
    # to output column 4*wo + co; rows 16..31 of every 32-block are zero.
    wt = params["trans1"]["w"][0, 0] * params["trans1"]["scale"][None, :]  # (16,4)
    wt_p = jnp.zeros((32, 4), f32).at[:16].set(wt)
    mt2 = jnp.einsum('ab,cd->acbd', jnp.eye(14, dtype=f32), wt_p
                     ).reshape(448, 56)[:432]
    ops += [mt2.astype(bf16), _tile_bias(params["trans1"]["bias"], 14)]
    # H-pool row-compaction selection matrix: (B*16, B*32-3)
    rows = jnp.arange(B * 16)
    cols = jnp.arange(B * 32 - 3)
    tgt = (rows // 16) * 32 + 2 * (rows % 16)
    hcomp = ((cols[None, :] == tgt[:, None])
             & ((rows % 16) < 14)[:, None]).astype(bf16)
    ops += [hcomp]
    # convblock3: 4->8 (14->12), 8->16 (12->10), 16->16 (10->8), valid
    ops += [_band_weights(fold(params["conv3a"]), 14, 12, 0).astype(bf16),
            _tile_bias(params["conv3a"]["bias"], 12)]
    ops += [_band_weights(fold(params["conv3b"]), 12, 10, 0).astype(bf16),
            _tile_bias(params["conv3b"]["bias"], 10)]
    ops += [_band_weights(fold(params["conv3c"]), 10, 8, 0).astype(bf16),
            _tile_bias(params["conv3c"]["bias"], 8)]
    # head: per-image H average (1/8) and W-average (1/8) folded into conv5
    rows = jnp.arange(B)
    cols = jnp.arange(B * 16 - 6)
    hsum = (((cols[None, :] >= rows[:, None] * 16)
             & (cols[None, :] < rows[:, None] * 16 + 8)).astype(f32) / 8.0
            ).astype(bf16)
    hw = (jnp.tile(params["conv5_w"].reshape(16, 10), (8, 1)) / 8.0).astype(bf16)
    ops += [hsum, hw]
    return ops


def net1_forward(x_nchw, params, *, block_b=8):
    n = x_nchw.shape[0]
    B = block_b                              # images per grid step (multiple of 8)
    n_pad = ((n + B - 1) // B) * B
    x = x_nchw.reshape(n, 28, 28).astype(jnp.float32)
    # H zero-padding + batch padding on the wrapper side: data rows 1..28 of
    # every 32-row block, rows 0 / 29..31 are zeros.
    x = jnp.pad(x, ((0, n_pad - n), (1, 3), (0, 0)))       # (n_pad, 32, 28)
    x = x.reshape(n_pad * 32, 28)

    ops = _prepare_operands(params, B)

    def const_spec(a):
        nd = a.ndim
        return pl.BlockSpec(a.shape, lambda i, _nd=nd: (0,) * _nd)

    in_specs = [pl.BlockSpec((B * 32, 28), lambda i: (i, 0))]
    in_specs += [const_spec(a) for a in ops]

    out = pl.pallas_call(
        _net1_kernel,
        out_shape=jax.ShapeDtypeStruct((n_pad, 10), jnp.float32),
        grid=(n_pad // B,),
        in_specs=in_specs,
        out_specs=pl.BlockSpec((B, 10), lambda i: (i, 0)),
        scratch_shapes=[pltpu.VMEM((B * 32, 224), jnp.float32)],
        compiler_params=pltpu.CompilerParams(
            dimension_semantics=("parallel",),
            vmem_limit_bytes=32 * 1024 * 1024,
        ),
    )(x, *ops)
    return out[:n]                                          # (N, 10) log-probs


# ---------------------------------------------------------------------------
# Parameters (deterministic synthetic init, eval-mode BN folded to scale/bias)
# ---------------------------------------------------------------------------

def _make_conv_bn(key, kh, kw, cin, cout, eps=1e-5):
    k1, k2, k3, k4, k5 = jax.random.split(key, 5)
    w = jax.random.normal(k1, (kh, kw, cin, cout), jnp.float32) * 0.1
    gamma = jax.random.uniform(k2, (cout,), jnp.float32, 0.5, 1.5)
    beta = jax.random.normal(k3, (cout,), jnp.float32) * 0.1
    rmean = jax.random.normal(k4, (cout,), jnp.float32) * 0.1
    rvar = jax.random.uniform(k5, (cout,), jnp.float32, 0.5, 1.5)
    scale = gamma / jnp.sqrt(rvar + eps)
    bias = beta - rmean * scale
    return {"w": w, "scale": scale, "bias": bias}


def init_params(key):
    keys = jax.random.split(key, 7)
    return {
        "conv1":  _make_conv_bn(keys[0], 3, 3, 1, 8),
        "conv2":  _make_conv_bn(keys[1], 3, 3, 8, 16),
        "trans1": _make_conv_bn(keys[2], 1, 1, 16, 4),
        "conv3a": _make_conv_bn(keys[3], 3, 3, 4, 8),
        "conv3b": _make_conv_bn(keys[4], 3, 3, 8, 16),
        "conv3c": _make_conv_bn(keys[5], 3, 3, 16, 16),
        "conv5_w": jax.random.normal(keys[6], (1, 1, 16, 10), jnp.float32) * 0.1,
    }


# ---------------------------------------------------------------------------
# Pure-JAX reference (eval mode) for a correctness cross-check
# ---------------------------------------------------------------------------

def net1_reference(x_nchw, params):
    x = jnp.transpose(x_nchw, (0, 2, 3, 1)).astype(jnp.float32)   # NHWC

    def conv(x, p, padding):
        y = jax.lax.conv_general_dilated(
            x, p["w"], window_strides=(1, 1), padding=padding,
            dimension_numbers=("NHWC", "HWIO", "NHWC"),
            precision=jax.lax.Precision.HIGHEST)
        return jax.nn.relu(y * p["scale"] + p["bias"])

    x = conv(x, params["conv1"], "SAME")
    x = conv(x, params["conv2"], "SAME")
    n, h, w, c = x.shape
    x = x.reshape(n, h // 2, 2, w // 2, 2, c).max(axis=(2, 4))    # MaxPool2d(2,2)
    x = conv(x, params["trans1"], "VALID")
    x = conv(x, params["conv3a"], "VALID")
    x = conv(x, params["conv3b"], "VALID")
    x = conv(x, params["conv3c"], "VALID")
    g = x.mean(axis=(1, 2))                                       # AvgPool2d(8)
    logits = g @ params["conv5_w"].reshape(16, 10)
    return jax.nn.log_softmax(logits, axis=-1)


if __name__ == "__main__":
    key = jax.random.PRNGKey(0)
    kx, kp = jax.random.split(key)
    # Net1's AvgPool2d(8) after three valid 3x3 convs implies 28x28 input.
    # N=16 with B=8 per grid step -> grid=(2,) so both v7x cores get work.
    x = jax.random.normal(kx, (16, 1, 28, 28), jnp.float32)
    params = init_params(kp)

    out = jax.block_until_ready(jax.jit(net1_forward)(x, params))
    assert out.shape == (16, 10), out.shape

    # log_softmax sanity: rows of exp(out) sum to 1 (softmax done in f32).
    row_sums = jnp.sum(jnp.exp(out), axis=-1)
    assert bool(jnp.all(jnp.abs(row_sums - 1.0) < 1e-3)), row_sums
    assert bool(jnp.all(jnp.isfinite(out)))

    # Cross-check against a pure-JAX f32 reference of the same module (eval
    # mode).  Matmuls inside the kernel use bf16 operands with f32 accumulation,
    # so allow a slightly wider tolerance than the all-f32 version.
    ref = jax.block_until_ready(jax.jit(net1_reference)(x, params))
    err = float(jnp.max(jnp.abs(out - ref)))
    assert err < 0.1, err

    print("KERNEL_OK")
</pallas_src>

<mosaic_0001>
module attributes {stable_mosaic.version = 11 : i64} {
  func.func @_net1_kernel(%arg0: i32, %arg1: memref<256x28xf32, #tpu.memory_space<vmem>>, %arg2: memref<3x28x224xbf16, #tpu.memory_space<vmem>>, %arg3: memref<1x224xf32, #tpu.memory_space<vmem>>, %arg4: memref<3x224x448xbf16, #tpu.memory_space<vmem>>, %arg5: memref<1x448xf32, #tpu.memory_space<vmem>>, %arg6: memref<432x56xbf16, #tpu.memory_space<vmem>>, %arg7: memref<1x56xf32, #tpu.memory_space<vmem>>, %arg8: memref<128x253xbf16, #tpu.memory_space<vmem>>, %arg9: memref<3x56x96xbf16, #tpu.memory_space<vmem>>, %arg10: memref<1x96xf32, #tpu.memory_space<vmem>>, %arg11: memref<3x96x160xbf16, #tpu.memory_space<vmem>>, %arg12: memref<1x160xf32, #tpu.memory_space<vmem>>, %arg13: memref<3x160x128xbf16, #tpu.memory_space<vmem>>, %arg14: memref<1x128xf32, #tpu.memory_space<vmem>>, %arg15: memref<8x122xbf16, #tpu.memory_space<vmem>>, %arg16: memref<128x10xbf16, #tpu.memory_space<vmem>>, %arg17: memref<8x10xf32, #tpu.memory_space<vmem>>, %arg18: memref<256x224xf32, #tpu.memory_space<vmem>>) attributes {dimension_semantics = [#tpu.dimension_semantics<parallel>], iteration_bounds = array<i64: 2>, scalar_prefetch = 0 : i64, scratch_operands = 1 : i64, tpu.core_type = #tpu.core_type<tc>, window_params = [{transform_indices = @transform_0, window_bounds = array<i64: 256, 28>}, {pipeline_mode = #tpu.pipeline_mode<synchronous>, transform_indices = @transform_1, window_bounds = array<i64: 3, 28, 224>}, {pipeline_mode = #tpu.pipeline_mode<synchronous>, transform_indices = @transform_2, window_bounds = array<i64: 1, 224>}, {pipeline_mode = #tpu.pipeline_mode<synchronous>, transform_indices = @transform_3, window_bounds = array<i64: 3, 224, 448>}, {pipeline_mode = #tpu.pipeline_mode<synchronous>, transform_indices = @transform_4, window_bounds = array<i64: 1, 448>}, {pipeline_mode = #tpu.pipeline_mode<synchronous>, transform_indices = @transform_5, window_bounds = array<i64: 432, 56>}, {pipeline_mode = #tpu.pipeline_mode<synchronous>, transform_indices = @transform_6, window_bounds = array<i64: 1, 56>}, {pipeline_mode = #tpu.pipeline_mode<synchronous>, transform_indices = @transform_7, window_bounds = array<i64: 128, 253>}, {pipeline_mode = #tpu.pipeline_mode<synchronous>, transform_indices = @transform_8, window_bounds = array<i64: 3, 56, 96>}, {pipeline_mode = #tpu.pipeline_mode<synchronous>, transform_indices = @transform_9, window_bounds = array<i64: 1, 96>}, {pipeline_mode = #tpu.pipeline_mode<synchronous>, transform_indices = @transform_10, window_bounds = array<i64: 3, 96, 160>}, {pipeline_mode = #tpu.pipeline_mode<synchronous>, transform_indices = @transform_11, window_bounds = array<i64: 1, 160>}, {pipeline_mode = #tpu.pipeline_mode<synchronous>, transform_indices = @transform_12, window_bounds = array<i64: 3, 160, 128>}, {pipeline_mode = #tpu.pipeline_mode<synchronous>, transform_indices = @transform_13, window_bounds = array<i64: 1, 128>}, {pipeline_mode = #tpu.pipeline_mode<synchronous>, transform_indices = @transform_14, window_bounds = array<i64: 8, 122>}, {pipeline_mode = #tpu.pipeline_mode<synchronous>, transform_indices = @transform_15, window_bounds = array<i64: 128, 10>}, {transform_indices = @transform_16, window_bounds = array<i64: 8, 10>}]} {
    %cst = arith.constant 0.000000e+00 : f32
    %0 = vector.broadcast %cst : f32 to vector<254x224xf32>
    %c0 = arith.constant 0 : index
    %c0_0 = arith.constant 0 : index
    %1 = vector.load %arg1[%c0, %c0_0] : memref<256x28xf32, #tpu.memory_space<vmem>>, vector<254x28xf32>
    %2 = arith.truncf %1 : vector<254x28xf32> to vector<254x28xbf16>
    %c0_1 = arith.constant 0 : index
    %c0_2 = arith.constant 0 : index
    %c0_3 = arith.constant 0 : index
    %3 = vector.load %arg2[%c0_1, %c0_2, %c0_3] : memref<3x28x224xbf16, #tpu.memory_space<vmem>>, vector<1x28x224xbf16>
    %4 = vector.shape_cast %3 : vector<1x28x224xbf16> to vector<28x224xbf16>
    %cst_4 = arith.constant dense<0.000000e+00> : vector<254x224xf32>
    %5 = tpu.matmul %2, %4, %cst_4 {dimension_numbers = #tpu.dot_dimension_numbers<[1], [0], [0], [1], [0, 0, 1, 1], [], []>} : vector<254x28xbf16>, vector<28x224xbf16>, vector<254x224xf32> -> vector<254x224xf32>
    %6 = arith.addf %0, %5 : vector<254x224xf32>
    %c1 = arith.constant 1 : index
    %c0_5 = arith.constant 0 : index
    %7 = vector.load %arg1[%c1, %c0_5] : memref<256x28xf32, #tpu.memory_space<vmem>>, vector<254x28xf32>
    %8 = arith.truncf %7 : vector<254x28xf32> to vector<254x28xbf16>
    %c1_6 = arith.constant 1 : index
    %c0_7 = arith.constant 0 : index
    %c0_8 = arith.constant 0 : index
    %9 = vector.load %arg2[%c1_6, %c0_7, %c0_8] : memref<3x28x224xbf16, #tpu.memory_space<vmem>>, vector<1x28x224xbf16>
    %10 = vector.shape_cast %9 : vector<1x28x224xbf16> to vector<28x224xbf16>
    %cst_9 = arith.constant dense<0.000000e+00> : vector<254x224xf32>
    %11 = tpu.matmul %8, %10, %cst_9 {dimension_numbers = #tpu.dot_dimension_numbers<[1], [0], [0], [1], [0, 0, 1, 1], [], []>} : vector<254x28xbf16>, vector<28x224xbf16>, vector<254x224xf32> -> vector<254x224xf32>
    %12 = arith.addf %6, %11 : vector<254x224xf32>
    %c2 = arith.constant 2 : index
    %c0_10 = arith.constant 0 : index
    %13 = vector.load %arg1[%c2, %c0_10] : memref<256x28xf32, #tpu.memory_space<vmem>>, vector<254x28xf32>
    %14 = arith.truncf %13 : vector<254x28xf32> to vector<254x28xbf16>
    %c2_11 = arith.constant 2 : index
    %c0_12 = arith.constant 0 : index
    %c0_13 = arith.constant 0 : index
    %15 = vector.load %arg2[%c2_11, %c0_12, %c0_13] : memref<3x28x224xbf16, #tpu.memory_space<vmem>>, vector<1x28x224xbf16>
    %16 = vector.shape_cast %15 : vector<1x28x224xbf16> to vector<28x224xbf16>
    %cst_14 = arith.constant dense<0.000000e+00> : vector<254x224xf32>
    %17 = tpu.matmul %14, %16, %cst_14 {dimension_numbers = #tpu.dot_dimension_numbers<[1], [0], [0], [1], [0, 0, 1, 1], [], []>} : vector<254x28xbf16>, vector<28x224xbf16>, vector<254x224xf32> -> vector<254x224xf32>
    %18 = arith.addf %12, %17 : vector<254x224xf32>
    %c0_15 = arith.constant 0 : index
    %c0_16 = arith.constant 0 : index
    %19 = vector.load %arg3[%c0_15, %c0_16] : memref<1x224xf32, #tpu.memory_space<vmem>>, vector<1x224xf32>
    %20 = vector.broadcast %19 : vector<1x224xf32> to vector<254x224xf32>
    %21 = arith.addf %18, %20 : vector<254x224xf32>
    %cst_17 = arith.constant 0.000000e+00 : f32
    %22 = vector.broadcast %cst_17 : f32 to vector<254x224xf32>
    %23 = arith.maximumf %21, %22 : vector<254x224xf32>
    %cst_18 = arith.constant 0.000000e+00 : f32
    %24 = vector.broadcast %cst_18 : f32 to vector<1x224xf32>
    %cst_19 = arith.constant 0.000000e+00 : f32
    %25 = vector.broadcast %cst_19 : f32 to vector<3x224xf32>
    %c0_20 = arith.constant 0 : index
    %c0_21 = arith.constant 0 : index
    %26 = vector.load %arg18[%c0_20, %c0_21] : memref<256x224xf32, #tpu.memory_space<vmem>>, vector<1x224xf32>
    tpu.vector_store %arg18[%c0_20, %c0_21], %24 {strides = array<i32>} : memref<256x224xf32, #tpu.memory_space<vmem>>, vector<1x224xf32>,
    %27 = vector.extract_strided_slice %23 {offsets = [0, 0], sizes = [28, 224], strides = [1, 1]} : vector<254x224xf32> to vector<28x224xf32>
    %c1_22 = arith.constant 1 : index
    %c0_23 = arith.constant 0 : index
    %28 = vector.load %arg18[%c1_22, %c0_23] : memref<256x224xf32, #tpu.memory_space<vmem>>, vector<28x224xf32>
    tpu.vector_store %arg18[%c1_22, %c0_23], %27 {strides = array<i32>} : memref<256x224xf32, #tpu.memory_space<vmem>>, vector<28x224xf32>,
    %c29 = arith.constant 29 : index
    %c0_24 = arith.constant 0 : index
    %29 = vector.load %arg18[%c29, %c0_24] : memref<256x224xf32, #tpu.memory_space<vmem>>, vector<3x224xf32>
    tpu.vector_store %arg18[%c29, %c0_24], %25 {strides = array<i32>} : memref<256x224xf32, #tpu.memory_space<vmem>>, vector<3x224xf32>,
    %c32 = arith.constant 32 : index
    %c0_25 = arith.constant 0 : index
    %30 = vector.load %arg18[%c32, %c0_25] : memref<256x224xf32, #tpu.memory_space<vmem>>, vector<1x224xf32>
    tpu.vector_store %arg18[%c32, %c0_25], %24 {strides = array<i32>} : memref<256x224xf32, #tpu.memory_space<vmem>>, vector<1x224xf32>,
    %31 = vector.extract_strided_slice %23 {offsets = [32, 0], sizes = [28, 224], strides = [1, 1]} : vector<254x224xf32> to vector<28x224xf32>
    %c33 = arith.constant 33 : index
    %c0_26 = arith.constant 0 : index
    %32 = vector.load %arg18[%c33, %c0_26] : memref<256x224xf32, #tpu.memory_space<vmem>>, vector<28x224xf32>
    tpu.vector_store %arg18[%c33, %c0_26], %31 {strides = array<i32>} : memref<256x224xf32, #tpu.memory_space<vmem>>, vector<28x224xf32>,
    %c61 = arith.constant 61 : index
    %c0_27 = arith.constant 0 : index
    %33 = vector.load %arg18[%c61, %c0_27] : memref<256x224xf32, #tpu.memory_space<vmem>>, vector<3x224xf32>
    tpu.vector_store %arg18[%c61, %c0_27], %25 {strides = array<i32>} : memref<256x224xf32, #tpu.memory_space<vmem>>, vector<3x224xf32>,
    %c64 = arith.constant 64 : index
    %c0_28 = arith.constant 0 : index
    %34 = vector.load %arg18[%c64, %c0_28] : memref<256x224xf32, #tpu.memory_space<vmem>>, vector<1x224xf32>
    tpu.vector_store %arg18[%c64, %c0_28], %24 {strides = array<i32>} : memref<256x224xf32, #tpu.memory_space<vmem>>, vector<1x224xf32>,
    %35 = vector.extract_strided_slice %23 {offsets = [64, 0], sizes = [28, 224], strides = [1, 1]} : vector<254x224xf32> to vector<28x224xf32>
    %c65 = arith.constant 65 : index
    %c0_29 = arith.constant 0 : index
    %36 = vector.load %arg18[%c65, %c0_29] : memref<256x224xf32, #tpu.memory_space<vmem>>, vector<28x224xf32>
    tpu.vector_store %arg18[%c65, %c0_29], %35 {strides = array<i32>} : memref<256x224xf32, #tpu.memory_space<vmem>>, vector<28x224xf32>,
    %c93 = arith.constant 93 : index
    %c0_30 = arith.constant 0 : index
    %37 = vector.load %arg18[%c93, %c0_30] : memref<256x224xf32, #tpu.memory_space<vmem>>, vector<3x224xf32>
    tpu.vector_store %arg18[%c93, %c0_30], %25 {strides = array<i32>} : memref<256x224xf32, #tpu.memory_space<vmem>>, vector<3x224xf32>,
    %c96 = arith.constant 96 : index
    %c0_31 = arith.constant 0 : index
    %38 = vector.load %arg18[%c96, %c0_31] : memref<256x224xf32, #tpu.memory_space<vmem>>, vector<1x224xf32>
    tpu.vector_store %arg18[%c96, %c0_31], %24 {strides = array<i32>} : memref<256x224xf32, #tpu.memory_space<vmem>>, vector<1x224xf32>,
    %39 = vector.extract_strided_slice %23 {offsets = [96, 0], sizes = [28, 224], strides = [1, 1]} : vector<254x224xf32> to vector<28x224xf32>
    %c97 = arith.constant 97 : index
    %c0_32 = arith.constant 0 : index
    %40 = vector.load %arg18[%c97, %c0_32] : memref<256x224xf32, #tpu.memory_space<vmem>>, vector<28x224xf32>
    tpu.vector_store %arg18[%c97, %c0_32], %39 {strides = array<i32>} : memref<256x224xf32, #tpu.memory_space<vmem>>, vector<28x224xf32>,
    %c125 = arith.constant 125 : index
    %c0_33 = arith.constant 0 : index
    %41 = vector.load %arg18[%c125, %c0_33] : memref<256x224xf32, #tpu.memory_space<vmem>>, vector<3x224xf32>
    tpu.vector_store %arg18[%c125, %c0_33], %25 {strides = array<i32>} : memref<256x224xf32, #tpu.memory_space<vmem>>, vector<3x224xf32>,
    %c128 = arith.constant 128 : index
    %c0_34 = arith.constant 0 : index
    %42 = vector.load %arg18[%c128, %c0_34] : memref<256x224xf32, #tpu.memory_space<vmem>>, vector<1x224xf32>
    tpu.vector_store %arg18[%c128, %c0_34], %24 {strides = array<i32>} : memref<256x224xf32, #tpu.memory_space<vmem>>, vector<1x224xf32>,
    %43 = vector.extract_strided_slice %23 {offsets = [128, 0], sizes = [28, 224], strides = [1, 1]} : vector<254x224xf32> to vector<28x224xf32>
    %c129 = arith.constant 129 : index
    %c0_35 = arith.constant 0 : index
    %44 = vector.load %arg18[%c129, %c0_35] : memref<256x224xf32, #tpu.memory_space<vmem>>, vector<28x224xf32>
    tpu.vector_store %arg18[%c129, %c0_35], %43 {strides = array<i32>} : memref<256x224xf32, #tpu.memory_space<vmem>>, vector<28x224xf32>,
    %c157 = arith.constant 157 : index
    %c0_36 = arith.constant 0 : index
    %45 = vector.load %arg18[%c157, %c0_36] : memref<256x224xf32, #tpu.memory_space<vmem>>, vector<3x224xf32>
    tpu.vector_store %arg18[%c157, %c0_36], %25 {strides = array<i32>} : memref<256x224xf32, #tpu.memory_space<vmem>>, vector<3x224xf32>,
    %c160 = arith.constant 160 : index
    %c0_37 = arith.constant 0 : index
    %46 = vector.load %arg18[%c160, %c0_37] : memref<256x224xf32, #tpu.memory_space<vmem>>, vector<1x224xf32>
    tpu.vector_store %arg18[%c160, %c0_37], %24 {strides = array<i32>} : memref<256x224xf32, #tpu.memory_space<vmem>>, vector<1x224xf32>,
    %47 = vector.extract_strided_slice %23 {offsets = [160, 0], sizes = [28, 224], strides = [1, 1]} : vector<254x224xf32> to vector<28x224xf32>
    %c161 = arith.constant 161 : index
    %c0_38 = arith.constant 0 : index
    %48 = vector.load %arg18[%c161, %c0_38] : memref<256x224xf32, #tpu.memory_space<vmem>>, vector<28x224xf32>
    tpu.vector_store %arg18[%c161, %c0_38], %47 {strides = array<i32>} : memref<256x224xf32, #tpu.memory_space<vmem>>, vector<28x224xf32>,
    %c189 = arith.constant 189 : index
    %c0_39 = arith.constant 0 : index
    %49 = vector.load %arg18[%c189, %c0_39] : memref<256x224xf32, #tpu.memory_space<vmem>>, vector<3x224xf32>
    tpu.vector_store %arg18[%c189, %c0_39], %25 {strides = array<i32>} : memref<256x224xf32, #tpu.memory_space<vmem>>, vector<3x224xf32>,
    %c192 = arith.constant 192 : index
    %c0_40 = arith.constant 0 : index
    %50 = vector.load %arg18[%c192, %c0_40] : memref<256x224xf32, #tpu.memory_space<vmem>>, vector<1x224xf32>
    tpu.vector_store %arg18[%c192, %c0_40], %24 {strides = array<i32>} : memref<256x224xf32, #tpu.memory_space<vmem>>, vector<1x224xf32>,
    %51 = vector.extract_strided_slice %23 {offsets = [192, 0], sizes = [28, 224], strides = [1, 1]} : vector<254x224xf32> to vector<28x224xf32>
    %c193 = arith.constant 193 : index
    %c0_41 = arith.constant 0 : index
    %52 = vector.load %arg18[%c193, %c0_41] : memref<256x224xf32, #tpu.memory_space<vmem>>, vector<28x224xf32>
    tpu.vector_store %arg18[%c193, %c0_41], %51 {strides = array<i32>} : memref<256x224xf32, #tpu.memory_space<vmem>>, vector<28x224xf32>,
    %c221 = arith.constant 221 : index
    %c0_42 = arith.constant 0 : index
    %53 = vector.load %arg18[%c221, %c0_42] : memref<256x224xf32, #tpu.memory_space<vmem>>, vector<3x224xf32>
    tpu.vector_store %arg18[%c221, %c0_42], %25 {strides = array<i32>} : memref<256x224xf32, #tpu.memory_space<vmem>>, vector<3x224xf32>,
    %c224 = arith.constant 224 : index
    %c0_43 = arith.constant 0 : index
    %54 = vector.load %arg18[%c224, %c0_43] : memref<256x224xf32, #tpu.memory_space<vmem>>, vector<1x224xf32>
    tpu.vector_store %arg18[%c224, %c0_43], %24 {strides = array<i32>} : memref<256x224xf32, #tpu.memory_space<vmem>>, vector<1x224xf32>,
    %55 = vector.extract_strided_slice %23 {offsets = [224, 0], sizes = [28, 224], strides = [1, 1]} : vector<254x224xf32> to vector<28x224xf32>
    %c225 = arith.constant 225 : index
    %c0_44 = arith.constant 0 : index
    %56 = vector.load %arg18[%c225, %c0_44] : memref<256x224xf32, #tpu.memory_space<vmem>>, vector<28x224xf32>
    tpu.vector_store %arg18[%c225, %c0_44], %55 {strides = array<i32>} : memref<256x224xf32, #tpu.memory_space<vmem>>, vector<28x224xf32>,
    %c253 = arith.constant 253 : index
    %c0_45 = arith.constant 0 : index
    %57 = vector.load %arg18[%c253, %c0_45] : memref<256x224xf32, #tpu.memory_space<vmem>>, vector<3x224xf32>
    tpu.vector_store %arg18[%c253, %c0_45], %25 {strides = array<i32>} : memref<256x224xf32, #tpu.memory_space<vmem>>, vector<3x224xf32>,
    %cst_46 = arith.constant 0.000000e+00 : f32
    %58 = vector.broadcast %cst_46 : f32 to vector<254x448xf32>
    %c0_47 = arith.constant 0 : index
    %c0_48 = arith.constant 0 : index
    %59 = vector.load %arg18[%c0_47, %c0_48] : memref<256x224xf32, #tpu.memory_space<vmem>>, vector<254x224xf32>
    %60 = arith.truncf %59 : vector<254x224xf32> to vector<254x224xbf16>
    %c0_49 = arith.constant 0 : index
    %c0_50 = arith.constant 0 : index
    %c0_51 = arith.constant 0 : index
    %61 = vector.load %arg4[%c0_49, %c0_50, %c0_51] : memref<3x224x448xbf16, #tpu.memory_space<vmem>>, vector<1x224x448xbf16>
    %62 = vector.shape_cast %61 : vector<1x224x448xbf16> to vector<224x448xbf16>
    %cst_52 = arith.constant dense<0.000000e+00> : vector<254x448xf32>
    %63 = tpu.matmul %60, %62, %cst_52 {dimension_numbers = #tpu.dot_dimension_numbers<[1], [0], [0], [1], [0, 0, 1, 1], [], []>} : vector<254x224xbf16>, vector<224x448xbf16>, vector<254x448xf32> -> vector<254x448xf32>
    %64 = arith.addf %58, %63 : vector<254x448xf32>
    %c1_53 = arith.constant 1 : index
    %c0_54 = arith.constant 0 : index
    %65 = vector.load %arg18[%c1_53, %c0_54] : memref<256x224xf32, #tpu.memory_space<vmem>>, vector<254x224xf32>
    %66 = arith.truncf %65 : vector<254x224xf32> to vector<254x224xbf16>
    %c1_55 = arith.constant 1 : index
    %c0_56 = arith.constant 0 : index
    %c0_57 = arith.constant 0 : index
    %67 = vector.load %arg4[%c1_55, %c0_56, %c0_57] : memref<3x224x448xbf16, #tpu.memory_space<vmem>>, vector<1x224x448xbf16>
    %68 = vector.shape_cast %67 : vector<1x224x448xbf16> to vector<224x448xbf16>
    %cst_58 = arith.constant dense<0.000000e+00> : vector<254x448xf32>
    %69 = tpu.matmul %66, %68, %cst_58 {dimension_numbers = #tpu.dot_dimension_numbers<[1], [0], [0], [1], [0, 0, 1, 1], [], []>} : vector<254x224xbf16>, vector<224x448xbf16>, vector<254x448xf32> -> vector<254x448xf32>
    %70 = arith.addf %64, %69 : vector<254x448xf32>
    %c2_59 = arith.constant 2 : index
    %c0_60 = arith.constant 0 : index
    %71 = vector.load %arg18[%c2_59, %c0_60] : memref<256x224xf32, #tpu.memory_space<vmem>>, vector<254x224xf32>
    %72 = arith.truncf %71 : vector<254x224xf32> to vector<254x224xbf16>
    %c2_61 = arith.constant 2 : index
    %c0_62 = arith.constant 0 : index
    %c0_63 = arith.constant 0 : index
    %73 = vector.load %arg4[%c2_61, %c0_62, %c0_63] : memref<3x224x448xbf16, #tpu.memory_space<vmem>>, vector<1x224x448xbf16>
    %74 = vector.shape_cast %73 : vector<1x224x448xbf16> to vector<224x448xbf16>
    %cst_64 = arith.constant dense<0.000000e+00> : vector<254x448xf32>
    %75 = tpu.matmul %72, %74, %cst_64 {dimension_numbers = #tpu.dot_dimension_numbers<[1], [0], [0], [1], [0, 0, 1, 1], [], []>} : vector<254x224xbf16>, vector<224x448xbf16>, vector<254x448xf32> -> vector<254x448xf32>
    %76 = arith.addf %70, %75 : vector<254x448xf32>
    %c0_65 = arith.constant 0 : index
    %c0_66 = arith.constant 0 : index
    %77 = vector.load %arg5[%c0_65, %c0_66] : memref<1x448xf32, #tpu.memory_space<vmem>>, vector<1x448xf32>
    %78 = vector.broadcast %77 : vector<1x448xf32> to vector<254x448xf32>
    %79 = arith.addf %76, %78 : vector<254x448xf32>
    %cst_67 = arith.constant 0.000000e+00 : f32
    %80 = vector.broadcast %cst_67 : f32 to vector<254x448xf32>
    %81 = arith.maximumf %79, %80 : vector<254x448xf32>
    %82 = vector.extract_strided_slice %81 {offsets = [0, 0], sizes = [253, 448], strides = [1, 1]} : vector<254x448xf32> to vector<253x448xf32>
    %83 = vector.extract_strided_slice %81 {offsets = [1, 0], sizes = [253, 448], strides = [1, 1]} : vector<254x448xf32> to vector<253x448xf32>
    %84 = arith.maximumf %82, %83 : vector<253x448xf32>
    %85 = vector.extract_strided_slice %84 {offsets = [0, 0], sizes = [253, 432], strides = [1, 1]} : vector<253x448xf32> to vector<253x432xf32>
    %86 = vector.extract_strided_slice %84 {offsets = [0, 16], sizes = [253, 432], strides = [1, 1]} : vector<253x448xf32> to vector<253x432xf32>
    %87 = arith.maximumf %85, %86 : vector<253x432xf32>
    %88 = arith.truncf %87 : vector<253x432xf32> to vector<253x432xbf16>
    %c0_68 = arith.constant 0 : index
    %c0_69 = arith.constant 0 : index
    %89 = vector.load %arg6[%c0_68, %c0_69] : memref<432x56xbf16, #tpu.memory_space<vmem>>, vector<432x56xbf16>
    %cst_70 = arith.constant dense<0.000000e+00> : vector<253x56xf32>
    %90 = tpu.matmul %88, %89, %cst_70 {dimension_numbers = #tpu.dot_dimension_numbers<[1], [0], [0], [1], [0, 0, 1, 1], [], []>} : vector<253x432xbf16>, vector<432x56xbf16>, vector<253x56xf32> -> vector<253x56xf32>
    %c0_71 = arith.constant 0 : index
    %c0_72 = arith.constant 0 : index
    %91 = vector.load %arg8[%c0_71, %c0_72] : memref<128x253xbf16, #tpu.memory_space<vmem>>, vector<128x253xbf16>
    %92 = arith.truncf %90 : vector<253x56xf32> to vector<253x56xbf16>
    %cst_73 = arith.constant dense<0.000000e+00> : vector<128x56xf32>
    %93 = tpu.matmul %91, %92, %cst_73 {dimension_numbers = #tpu.dot_dimension_numbers<[1], [0], [0], [1], [0, 0, 1, 1], [], []>} : vector<128x253xbf16>, vector<253x56xbf16>, vector<128x56xf32> -> vector<128x56xf32>
    %c0_74 = arith.constant 0 : index
    %c0_75 = arith.constant 0 : index
    %94 = vector.load %arg7[%c0_74, %c0_75] : memref<1x56xf32, #tpu.memory_space<vmem>>, vector<1x56xf32>
    %95 = vector.broadcast %94 : vector<1x56xf32> to vector<128x56xf32>
    %96 = arith.addf %93, %95 : vector<128x56xf32>
    %cst_76 = arith.constant 0.000000e+00 : f32
    %97 = vector.broadcast %cst_76 : f32 to vector<128x56xf32>
    %98 = arith.maximumf %96, %97 : vector<128x56xf32>
    %cst_77 = arith.constant 0.000000e+00 : f32
    %99 = vector.broadcast %cst_77 : f32 to vector<126x96xf32>
    %100 = vector.extract_strided_slice %98 {offsets = [0, 0], sizes = [126, 56], strides = [1, 1]} : vector<128x56xf32> to vector<126x56xf32>
    %101 = arith.truncf %100 : vector<126x56xf32> to vector<126x56xbf16>
    %c0_78 = arith.constant 0 : index
    %c0_79 = arith.constant 0 : index
    %c0_80 = arith.constant 0 : index
    %102 = vector.load %arg9[%c0_78, %c0_79, %c0_80] : memref<3x56x96xbf16, #tpu.memory_space<vmem>>, vector<1x56x96xbf16>
    %103 = vector.shape_cast %102 : vector<1x56x96xbf16> to vector<56x96xbf16>
    %cst_81 = arith.constant dense<0.000000e+00> : vector<126x96xf32>
    %104 = tpu.matmul %101, %103, %cst_81 {dimension_numbers = #tpu.dot_dimension_numbers<[1], [0], [0], [1], [0, 0, 1, 1], [], []>} : vector<126x56xbf16>, vector<56x96xbf16>, vector<126x96xf32> -> vector<126x96xf32>
    %105 = arith.addf %99, %104 : vector<126x96xf32>
    %106 = vector.extract_strided_slice %98 {offsets = [1, 0], sizes = [126, 56], strides = [1, 1]} : vector<128x56xf32> to vector<126x56xf32>
    %107 = arith.truncf %106 : vector<126x56xf32> to vector<126x56xbf16>
    %c1_82 = arith.constant 1 : index
    %c0_83 = arith.constant 0 : index
    %c0_84 = arith.constant 0 : index
    %108 = vector.load %arg9[%c1_82, %c0_83, %c0_84] : memref<3x56x96xbf16, #tpu.memory_space<vmem>>, vector<1x56x96xbf16>
    %109 = vector.shape_cast %108 : vector<1x56x96xbf16> to vector<56x96xbf16>
    %cst_85 = arith.constant dense<0.000000e+00> : vector<126x96xf32>
    %110 = tpu.matmul %107, %109, %cst_85 {dimension_numbers = #tpu.dot_dimension_numbers<[1], [0], [0], [1], [0, 0, 1, 1], [], []>} : vector<126x56xbf16>, vector<56x96xbf16>, vector<126x96xf32> -> vector<126x96xf32>
    %111 = arith.addf %105, %110 : vector<126x96xf32>
    %112 = vector.extract_strided_slice %98 {offsets = [2, 0], sizes = [126, 56], strides = [1, 1]} : vector<128x56xf32> to vector<126x56xf32>
    %113 = arith.truncf %112 : vector<126x56xf32> to vector<126x56xbf16>
    %c2_86 = arith.constant 2 : index
    %c0_87 = arith.constant 0 : index
    %c0_88 = arith.constant 0 : index
    %114 = vector.load %arg9[%c2_86, %c0_87, %c0_88] : memref<3x56x96xbf16, #tpu.memory_space<vmem>>, vector<1x56x96xbf16>
    %115 = vector.shape_cast %114 : vector<1x56x96xbf16> to vector<56x96xbf16>
    %cst_89 = arith.constant dense<0.000000e+00> : vector<126x96xf32>
    %116 = tpu.matmul %113, %115, %cst_89 {dimension_numbers = #tpu.dot_dimension_numbers<[1], [0], [0], [1], [0, 0, 1, 1], [], []>} : vector<126x56xbf16>, vector<56x96xbf16>, vector<126x96xf32> -> vector<126x96xf32>
    %117 = arith.addf %111, %116 : vector<126x96xf32>
    %c0_90 = arith.constant 0 : index
    %c0_91 = arith.constant 0 : index
    %118 = vector.load %arg10[%c0_90, %c0_91] : memref<1x96xf32, #tpu.memory_space<vmem>>, vector<1x96xf32>
    %119 = vector.broadcast %118 : vector<1x96xf32> to vector<126x96xf32>
    %120 = arith.addf %117, %119 : vector<126x96xf32>
    %cst_92 = arith.constant 0.000000e+00 : f32
    %121 = vector.broadcast %cst_92 : f32 to vector<126x96xf32>
    %122 = arith.maximumf %120, %121 : vector<126x96xf32>
    %cst_93 = arith.constant 0.000000e+00 : f32
    %123 = vector.broadcast %cst_93 : f32 to vector<124x160xf32>
    %124 = vector.extract_strided_slice %122 {offsets = [0, 0], sizes = [124, 96], strides = [1, 1]} : vector<126x96xf32> to vector<124x96xf32>
    %125 = arith.truncf %124 : vector<124x96xf32> to vector<124x96xbf16>
    %c0_94 = arith.constant 0 : index
    %c0_95 = arith.constant 0 : index
    %c0_96 = arith.constant 0 : index
    %126 = vector.load %arg11[%c0_94, %c0_95, %c0_96] : memref<3x96x160xbf16, #tpu.memory_space<vmem>>, vector<1x96x160xbf16>
    %127 = vector.shape_cast %126 : vector<1x96x160xbf16> to vector<96x160xbf16>
    %cst_97 = arith.constant dense<0.000000e+00> : vector<124x160xf32>
    %128 = tpu.matmul %125, %127, %cst_97 {dimension_numbers = #tpu.dot_dimension_numbers<[1], [0], [0], [1], [0, 0, 1, 1], [], []>} : vector<124x96xbf16>, vector<96x160xbf16>, vector<124x160xf32> -> vector<124x160xf32>
    %129 = arith.addf %123, %128 : vector<124x160xf32>
    %130 = vector.extract_strided_slice %122 {offsets = [1, 0], sizes = [124, 96], strides = [1, 1]} : vector<126x96xf32> to vector<124x96xf32>
    %131 = arith.truncf %130 : vector<124x96xf32> to vector<124x96xbf16>
    %c1_98 = arith.constant 1 : index
    %c0_99 = arith.constant 0 : index
    %c0_100 = arith.constant 0 : index
    %132 = vector.load %arg11[%c1_98, %c0_99, %c0_100] : memref<3x96x160xbf16, #tpu.memory_space<vmem>>, vector<1x96x160xbf16>
    %133 = vector.shape_cast %132 : vector<1x96x160xbf16> to vector<96x160xbf16>
    %cst_101 = arith.constant dense<0.000000e+00> : vector<124x160xf32>
    %134 = tpu.matmul %131, %133, %cst_101 {dimension_numbers = #tpu.dot_dimension_numbers<[1], [0], [0], [1], [0, 0, 1, 1], [], []>} : vector<124x96xbf16>, vector<96x160xbf16>, vector<124x160xf32> -> vector<124x160xf32>
    %135 = arith.addf %129, %134 : vector<124x160xf32>
    %136 = vector.extract_strided_slice %122 {offsets = [2, 0], sizes = [124, 96], strides = [1, 1]} : vector<126x96xf32> to vector<124x96xf32>
    %137 = arith.truncf %136 : vector<124x96xf32> to vector<124x96xbf16>
    %c2_102 = arith.constant 2 : index
    %c0_103 = arith.constant 0 : index
    %c0_104 = arith.constant 0 : index
    %138 = vector.load %arg11[%c2_102, %c0_103, %c0_104] : memref<3x96x160xbf16, #tpu.memory_space<vmem>>, vector<1x96x160xbf16>
    %139 = vector.shape_cast %138 : vector<1x96x160xbf16> to vector<96x160xbf16>
    %cst_105 = arith.constant dense<0.000000e+00> : vector<124x160xf32>
    %140 = tpu.matmul %137, %139, %cst_105 {dimension_numbers = #tpu.dot_dimension_numbers<[1], [0], [0], [1], [0, 0, 1, 1], [], []>} : vector<124x96xbf16>, vector<96x160xbf16>, vector<124x160xf32> -> vector<124x160xf32>
    %141 = arith.addf %135, %140 : vector<124x160xf32>
    %c0_106 = arith.constant 0 : index
    %c0_107 = arith.constant 0 : index
    %142 = vector.load %arg12[%c0_106, %c0_107] : memref<1x160xf32, #tpu.memory_space<vmem>>, vector<1x160xf32>
    %143 = vector.broadcast %142 : vector<1x160xf32> to vector<124x160xf32>
    %144 = arith.addf %141, %143 : vector<124x160xf32>
    %cst_108 = arith.constant 0.000000e+00 : f32
    %145 = vector.broadcast %cst_108 : f32 to vector<124x160xf32>
    %146 = arith.maximumf %144, %145 : vector<124x160xf32>
    %cst_109 = arith.constant 0.000000e+00 : f32
    %147 = vector.broadcast %cst_109 : f32 to vector<122x128xf32>
    %148 = vector.extract_strided_slice %146 {offsets = [0, 0], sizes = [122, 160], strides = [1, 1]} : vector<124x160xf32> to vector<122x160xf32>
    %149 = arith.truncf %148 : vector<122x160xf32> to vector<122x160xbf16>
    %c0_110 = arith.constant 0 : index
    %c0_111 = arith.constant 0 : index
    %c0_112 = arith.constant 0 : index
    %150 = vector.load %arg13[%c0_110, %c0_111, %c0_112] : memref<3x160x128xbf16, #tpu.memory_space<vmem>>, vector<1x160x128xbf16>
    %151 = vector.shape_cast %150 : vector<1x160x128xbf16> to vector<160x128xbf16>
    %cst_113 = arith.constant dense<0.000000e+00> : vector<122x128xf32>
    %152 = tpu.matmul %149, %151, %cst_113 {dimension_numbers = #tpu.dot_dimension_numbers<[1], [0], [0], [1], [0, 0, 1, 1], [], []>} : vector<122x160xbf16>, vector<160x128xbf16>, vector<122x128xf32> -> vector<122x128xf32>
    %153 = arith.addf %147, %152 : vector<122x128xf32>
    %154 = vector.extract_strided_slice %146 {offsets = [1, 0], sizes = [122, 160], strides = [1, 1]} : vector<124x160xf32> to vector<122x160xf32>
    %155 = arith.truncf %154 : vector<122x160xf32> to vector<122x160xbf16>
    %c1_114 = arith.constant 1 : index
    %c0_115 = arith.constant 0 : index
    %c0_116 = arith.constant 0 : index
    %156 = vector.load %arg13[%c1_114, %c0_115, %c0_116] : memref<3x160x128xbf16, #tpu.memory_space<vmem>>, vector<1x160x128xbf16>
    %157 = vector.shape_cast %156 : vector<1x160x128xbf16> to vector<160x128xbf16>
    %cst_117 = arith.constant dense<0.000000e+00> : vector<122x128xf32>
    %158 = tpu.matmul %155, %157, %cst_117 {dimension_numbers = #tpu.dot_dimension_numbers<[1], [0], [0], [1], [0, 0, 1, 1], [], []>} : vector<122x160xbf16>, vector<160x128xbf16>, vector<122x128xf32> -> vector<122x128xf32>
    %159 = arith.addf %153, %158 : vector<122x128xf32>
    %160 = vector.extract_strided_slice %146 {offsets = [2, 0], sizes = [122, 160], strides = [1, 1]} : vector<124x160xf32> to vector<122x160xf32>
    %161 = arith.truncf %160 : vector<122x160xf32> to vector<122x160xbf16>
    %c2_118 = arith.constant 2 : index
    %c0_119 = arith.constant 0 : index
    %c0_120 = arith.constant 0 : index
    %162 = vector.load %arg13[%c2_118, %c0_119, %c0_120] : memref<3x160x128xbf16, #tpu.memory_space<vmem>>, vector<1x160x128xbf16>
    %163 = vector.shape_cast %162 : vector<1x160x128xbf16> to vector<160x128xbf16>
    %cst_121 = arith.constant dense<0.000000e+00> : vector<122x128xf32>
    %164 = tpu.matmul %161, %163, %cst_121 {dimension_numbers = #tpu.dot_dimension_numbers<[1], [0], [0], [1], [0, 0, 1, 1], [], []>} : vector<122x160xbf16>, vector<160x128xbf16>, vector<122x128xf32> -> vector<122x128xf32>
    %165 = arith.addf %159, %164 : vector<122x128xf32>
    %c0_122 = arith.constant 0 : index
    %c0_123 = arith.constant 0 : index
    %166 = vector.load %arg14[%c0_122, %c0_123] : memref<1x128xf32, #tpu.memory_space<vmem>>, vector<1x128xf32>
    %167 = vector.broadcast %166 : vector<1x128xf32> to vector<122x128xf32>
    %168 = arith.addf %165, %167 : vector<122x128xf32>
    %cst_124 = arith.constant 0.000000e+00 : f32
    %169 = vector.broadcast %cst_124 : f32 to vector<122x128xf32>
    %170 = arith.maximumf %168, %169 : vector<122x128xf32>
    %c0_125 = arith.constant 0 : index
    %c0_126 = arith.constant 0 : index
    %171 = vector.load %arg15[%c0_125, %c0_126] : memref<8x122xbf16, #tpu.memory_space<vmem>>, vector<8x122xbf16>
    %172 = arith.truncf %170 : vector<122x128xf32> to vector<122x128xbf16>
    %cst_127 = arith.constant dense<0.000000e+00> : vector<8x128xf32>
    %173 = tpu.matmul %171, %172, %cst_127 {dimension_numbers = #tpu.dot_dimension_numbers<[1], [0], [0], [1], [0, 0, 1, 1], [], []>} : vector<8x122xbf16>, vector<122x128xbf16>, vector<8x128xf32> -> vector<8x128xf32>
    %174 = arith.truncf %173 : vector<8x128xf32> to vector<8x128xbf16>
    %c0_128 = arith.constant 0 : index
    %c0_129 = arith.constant 0 : index
    %175 = vector.load %arg16[%c0_128, %c0_129] : memref<128x10xbf16, #tpu.memory_space<vmem>>, vector<128x10xbf16>
    %cst_130 = arith.constant dense<0.000000e+00> : vector<8x10xf32>
    %176 = tpu.matmul %174, %175, %cst_130 {dimension_numbers = #tpu.dot_dimension_numbers<[1], [0], [0], [1], [0, 0, 1, 1], [], []>} : vector<8x128xbf16>, vector<128x10xbf16>, vector<8x10xf32> -> vector<8x10xf32>
    %cst_131 = arith.constant dense<0xFF800000> : vector<8xf32>
    %177 = vector.multi_reduction <maximumf>, %176, %cst_131 [1] : vector<8x10xf32> to vector<8xf32>
    %178 = vector.shape_cast %177 : vector<8xf32> to vector<8x1xf32>
    %179 = vector.broadcast %178 : vector<8x1xf32> to vector<8x10xf32>
    %180 = arith.subf %176, %179 : vector<8x10xf32>
    %181 = math.exp %180 : vector<8x10xf32>
    %cst_132 = arith.constant dense<0.000000e+00> : vector<8xf32>
    %182 = vector.multi_reduction <add>, %181, %cst_132 [1] : vector<8x10xf32> to vector<8xf32>
    %183 = vector.shape_cast %182 : vector<8xf32> to vector<8x1xf32>
    %184 = math.log %183 : vector<8x1xf32>
    %185 = vector.broadcast %184 : vector<8x1xf32> to vector<8x10xf32>
    %186 = arith.subf %180, %185 : vector<8x10xf32>
    %c0_133 = arith.constant 0 : index
    %c0_134 = arith.constant 0 : index
    %187 = vector.load %arg17[%c0_133, %c0_134] : memref<8x10xf32, #tpu.memory_space<vmem>>, vector<8x10xf32>
    tpu.vector_store %arg17[%c0_133, %c0_134], %186 {strides = array<i32>} : memref<8x10xf32, #tpu.memory_space<vmem>>, vector<8x10xf32>,
    return
  }
  func.func @transform_0(%arg0: i32) -> (i32, i32) {
    %c0_i32 = arith.constant 0 : i32
    %c0_i32_0 = arith.constant 0 : i32
    return %arg0, %c0_i32 : i32, i32
  }
  func.func @transform_1(%arg0: i32) -> (i32, i32, i32) {
    %c0_i32 = arith.constant 0 : i32
    %c0_i32_0 = arith.constant 0 : i32
    %c0_i32_1 = arith.constant 0 : i32
    %c0_i32_2 = arith.constant 0 : i32
    return %c0_i32, %c0_i32_0, %c0_i32_1 : i32, i32, i32
  }
  func.func @transform_2(%arg0: i32) -> (i32, i32) {
    %c0_i32 = arith.constant 0 : i32
    %c0_i32_0 = arith.constant 0 : i32
    %c0_i32_1 = arith.constant 0 : i32
    return %c0_i32, %c0_i32_0 : i32, i32
  }
  func.func @transform_3(%arg0: i32) -> (i32, i32, i32) {
    %c0_i32 = arith.constant 0 : i32
    %c0_i32_0 = arith.constant 0 : i32
    %c0_i32_1 = arith.constant 0 : i32
    %c0_i32_2 = arith.constant 0 : i32
    return %c0_i32, %c0_i32_0, %c0_i32_1 : i32, i32, i32
  }
  func.func @transform_4(%arg0: i32) -> (i32, i32) {
    %c0_i32 = arith.constant 0 : i32
    %c0_i32_0 = arith.constant 0 : i32
    %c0_i32_1 = arith.constant 0 : i32
    return %c0_i32, %c0_i32_0 : i32, i32
  }
  func.func @transform_5(%arg0: i32) -> (i32, i32) {
    %c0_i32 = arith.constant 0 : i32
    %c0_i32_0 = arith.constant 0 : i32
    %c0_i32_1 = arith.constant 0 : i32
    return %c0_i32, %c0_i32_0 : i32, i32
  }
  func.func @transform_6(%arg0: i32) -> (i32, i32) {
    %c0_i32 = arith.constant 0 : i32
    %c0_i32_0 = arith.constant 0 : i32
    %c0_i32_1 = arith.constant 0 : i32
    return %c0_i32, %c0_i32_0 : i32, i32
  }
  func.func @transform_7(%arg0: i32) -> (i32, i32) {
    %c0_i32 = arith.constant 0 : i32
    %c0_i32_0 = arith.constant 0 : i32
    %c0_i32_1 = arith.constant 0 : i32
    return %c0_i32, %c0_i32_0 : i32, i32
  }
  func.func @transform_8(%arg0: i32) -> (i32, i32, i32) {
    %c0_i32 = arith.constant 0 : i32
    %c0_i32_0 = arith.constant 0 : i32
    %c0_i32_1 = arith.constant 0 : i32
    %c0_i32_2 = arith.constant 0 : i32
    return %c0_i32, %c0_i32_0, %c0_i32_1 : i32, i32, i32
  }
  func.func @transform_9(%arg0: i32) -> (i32, i32) {
    %c0_i32 = arith.constant 0 : i32
    %c0_i32_0 = arith.constant 0 : i32
    %c0_i32_1 = arith.constant 0 : i32
    return %c0_i32, %c0_i32_0 : i32, i32
  }
  func.func @transform_10(%arg0: i32) -> (i32, i32, i32) {
    %c0_i32 = arith.constant 0 : i32
    %c0_i32_0 = arith.constant 0 : i32
    %c0_i32_1 = arith.constant 0 : i32
    %c0_i32_2 = arith.constant 0 : i32
    return %c0_i32, %c0_i32_0, %c0_i32_1 : i32, i32, i32
  }
  func.func @transform_11(%arg0: i32) -> (i32, i32) {
    %c0_i32 = arith.constant 0 : i32
    %c0_i32_0 = arith.constant 0 : i32
    %c0_i32_1 = arith.constant 0 : i32
    return %c0_i32, %c0_i32_0 : i32, i32
  }
  func.func @transform_12(%arg0: i32) -> (i32, i32, i32) {
    %c0_i32 = arith.constant 0 : i32
    %c0_i32_0 = arith.constant 0 : i32
    %c0_i32_1 = arith.constant 0 : i32
    %c0_i32_2 = arith.constant 0 : i32
    return %c0_i32, %c0_i32_0, %c0_i32_1 : i32, i32, i32
  }
  func.func @transform_13(%arg0: i32) -> (i32, i32) {
    %c0_i32 = arith.constant 0 : i32
    %c0_i32_0 = arith.constant 0 : i32
    %c0_i32_1 = arith.constant 0 : i32
    return %c0_i32, %c0_i32_0 : i32, i32
  }
  func.func @transform_14(%arg0: i32) -> (i32, i32) {
    %c0_i32 = arith.constant 0 : i32
    %c0_i32_0 = arith.constant 0 : i32
    %c0_i32_1 = arith.constant 0 : i32
    return %c0_i32, %c0_i32_0 : i32, i32
  }
  func.func @transform_15(%arg0: i32) -> (i32, i32) {
    %c0_i32 = arith.constant 0 : i32
    %c0_i32_0 = arith.constant 0 : i32
    %c0_i32_1 = arith.constant 0 : i32
    return %c0_i32, %c0_i32_0 : i32, i32
  }
  func.func @transform_16(%arg0: i32) -> (i32, i32) {
    %c0_i32 = arith.constant 0 : i32
    %c0_i32_0 = arith.constant 0 : i32
    return %arg0, %c0_i32 : i32, i32
  }
}

</mosaic_0001>

<llo_original>
// kernel: tile.42
$region0: #{tile.42}
  #allocation0 [shape = 's32[1]{0}', space=sflag, size = 0x4, scoped, tag = 'scoped memory for tile.42']
  %s0 = inlined_call_operand.vmem [shape: f32[16], index: 0, kind: input, shape index: {}]
  %s1 = inlined_call_operand.vmem [shape: f32[28,16], index: 1, kind: output, shape index: {}]
  // Predicated region
  $region2: #{tile.42} parent=0 // pred_check
    _
  $region3: #{tile.42} parent=0 // pred_check_branch
    %3 = sbr.rel (0) target = $region5
  $region4: #{tile.42} parent=0 // pred_region
    _
  $region5: #{tile.42} parent=0 // pred_fallthru
    _
  %v4 = vld [vmem:[%s0] ss:$0 sm:$0xff]
  %5 = vst [vmem:[%s1] sm:$0xff] %v4
  %s6 = scalar_lea.vmem %s1, 8
  %7 = vst [vmem:[%s6] sm:$0xff] %v4
  %s8 = scalar_lea.vmem %s1, 16
  %9 = vst [vmem:[%s8] sm:$0xff] %v4
  %s10 = scalar_lea.vmem %s1, 24
  %11 = vst [vmem:[%s10] sm:$0xff] %v4

// kernel: tile.37
$region0: #{tile.37}
  #allocation0 [shape = 's32[1]{0}', space=sflag, size = 0x4, scoped, tag = 'scoped memory for tile.37']
  %s0 = inlined_call_operand.vmem [shape: f32[8], index: 0, kind: input, shape index: {}]
  %s1 = inlined_call_operand.vmem [shape: f32[28,8], index: 1, kind: output, shape index: {}]
  // Predicated region
  $region2: #{tile.37} parent=0 // pred_check
    _
  $region3: #{tile.37} parent=0 // pred_check_branch
    %3 = sbr.rel (0) target = $region5
  $region4: #{tile.37} parent=0 // pred_region
    _
  $region5: #{tile.37} parent=0 // pred_fallthru
    _
  %v4 = vld [vmem:[%s0] ss:$0 sm:$0xff]
  %5 = vst [vmem:[%s1] sm:$0xff] %v4
  %s6 = scalar_lea.vmem %s1, 8
  %7 = vst [vmem:[%s6] sm:$0xff] %v4
  %s8 = scalar_lea.vmem %s1, 16
  %9 = vst [vmem:[%s8] sm:$0xff] %v4
  %s10 = scalar_lea.vmem %s1, 24
  %11 = vst [vmem:[%s10] sm:$0xff] %v4

// kernel: tile.43
$region0: #{tile.43}
  %s0 = inlined_call_operand.vmem [shape: f32[28,16], index: 0, kind: input, shape index: {}]
  %s1 = inlined_call_operand.vmem [shape: f32[1,448], index: 1, kind: output, shape index: {}]
  $region1: #{tile.43} parent=0
    #allocation0 [shape = 'u8[16384]{0}', space=vmem, size = 0x4000, scoped, tag = 'scoped mem for output reshape']
    %v2 = vld [vmem:[%s0] ss:$8 sm:$0xf]
    %vm3 = vcmask 130048
    %4 = vst.msk [vmem:[#allocation0] ss:$8 sm:$0xf] %vm3, %v2
    %s5 = scalar_lea.vmem %s0, 7
    %v6 = vld [vmem:[%s5] ss:$8 sm:$0x7]
    %7 = vrot.lane.b32.xlu0 %v6, 112
    %v8 = vpop.permute.xlu0 %7
    %vm9 = vcmask 1048448
    %10 = vst.msk [vmem:[#allocation0] ss:$8 sm:$0x7] %vm9, %v8
    %s11 = scalar_lea.vmem %s0, 6
    %v12 = vld [vmem:[%s11] ss:$8 sm:$0x7]
    %13 = vrot.lane.b32.xlu0 %v12, 96
    %v14 = vpop.permute.xlu0 %13
    %vm15 = vcmask 917248
    %16 = vst.msk [vmem:[#allocation0] ss:$8 sm:$0x7] %vm15, %v14
    %s17 = scalar_lea.vmem %s0, 5
    %v18 = vld [vmem:[%s17] ss:$8 sm:$0x7]
    %19 = vrot.lane.b32.xlu0 %v18, 80
    %v20 = vpop.permute.xlu0 %19
    %vm21 = vcmask 786048
    %22 = vst.msk [vmem:[#allocation0] ss:$8 sm:$0x7] %vm21, %v20
    %s23 = scalar_lea.vmem %s0, 4
    %v24 = vld [vmem:[%s23] ss:$8 sm:$0x7]
    %25 = vrot.lane.b32.xlu0 %v24, 64
    %v26 = vpop.permute.xlu0 %25
    %vm27 = vcmask 654848
    %28 = vst.msk [vmem:[#allocation0] ss:$8 sm:$0x7] %vm27, %v26
    %s29 = scalar_lea.vmem %s0, 3
    %v30 = vld [vmem:[%s29] ss:$8 sm:$0xf]
    %31 = vrot.lane.b32.xlu0 %v30, 48
    %v32 = vpop.permute.xlu0 %31
    %vm33 = vcmask 523648
    %34 = vst.msk [vmem:[#allocation0] ss:$8 sm:$0xf] %vm33, %v32
    %s35 = scalar_lea.vmem %s0, 2
    %v36 = vld [vmem:[%s35] ss:$8 sm:$0xf]
    %37 = vrot.lane.b32.xlu0 %v36, 32
    %v38 = vpop.permute.xlu0 %37
    %vm39 = vcmask 392448
    %40 = vst.msk [vmem:[#allocation0] ss:$8 sm:$0xf] %vm39, %v38
    %s41 = scalar_lea.vmem %s0, 1
    %v42 = vld [vmem:[%s41] ss:$8 sm:$0xf]
    %43 = vrot.lane.b32.xlu0 %v42, 16
    %v44 = vpop.permute.xlu0 %43
    %vm45 = vcmask 261248
    %46 = vst.msk [vmem:[#allocation0] ss:$8 sm:$0xf] %vm45, %v44
    %s48 = ssub.s32 2, 1
    %v49 = vld [vmem:[#allocation0] sm:%s48]
    %s51 = ssub.s32 2, 1
    %52 = vst [vmem:[%s1] sm:%s51] %v49
    %s53 = scalar_lea.vmem [#allocation0], 8
    %v54 = vld [vmem:[%s53] sm:%s48]
    %s56 = ssub.s32 2, 1
    %s57 = scalar_lea.vmem %s1, 1
    %58 = vst [vmem:[%s57] sm:%s56] %v54
    %s59 = scalar_lea.vmem [#allocation0], 16
    %v60 = vld [vmem:[%s59] sm:%s48]
    %s62 = ssub.s32 2, 1
    %s63 = scalar_lea.vmem %s1, 2
    %64 = vst [vmem:[%s63] sm:%s62] %v60
    %s65 = scalar_lea.vmem [#allocation0], 24
    %v66 = vld [vmem:[%s65] sm:%s48]
    %s68 = ssub.s32 2, 1
    %s69 = scalar_lea.vmem %s1, 3
    %70 = vst [vmem:[%s69] sm:%s68] %v66

// kernel: tile.38
$region0: #{tile.38}
  %s0 = inlined_call_operand.vmem [shape: f32[28,8], index: 0, kind: input, shape index: {}]
  %s1 = inlined_call_operand.vmem [shape: f32[1,224], index: 1, kind: output, shape index: {}]
  $region1: #{tile.38} parent=0
    #allocation0 [shape = 'u8[8192]{0}', space=vmem, size = 0x2000, scoped, tag = 'scoped mem for output reshape']
    %s2 = smov 3
    %v3 = vld [vmem:[%s0] ss:$16 sm:%s2]
    %vm4 = vcmask 64512
    %5 = vst.msk [vmem:[#allocation0] ss:$8 sm:$0x3] %vm4, %v3
    %s6 = scalar_lea.vmem %s0, 15
    %v7 = vld [vmem:[%s6] sm:$0x1]
    %8 = vrot.lane.b32.xlu0 %v7, 120
    %v9 = vpop.permute.xlu0 %8
    %vm10 = vcmask 1048512
    %11 = vst.msk [vmem:[#allocation0] sm:$0x1] %vm10, %v9
    %s12 = scalar_lea.vmem %s0, 14
    %v13 = vld [vmem:[%s12] sm:$0x1]
    %14 = vrot.lane.b32.xlu0 %v13, 112
    %v15 = vpop.permute.xlu0 %14
    %vm16 = vcmask 982912
    %17 = vst.msk [vmem:[#allocation0] sm:$0x1] %vm16, %v15
    %s18 = scalar_lea.vmem %s0, 13
    %v19 = vld [vmem:[%s18] sm:$0x1]
    %20 = vrot.lane.b32.xlu0 %v19, 104
    %v21 = vpop.permute.xlu0 %20
    %vm22 = vcmask 917312
    %23 = vst.msk [vmem:[#allocation0] sm:$0x1] %vm22, %v21
    %s24 = scalar_lea.vmem %s0, 12
    %v25 = vld [vmem:[%s24] sm:$0x1]
    %26 = vrot.lane.b32.xlu0 %v25, 96
    %v27 = vpop.permute.xlu0 %26
    %vm28 = vcmask 851712
    %29 = vst.msk [vmem:[#allocation0] sm:$0x1] %vm28, %v27
    %s30 = scalar_lea.vmem %s0, 11
    %s31 = smov 3
    %v32 = vld [vmem:[%s30] ss:$16 sm:%s31]
    %33 = vrot.lane.b32.xlu0 %v32, 88
    %v34 = vpop.permute.xlu0 %33
    %vm35 = vcmask 786112
    %36 = vst.msk [vmem:[#allocation0] ss:$8 sm:$0x3] %vm35, %v34
    %s37 = scalar_lea.vmem %s0, 10
    %s38 = smov 3
    %v39 = vld [vmem:[%s37] ss:$16 sm:%s38]
    %40 = vrot.lane.b32.xlu0 %v39, 80
    %v41 = vpop.permute.xlu0 %40
    %vm42 = vcmask 720512
    %43 = vst.msk [vmem:[#allocation0] ss:$8 sm:$0x3] %vm42, %v41
    %s44 = scalar_lea.vmem %s0, 9
    %s45 = smov 3
    %v46 = vld [vmem:[%s44] ss:$16 sm:%s45]
    %47 = vrot.lane.b32.xlu0 %v46, 72
    %v48 = vpop.permute.xlu0 %47
    %vm49 = vcmask 654912
    %50 = vst.msk [vmem:[#allocation0] ss:$8 sm:$0x3] %vm49, %v48
    %s51 = scalar_lea.vmem %s0, 8
    %s52 = smov 3
    %v53 = vld [vmem:[%s51] ss:$16 sm:%s52]
    %54 = vrot.lane.b32.xlu0 %v53, 64
    %v55 = vpop.permute.xlu0 %54
    %vm56 = vcmask 589312
    %57 = vst.msk [vmem:[#allocation0] ss:$8 sm:$0x3] %vm56, %v55
    %s58 = scalar_lea.vmem %s0, 7
    %s59 = smov 3
    %v60 = vld [vmem:[%s58] ss:$16 sm:%s59]
    %61 = vrot.lane.b32.xlu0 %v60, 56
    %v62 = vpop.permute.xlu0 %61
    %vm63 = vcmask 523712
    %64 = vst.msk [vmem:[#allocation0] ss:$8 sm:$0x3] %vm63, %v62
    %s65 = scalar_lea.vmem %s0, 6
    %s66 = smov 3
    %v67 = vld [vmem:[%s65] ss:$16 sm:%s66]
    %68 = vrot.lane.b32.xlu0 %v67, 48
    %v69 = vpop.permute.xlu0 %68
    %vm70 = vcmask 458112
    %71 = vst.msk [vmem:[#allocation0] ss:$8 sm:$0x3] %vm70, %v69
    %s72 = scalar_lea.vmem %s0, 5
    %s73 = smov 3
    %v74 = vld [vmem:[%s72] ss:$16 sm:%s73]
    %75 = vrot.lane.b32.xlu0 %v74, 40
    %v76 = vpop.permute.xlu0 %75
    %vm77 = vcmask 392512
    %78 = vst.msk [vmem:[#allocation0] ss:$8 sm:$0x3] %vm77, %v76
    %s79 = scalar_lea.vmem %s0, 4
    %s80 = smov 3
    %v81 = vld [vmem:[%s79] ss:$16 sm:%s80]
    %82 = vrot.lane.b32.xlu0 %v81, 32
    %v83 = vpop.permute.xlu0 %82
    %vm84 = vcmask 326912
    %85 = vst.msk [vmem:[#allocation0] ss:$8 sm:$0x3] %vm84, %v83
    %s86 = scalar_lea.vmem %s0, 3
    %s87 = smov 3
    %v88 = vld [vmem:[%s86] ss:$16 sm:%s87]
    %89 = vrot.lane.b32.xlu0 %v88, 24
    %v90 = vpop.permute.xlu0 %89
    %vm91 = vcmask 261312
    %92 = vst.msk [vmem:[#allocation0] ss:$8 sm:$0x3] %vm91, %v90
    %s93 = scalar_lea.vmem %s0, 2
    %s94 = smov 3
    %v95 = vld [vmem:[%s93] ss:$16 sm:%s94]
    %96 = vrot.lane.b32.xlu0 %v95, 16
    %v97 = vpop.permute.xlu0 %96
    %vm98 = vcmask 195712
    %99 = vst.msk [vmem:[#allocation0] ss:$8 sm:$0x3] %vm98, %v97
    %s100 = scalar_lea.vmem %s0, 1
    %s101 = smov 3
    %v102 = vld [vmem:[%s100] ss:$16 sm:%s101]
    %103 = vrot.lane.b32.xlu0 %v102, 8
    %v104 = vpop.permute.xlu0 %103
    %vm105 = vcmask 130112
    %106 = vst.msk [vmem:[#allocation0] ss:$8 sm:$0x3] %vm105, %v104
    %s108 = ssub.s32 2, 1
    %v109 = vld [vmem:[#allocation0] sm:%s108]
    %s111 = ssub.s32 2, 1
    %112 = vst [vmem:[%s1] sm:%s111] %v109
    %s113 = scalar_lea.vmem [#allocation0], 8
    %v114 = vld [vmem:[%s113] sm:%s108]
    %s116 = ssub.s32 2, 1
    %s117 = scalar_lea.vmem %s1, 1
    %118 = vst [vmem:[%s117] sm:%s116] %v114

// kernel: tile.57
$region0: #{tile.57}
  #allocation0 [shape = 's32[1]{0}', space=sflag, size = 0x4, scoped, tag = 'scoped memory for tile.57']
  %s0 = inlined_call_operand.vmem [shape: f32[16], index: 0, kind: input, shape index: {}]
  %s1 = inlined_call_operand.vmem [shape: f32[10,16], index: 1, kind: output, shape index: {}]
  // Predicated region
  $region2: #{tile.57} parent=0 // pred_check
    _
  $region3: #{tile.57} parent=0 // pred_check_branch
    %3 = sbr.rel (0) target = $region5
  $region4: #{tile.57} parent=0 // pred_region
    _
  $region5: #{tile.57} parent=0 // pred_fallthru
    _
  %v4 = vld [vmem:[%s0] ss:$0 sm:$0xff]
  %5 = vst [vmem:[%s1] sm:$0xff] %v4
  %s6 = scalar_lea.vmem %s1, 8
  %7 = vst [vmem:[%s6] sm:$0xff] %v4

// kernel: tile.58
$region0: #{tile.58}
  %s0 = inlined_call_operand.vmem [shape: f32[10,16], index: 0, kind: input, shape index: {}]
  %s1 = inlined_call_operand.vmem [shape: f32[1,160], index: 1, kind: output, shape index: {}]
  $region1: #{tile.58} parent=0
    #allocation0 [shape = 'u8[8192]{0}', space=vmem, size = 0x2000, scoped, tag = 'scoped mem for output reshape']
    %s2 = smov 3
    %v3 = vld [vmem:[%s0] ss:$8 sm:%s2]
    %vm4 = vcmask 130048
    %5 = vst.msk [vmem:[#allocation0] ss:$8 sm:$0x3] %vm4, %v3
    %s6 = scalar_lea.vmem %s0, 7
    %v7 = vld [vmem:[%s6] sm:$0x1]
    %8 = vrot.lane.b32.xlu0 %v7, 112
    %v9 = vpop.permute.xlu0 %8
    %vm10 = vcmask 1048448
    %11 = vst.msk [vmem:[#allocation0] sm:$0x1] %vm10, %v9
    %s12 = scalar_lea.vmem %s0, 6
    %v13 = vld [vmem:[%s12] sm:$0x1]
    %14 = vrot.lane.b32.xlu0 %v13, 96
    %v15 = vpop.permute.xlu0 %14
    %vm16 = vcmask 917248
    %17 = vst.msk [vmem:[#allocation0] sm:$0x1] %vm16, %v15
    %s18 = scalar_lea.vmem %s0, 5
    %v19 = vld [vmem:[%s18] sm:$0x1]
    %20 = vrot.lane.b32.xlu0 %v19, 80
    %v21 = vpop.permute.xlu0 %20
    %vm22 = vcmask 786048
    %23 = vst.msk [vmem:[#allocation0] sm:$0x1] %vm22, %v21
    %s24 = scalar_lea.vmem %s0, 4
    %v25 = vld [vmem:[%s24] sm:$0x1]
    %26 = vrot.lane.b32.xlu0 %v25, 64
    %v27 = vpop.permute.xlu0 %26
    %vm28 = vcmask 654848
    %29 = vst.msk [vmem:[#allocation0] sm:$0x1] %vm28, %v27
    %s30 = scalar_lea.vmem %s0, 3
    %v31 = vld [vmem:[%s30] sm:$0x1]
    %32 = vrot.lane.b32.xlu0 %v31, 48
    %v33 = vpop.permute.xlu0 %32
    %vm34 = vcmask 523648
    %35 = vst.msk [vmem:[#allocation0] sm:$0x1] %vm34, %v33
    %s36 = scalar_lea.vmem %s0, 2
    %v37 = vld [vmem:[%s36] sm:$0x1]
    %38 = vrot.lane.b32.xlu0 %v37, 32
    %v39 = vpop.permute.xlu0 %38
    %vm40 = vcmask 392448
    %41 = vst.msk [vmem:[#allocation0] sm:$0x1] %vm40, %v39
    %s42 = scalar_lea.vmem %s0, 1
    %s43 = smov 3
    %v44 = vld [vmem:[%s42] ss:$8 sm:%s43]
    %45 = vrot.lane.b32.xlu0 %v44, 16
    %v46 = vpop.permute.xlu0 %45
    %vm47 = vcmask 261248
    %48 = vst.msk [vmem:[#allocation0] ss:$8 sm:$0x3] %vm47, %v46
    %s50 = ssub.s32 2, 1
    %v51 = vld [vmem:[#allocation0] sm:%s50]
    %s53 = ssub.s32 2, 1
    %54 = vst [vmem:[%s1] sm:%s53] %v51
    %s55 = scalar_lea.vmem [#allocation0], 8
    %v56 = vld [vmem:[%s55] sm:%s50]
    %s58 = ssub.s32 2, 1
    %s59 = scalar_lea.vmem %s1, 1
    %60 = vst [vmem:[%s59] sm:%s58] %v56

// kernel: tile.47
$region0: #{tile.47}
  #allocation0 [shape = 's32[1]{0}', space=sflag, size = 0x4, scoped, tag = 'scoped memory for tile.47']
  %s0 = inlined_call_operand.vmem [shape: f32[4], index: 0, kind: input, shape index: {}]
  %s1 = inlined_call_operand.vmem [shape: f32[14,4], index: 1, kind: output, shape index: {}]
  // Predicated region
  $region2: #{tile.47} parent=0 // pred_check
    _
  $region3: #{tile.47} parent=0 // pred_check_branch
    %3 = sbr.rel (0) target = $region5
  $region4: #{tile.47} parent=0 // pred_region
    _
  $region5: #{tile.47} parent=0 // pred_fallthru
    _
  %v4 = vld [vmem:[%s0] ss:$0 sm:$0xff]
  %5 = vst [vmem:[%s1] sm:$0xff] %v4
  %s6 = scalar_lea.vmem %s1, 8
  %7 = vst [vmem:[%s6] sm:$0xff] %v4

// kernel: tile.48
$region0: #{tile.48}
  %s0 = inlined_call_operand.vmem [shape: f32[14,4], index: 0, kind: input, shape index: {}]
  %s1 = inlined_call_operand.vmem [shape: f32[1,56], index: 1, kind: output, shape index: {}]
  $region1: #{tile.48} parent=0
    #allocation0 [shape = 'u8[4096]{0}', space=vmem, size = 0x1000, scoped, tag = 'scoped mem for output reshape']
    %v2 = vld [vmem:[%s0] sm:$0x1]
    %vm3 = vcmask 31744
    %4 = vst.msk [vmem:[#allocation0] sm:$0x1] %vm3, %v2
    %s5 = scalar_lea.vmem %s0, 13
    %v6 = vld [vmem:[%s5] sm:$0x1]
    %7 = vrot.lane.b32.xlu0 %v6, 52
    %v8 = vpop.permute.xlu0 %7
    %vm9 = vcmask 458144
    %10 = vst.msk [vmem:[#allocation0] sm:$0x1] %vm9, %v8
    %s11 = scalar_lea.vmem %s0, 12
    %v12 = vld [vmem:[%s11] sm:$0x1]
    %13 = vrot.lane.b32.xlu0 %v12, 48
    %v14 = vpop.permute.xlu0 %13
    %vm15 = vcmask 425344
    %16 = vst.msk [vmem:[#allocation0] sm:$0x1] %vm15, %v14
    %s17 = scalar_lea.vmem %s0, 11
    %v18 = vld [vmem:[%s17] sm:$0x1]
    %19 = vrot.lane.b32.xlu0 %v18, 44
    %v20 = vpop.permute.xlu0 %19
    %vm21 = vcmask 392544
    %22 = vst.msk [vmem:[#allocation0] sm:$0x1] %vm21, %v20
    %s23 = scalar_lea.vmem %s0, 10
    %v24 = vld [vmem:[%s23] sm:$0x1]
    %25 = vrot.lane.b32.xlu0 %v24, 40
    %v26 = vpop.permute.xlu0 %25
    %vm27 = vcmask 359744
    %28 = vst.msk [vmem:[#allocation0] sm:$0x1] %vm27, %v26
    %s29 = scalar_lea.vmem %s0, 9
    %v30 = vld [vmem:[%s29] sm:$0x1]
    %31 = vrot.lane.b32.xlu0 %v30, 36
    %v32 = vpop.permute.xlu0 %31
    %vm33 = vcmask 326944
    %34 = vst.msk [vmem:[#allocation0] sm:$0x1] %vm33, %v32
    %s35 = scalar_lea.vmem %s0, 8
    %v36 = vld [vmem:[%s35] sm:$0x1]
    %37 = vrot.lane.b32.xlu0 %v36, 32
    %v38 = vpop.permute.xlu0 %37
    %vm39 = vcmask 294144
    %40 = vst.msk [vmem:[#allocation0] sm:$0x1] %vm39, %v38
    %s41 = scalar_lea.vmem %s0, 7
    %v42 = vld [vmem:[%s41] sm:$0x1]
    %43 = vrot.lane.b32.xlu0 %v42, 28
    %v44 = vpop.permute.xlu0 %43
    %vm45 = vcmask 261344
    %46 = vst.msk [vmem:[#allocation0] sm:$0x1] %vm45, %v44
    %s47 = scalar_lea.vmem %s0, 6
    %v48 = vld [vmem:[%s47] sm:$0x1]
    %49 = vrot.lane.b32.xlu0 %v48, 24
    %v50 = vpop.permute.xlu0 %49
    %vm51 = vcmask 228544
    %52 = vst.msk [vmem:[#allocation0] sm:$0x1] %vm51, %v50
    %s53 = scalar_lea.vmem %s0, 5
    %v54 = vld [vmem:[%s53] sm:$0x1]
    %55 = vrot.lane.b32.xlu0 %v54, 20
    %v56 = vpop.permute.xlu0 %55
    %vm57 = vcmask 195744
    %58 = vst.msk [vmem:[#allocation0] sm:$0x1] %vm57, %v56
    %s59 = scalar_lea.vmem %s0, 4
    %v60 = vld [vmem:[%s59] sm:$0x1]
    %61 = vrot.lane.b32.xlu0 %v60, 16
    %v62 = vpop.permute.xlu0 %61
    %vm63 = vcmask 162944
    %64 = vst.msk [vmem:[#allocation0] sm:$0x1] %vm63, %v62
    %s65 = scalar_lea.vmem %s0, 3
    %v66 = vld [vmem:[%s65] sm:$0x1]
    %67 = vrot.lane.b32.xlu0 %v66, 12
    %v68 = vpop.permute.xlu0 %67
    %vm69 = vcmask 130144
    %70 = vst.msk [vmem:[#allocation0] sm:$0x1] %vm69, %v68
    %s71 = scalar_lea.vmem %s0, 2
    %v72 = vld [vmem:[%s71] sm:$0x1]
    %73 = vrot.lane.b32.xlu0 %v72, 8
    %v74 = vpop.permute.xlu0 %73
    %vm75 = vcmask 97344
    %76 = vst.msk [vmem:[#allocation0] sm:$0x1] %vm75, %v74
    %s77 = scalar_lea.vmem %s0, 1
    %v78 = vld [vmem:[%s77] sm:$0x1]
    %79 = vrot.lane.b32.xlu0 %v78, 4
    %v80 = vpop.permute.xlu0 %79
    %vm81 = vcmask 64544
    %82 = vst.msk [vmem:[#allocation0] sm:$0x1] %vm81, %v80
    %s84 = ssub.s32 2, 1
    %v85 = vld [vmem:[#allocation0] sm:%s84]
    %s87 = ssub.s32 2, 1
    %88 = vst [vmem:[%s1] sm:%s87] %v85

// kernel: tile.52
$region0: #{tile.52}
  #allocation0 [shape = 's32[1]{0}', space=sflag, size = 0x4, scoped, tag = 'scoped memory for tile.52']
  %s0 = inlined_call_operand.vmem [shape: f32[8], index: 0, kind: input, shape index: {}]
  %s1 = inlined_call_operand.vmem [shape: f32[12,8], index: 1, kind: output, shape index: {}]
  // Predicated region
  $region2: #{tile.52} parent=0 // pred_check
    _
  $region3: #{tile.52} parent=0 // pred_check_branch
    %3 = sbr.rel (0) target = $region5
  $region4: #{tile.52} parent=0 // pred_region
    _
  $region5: #{tile.52} parent=0 // pred_fallthru
    _
  %v4 = vld [vmem:[%s0] ss:$0 sm:$0xff]
  %5 = vst [vmem:[%s1] sm:$0xff] %v4
  %s6 = scalar_lea.vmem %s1, 8
  %7 = vst [vmem:[%s6] sm:$0xff] %v4

// kernel: tile.53
$region0: #{tile.53}
  %s0 = inlined_call_operand.vmem [shape: f32[12,8], index: 0, kind: input, shape index: {}]
  %s1 = inlined_call_operand.vmem [shape: f32[1,96], index: 1, kind: output, shape index: {}]
  $region1: #{tile.53} parent=0
    #allocation0 [shape = 'u8[4096]{0}', space=vmem, size = 0x1000, scoped, tag = 'scoped mem for output reshape']
    %v2 = vld [vmem:[%s0] sm:$0x1]
    %vm3 = vcmask 64512
    %4 = vst.msk [vmem:[#allocation0] sm:$0x1] %vm3, %v2
    %s5 = scalar_lea.vmem %s0, 11
    %v6 = vld [vmem:[%s5] sm:$0x1]
    %7 = vrot.lane.b32.xlu0 %v6, 88
    %v8 = vpop.permute.xlu0 %7
    %vm9 = vcmask 786112
    %10 = vst.msk [vmem:[#allocation0] sm:$0x1] %vm9, %v8
    %s11 = scalar_lea.vmem %s0, 10
    %v12 = vld [vmem:[%s11] sm:$0x1]
    %13 = vrot.lane.b32.xlu0 %v12, 80
    %v14 = vpop.permute.xlu0 %13
    %vm15 = vcmask 720512
    %16 = vst.msk [vmem:[#allocation0] sm:$0x1] %vm15, %v14
    %s17 = scalar_lea.vmem %s0, 9
    %v18 = vld [vmem:[%s17] sm:$0x1]
    %19 = vrot.lane.b32.xlu0 %v18, 72
    %v20 = vpop.permute.xlu0 %19
    %vm21 = vcmask 654912
    %22 = vst.msk [vmem:[#allocation0] sm:$0x1] %vm21, %v20
    %s23 = scalar_lea.vmem %s0, 8
    %v24 = vld [vmem:[%s23] sm:$0x1]
    %25 = vrot.lane.b32.xlu0 %v24, 64
    %v26 = vpop.permute.xlu0 %25
    %vm27 = vcmask 589312
    %28 = vst.msk [vmem:[#allocation0] sm:$0x1] %vm27, %v26
    %s29 = scalar_lea.vmem %s0, 7
    %v30 = vld [vmem:[%s29] sm:$0x1]
    %31 = vrot.lane.b32.xlu0 %v30, 56
    %v32 = vpop.permute.xlu0 %31
    %vm33 = vcmask 523712
    %34 = vst.msk [vmem:[#allocation0] sm:$0x1] %vm33, %v32
    %s35 = scalar_lea.vmem %s0, 6
    %v36 = vld [vmem:[%s35] sm:$0x1]
    %37 = vrot.lane.b32.xlu0 %v36, 48
    %v38 = vpop.permute.xlu0 %37
    %vm39 = vcmask 458112
    %40 = vst.msk [vmem:[#allocation0] sm:$0x1] %vm39, %v38
    %s41 = scalar_lea.vmem %s0, 5
    %v42 = vld [vmem:[%s41] sm:$0x1]
    %43 = vrot.lane.b32.xlu0 %v42, 40
    %v44 = vpop.permute.xlu0 %43
    %vm45 = vcmask 392512
    %46 = vst.msk [vmem:[#allocation0] sm:$0x1] %vm45, %v44
    %s47 = scalar_lea.vmem %s0, 4
    %v48 = vld [vmem:[%s47] sm:$0x1]
    %49 = vrot.lane.b32.xlu0 %v48, 32
    %v50 = vpop.permute.xlu0 %49
    %vm51 = vcmask 326912
    %52 = vst.msk [vmem:[#allocation0] sm:$0x1] %vm51, %v50
    %s53 = scalar_lea.vmem %s0, 3
    %v54 = vld [vmem:[%s53] sm:$0x1]
    %55 = vrot.lane.b32.xlu0 %v54, 24
    %v56 = vpop.permute.xlu0 %55
    %vm57 = vcmask 261312
    %58 = vst.msk [vmem:[#allocation0] sm:$0x1] %vm57, %v56
    %s59 = scalar_lea.vmem %s0, 2
    %v60 = vld [vmem:[%s59] sm:$0x1]
    %61 = vrot.lane.b32.xlu0 %v60, 16
    %v62 = vpop.permute.xlu0 %61
    %vm63 = vcmask 195712
    %64 = vst.msk [vmem:[#allocation0] sm:$0x1] %vm63, %v62
    %s65 = scalar_lea.vmem %s0, 1
    %v66 = vld [vmem:[%s65] sm:$0x1]
    %67 = vrot.lane.b32.xlu0 %v66, 8
    %v68 = vpop.permute.xlu0 %67
    %vm69 = vcmask 130112
    %70 = vst.msk [vmem:[#allocation0] sm:$0x1] %vm69, %v68
    %s72 = ssub.s32 2, 1
    %v73 = vld [vmem:[#allocation0] sm:%s72]
    %s75 = ssub.s32 2, 1
    %76 = vst [vmem:[%s1] sm:%s75] %v73

// kernel: tile.62
$region0: #{tile.62}
  #allocation0 [shape = 's32[1]{0}', space=sflag, size = 0x4, scoped, tag = 'scoped memory for tile.62']
  %s0 = inlined_call_operand.vmem [shape: f32[16], index: 0, kind: input, shape index: {}]
  %s1 = inlined_call_operand.vmem [shape: f32[8,16], index: 1, kind: output, shape index: {}]
  // Predicated region
  $region2: #{tile.62} parent=0 // pred_check
    _
  $region3: #{tile.62} parent=0 // pred_check_branch
    %3 = sbr.rel (0) target = $region5
  $region4: #{tile.62} parent=0 // pred_region
    _
  $region5: #{tile.62} parent=0 // pred_fallthru
    _
  %v4 = vld [vmem:[%s0] ss:$0 sm:$0xff]
  %5 = vst [vmem:[%s1] sm:$0xff] %v4

// kernel: tile.63
$region0: #{tile.63}
  %s0 = inlined_call_operand.vmem [shape: f32[8,16], index: 0, kind: input, shape index: {}]
  %s1 = inlined_call_operand.vmem [shape: f32[1,128], index: 1, kind: output, shape index: {}]
  $region1: #{tile.63} parent=0
    #allocation0 [shape = 'u8[4096]{0}', space=vmem, size = 0x1000, scoped, tag = 'scoped mem for output reshape']
    %v2 = vld [vmem:[%s0] sm:$0x1]
    %vm3 = vcmask 130048
    %4 = vst.msk [vmem:[#allocation0] sm:$0x1] %vm3, %v2
    %s5 = scalar_lea.vmem %s0, 7
    %v6 = vld [vmem:[%s5] sm:$0x1]
    %7 = vrot.lane.b32.xlu0 %v6, 112
    %v8 = vpop.permute.xlu0 %7
    %vm9 = vcmask 1048448
    %10 = vst.msk [vmem:[#allocation0] sm:$0x1] %vm9, %v8
    %s11 = scalar_lea.vmem %s0, 6
    %v12 = vld [vmem:[%s11] sm:$0x1]
    %13 = vrot.lane.b32.xlu0 %v12, 96
    %v14 = vpop.permute.xlu0 %13
    %vm15 = vcmask 917248
    %16 = vst.msk [vmem:[#allocation0] sm:$0x1] %vm15, %v14
    %s17 = scalar_lea.vmem %s0, 5
    %v18 = vld [vmem:[%s17] sm:$0x1]
    %19 = vrot.lane.b32.xlu0 %v18, 80
    %v20 = vpop.permute.xlu0 %19
    %vm21 = vcmask 786048
    %22 = vst.msk [vmem:[#allocation0] sm:$0x1] %vm21, %v20
    %s23 = scalar_lea.vmem %s0, 4
    %v24 = vld [vmem:[%s23] sm:$0x1]
    %25 = vrot.lane.b32.xlu0 %v24, 64
    %v26 = vpop.permute.xlu0 %25
    %vm27 = vcmask 654848
    %28 = vst.msk [vmem:[#allocation0] sm:$0x1] %vm27, %v26
    %s29 = scalar_lea.vmem %s0, 3
    %v30 = vld [vmem:[%s29] sm:$0x1]
    %31 = vrot.lane.b32.xlu0 %v30, 48
    %v32 = vpop.permute.xlu0 %31
    %vm33 = vcmask 523648
    %34 = vst.msk [vmem:[#allocation0] sm:$0x1] %vm33, %v32
    %s35 = scalar_lea.vmem %s0, 2
    %v36 = vld [vmem:[%s35] sm:$0x1]
    %37 = vrot.lane.b32.xlu0 %v36, 32
    %v38 = vpop.permute.xlu0 %37
    %vm39 = vcmask 392448
    %40 = vst.msk [vmem:[#allocation0] sm:$0x1] %vm39, %v38
    %s41 = scalar_lea.vmem %s0, 1
    %v42 = vld [vmem:[%s41] sm:$0x1]
    %43 = vrot.lane.b32.xlu0 %v42, 16
    %v44 = vpop.permute.xlu0 %43
    %vm45 = vcmask 261248
    %46 = vst.msk [vmem:[#allocation0] sm:$0x1] %vm45, %v44
    %s48 = ssub.s32 2, 1
    %v49 = vld [vmem:[#allocation0] sm:%s48]
    %s51 = ssub.s32 2, 1
    %52 = vst [vmem:[%s1] sm:%s51] %v49

// kernel: net1_forward.1
$region0: #{net1_forward.1}
  #allocation0 [shape = 'u32[]', space=smem, size = 0x4, offset = 0x4, fixed_abs, tag = 'smem constant byte address 0x4 - core index']
  #allocation1 [shape = 'u32[72,128]{1,0:T(1,128)}', space=vmem, size = 0x9000, scoped, tag = 'internal scratch']
  #allocation2 [shape = 'f32[256,224]{1,0:T(8,128)}', space=vmem, size = 0x40000, scoped, tag = 'scratch operand']
  %s0 = inlined_call_operand.vmem [shape: f32[512,28], index: 0, kind: input, shape index: {}]
  %s1 = inlined_call_operand.vmem [shape: bf16[3,28,224], index: 1, kind: input, shape index: {}]
  %s2 = inlined_call_operand.vmem [shape: f32[1,224], index: 2, kind: input, shape index: {}]
  %s3 = inlined_call_operand.vmem [shape: bf16[3,224,448], index: 3, kind: input, shape index: {}]
  %s4 = inlined_call_operand.vmem [shape: f32[1,448], index: 4, kind: input, shape index: {}]
  %s5 = inlined_call_operand.vmem [shape: bf16[432,56], index: 5, kind: input, shape index: {}]
  %s6 = inlined_call_operand.vmem [shape: f32[1,56], index: 6, kind: input, shape index: {}]
  %s7 = inlined_call_operand.vmem [shape: bf16[128,253], index: 7, kind: input, shape index: {}]
  %s8 = inlined_call_operand.vmem [shape: bf16[3,56,96], index: 8, kind: input, shape index: {}]
  %s9 = inlined_call_operand.vmem [shape: f32[1,96], index: 9, kind: input, shape index: {}]
  %s10 = inlined_call_operand.vmem [shape: bf16[3,96,160], index: 10, kind: input, shape index: {}]
  %s11 = inlined_call_operand.vmem [shape: f32[1,160], index: 11, kind: input, shape index: {}]
  %s12 = inlined_call_operand.vmem [shape: bf16[3,160,128], index: 12, kind: input, shape index: {}]
  %s13 = inlined_call_operand.vmem [shape: f32[1,128], index: 13, kind: input, shape index: {}]
  %s14 = inlined_call_operand.vmem [shape: bf16[8,122], index: 14, kind: input, shape index: {}]
  %s15 = inlined_call_operand.vmem [shape: bf16[128,10], index: 15, kind: input, shape index: {}]
  %s16 = inlined_call_operand.hbm [shape: f32[16,10], index: 16, kind: output, shape index: {}]
  %s17 = sld [smem:[#allocation0]]
  $region97: #{net1_forward.1} parent=0
    _
  %s19 = ssub.s32 1, %s17
  %s20 = scalar_select 0, %s19, %s17
  $region1: #{net1_forward.1} parent=0
    #allocation3 [shape = 'u8[8192]{0}', space=vmem, size = 0x2000, scoped, tag = 'output window, operand 0']
    #allocation4 [shape = 's32[2]{0}', space=sflag, size = 0x8, scoped, tag = 'scoped memory for net1_forward.1']
    %21 = vsyncpa [#allocation4], 0
    %s22 = scalar_lea.sflag [#allocation4], 1
    %23 = vsyncpa %s22, 0
    loop: start=0, step=1, limit=4
    $region2: #{net1_forward.1} parent=1 // loop_pre_header
      _
    $region3: #{net1_forward.1} parent=1 // loop_header
      %s25 = sphi 0, %s29
      %p26 = scmp.ge.s32.totalorder %s25, 4
      %s35 = sphi 0, %s37
      %s38 = sphi 0, %s35
      %s39 = sphi 0, %s38
      %s55 = sphi 0, %s39
      %s59 = sphi 0, %s59
      %s61 = sphi 0, %s59
      %s62 = sphi 0, %s61
      %s76 = sphi 0, %s62
      %s80 = sphi 0, %s80
      %s82 = sphi 0, %s80
      %s83 = sphi 0, %s82
      %s97 = sphi 0, %s83
      %s101 = sphi 0, %s101
      %s103 = sphi 0, %s101
      %s104 = sphi 0, %s103
      %s118 = sphi 0, %s104
      %s122 = sphi 0, %s122
      %s124 = sphi 0, %s122
      %s125 = sphi 0, %s124
      %s139 = sphi 0, %s125
      %s143 = sphi 0, %s143
      %s145 = sphi 0, %s143
      %s146 = sphi 0, %s145
      %s160 = sphi 0, %s146
      %s164 = sphi 0, %s164
      %s166 = sphi 0, %s164
      %s167 = sphi 0, %s166
      %s181 = sphi 0, %s167
      %s185 = sphi 0, %s185
      %s187 = sphi 0, %s185
      %s188 = sphi 0, %s187
      %s202 = sphi 0, %s188
      %s206 = sphi 0, %s206
      %s208 = sphi 0, %s206
      %s209 = sphi 0, %s208
      %s223 = sphi 0, %s209
      %s227 = sphi 0, %s227
      %s229 = sphi 0, %s227
      %s230 = sphi 0, %s229
      %s244 = sphi 0, %s230
      %s248 = sphi 0, %s248
      %s250 = sphi 0, %s248
      %s251 = sphi 0, %s250
      %s265 = sphi 0, %s251
      %s269 = sphi 0, %s269
      %s271 = sphi 0, %s269
      %s272 = sphi 0, %s271
      %s286 = sphi 0, %s272
      %s290 = sphi 0, %s290
      %s292 = sphi 0, %s290
      %s293 = sphi 0, %s292
      %s307 = sphi 0, %s293
      %s311 = sphi 0, %s311
      %s313 = sphi 0, %s311
      %s314 = sphi 0, %s313
      %s328 = sphi 0, %s314
      %s332 = sphi 0, %s332
      %s334 = sphi 0, %s332
      %s335 = sphi 0, %s334
      %s349 = sphi 0, %s335
      %s353 = sphi 0, %s353
      %s355 = sphi 0, %s353
      %s356 = sphi 0, %s355
      %s370 = sphi 0, %s356
      %s376 = sphi 0, %s378
      %s379 = sphi 0, %s376
      %s380 = sphi 0, %s379
      %s396 = sphi 0, %s380
    $region4: #{net1_forward.1} parent=1 // loop_header_branch
      %28 = sbr.rel (%p26) target = $region8
    $region5: #{net1_forward.1} parent=1 // loop_body
      %s30 = ssub.s32 %s25, 1
      %s31 = ssub.s32 %s25, 2
      %s32 = sadd.s32 %s25, 1
      %s33 = ssub.s32 %s25, %s32
      %p34 = scmp.eq.s32.totalorder %s33, 0
      %s36 = sadd.s32 %s35, 1
      %s37 = scalar_select %p34, %s35, %s36
      %p40 = pneg %p34
      %p41 = scmp.eq.s32.totalorder %s25, 1
      %p42 = por %p40, %p41
      %p43 = scmp.ne.s32.totalorder %s35, %s38
      %p44 = scmp.eq.s32.totalorder %s25, 0
      %p45 = por %p43, %p44
      %p46 = scmp.ne.s32.totalorder %s35, %s38
      %p47 = scmp.eq.s32.totalorder %s30, 1
      %p48 = por %p46, %p47
      %p49 = scmp.ne.s32.totalorder %s38, %s39
      %p50 = scmp.eq.s32.totalorder %s30, 0
      %p51 = por %p49, %p50
      %p52 = scmp.ne.s32.totalorder %s38, %s39
      %p53 = scmp.eq.s32.totalorder %s31, 1
      %p54 = por %p52, %p53
      %p56 = scmp.ne.s32.totalorder %s39, %s55
      %p57 = scmp.eq.s32.totalorder %s31, 0
      %p58 = por %p56, %p57
      %s60 = sadd.s32 %s59, 1
      %p63 = scmp.eq.s32.totalorder %s25, 1
      %p64 = scmp.ne.s32.totalorder %s59, %s61
      %p65 = scmp.eq.s32.totalorder %s25, 0
      %p66 = por %p64, %p65
      %p67 = scmp.ne.s32.totalorder %s59, %s61
      %p68 = scmp.eq.s32.totalorder %s30, 1
      %p69 = por %p67, %p68
      %p70 = scmp.ne.s32.totalorder %s61, %s62
      %p71 = scmp.eq.s32.totalorder %s30, 0
      %p72 = por %p70, %p71
      %p73 = scmp.ne.s32.totalorder %s61, %s62
      %p74 = scmp.eq.s32.totalorder %s31, 1
      %p75 = por %p73, %p74
      %p77 = scmp.ne.s32.totalorder %s62, %s76
      %p78 = scmp.eq.s32.totalorder %s31, 0
      %p79 = por %p77, %p78
      %s81 = sadd.s32 %s80, 1
      %p84 = scmp.eq.s32.totalorder %s25, 1
      %p85 = scmp.ne.s32.totalorder %s80, %s82
      %p86 = scmp.eq.s32.totalorder %s25, 0
      %p87 = por %p85, %p86
      %p88 = scmp.ne.s32.totalorder %s80, %s82
      %p89 = scmp.eq.s32.totalorder %s30, 1
      %p90 = por %p88, %p89
      %p91 = scmp.ne.s32.totalorder %s82, %s83
      %p92 = scmp.eq.s32.totalorder %s30, 0
      %p93 = por %p91, %p92
      %p94 = scmp.ne.s32.totalorder %s82, %s83
      %p95 = scmp.eq.s32.totalorder %s31, 1
      %p96 = por %p94, %p95
      %p98 = scmp.ne.s32.totalorder %s83, %s97
      %p99 = scmp.eq.s32.totalorder %s31, 0
      %p100 = por %p98, %p99
      %s102 = sadd.s32 %s101, 1
      %p105 = scmp.eq.s32.totalorder %s25, 1
      %p106 = scmp.ne.s32.totalorder %s101, %s103
      %p107 = scmp.eq.s32.totalorder %s25, 0
      %p108 = por %p106, %p107
      %p109 = scmp.ne.s32.totalorder %s101, %s103
      %p110 = scmp.eq.s32.totalorder %s30, 1
      %p111 = por %p109, %p110
      %p112 = scmp.ne.s32.totalorder %s103, %s104
      %p113 = scmp.eq.s32.totalorder %s30, 0
      %p114 = por %p112, %p113
      %p115 = scmp.ne.s32.totalorder %s103, %s104
      %p116 = scmp.eq.s32.totalorder %s31, 1
      %p117 = por %p115, %p116
      %p119 = scmp.ne.s32.totalorder %s104, %s118
      %p120 = scmp.eq.s32.totalorder %s31, 0
      %p121 = por %p119, %p120
      %s123 = sadd.s32 %s122, 1
      %p126 = scmp.eq.s32.totalorder %s25, 1
      %p127 = scmp.ne.s32.totalorder %s122, %s124
      %p128 = scmp.eq.s32.totalorder %s25, 0
      %p129 = por %p127, %p128
      %p130 = scmp.ne.s32.totalorder %s122, %s124
      %p131 = scmp.eq.s32.totalorder %s30, 1
      %p132 = por %p130, %p131
      %p133 = scmp.ne.s32.totalorder %s124, %s125
      %p134 = scmp.eq.s32.totalorder %s30, 0
      %p135 = por %p133, %p134
      %p136 = scmp.ne.s32.totalorder %s124, %s125
      %p137 = scmp.eq.s32.totalorder %s31, 1
      %p138 = por %p136, %p137
      %p140 = scmp.ne.s32.totalorder %s125, %s139
      %p141 = scmp.eq.s32.totalorder %s31, 0
      %p142 = por %p140, %p141
      %s144 = sadd.s32 %s143, 1
      %p147 = scmp.eq.s32.totalorder %s25, 1
      %p148 = scmp.ne.s32.totalorder %s143, %s145
      %p149 = scmp.eq.s32.totalorder %s25, 0
      %p150 = por %p148, %p149
      %p151 = scmp.ne.s32.totalorder %s143, %s145
      %p152 = scmp.eq.s32.totalorder %s30, 1
      %p153 = por %p151, %p152
      %p154 = scmp.ne.s32.totalorder %s145, %s146
      %p155 = scmp.eq.s32.totalorder %s30, 0
      %p156 = por %p154, %p155
      %p157 = scmp.ne.s32.totalorder %s145, %s146
      %p158 = scmp.eq.s32.totalorder %s31, 1
      %p159 = por %p157, %p158
      %p161 = scmp.ne.s32.totalorder %s146, %s160
      %p162 = scmp.eq.s32.totalorder %s31, 0
      %p163 = por %p161, %p162
      %s165 = sadd.s32 %s164, 1
      %p168 = scmp.eq.s32.totalorder %s25, 1
      %p169 = scmp.ne.s32.totalorder %s164, %s166
      %p170 = scmp.eq.s32.totalorder %s25, 0
      %p171 = por %p169, %p170
      %p172 = scmp.ne.s32.totalorder %s164, %s166
      %p173 = scmp.eq.s32.totalorder %s30, 1
      %p174 = por %p172, %p173
      %p175 = scmp.ne.s32.totalorder %s166, %s167
      %p176 = scmp.eq.s32.totalorder %s30, 0
      %p177 = por %p175, %p176
      %p178 = scmp.ne.s32.totalorder %s166, %s167
      %p179 = scmp.eq.s32.totalorder %s31, 1
      %p180 = por %p178, %p179
      %p182 = scmp.ne.s32.totalorder %s167, %s181
      %p183 = scmp.eq.s32.totalorder %s31, 0
      %p184 = por %p182, %p183
      %s186 = sadd.s32 %s185, 1
      %p189 = scmp.eq.s32.totalorder %s25, 1
      %p190 = scmp.ne.s32.totalorder %s185, %s187
      %p191 = scmp.eq.s32.totalorder %s25, 0
      %p192 = por %p190, %p191
      %p193 = scmp.ne.s32.totalorder %s185, %s187
      %p194 = scmp.eq.s32.totalorder %s30, 1
      %p195 = por %p193, %p194
      %p196 = scmp.ne.s32.totalorder %s187, %s188
      %p197 = scmp.eq.s32.totalorder %s30, 0
      %p198 = por %p196, %p197
      %p199 = scmp.ne.s32.totalorder %s187, %s188
      %p200 = scmp.eq.s32.totalorder %s31, 1
      %p201 = por %p199, %p200
      %p203 = scmp.ne.s32.totalorder %s188, %s202
      %p204 = scmp.eq.s32.totalorder %s31, 0
      %p205 = por %p203, %p204
      %s207 = sadd.s32 %s206, 1
      %p210 = scmp.eq.s32.totalorder %s25, 1
      %p211 = scmp.ne.s32.totalorder %s206, %s208
      %p212 = scmp.eq.s32.totalorder %s25, 0
      %p213 = por %p211, %p212
      %p214 = scmp.ne.s32.totalorder %s206, %s208
      %p215 = scmp.eq.s32.totalorder %s30, 1
      %p216 = por %p214, %p215
      %p217 = scmp.ne.s32.totalorder %s208, %s209
      %p218 = scmp.eq.s32.totalorder %s30, 0
      %p219 = por %p217, %p218
      %p220 = scmp.ne.s32.totalorder %s208, %s209
      %p221 = scmp.eq.s32.totalorder %s31, 1
      %p222 = por %p220, %p221
      %p224 = scmp.ne.s32.totalorder %s209, %s223
      %p225 = scmp.eq.s32.totalorder %s31, 0
      %p226 = por %p224, %p225
      %s228 = sadd.s32 %s227, 1
      %p231 = scmp.eq.s32.totalorder %s25, 1
      %p232 = scmp.ne.s32.totalorder %s227, %s229
      %p233 = scmp.eq.s32.totalorder %s25, 0
      %p234 = por %p232, %p233
      %p235 = scmp.ne.s32.totalorder %s227, %s229
      %p236 = scmp.eq.s32.totalorder %s30, 1
      %p237 = por %p235, %p236
      %p238 = scmp.ne.s32.totalorder %s229, %s230
      %p239 = scmp.eq.s32.totalorder %s30, 0
      %p240 = por %p238, %p239
      %p241 = scmp.ne.s32.totalorder %s229, %s230
      %p242 = scmp.eq.s32.totalorder %s31, 1
      %p243 = por %p241, %p242
      %p245 = scmp.ne.s32.totalorder %s230, %s244
      %p246 = scmp.eq.s32.totalorder %s31, 0
      %p247 = por %p245, %p246
      %s249 = sadd.s32 %s248, 1
      %p252 = scmp.eq.s32.totalorder %s25, 1
      %p253 = scmp.ne.s32.totalorder %s248, %s250
      %p254 = scmp.eq.s32.totalorder %s25, 0
      %p255 = por %p253, %p254
      %p256 = scmp.ne.s32.totalorder %s248, %s250
      %p257 = scmp.eq.s32.totalorder %s30, 1
      %p258 = por %p256, %p257
      %p259 = scmp.ne.s32.totalorder %s250, %s251
      %p260 = scmp.eq.s32.totalorder %s30, 0
      %p261 = por %p259, %p260
      %p262 = scmp.ne.s32.totalorder %s250, %s251
      %p263 = scmp.eq.s32.totalorder %s31, 1
      %p264 = por %p262, %p263
      %p266 = scmp.ne.s32.totalorder %s251, %s265
      %p267 = scmp.eq.s32.totalorder %s31, 0
      %p268 = por %p266, %p267
      %s270 = sadd.s32 %s269, 1
      %p273 = scmp.eq.s32.totalorder %s25, 1
      %p274 = scmp.ne.s32.totalorder %s269, %s271
      %p275 = scmp.eq.s32.totalorder %s25, 0
      %p276 = por %p274, %p275
      %p277 = scmp.ne.s32.totalorder %s269, %s271
      %p278 = scmp.eq.s32.totalorder %s30, 1
      %p279 = por %p277, %p278
      %p280 = scmp.ne.s32.totalorder %s271, %s272
      %p281 = scmp.eq.s32.totalorder %s30, 0
      %p282 = por %p280, %p281
      %p283 = scmp.ne.s32.totalorder %s271, %s272
      %p284 = scmp.eq.s32.totalorder %s31, 1
      %p285 = por %p283, %p284
      %p287 = scmp.ne.s32.totalorder %s272, %s286
      %p288 = scmp.eq.s32.totalorder %s31, 0
      %p289 = por %p287, %p288
      %s291 = sadd.s32 %s290, 1
      %p294 = scmp.eq.s32.totalorder %s25, 1
      %p295 = scmp.ne.s32.totalorder %s290, %s292
      %p296 = scmp.eq.s32.totalorder %s25, 0
      %p297 = por %p295, %p296
      %p298 = scmp.ne.s32.totalorder %s290, %s292
      %p299 = scmp.eq.s32.totalorder %s30, 1
      %p300 = por %p298, %p299
      %p301 = scmp.ne.s32.totalorder %s292, %s293
      %p302 = scmp.eq.s32.totalorder %s30, 0
      %p303 = por %p301, %p302
      %p304 = scmp.ne.s32.totalorder %s292, %s293
      %p305 = scmp.eq.s32.totalorder %s31, 1
      %p306 = por %p304, %p305
      %p308 = scmp.ne.s32.totalorder %s293, %s307
      %p309 = scmp.eq.s32.totalorder %s31, 0
      %p310 = por %p308, %p309
      %s312 = sadd.s32 %s311, 1
      %p315 = scmp.eq.s32.totalorder %s25, 1
      %p316 = scmp.ne.s32.totalorder %s311, %s313
      %p317 = scmp.eq.s32.totalorder %s25, 0
      %p318 = por %p316, %p317
      %p319 = scmp.ne.s32.totalorder %s311, %s313
      %p320 = scmp.eq.s32.totalorder %s30, 1
      %p321 = por %p319, %p320
      %p322 = scmp.ne.s32.totalorder %s313, %s314
      %p323 = scmp.eq.s32.totalorder %s30, 0
      %p324 = por %p322, %p323
      %p325 = scmp.ne.s32.totalorder %s313, %s314
      %p326 = scmp.eq.s32.totalorder %s31, 1
      %p327 = por %p325, %p326
      %p329 = scmp.ne.s32.totalorder %s314, %s328
      %p330 = scmp.eq.s32.totalorder %s31, 0
      %p331 = por %p329, %p330
      %s333 = sadd.s32 %s332, 1
      %p336 = scmp.eq.s32.totalorder %s25, 1
      %p337 = scmp.ne.s32.totalorder %s332, %s334
      %p338 = scmp.eq.s32.totalorder %s25, 0
      %p339 = por %p337, %p338
      %p340 = scmp.ne.s32.totalorder %s332, %s334
      %p341 = scmp.eq.s32.totalorder %s30, 1
      %p342 = por %p340, %p341
      %p343 = scmp.ne.s32.totalorder %s334, %s335
      %p344 = scmp.eq.s32.totalorder %s30, 0
      %p345 = por %p343, %p344
      %p346 = scmp.ne.s32.totalorder %s334, %s335
      %p347 = scmp.eq.s32.totalorder %s31, 1
      %p348 = por %p346, %p347
      %p350 = scmp.ne.s32.totalorder %s335, %s349
      %p351 = scmp.eq.s32.totalorder %s31, 0
      %p352 = por %p350, %p351
      %s354 = sadd.s32 %s353, 1
      %p357 = scmp.eq.s32.totalorder %s25, 1
      %p358 = scmp.ne.s32.totalorder %s353, %s355
      %p359 = scmp.eq.s32.totalorder %s25, 0
      %p360 = por %p358, %p359
      %p361 = scmp.ne.s32.totalorder %s353, %s355
      %p362 = scmp.eq.s32.totalorder %s30, 1
      %p363 = por %p361, %p362
      %p364 = scmp.ne.s32.totalorder %s355, %s356
      %p365 = scmp.eq.s32.totalorder %s30, 0
      %p366 = por %p364, %p365
      %p367 = scmp.ne.s32.totalorder %s355, %s356
      %p368 = scmp.eq.s32.totalorder %s31, 1
      %p369 = por %p367, %p368
      %p371 = scmp.ne.s32.totalorder %s356, %s370
      %p372 = scmp.eq.s32.totalorder %s31, 0
      %p373 = por %p371, %p372
      %s374 = ssub.s32 %s25, %s32
      %p375 = scmp.eq.s32.totalorder %s374, 0
      %s377 = sadd.s32 %s376, 1
      %s378 = scalar_select %p375, %s376, %s377
      %p381 = pneg %p375
      %p382 = scmp.eq.s32.totalorder %s25, 1
      %p383 = por %p381, %p382
      %p384 = scmp.ne.s32.totalorder %s376, %s379
      %p385 = scmp.eq.s32.totalorder %s25, 0
      %p386 = por %p384, %p385
      %p387 = scmp.ne.s32.totalorder %s376, %s379
      %p388 = scmp.eq.s32.totalorder %s30, 1
      %p389 = por %p387, %p388
      %p390 = scmp.ne.s32.totalorder %s379, %s380
      %p391 = scmp.eq.s32.totalorder %s30, 0
      %p392 = por %p390, %p391
      %p393 = scmp.ne.s32.totalorder %s379, %s380
      %p394 = scmp.eq.s32.totalorder %s31, 1
      %p395 = por %p393, %p394
      %p397 = scmp.ne.s32.totalorder %s380, %s396
      %p398 = scmp.eq.s32.totalorder %s31, 0
      %p399 = por %p397, %p398
      %p400 = scmp.le.s32.totalorder 1, %s25
      %p401 = scmp.lt.s32.totalorder %s25, 3
      %p402 = pnand %p400, %p401
      %p403 = pneg %p402
      // Predicated region
      $region9: #{net1_forward.1} parent=5 // pred_check
        _
      $region10: #{net1_forward.1} parent=5 // pred_check_branch
        %405 = sbr.rel (%p402) target = $region12
      $region11: #{net1_forward.1} parent=5 // pred_region
        %s406 = ssub.s32 %s25, 1
        // Predicated region
        $region13: #{net1_forward.1} parent=11 // pred_check
          %p407 = pneg %p72
        $region14: #{net1_forward.1} parent=11 // pred_check_branch
          %409 = sbr.rel (%p407) target = $region16
        $region15: #{net1_forward.1} parent=11 // pred_region
          _
        $region16: #{net1_forward.1} parent=11 // pred_fallthru
          _
        // Predicated region
        $region17: #{net1_forward.1} parent=11 // pred_check
          %p410 = pneg %p93
        $region18: #{net1_forward.1} parent=11 // pred_check_branch
          %412 = sbr.rel (%p410) target = $region20
        $region19: #{net1_forward.1} parent=11 // pred_region
          _
        $region20: #{net1_forward.1} parent=11 // pred_fallthru
          _
        // Predicated region
        $region21: #{net1_forward.1} parent=11 // pred_check
          %p413 = pneg %p114
        $region22: #{net1_forward.1} parent=11 // pred_check_branch
          %415 = sbr.rel (%p413) target = $region24
        $region23: #{net1_forward.1} parent=11 // pred_region
          _
        $region24: #{net1_forward.1} parent=11 // pred_fallthru
          _
        // Predicated region
        $region25: #{net1_forward.1} parent=11 // pred_check
          %p416 = pneg %p135
        $region26: #{net1_forward.1} parent=11 // pred_check_branch
          %418 = sbr.rel (%p416) target = $region28
        $region27: #{net1_forward.1} parent=11 // pred_region
          _
        $region28: #{net1_forward.1} parent=11 // pred_fallthru
          _
        // Predicated region
        $region29: #{net1_forward.1} parent=11 // pred_check
          %p419 = pneg %p156
        $region30: #{net1_forward.1} parent=11 // pred_check_branch
          %421 = sbr.rel (%p419) target = $region32
        $region31: #{net1_forward.1} parent=11 // pred_region
          _
        $region32: #{net1_forward.1} parent=11 // pred_fallthru
          _
        // Predicated region
        $region33: #{net1_forward.1} parent=11 // pred_check
          %p422 = pneg %p177
        $region34: #{net1_forward.1} parent=11 // pred_check_branch
          %424 = sbr.rel (%p422) target = $region36
        $region35: #{net1_forward.1} parent=11 // pred_region
          _
        $region36: #{net1_forward.1} parent=11 // pred_fallthru
          _
        // Predicated region
        $region37: #{net1_forward.1} parent=11 // pred_check
          %p425 = pneg %p198
        $region38: #{net1_forward.1} parent=11 // pred_check_branch
          %427 = sbr.rel (%p425) target = $region40
        $region39: #{net1_forward.1} parent=11 // pred_region
          _
        $region40: #{net1_forward.1} parent=11 // pred_fallthru
          _
        // Predicated region
        $region41: #{net1_forward.1} parent=11 // pred_check
          %p428 = pneg %p219
        $region42: #{net1_forward.1} parent=11 // pred_check_branch
          %430 = sbr.rel (%p428) target = $region44
        $region43: #{net1_forward.1} parent=11 // pred_region
          _
        $region44: #{net1_forward.1} parent=11 // pred_fallthru
          _
        // Predicated region
        $region45: #{net1_forward.1} parent=11 // pred_check
          %p431 = pneg %p240
        $region46: #{net1_forward.1} parent=11 // pred_check_branch
          %433 = sbr.rel (%p431) target = $region48
        $region47: #{net1_forward.1} parent=11 // pred_region
          _
        $region48: #{net1_forward.1} parent=11 // pred_fallthru
          _
        // Predicated region
        $region49: #{net1_forward.1} parent=11 // pred_check
          %p434 = pneg %p261
        $region50: #{net1_forward.1} parent=11 // pred_check_branch
          %436 = sbr.rel (%p434) target = $region52
        $region51: #{net1_forward.1} parent=11 // pred_region
          _
        $region52: #{net1_forward.1} parent=11 // pred_fallthru
          _
        // Predicated region
        $region53: #{net1_forward.1} parent=11 // pred_check
          %p437 = pneg %p282
        $region54: #{net1_forward.1} parent=11 // pred_check_branch
          %439 = sbr.rel (%p437) target = $region56
        $region55: #{net1_forward.1} parent=11 // pred_region
          _
        $region56: #{net1_forward.1} parent=11 // pred_fallthru
          _
        // Predicated region
        $region57: #{net1_forward.1} parent=11 // pred_check
          %p440 = pneg %p303
        $region58: #{net1_forward.1} parent=11 // pred_check_branch
          %442 = sbr.rel (%p440) target = $region60
        $region59: #{net1_forward.1} parent=11 // pred_region
          _
        $region60: #{net1_forward.1} parent=11 // pred_fallthru
          _
        // Predicated region
        $region61: #{net1_forward.1} parent=11 // pred_check
          %p443 = pneg %p324
        $region62: #{net1_forward.1} parent=11 // pred_check_branch
          %445 = sbr.rel (%p443) target = $region64
        $region63: #{net1_forward.1} parent=11 // pred_region
          _
        $region64: #{net1_forward.1} parent=11 // pred_fallthru
          _
        // Predicated region
        $region65: #{net1_forward.1} parent=11 // pred_check
          %p446 = pneg %p345
        $region66: #{net1_forward.1} parent=11 // pred_check_branch
          %448 = sbr.rel (%p446) target = $region68
        $region67: #{net1_forward.1} parent=11 // pred_region
          _
        $region68: #{net1_forward.1} parent=11 // pred_fallthru
          _
        // Predicated region
        $region69: #{net1_forward.1} parent=11 // pred_check
          %p449 = pneg %p366
        $region70: #{net1_forward.1} parent=11 // pred_check_branch
          %451 = sbr.rel (%p449) target = $region72
        $region71: #{net1_forward.1} parent=11 // pred_region
          _
        $region72: #{net1_forward.1} parent=11 // pred_fallthru
          _
      $region12: #{net1_forward.1} parent=5 // pred_fallthru
        _
      %p452 = scmp.lt.s32.totalorder %s25, 2
      // Predicated region
      $region73: #{net1_forward.1} parent=5 // pred_check
        %p453 = pneg %p452
      $region74: #{net1_forward.1} parent=5 // pred_check_branch
        %455 = sbr.rel (%p453) target = $region76
      $region75: #{net1_forward.1} parent=5 // pred_region
        // Predicated region
        $region77: #{net1_forward.1} parent=75 // pred_check
          %p456 = pneg %p45
        $region78: #{net1_forward.1} parent=75 // pred_check_branch
          %458 = sbr.rel (%p456) target = $region80
        $region79: #{net1_forward.1} parent=75 // pred_region
          %s459 = smul.u32 32, %s25
          %p460 = scmp.lt.s32.totalorder %s459, 63
          %s461 = scalar_select %p460, %s459, 63
          %s462 = smul.addr %s461, 8
          %s463 = scalar_lea.vmem %s0, %s462
          %s464 = smul.u32 32, %s25
        $region80: #{net1_forward.1} parent=75 // pred_fallthru
          _
      $region76: #{net1_forward.1} parent=5 // pred_fallthru
        _
      %p465 = scmp.le.s32.totalorder 1, %s25
      %p466 = scmp.lt.s32.totalorder %s25, 3
      %p467 = pnand %p465, %p466
      %p468 = pneg %p467
      // Predicated region
      $region81: #{net1_forward.1} parent=5 // pred_check
        _
      $region82: #{net1_forward.1} parent=5 // pred_check_branch
        %470 = sbr.rel (%p467) target = $region84
      $region83: #{net1_forward.1} parent=5 // pred_region
        %s471 = ssub.s32 %s25, 1
        %s472 = smul.u32 32, %s30
        %p473 = scmp.lt.s32.totalorder %s472, 63
        %s474 = scalar_select %p473, %s472, 63
        %s475 = smul.addr %s474, 8
        %s476 = scalar_lea.vmem %s0, %s475
        %p477 = pneg %p51
        %p478 = pneg %p48
        %p479 = pneg %p72
        %p480 = pneg %p69
        %p481 = pneg %p93
        %p482 = pneg %p90
        %p483 = pneg %p114
        %p484 = pneg %p111
        %p485 = pneg %p135
        %p486 = pneg %p132
        %p487 = pneg %p156
        %p488 = pneg %p153
        %p489 = pneg %p177
        %p490 = pneg %p174
        %p491 = pneg %p198
        %p492 = pneg %p195
        %p493 = pneg %p219
        %p494 = pneg %p216
        %p495 = pneg %p240
        %p496 = pneg %p237
        %p497 = pneg %p261
        %p498 = pneg %p258
        %p499 = pneg %p282
        %p500 = pneg %p279
        %p501 = pneg %p303
        %p502 = pneg %p300
        %p503 = pneg %p324
        %p504 = pneg %p321
        %p505 = pneg %p345
        %p506 = pneg %p342
        %p507 = pneg %p366
        %p508 = pneg %p363
        %p509 = pneg %p392
        %p510 = pneg %p389
        %s511 = sand.u32 %s379, 1
        %s512 = scalar_lea.sflag [#allocation4], %s511
        %s513 = sand.u32 %s379, 1
        %s514 = smul.addr %s513, 8
        %s515 = scalar_lea.vmem [#allocation3], %s514
        %s516 = smul.u32 32, %s30
        %p517 = scmp.lt.s32.totalorder %s516, 63
        %s518 = scalar_select %p517, %s516, 63
        %s519 = smul.addr %s518, 8
        %s520 = scalar_lea.vmem %s0, %s519
        %s521 = smul.u32 32, %s30
        %v523 = vld [vmem:[%s520] sm:$0xff]
        %v524 = vld [vmem:[%s520 + $0x8] sm:$0xff]
        %v525 = vld [vmem:[%s520 + $0x10] sm:$0xff]
        %v526 = vld [vmem:[%s520 + $0x18] sm:$0xff]
        %v527 = vld [vmem:[%s520 + $0x20] sm:$0xff]
        %v528 = vld [vmem:[%s520 + $0x28] sm:$0xff]
        %v529 = vld [vmem:[%s520 + $0x30] sm:$0xff]
        %v530 = vld [vmem:[%s520 + $0x38] sm:$0xff]
        %v531 = vld [vmem:[%s520 + $0x40] sm:$0xff]
        %v532 = vld [vmem:[%s520 + $0x48] sm:$0xff]
        %v533 = vld [vmem:[%s520 + $0x50] sm:$0xff]
        %v534 = vld [vmem:[%s520 + $0x58] sm:$0xff]
        %v535 = vld [vmem:[%s520 + $0x60] sm:$0xff]
        %v536 = vld [vmem:[%s520 + $0x68] sm:$0xff]
        %v537 = vld [vmem:[%s520 + $0x70] sm:$0xff]
        %v538 = vld [vmem:[%s520 + $0x78] sm:$0xff]
        %v539 = vld [vmem:[%s520 + $0x80] sm:$0xff]
        %v540 = vld [vmem:[%s520 + $0x88] sm:$0xff]
        %v541 = vld [vmem:[%s520 + $0x90] sm:$0xff]
        %v542 = vld [vmem:[%s520 + $0x98] sm:$0xff]
        %v543 = vld [vmem:[%s520 + $0xa0] sm:$0xff]
        %v544 = vld [vmem:[%s520 + $0xa8] sm:$0xff]
        %v545 = vld [vmem:[%s520 + $0xb0] sm:$0xff]
        %v546 = vld [vmem:[%s520 + $0xb8] sm:$0xff]
        %v547 = vld [vmem:[%s520 + $0xc0] sm:$0xff]
        %v548 = vld [vmem:[%s520 + $0xc8] sm:$0xff]
        %v549 = vld [vmem:[%s520 + $0xd0] sm:$0xff]
        %v550 = vld [vmem:[%s520 + $0xd8] sm:$0xff]
        %v551 = vld [vmem:[%s520 + $0xe0] sm:$0xff]
        %v552 = vld [vmem:[%s520 + $0xe8] sm:$0xff]
        %v553 = vld [vmem:[%s520 + $0xf0] sm:$0xff]
        %v554 = vld [vmem:[%s520 + $0xf8] sm:$0x3f]
        %v555 = vpack.c.bf16 %v524, %v523
        %v556 = vpack.c.bf16 %v526, %v525
        %v557 = vpack.c.bf16 %v528, %v527
        %v558 = vpack.c.bf16 %v530, %v529
        %v559 = vpack.c.bf16 %v532, %v531
        %v560 = vpack.c.bf16 %v534, %v533
        %v561 = vpack.c.bf16 %v536, %v535
        %v562 = vpack.c.bf16 %v538, %v537
        %v563 = vpack.c.bf16 %v540, %v539
        %v564 = vpack.c.bf16 %v542, %v541
        %v565 = vpack.c.bf16 %v544, %v543
        %v566 = vpack.c.bf16 %v546, %v545
        %v567 = vpack.c.bf16 %v548, %v547
        %v568 = vpack.c.bf16 %v550, %v549
        %v569 = vpack.c.bf16 %v552, %v551
        %v570 = vpack.c.bf16 %v554, %v553
        %v571 = vld [vmem:[%s1] sm:$0xff]
        %v572 = vld [vmem:[%s1 + $0x8] sm:$0xff]
        %v573 = vld [vmem:[%s1 + $0x10] sm:$0xff]
        %v574 = vld [vmem:[%s1 + $0x18] sm:$0x33]
        %v575 = vld [vmem:[%s520 + $0x1] sm:$0xff]
        %v576 = vld [vmem:[%s520 + $0x9] sm:$0xff]
        %v577 = vld [vmem:[%s520 + $0x11] sm:$0xff]
        %v578 = vld [vmem:[%s520 + $0x19] sm:$0xff]
        %v579 = vld [vmem:[%s520 + $0x21] sm:$0xff]
        %v580 = vld [vmem:[%s520 + $0x29] sm:$0xff]
        %v581 = vld [vmem:[%s520 + $0x31] sm:$0xff]
        %v582 = vld [vmem:[%s520 + $0x39] sm:$0xff]
        %v583 = vld [vmem:[%s520 + $0x41] sm:$0xff]
        %v584 = vld [vmem:[%s520 + $0x49] sm:$0xff]
        %v585 = vld [vmem:[%s520 + $0x51] sm:$0xff]
        %v586 = vld [vmem:[%s520 + $0x59] sm:$0xff]
        %v587 = vld [vmem:[%s520 + $0x61] sm:$0xff]
        %v588 = vld [vmem:[%s520 + $0x69] sm:$0xff]
        %v589 = vld [vmem:[%s520 + $0x71] sm:$0xff]
        %v590 = vld [vmem:[%s520 + $0x79] sm:$0xff]
        %v591 = vld [vmem:[%s520 + $0x81] sm:$0xff]
        %v592 = vld [vmem:[%s520 + $0x89] sm:$0xff]
        %v593 = vld [vmem:[%s520 + $0x91] sm:$0xff]
        %v594 = vld [vmem:[%s520 + $0x99] sm:$0xff]
        %v595 = vld [vmem:[%s520 + $0xa1] sm:$0xff]
        %v596 = vld [vmem:[%s520 + $0xa9] sm:$0xff]
        %v597 = vld [vmem:[%s520 + $0xb1] sm:$0xff]
        %v598 = vld [vmem:[%s520 + $0xb9] sm:$0xff]
        %v599 = vld [vmem:[%s520 + $0xc1] sm:$0xff]
        %v600 = vld [vmem:[%s520 + $0xc9] sm:$0xff]
        %v601 = vld [vmem:[%s520 + $0xd1] sm:$0xff]
        %v602 = vld [vmem:[%s520 + $0xd9] sm:$0xff]
        %v603 = vld [vmem:[%s520 + $0xe1] sm:$0xff]
        %v604 = vld [vmem:[%s520 + $0xe9] sm:$0xff]
        %v605 = vld [vmem:[%s520 + $0xf1] sm:$0xff]
        %v606 = vld [vmem:[%s520 + $0xf9] sm:$0x3f]
        %v607 = vpack.c.bf16 %v576, %v575
        %v608 = vpack.c.bf16 %v578, %v577
        %v609 = vpack.c.bf16 %v580, %v579
        %v610 = vpack.c.bf16 %v582, %v581
        %v611 = vpack.c.bf16 %v584, %v583
        %v612 = vpack.c.bf16 %v586, %v585
        %v613 = vpack.c.bf16 %v588, %v587
        %v614 = vpack.c.bf16 %v590, %v589
        %v615 = vpack.c.bf16 %v592, %v591
        %v616 = vpack.c.bf16 %v594, %v593
        %v617 = vpack.c.bf16 %v596, %v595
        %v618 = vpack.c.bf16 %v598, %v597
        %v619 = vpack.c.bf16 %v600, %v599
        %v620 = vpack.c.bf16 %v602, %v601
        %v621 = vpack.c.bf16 %v604, %v603
        %v622 = vpack.c.bf16 %v606, %v605
        %s623 = scalar_lea.vmem %s1, 32
        %v624 = vld [vmem:[%s623] sm:$0xff]
        %v625 = vld [vmem:[%s623 + $0x8] sm:$0xff]
        %v626 = vld [vmem:[%s623 + $0x10] sm:$0xff]
        %v627 = vld [vmem:[%s623 + $0x18] sm:$0x33]
        %v632 = vunpack.c.l.b16 %v624
        %v633 = vunpack.c.h.b16 %v624
        %v634 = vunpack.c.l.b16 %v625
        %v635 = vunpack.c.h.b16 %v625
        %v636 = vunpack.c.l.b16 %v626
        %v637 = vunpack.c.h.b16 %v626
        %v638 = vunpack.c.l.b16 %v627
        %v639 = vunpack.c.h.b16 %v627
        %v640 = vpack.c.b16 %v634, %v632
        %v641 = vpack.c.b16 %v635, %v633
        %v642 = vpack.c.b16 %v638, %v636
        %v643 = vpack.c.b16 %v639, %v637
        %vm646 = vcmask 228352
        %v648 = vsel %vm646, %v607, 0
        %v651 = vsel %vm646, %v608, 0
        %v654 = vsel %vm646, %v609, 0
        %v657 = vsel %vm646, %v610, 0
        %v660 = vsel %vm646, %v611, 0
        %v663 = vsel %vm646, %v612, 0
        %v666 = vsel %vm646, %v613, 0
        %v669 = vsel %vm646, %v614, 0
        %v672 = vsel %vm646, %v615, 0
        %v675 = vsel %vm646, %v616, 0
        %v678 = vsel %vm646, %v617, 0
        %v681 = vsel %vm646, %v618, 0
        %v684 = vsel %vm646, %v619, 0
        %v687 = vsel %vm646, %v620, 0
        %v690 = vsel %vm646, %v621, 0
        %v693 = vsel %vm646, %v622, 0
        %vm695 = vcmask 1045504
        %v697 = vsel %vm695, %v642, 0
        %v700 = vsel %vm695, %v643, 0
        %702 = vmatpush.bf16.msra.mxu0 0
        %703 = vmatpush.bf16.msra.mxu0 0
        %704 = vmatpush.bf16.msra.mxu0 0
        %705 = vmatpush.bf16.msra.mxu0 0
        %706 = vmatpush.bf16.msra.mxu0 0
        %707 = vmatpush.bf16.msra.mxu0 0
        %708 = vmatpush.bf16.msra.mxu0 %v697
        %709 = vmatpush.bf16.msra.mxu0 %v640
        %710 = vmatmul.bf16.gmra.mxu0 %v648
        %v711 = vpop.f32.mrf.mxu0
        %v712 = vadd.f32 0.0, %v711
        %v713 = vpop.f32.mrf.mxu0
        %v714 = vadd.f32 0.0, %v713
        %715 = vmatmul.bf16.gmra.mxu0 %v651
        %v716 = vpop.f32.mrf.mxu0
        %v717 = vadd.f32 0.0, %v716
        %v718 = vpop.f32.mrf.mxu0
        %v719 = vadd.f32 0.0, %v718
        %720 = vmatmul.bf16.gmra.mxu0 %v654
        %v721 = vpop.f32.mrf.mxu0
        %v722 = vadd.f32 0.0, %v721
        %v723 = vpop.f32.mrf.mxu0
        %v724 = vadd.f32 0.0, %v723
        %725 = vmatmul.bf16.gmra.mxu0 %v657
        %v726 = vpop.f32.mrf.mxu0
        %v727 = vadd.f32 0.0, %v726
        %v728 = vpop.f32.mrf.mxu0
        %v729 = vadd.f32 0.0, %v728
        %730 = vmatmul.bf16.gmra.mxu0 %v660
        %v731 = vpop.f32.mrf.mxu0
        %v732 = vadd.f32 0.0, %v731
        %v733 = vpop.f32.mrf.mxu0
        %v734 = vadd.f32 0.0, %v733
        %735 = vmatmul.bf16.gmra.mxu0 %v663
        %v736 = vpop.f32.mrf.mxu0
        %v737 = vadd.f32 0.0, %v736
        %v738 = vpop.f32.mrf.mxu0
        %v739 = vadd.f32 0.0, %v738
        %740 = vmatmul.bf16.gmra.mxu0 %v666
        %v741 = vpop.f32.mrf.mxu0
        %v742 = vadd.f32 0.0, %v741
        %v743 = vpop.f32.mrf.mxu0
        %v744 = vadd.f32 0.0, %v743
        %745 = vmatmul.bf16.gmra.mxu0 %v669
        %v746 = vpop.f32.mrf.mxu0
        %v747 = vadd.f32 0.0, %v746
        %v748 = vpop.f32.mrf.mxu0
        %v749 = vadd.f32 0.0, %v748
        %750 = vmatmul.bf16.gmra.mxu0 %v672
        %v751 = vpop.f32.mrf.mxu0
        %v752 = vadd.f32 0.0, %v751
        %v753 = vpop.f32.mrf.mxu0
        %v754 = vadd.f32 0.0, %v753
        %755 = vmatmul.bf16.gmra.mxu0 %v675
        %v756 = vpop.f32.mrf.mxu0
        %v757 = vadd.f32 0.0, %v756
        %v758 = vpop.f32.mrf.mxu0
        %v759 = vadd.f32 0.0, %v758
        %760 = vmatmul.bf16.gmra.mxu0 %v678
        %v761 = vpop.f32.mrf.mxu0
        %v762 = vadd.f32 0.0, %v761
        %v763 = vpop.f32.mrf.mxu0
        %v764 = vadd.f32 0.0, %v763
        %765 = vmatmul.bf16.gmra.mxu0 %v681
        %v766 = vpop.f32.mrf.mxu0
        %v767 = vadd.f32 0.0, %v766
        %v768 = vpop.f32.mrf.mxu0
        %v769 = vadd.f32 0.0, %v768
        %770 = vmatmul.bf16.gmra.mxu0 %v684
        %v771 = vpop.f32.mrf.mxu0
        %v772 = vadd.f32 0.0, %v771
        %v773 = vpop.f32.mrf.mxu0
        %v774 = vadd.f32 0.0, %v773
        %775 = vmatmul.bf16.gmra.mxu0 %v687
        %v776 = vpop.f32.mrf.mxu0
        %v777 = vadd.f32 0.0, %v776
        %v778 = vpop.f32.mrf.mxu0
        %v779 = vadd.f32 0.0, %v778
        %780 = vmatmul.bf16.gmra.mxu0 %v690
        %v781 = vpop.f32.mrf.mxu0
        %v782 = vadd.f32 0.0, %v781
        %v783 = vpop.f32.mrf.mxu0
        %v784 = vadd.f32 0.0, %v783
        %785 = vmatmul.bf16.gmra.mxu0 %v693
        %v786 = vpop.f32.mrf.mxu0
        %v787 = vadd.f32 0.0, %v786
        %v788 = vpop.f32.mrf.mxu0
        %v789 = vadd.f32 0.0, %v788
        %790 = vdwg.mxu0
        %791 = vmatpush.bf16.msra.mxu0 0
        %792 = vmatpush.bf16.msra.mxu0 0
        %793 = vmatpush.bf16.msra.mxu0 0
        %794 = vmatpush.bf16.msra.mxu0 0
        %795 = vmatpush.bf16.msra.mxu0 0
        %796 = vmatpush.bf16.msra.mxu0 0
        %797 = vmatpush.bf16.msra.mxu0 %v700
        %798 = vmatpush.bf16.msra.mxu0 %v641
        %799 = vmatmul.bf16.gmra.mxu0 %v648
        %v800 = vpop.f32.mrf.mxu0
        %v801 = vadd.f32 0.0, %v800
        %v802 = vpop.f32.mrf.mxu0
        %v803 = vadd.f32 0.0, %v802
        %804 = vmatmul.bf16.gmra.mxu0 %v651
        %v805 = vpop.f32.mrf.mxu0
        %v806 = vadd.f32 0.0, %v805
        %v807 = vpop.f32.mrf.mxu0
        %v808 = vadd.f32 0.0, %v807
        %809 = vmatmul.bf16.gmra.mxu0 %v654
        %v810 = vpop.f32.mrf.mxu0
        %v811 = vadd.f32 0.0, %v810
        %v812 = vpop.f32.mrf.mxu0
        %v813 = vadd.f32 0.0, %v812
        %814 = vmatmul.bf16.gmra.mxu0 %v657
        %v815 = vpop.f32.mrf.mxu0
        %v816 = vadd.f32 0.0, %v815
        %v817 = vpop.f32.mrf.mxu0
        %v818 = vadd.f32 0.0, %v817
        %819 = vmatmul.bf16.gmra.mxu0 %v660
        %v820 = vpop.f32.mrf.mxu0
        %v821 = vadd.f32 0.0, %v820
        %v822 = vpop.f32.mrf.mxu0
        %v823 = vadd.f32 0.0, %v822
        %824 = vmatmul.bf16.gmra.mxu0 %v663
        %v825 = vpop.f32.mrf.mxu0
        %v826 = vadd.f32 0.0, %v825
        %v827 = vpop.f32.mrf.mxu0
        %v828 = vadd.f32 0.0, %v827
        %829 = vmatmul.bf16.gmra.mxu0 %v666
        %v830 = vpop.f32.mrf.mxu0
        %v831 = vadd.f32 0.0, %v830
        %v832 = vpop.f32.mrf.mxu0
        %v833 = vadd.f32 0.0, %v832
        %834 = vmatmul.bf16.gmra.mxu0 %v669
        %v835 = vpop.f32.mrf.mxu0
        %v836 = vadd.f32 0.0, %v835
        %v837 = vpop.f32.mrf.mxu0
        %v838 = vadd.f32 0.0, %v837
        %839 = vmatmul.bf16.gmra.mxu0 %v672
        %v840 = vpop.f32.mrf.mxu0
        %v841 = vadd.f32 0.0, %v840
        %v842 = vpop.f32.mrf.mxu0
        %v843 = vadd.f32 0.0, %v842
        %844 = vmatmul.bf16.gmra.mxu0 %v675
        %v845 = vpop.f32.mrf.mxu0
        %v846 = vadd.f32 0.0, %v845
        %v847 = vpop.f32.mrf.mxu0
        %v848 = vadd.f32 0.0, %v847
        %849 = vmatmul.bf16.gmra.mxu0 %v678
        %v850 = vpop.f32.mrf.mxu0
        %v851 = vadd.f32 0.0, %v850
        %v852 = vpop.f32.mrf.mxu0
        %v853 = vadd.f32 0.0, %v852
        %854 = vmatmul.bf16.gmra.mxu0 %v681
        %v855 = vpop.f32.mrf.mxu0
        %v856 = vadd.f32 0.0, %v855
        %v857 = vpop.f32.mrf.mxu0
        %v858 = vadd.f32 0.0, %v857
        %859 = vmatmul.bf16.gmra.mxu0 %v684
        %v860 = vpop.f32.mrf.mxu0
        %v861 = vadd.f32 0.0, %v860
        %v862 = vpop.f32.mrf.mxu0
        %v863 = vadd.f32 0.0, %v862
        %864 = vmatmul.bf16.gmra.mxu0 %v687
        %v865 = vpop.f32.mrf.mxu0
        %v866 = vadd.f32 0.0, %v865
        %v867 = vpop.f32.mrf.mxu0
        %v868 = vadd.f32 0.0, %v867
        %869 = vmatmul.bf16.gmra.mxu0 %v690
        %v870 = vpop.f32.mrf.mxu0
        %v871 = vadd.f32 0.0, %v870
        %v872 = vpop.f32.mrf.mxu0
        %v873 = vadd.f32 0.0, %v872
        %874 = vmatmul.bf16.gmra.mxu0 %v693
        %v875 = vpop.f32.mrf.mxu0
        %v876 = vadd.f32 0.0, %v875
        %v877 = vpop.f32.mrf.mxu0
        %v878 = vadd.f32 0.0, %v877
        %879 = vdwg.mxu0
        %v884 = vunpack.c.l.b16 %v571
        %v885 = vunpack.c.h.b16 %v571
        %v886 = vunpack.c.l.b16 %v572
        %v887 = vunpack.c.h.b16 %v572
        %v888 = vunpack.c.l.b16 %v573
        %v889 = vunpack.c.h.b16 %v573
        %v890 = vunpack.c.l.b16 %v574
        %v891 = vunpack.c.h.b16 %v574
        %v892 = vpack.c.b16 %v886, %v884
        %v893 = vpack.c.b16 %v887, %v885
        %v894 = vpack.c.b16 %v890, %v888
        %v895 = vpack.c.b16 %v891, %v889
        %v899 = vsel %vm646, %v555, 0
        %v902 = vsel %vm646, %v556, 0
        %v905 = vsel %vm646, %v557, 0
        %v908 = vsel %vm646, %v558, 0
        %v911 = vsel %vm646, %v559, 0
        %v914 = vsel %vm646, %v560, 0
        %v917 = vsel %vm646, %v561, 0
        %v920 = vsel %vm646, %v562, 0
        %v923 = vsel %vm646, %v563, 0
        %v926 = vsel %vm646, %v564, 0
        %v929 = vsel %vm646, %v565, 0
        %v932 = vsel %vm646, %v566, 0
        %v935 = vsel %vm646, %v567, 0
        %v938 = vsel %vm646, %v568, 0
        %v941 = vsel %vm646, %v569, 0
        %v944 = vsel %vm646, %v570, 0
        %v947 = vsel %vm695, %v894, 0
        %v950 = vsel %vm695, %v895, 0
        %952 = vmatpush.bf16.msra.mxu0 0
        %953 = vmatpush.bf16.msra.mxu0 0
        %954 = vmatpush.bf16.msra.mxu0 0
        %955 = vmatpush.bf16.msra.mxu0 0
        %956 = vmatpush.bf16.msra.mxu0 0
        %957 = vmatpush.bf16.msra.mxu0 0
        %958 = vmatpush.bf16.msra.mxu0 %v947
        %959 = vmatpush.bf16.msra.mxu0 %v892
        %960 = vmatmul.bf16.gmra.mxu0 %v899
        %v961 = vpop.f32.mrf.mxu0
        %v962 = vadd.f32 %v712, %v961
        %v963 = vpop.f32.mrf.mxu0
        %v964 = vadd.f32 %v714, %v963
        %965 = vmatmul.bf16.gmra.mxu0 %v902
        %v966 = vpop.f32.mrf.mxu0
        %v967 = vadd.f32 %v717, %v966
        %v968 = vpop.f32.mrf.mxu0
        %v969 = vadd.f32 %v719, %v968
        %970 = vmatmul.bf16.gmra.mxu0 %v905
        %v971 = vpop.f32.mrf.mxu0
        %v972 = vadd.f32 %v722, %v971
        %v973 = vpop.f32.mrf.mxu0
        %v974 = vadd.f32 %v724, %v973
        %975 = vmatmul.bf16.gmra.mxu0 %v908
        %v976 = vpop.f32.mrf.mxu0
        %v977 = vadd.f32 %v727, %v976
        %v978 = vpop.f32.mrf.mxu0
        %v979 = vadd.f32 %v729, %v978
        %980 = vmatmul.bf16.gmra.mxu0 %v911
        %v981 = vpop.f32.mrf.mxu0
        %v982 = vadd.f32 %v732, %v981
        %v983 = vpop.f32.mrf.mxu0
        %v984 = vadd.f32 %v734, %v983
        %985 = vmatmul.bf16.gmra.mxu0 %v914
        %v986 = vpop.f32.mrf.mxu0
        %v987 = vadd.f32 %v737, %v986
        %v988 = vpop.f32.mrf.mxu0
        %v989 = vadd.f32 %v739, %v988
        %990 = vmatmul.bf16.gmra.mxu0 %v917
        %v991 = vpop.f32.mrf.mxu0
        %v992 = vadd.f32 %v742, %v991
        %v993 = vpop.f32.mrf.mxu0
        %v994 = vadd.f32 %v744, %v993
        %995 = vmatmul.bf16.gmra.mxu0 %v920
        %v996 = vpop.f32.mrf.mxu0
        %v997 = vadd.f32 %v747, %v996
        %v998 = vpop.f32.mrf.mxu0
        %v999 = vadd.f32 %v749, %v998
        %1000 = vmatmul.bf16.gmra.mxu0 %v923
        %v1001 = vpop.f32.mrf.mxu0
        %v1002 = vadd.f32 %v752, %v1001
        %v1003 = vpop.f32.mrf.mxu0
        %v1004 = vadd.f32 %v754, %v1003
        %1005 = vmatmul.bf16.gmra.mxu0 %v926
        %v1006 = vpop.f32.mrf.mxu0
        %v1007 = vadd.f32 %v757, %v1006
        %v1008 = vpop.f32.mrf.mxu0
        %v1009 = vadd.f32 %v759, %v1008
        %1010 = vmatmul.bf16.gmra.mxu0 %v929
        %v1011 = vpop.f32.mrf.mxu0
        %v1012 = vadd.f32 %v762, %v1011
        %v1013 = vpop.f32.mrf.mxu0
        %v1014 = vadd.f32 %v764, %v1013
        %1015 = vmatmul.bf16.gmra.mxu0 %v932
        %v1016 = vpop.f32.mrf.mxu0
        %v1017 = vadd.f32 %v767, %v1016
        %v1018 = vpop.f32.mrf.mxu0
        %v1019 = vadd.f32 %v769, %v1018
        %1020 = vmatmul.bf16.gmra.mxu0 %v935
        %v1021 = vpop.f32.mrf.mxu0
        %v1022 = vadd.f32 %v772, %v1021
        %v1023 = vpop.f32.mrf.mxu0
        %v1024 = vadd.f32 %v774, %v1023
        %1025 = vmatmul.bf16.gmra.mxu0 %v938
        %v1026 = vpop.f32.mrf.mxu0
        %v1027 = vadd.f32 %v777, %v1026
        %v1028 = vpop.f32.mrf.mxu0
        %v1029 = vadd.f32 %v779, %v1028
        %1030 = vmatmul.bf16.gmra.mxu0 %v941
        %v1031 = vpop.f32.mrf.mxu0
        %v1032 = vadd.f32 %v782, %v1031
        %v1033 = vpop.f32.mrf.mxu0
        %v1034 = vadd.f32 %v784, %v1033
        %1035 = vmatmul.bf16.gmra.mxu0 %v944
        %v1036 = vpop.f32.mrf.mxu0
        %v1037 = vadd.f32 %v787, %v1036
        %v1038 = vpop.f32.mrf.mxu0
        %v1039 = vadd.f32 %v789, %v1038
        %1040 = vdwg.mxu0
        %1041 = vmatpush.bf16.msra.mxu0 0
        %1042 = vmatpush.bf16.msra.mxu0 0
        %1043 = vmatpush.bf16.msra.mxu0 0
        %1044 = vmatpush.bf16.msra.mxu0 0
        %1045 = vmatpush.bf16.msra.mxu0 0
        %1046 = vmatpush.bf16.msra.mxu0 0
        %1047 = vmatpush.bf16.msra.mxu0 %v950
        %1048 = vmatpush.bf16.msra.mxu0 %v893
        %1049 = vmatmul.bf16.gmra.mxu0 %v899
        %v1050 = vpop.f32.mrf.mxu0
        %v1051 = vadd.f32 %v801, %v1050
        %v1052 = vpop.f32.mrf.mxu0
        %v1053 = vadd.f32 %v803, %v1052
        %1054 = vmatmul.bf16.gmra.mxu0 %v902
        %v1055 = vpop.f32.mrf.mxu0
        %v1056 = vadd.f32 %v806, %v1055
        %v1057 = vpop.f32.mrf.mxu0
        %v1058 = vadd.f32 %v808, %v1057
        %1059 = vmatmul.bf16.gmra.mxu0 %v905
        %v1060 = vpop.f32.mrf.mxu0
        %v1061 = vadd.f32 %v811, %v1060
        %v1062 = vpop.f32.mrf.mxu0
        %v1063 = vadd.f32 %v813, %v1062
        %1064 = vmatmul.bf16.gmra.mxu0 %v908
        %v1065 = vpop.f32.mrf.mxu0
        %v1066 = vadd.f32 %v816, %v1065
        %v1067 = vpop.f32.mrf.mxu0
        %v1068 = vadd.f32 %v818, %v1067
        %1069 = vmatmul.bf16.gmra.mxu0 %v911
        %v1070 = vpop.f32.mrf.mxu0
        %v1071 = vadd.f32 %v821, %v1070
        %v1072 = vpop.f32.mrf.mxu0
        %v1073 = vadd.f32 %v823, %v1072
        %1074 = vmatmul.bf16.gmra.mxu0 %v914
        %v1075 = vpop.f32.mrf.mxu0
        %v1076 = vadd.f32 %v826, %v1075
        %v1077 = vpop.f32.mrf.mxu0
        %v1078 = vadd.f32 %v828, %v1077
        %1079 = vmatmul.bf16.gmra.mxu0 %v917
        %v1080 = vpop.f32.mrf.mxu0
        %v1081 = vadd.f32 %v831, %v1080
        %v1082 = vpop.f32.mrf.mxu0
        %v1083 = vadd.f32 %v833, %v1082
        %1084 = vmatmul.bf16.gmra.mxu0 %v920
        %v1085 = vpop.f32.mrf.mxu0
        %v1086 = vadd.f32 %v836, %v1085
        %v1087 = vpop.f32.mrf.mxu0
        %v1088 = vadd.f32 %v838, %v1087
        %1089 = vmatmul.bf16.gmra.mxu0 %v923
        %v1090 = vpop.f32.mrf.mxu0
        %v1091 = vadd.f32 %v841, %v1090
        %v1092 = vpop.f32.mrf.mxu0
        %v1093 = vadd.f32 %v843, %v1092
        %1094 = vmatmul.bf16.gmra.mxu0 %v926
        %v1095 = vpop.f32.mrf.mxu0
        %v1096 = vadd.f32 %v846, %v1095
        %v1097 = vpop.f32.mrf.mxu0
        %v1098 = vadd.f32 %v848, %v1097
        %1099 = vmatmul.bf16.gmra.mxu0 %v929
        %v1100 = vpop.f32.mrf.mxu0
        %v1101 = vadd.f32 %v851, %v1100
        %v1102 = vpop.f32.mrf.mxu0
        %v1103 = vadd.f32 %v853, %v1102
        %1104 = vmatmul.bf16.gmra.mxu0 %v932
        %v1105 = vpop.f32.mrf.mxu0
        %v1106 = vadd.f32 %v856, %v1105
        %v1107 = vpop.f32.mrf.mxu0
        %v1108 = vadd.f32 %v858, %v1107
        %1109 = vmatmul.bf16.gmra.mxu0 %v935
        %v1110 = vpop.f32.mrf.mxu0
        %v1111 = vadd.f32 %v861, %v1110
        %v1112 = vpop.f32.mrf.mxu0
        %v1113 = vadd.f32 %v863, %v1112
        %1114 = vmatmul.bf16.gmra.mxu0 %v938
        %v1115 = vpop.f32.mrf.mxu0
        %v1116 = vadd.f32 %v866, %v1115
        %v1117 = vpop.f32.mrf.mxu0
        %v1118 = vadd.f32 %v868, %v1117
        %1119 = vmatmul.bf16.gmra.mxu0 %v941
        %v1120 = vpop.f32.mrf.mxu0
        %v1121 = vadd.f32 %v871, %v1120
        %v1122 = vpop.f32.mrf.mxu0
        %v1123 = vadd.f32 %v873, %v1122
        %1124 = vmatmul.bf16.gmra.mxu0 %v944
        %v1125 = vpop.f32.mrf.mxu0
        %v1126 = vadd.f32 %v876, %v1125
        %v1127 = vpop.f32.mrf.mxu0
        %v1128 = vadd.f32 %v878, %v1127
        %1129 = vdwg.mxu0
        %v1130 = vld [vmem:[%s520 + $0x2] sm:$0xff]
        %v1131 = vld [vmem:[%s520 + $0xa] sm:$0xff]
        %v1132 = vld [vmem:[%s520 + $0x12] sm:$0xff]
        %v1133 = vld [vmem:[%s520 + $0x1a] sm:$0xff]
        %v1134 = vld [vmem:[%s520 + $0x22] sm:$0xff]
        %v1135 = vld [vmem:[%s520 + $0x2a] sm:$0xff]
        %v1136 = vld [vmem:[%s520 + $0x32] sm:$0xff]
        %v1137 = vld [vmem:[%s520 + $0x3a] sm:$0xff]
        %v1138 = vld [vmem:[%s520 + $0x42] sm:$0xff]
        %v1139 = vld [vmem:[%s520 + $0x4a] sm:$0xff]
        %v1140 = vld [vmem:[%s520 + $0x52] sm:$0xff]
        %v1141 = vld [vmem:[%s520 + $0x5a] sm:$0xff]
        %v1142 = vld [vmem:[%s520 + $0x62] sm:$0xff]
        %v1143 = vld [vmem:[%s520 + $0x6a] sm:$0xff]
        %v1144 = vld [vmem:[%s520 + $0x72] sm:$0xff]
        %v1145 = vld [vmem:[%s520 + $0x7a] sm:$0xff]
        %v1146 = vld [vmem:[%s520 + $0x82] sm:$0xff]
        %v1147 = vld [vmem:[%s520 + $0x8a] sm:$0xff]
        %v1148 = vld [vmem:[%s520 + $0x92] sm:$0xff]
        %v1149 = vld [vmem:[%s520 + $0x9a] sm:$0xff]
        %v1150 = vld [vmem:[%s520 + $0xa2] sm:$0xff]
        %v1151 = vld [vmem:[%s520 + $0xaa] sm:$0xff]
        %v1152 = vld [vmem:[%s520 + $0xb2] sm:$0xff]
        %v1153 = vld [vmem:[%s520 + $0xba] sm:$0xff]
        %v1154 = vld [vmem:[%s520 + $0xc2] sm:$0xff]
        %v1155 = vld [vmem:[%s520 + $0xca] sm:$0xff]
        %v1156 = vld [vmem:[%s520 + $0xd2] sm:$0xff]
        %v1157 = vld [vmem:[%s520 + $0xda] sm:$0xff]
        %v1158 = vld [vmem:[%s520 + $0xe2] sm:$0xff]
        %v1159 = vld [vmem:[%s520 + $0xea] sm:$0xff]
        %v1160 = vld [vmem:[%s520 + $0xf2] sm:$0xff]
        %v1161 = vld [vmem:[%s520 + $0xfa] sm:$0x3f]
        %v1162 = vpack.c.bf16 %v1131, %v1130
        %v1163 = vpack.c.bf16 %v1133, %v1132
        %v1164 = vpack.c.bf16 %v1135, %v1134
        %v1165 = vpack.c.bf16 %v1137, %v1136
        %v1166 = vpack.c.bf16 %v1139, %v1138
        %v1167 = vpack.c.bf16 %v1141, %v1140
        %v1168 = vpack.c.bf16 %v1143, %v1142
        %v1169 = vpack.c.bf16 %v1145, %v1144
        %v1170 = vpack.c.bf16 %v1147, %v1146
        %v1171 = vpack.c.bf16 %v1149, %v1148
        %v1172 = vpack.c.bf16 %v1151, %v1150
        %v1173 = vpack.c.bf16 %v1153, %v1152
        %v1174 = vpack.c.bf16 %v1155, %v1154
        %v1175 = vpack.c.bf16 %v1157, %v1156
        %v1176 = vpack.c.bf16 %v1159, %v1158
        %v1177 = vpack.c.bf16 %v1161, %v1160
        %s1178 = scalar_lea.vmem %s1, 64
        %v1179 = vld [vmem:[%s1178] sm:$0xff]
        %v1180 = vld [vmem:[%s1178 + $0x8] sm:$0xff]
        %v1181 = vld [vmem:[%s1178 + $0x10] sm:$0xff]
        %v1182 = vld [vmem:[%s1178 + $0x18] sm:$0x33]
        %v1187 = vunpack.c.l.b16 %v1179
        %v1188 = vunpack.c.h.b16 %v1179
        %v1189 = vunpack.c.l.b16 %v1180
        %v1190 = vunpack.c.h.b16 %v1180
        %v1191 = vunpack.c.l.b16 %v1181
        %v1192 = vunpack.c.h.b16 %v1181
        %v1193 = vunpack.c.l.b16 %v1182
        %v1194 = vunpack.c.h.b16 %v1182
        %v1195 = vpack.c.b16 %v1189, %v1187
        %v1196 = vpack.c.b16 %v1190, %v1188
        %v1197 = vpack.c.b16 %v1193, %v1191
        %v1198 = vpack.c.b16 %v1194, %v1192
        %v1202 = vsel %vm646, %v1162, 0
        %v1205 = vsel %vm646, %v1163, 0
        %v1208 = vsel %vm646, %v1164, 0
        %v1211 = vsel %vm646, %v1165, 0
        %v1214 = vsel %vm646, %v1166, 0
        %v1217 = vsel %vm646, %v1167, 0
        %v1220 = vsel %vm646, %v1168, 0
        %v1223 = vsel %vm646, %v1169, 0
        %v1226 = vsel %vm646, %v1170, 0
        %v1229 = vsel %vm646, %v1171, 0
        %v1232 = vsel %vm646, %v1172, 0
        %v1235 = vsel %vm646, %v1173, 0
        %v1238 = vsel %vm646, %v1174, 0
        %v1241 = vsel %vm646, %v1175, 0
        %v1244 = vsel %vm646, %v1176, 0
        %v1247 = vsel %vm646, %v1177, 0
        %v1250 = vsel %vm695, %v1197, 0
        %v1253 = vsel %vm695, %v1198, 0
        %1255 = vmatpush.bf16.msra.mxu0 0
        %1256 = vmatpush.bf16.msra.mxu0 0
        %1257 = vmatpush.bf16.msra.mxu0 0
        %1258 = vmatpush.bf16.msra.mxu0 0
        %1259 = vmatpush.bf16.msra.mxu0 0
        %1260 = vmatpush.bf16.msra.mxu0 0
        %1261 = vmatpush.bf16.msra.mxu0 %v1250
        %1262 = vmatpush.bf16.msra.mxu0 %v1195
        %1263 = vmatmul.bf16.gmra.mxu0 %v1202
        %v1264 = vpop.f32.mrf.mxu0
        %v1265 = vadd.f32 0.0, %v1264
        %v1266 = vpop.f32.mrf.mxu0
        %v1267 = vadd.f32 0.0, %v1266
        %1268 = vmatmul.bf16.gmra.mxu0 %v1205
        %v1269 = vpop.f32.mrf.mxu0
        %v1270 = vadd.f32 0.0, %v1269
        %v1271 = vpop.f32.mrf.mxu0
        %v1272 = vadd.f32 0.0, %v1271
        %1273 = vmatmul.bf16.gmra.mxu0 %v1208
        %v1274 = vpop.f32.mrf.mxu0
        %v1275 = vadd.f32 0.0, %v1274
        %v1276 = vpop.f32.mrf.mxu0
        %v1277 = vadd.f32 0.0, %v1276
        %1278 = vmatmul.bf16.gmra.mxu0 %v1211
        %v1279 = vpop.f32.mrf.mxu0
        %v1280 = vadd.f32 0.0, %v1279
        %v1281 = vpop.f32.mrf.mxu0
        %v1282 = vadd.f32 0.0, %v1281
        %1283 = vmatmul.bf16.gmra.mxu0 %v1214
        %v1284 = vpop.f32.mrf.mxu0
        %v1285 = vadd.f32 0.0, %v1284
        %v1286 = vpop.f32.mrf.mxu0
        %v1287 = vadd.f32 0.0, %v1286
        %1288 = vmatmul.bf16.gmra.mxu0 %v1217
        %v1289 = vpop.f32.mrf.mxu0
        %v1290 = vadd.f32 0.0, %v1289
        %v1291 = vpop.f32.mrf.mxu0
        %v1292 = vadd.f32 0.0, %v1291
        %1293 = vmatmul.bf16.gmra.mxu0 %v1220
        %v1294 = vpop.f32.mrf.mxu0
        %v1295 = vadd.f32 0.0, %v1294
        %v1296 = vpop.f32.mrf.mxu0
        %v1297 = vadd.f32 0.0, %v1296
        %1298 = vmatmul.bf16.gmra.mxu0 %v1223
        %v1299 = vpop.f32.mrf.mxu0
        %v1300 = vadd.f32 0.0, %v1299
        %v1301 = vpop.f32.mrf.mxu0
        %v1302 = vadd.f32 0.0, %v1301
        %1303 = vmatmul.bf16.gmra.mxu0 %v1226
        %v1304 = vpop.f32.mrf.mxu0
        %v1305 = vadd.f32 0.0, %v1304
        %v1306 = vpop.f32.mrf.mxu0
        %v1307 = vadd.f32 0.0, %v1306
        %1308 = vmatmul.bf16.gmra.mxu0 %v1229
        %v1309 = vpop.f32.mrf.mxu0
        %v1310 = vadd.f32 0.0, %v1309
        %v1311 = vpop.f32.mrf.mxu0
        %v1312 = vadd.f32 0.0, %v1311
        %1313 = vmatmul.bf16.gmra.mxu0 %v1232
        %v1314 = vpop.f32.mrf.mxu0
        %v1315 = vadd.f32 0.0, %v1314
        %v1316 = vpop.f32.mrf.mxu0
        %v1317 = vadd.f32 0.0, %v1316
        %1318 = vmatmul.bf16.gmra.mxu0 %v1235
        %v1319 = vpop.f32.mrf.mxu0
        %v1320 = vadd.f32 0.0, %v1319
        %v1321 = vpop.f32.mrf.mxu0
        %v1322 = vadd.f32 0.0, %v1321
        %1323 = vmatmul.bf16.gmra.mxu0 %v1238
        %v1324 = vpop.f32.mrf.mxu0
        %v1325 = vadd.f32 0.0, %v1324
        %v1326 = vpop.f32.mrf.mxu0
        %v1327 = vadd.f32 0.0, %v1326
        %1328 = vmatmul.bf16.gmra.mxu0 %v1241
        %v1329 = vpop.f32.mrf.mxu0
        %v1330 = vadd.f32 0.0, %v1329
        %v1331 = vpop.f32.mrf.mxu0
        %v1332 = vadd.f32 0.0, %v1331
        %1333 = vmatmul.bf16.gmra.mxu0 %v1244
        %v1334 = vpop.f32.mrf.mxu0
        %v1335 = vadd.f32 0.0, %v1334
        %v1336 = vpop.f32.mrf.mxu0
        %v1337 = vadd.f32 0.0, %v1336
        %1338 = vmatmul.bf16.gmra.mxu0 %v1247
        %v1339 = vpop.f32.mrf.mxu0
        %v1340 = vadd.f32 0.0, %v1339
        %v1341 = vpop.f32.mrf.mxu0
        %v1342 = vadd.f32 0.0, %v1341
        %1343 = vdwg.mxu0
        %1344 = vmatpush.bf16.msra.mxu0 0
        %1345 = vmatpush.bf16.msra.mxu0 0
        %1346 = vmatpush.bf16.msra.mxu0 0
        %1347 = vmatpush.bf16.msra.mxu0 0
        %1348 = vmatpush.bf16.msra.mxu0 0
        %1349 = vmatpush.bf16.msra.mxu0 0
        %1350 = vmatpush.bf16.msra.mxu0 %v1253
        %1351 = vmatpush.bf16.msra.mxu0 %v1196
        %1352 = vmatmul.bf16.gmra.mxu0 %v1202
        %v1353 = vpop.f32.mrf.mxu0
        %v1354 = vadd.f32 0.0, %v1353
        %v1355 = vpop.f32.mrf.mxu0
        %v1356 = vadd.f32 0.0, %v1355
        %1357 = vmatmul.bf16.gmra.mxu0 %v1205
        %v1358 = vpop.f32.mrf.mxu0
        %v1359 = vadd.f32 0.0, %v1358
        %v1360 = vpop.f32.mrf.mxu0
        %v1361 = vadd.f32 0.0, %v1360
        %1362 = vmatmul.bf16.gmra.mxu0 %v1208
        %v1363 = vpop.f32.mrf.mxu0
        %v1364 = vadd.f32 0.0, %v1363
        %v1365 = vpop.f32.mrf.mxu0
        %v1366 = vadd.f32 0.0, %v1365
        %1367 = vmatmul.bf16.gmra.mxu0 %v1211
        %v1368 = vpop.f32.mrf.mxu0
        %v1369 = vadd.f32 0.0, %v1368
        %v1370 = vpop.f32.mrf.mxu0
        %v1371 = vadd.f32 0.0, %v1370
        %1372 = vmatmul.bf16.gmra.mxu0 %v1214
        %v1373 = vpop.f32.mrf.mxu0
        %v1374 = vadd.f32 0.0, %v1373
        %v1375 = vpop.f32.mrf.mxu0
        %v1376 = vadd.f32 0.0, %v1375
        %1377 = vmatmul.bf16.gmra.mxu0 %v1217
        %v1378 = vpop.f32.mrf.mxu0
        %v1379 = vadd.f32 0.0, %v1378
        %v1380 = vpop.f32.mrf.mxu0
        %v1381 = vadd.f32 0.0, %v1380
        %1382 = vmatmul.bf16.gmra.mxu0 %v1220
        %v1383 = vpop.f32.mrf.mxu0
        %v1384 = vadd.f32 0.0, %v1383
        %v1385 = vpop.f32.mrf.mxu0
        %v1386 = vadd.f32 0.0, %v1385
        %1387 = vmatmul.bf16.gmra.mxu0 %v1223
        %v1388 = vpop.f32.mrf.mxu0
        %v1389 = vadd.f32 0.0, %v1388
        %v1390 = vpop.f32.mrf.mxu0
        %v1391 = vadd.f32 0.0, %v1390
        %1392 = vmatmul.bf16.gmra.mxu0 %v1226
        %v1393 = vpop.f32.mrf.mxu0
        %v1394 = vadd.f32 0.0, %v1393
        %v1395 = vpop.f32.mrf.mxu0
        %v1396 = vadd.f32 0.0, %v1395
        %1397 = vmatmul.bf16.gmra.mxu0 %v1229
        %v1398 = vpop.f32.mrf.mxu0
        %v1399 = vadd.f32 0.0, %v1398
        %v1400 = vpop.f32.mrf.mxu0
        %v1401 = vadd.f32 0.0, %v1400
        %1402 = vmatmul.bf16.gmra.mxu0 %v1232
        %v1403 = vpop.f32.mrf.mxu0
        %v1404 = vadd.f32 0.0, %v1403
        %v1405 = vpop.f32.mrf.mxu0
        %v1406 = vadd.f32 0.0, %v1405
        %1407 = vmatmul.bf16.gmra.mxu0 %v1235
        %v1408 = vpop.f32.mrf.mxu0
        %v1409 = vadd.f32 0.0, %v1408
        %v1410 = vpop.f32.mrf.mxu0
        %v1411 = vadd.f32 0.0, %v1410
        %1412 = vmatmul.bf16.gmra.mxu0 %v1238
        %v1413 = vpop.f32.mrf.mxu0
        %v1414 = vadd.f32 0.0, %v1413
        %v1415 = vpop.f32.mrf.mxu0
        %v1416 = vadd.f32 0.0, %v1415
        %1417 = vmatmul.bf16.gmra.mxu0 %v1241
        %v1418 = vpop.f32.mrf.mxu0
        %v1419 = vadd.f32 0.0, %v1418
        %v1420 = vpop.f32.mrf.mxu0
        %v1421 = vadd.f32 0.0, %v1420
        %1422 = vmatmul.bf16.gmra.mxu0 %v1244
        %v1423 = vpop.f32.mrf.mxu0
        %v1424 = vadd.f32 0.0, %v1423
        %v1425 = vpop.f32.mrf.mxu0
        %v1426 = vadd.f32 0.0, %v1425
        %1427 = vmatmul.bf16.gmra.mxu0 %v1247
        %v1428 = vpop.f32.mrf.mxu0
        %v1429 = vadd.f32 0.0, %v1428
        %v1430 = vpop.f32.mrf.mxu0
        %v1431 = vadd.f32 0.0, %v1430
        %1432 = vdwg.mxu0
        %v1433 = vadd.f32 %v962, %v1265
        %v1434 = vadd.f32 %v1051, %v1354
        %v1435 = vadd.f32 %v964, %v1267
        %v1436 = vadd.f32 %v1053, %v1356
        %v1437 = vadd.f32 %v967, %v1270
        %v1438 = vadd.f32 %v1056, %v1359
        %v1439 = vadd.f32 %v969, %v1272
        %v1440 = vadd.f32 %v1058, %v1361
        %v1441 = vadd.f32 %v972, %v1275
        %v1442 = vadd.f32 %v1061, %v1364
        %v1443 = vadd.f32 %v974, %v1277
        %v1444 = vadd.f32 %v1063, %v1366
        %v1445 = vadd.f32 %v977, %v1280
        %v1446 = vadd.f32 %v1066, %v1369
        %v1447 = vadd.f32 %v979, %v1282
        %v1448 = vadd.f32 %v1068, %v1371
        %v1449 = vadd.f32 %v982, %v1285
        %v1450 = vadd.f32 %v1071, %v1374
        %v1451 = vadd.f32 %v984, %v1287
        %v1452 = vadd.f32 %v1073, %v1376
        %v1453 = vadd.f32 %v987, %v1290
        %v1454 = vadd.f32 %v1076, %v1379
        %v1455 = vadd.f32 %v989, %v1292
        %v1456 = vadd.f32 %v1078, %v1381
        %v1457 = vadd.f32 %v992, %v1295
        %v1458 = vadd.f32 %v1081, %v1384
        %v1459 = vadd.f32 %v994, %v1297
        %v1460 = vadd.f32 %v1083, %v1386
        %v1461 = vadd.f32 %v997, %v1300
        %v1462 = vadd.f32 %v1086, %v1389
        %v1463 = vadd.f32 %v999, %v1302
        %v1464 = vadd.f32 %v1088, %v1391
        %v1465 = vadd.f32 %v1002, %v1305
        %v1466 = vadd.f32 %v1091, %v1394
        %v1467 = vadd.f32 %v1004, %v1307
        %v1468 = vadd.f32 %v1093, %v1396
        %v1469 = vadd.f32 %v1007, %v1310
        %v1470 = vadd.f32 %v1096, %v1399
        %v1471 = vadd.f32 %v1009, %v1312
        %v1472 = vadd.f32 %v1098, %v1401
        %v1473 = vadd.f32 %v1012, %v1315
        %v1474 = vadd.f32 %v1101, %v1404
        %v1475 = vadd.f32 %v1014, %v1317
        %v1476 = vadd.f32 %v1103, %v1406
        %v1477 = vadd.f32 %v1017, %v1320
        %v1478 = vadd.f32 %v1106, %v1409
        %v1479 = vadd.f32 %v1019, %v1322
        %v1480 = vadd.f32 %v1108, %v1411
        %v1481 = vadd.f32 %v1022, %v1325
        %v1482 = vadd.f32 %v1111, %v1414
        %v1483 = vadd.f32 %v1024, %v1327
        %v1484 = vadd.f32 %v1113, %v1416
        %v1485 = vadd.f32 %v1027, %v1330
        %v1486 = vadd.f32 %v1116, %v1419
        %v1487 = vadd.f32 %v1029, %v1332
        %v1488 = vadd.f32 %v1118, %v1421
        %v1489 = vadd.f32 %v1032, %v1335
        %v1490 = vadd.f32 %v1121, %v1424
        %v1491 = vadd.f32 %v1034, %v1337
        %v1492 = vadd.f32 %v1123, %v1426
        %v1493 = vadd.f32 %v1037, %v1340
        %v1494 = vadd.f32 %v1126, %v1429
        %v1495 = vadd.f32 %v1039, %v1342
        %v1496 = vadd.f32 %v1128, %v1431
        %v1497 = vld [vmem:[%s2] sm:$0x3]
        %v1499 = vperm.slane %v1497, 0
        %v1500 = vperm.slane %v1497, 1
        %v1503 = vadd.f32 %v1433, %v1499
        %v1504 = vadd.f32 %v1434, %v1500
        %v1505 = vadd.f32 %v1435, %v1499
        %v1506 = vadd.f32 %v1436, %v1500
        %v1507 = vadd.f32 %v1437, %v1499
        %v1508 = vadd.f32 %v1438, %v1500
        %v1509 = vadd.f32 %v1439, %v1499
        %v1510 = vadd.f32 %v1440, %v1500
        %v1511 = vadd.f32 %v1441, %v1499
        %v1512 = vadd.f32 %v1442, %v1500
        %v1513 = vadd.f32 %v1443, %v1499
        %v1514 = vadd.f32 %v1444, %v1500
        %v1515 = vadd.f32 %v1445, %v1499
        %v1516 = vadd.f32 %v1446, %v1500
        %v1517 = vadd.f32 %v1447, %v1499
        %v1518 = vadd.f32 %v1448, %v1500
        %v1519 = vadd.f32 %v1449, %v1499
        %v1520 = vadd.f32 %v1450, %v1500
        %v1521 = vadd.f32 %v1451, %v1499
        %v1522 = vadd.f32 %v1452, %v1500
        %v1523 = vadd.f32 %v1453, %v1499
        %v1524 = vadd.f32 %v1454, %v1500
        %v1525 = vadd.f32 %v1455, %v1499
        %v1526 = vadd.f32 %v1456, %v1500
        %v1527 = vadd.f32 %v1457, %v1499
        %v1528 = vadd.f32 %v1458, %v1500
        %v1529 = vadd.f32 %v1459, %v1499
        %v1530 = vadd.f32 %v1460, %v1500
        %v1531 = vadd.f32 %v1461, %v1499
        %v1532 = vadd.f32 %v1462, %v1500
        %v1533 = vadd.f32 %v1463, %v1499
        %v1534 = vadd.f32 %v1464, %v1500
        %v1535 = vadd.f32 %v1465, %v1499
        %v1536 = vadd.f32 %v1466, %v1500
        %v1537 = vadd.f32 %v1467, %v1499
        %v1538 = vadd.f32 %v1468, %v1500
        %v1539 = vadd.f32 %v1469, %v1499
        %v1540 = vadd.f32 %v1470, %v1500
        %v1541 = vadd.f32 %v1471, %v1499
        %v1542 = vadd.f32 %v1472, %v1500
        %v1543 = vadd.f32 %v1473, %v1499
        %v1544 = vadd.f32 %v1474, %v1500
        %v1545 = vadd.f32 %v1475, %v1499
        %v1546 = vadd.f32 %v1476, %v1500
        %v1547 = vadd.f32 %v1477, %v1499
        %v1548 = vadd.f32 %v1478, %v1500
        %v1549 = vadd.f32 %v1479, %v1499
        %v1550 = vadd.f32 %v1480, %v1500
        %v1551 = vadd.f32 %v1481, %v1499
        %v1552 = vadd.f32 %v1482, %v1500
        %v1553 = vadd.f32 %v1483, %v1499
        %v1554 = vadd.f32 %v1484, %v1500
        %v1555 = vadd.f32 %v1485, %v1499
        %v1556 = vadd.f32 %v1486, %v1500
        %v1557 = vadd.f32 %v1487, %v1499
        %v1558 = vadd.f32 %v1488, %v1500
        %v1559 = vadd.f32 %v1489, %v1499
        %v1560 = vadd.f32 %v1490, %v1500
        %v1561 = vadd.f32 %v1491, %v1499
        %v1562 = vadd.f32 %v1492, %v1500
        %v1563 = vadd.f32 %v1493, %v1499
        %v1564 = vadd.f32 %v1494, %v1500
        %v1565 = vadd.f32 %v1495, %v1499
        %v1566 = vadd.f32 %v1496, %v1500
        %v1567 = vmax.f32 %v1503, 0.0
        %v1568 = vmax.f32 %v1504, 0.0
        %v1569 = vmax.f32 %v1505, 0.0
        %v1570 = vmax.f32 %v1506, 0.0
        %v1571 = vmax.f32 %v1507, 0.0
        %v1572 = vmax.f32 %v1508, 0.0
        %v1573 = vmax.f32 %v1509, 0.0
        %v1574 = vmax.f32 %v1510, 0.0
        %v1575 = vmax.f32 %v1511, 0.0
        %v1576 = vmax.f32 %v1512, 0.0
        %v1577 = vmax.f32 %v1513, 0.0
        %v1578 = vmax.f32 %v1514, 0.0
        %v1579 = vmax.f32 %v1515, 0.0
        %v1580 = vmax.f32 %v1516, 0.0
        %v1581 = vmax.f32 %v1517, 0.0
        %v1582 = vmax.f32 %v1518, 0.0
        %v1583 = vmax.f32 %v1519, 0.0
        %v1584 = vmax.f32 %v1520, 0.0
        %v1585 = vmax.f32 %v1521, 0.0
        %v1586 = vmax.f32 %v1522, 0.0
        %v1587 = vmax.f32 %v1523, 0.0
        %v1588 = vmax.f32 %v1524, 0.0
        %v1589 = vmax.f32 %v1525, 0.0
        %v1590 = vmax.f32 %v1526, 0.0
        %v1591 = vmax.f32 %v1527, 0.0
        %v1592 = vmax.f32 %v1528, 0.0
        %v1593 = vmax.f32 %v1529, 0.0
        %v1594 = vmax.f32 %v1530, 0.0
        %v1595 = vmax.f32 %v1531, 0.0
        %v1596 = vmax.f32 %v1532, 0.0
        %v1597 = vmax.f32 %v1533, 0.0
        %v1598 = vmax.f32 %v1534, 0.0
        %v1599 = vmax.f32 %v1535, 0.0
        %v1600 = vmax.f32 %v1536, 0.0
        %v1601 = vmax.f32 %v1537, 0.0
        %v1602 = vmax.f32 %v1538, 0.0
        %v1603 = vmax.f32 %v1539, 0.0
        %v1604 = vmax.f32 %v1540, 0.0
        %v1605 = vmax.f32 %v1541, 0.0
        %v1606 = vmax.f32 %v1542, 0.0
        %v1607 = vmax.f32 %v1543, 0.0
        %v1608 = vmax.f32 %v1544, 0.0
        %v1609 = vmax.f32 %v1545, 0.0
        %v1610 = vmax.f32 %v1546, 0.0
        %v1611 = vmax.f32 %v1547, 0.0
        %v1612 = vmax.f32 %v1548, 0.0
        %v1613 = vmax.f32 %v1549, 0.0
        %v1614 = vmax.f32 %v1550, 0.0
        %v1615 = vmax.f32 %v1551, 0.0
        %v1616 = vmax.f32 %v1552, 0.0
        %v1617 = vmax.f32 %v1553, 0.0
        %v1618 = vmax.f32 %v1554, 0.0
        %v1619 = vmax.f32 %v1555, 0.0
        %v1620 = vmax.f32 %v1556, 0.0
        %v1621 = vmax.f32 %v1557, 0.0
        %v1622 = vmax.f32 %v1558, 0.0
        %v1623 = vmax.f32 %v1559, 0.0
        %v1624 = vmax.f32 %v1560, 0.0
        %v1625 = vmax.f32 %v1561, 0.0
        %v1626 = vmax.f32 %v1562, 0.0
        %v1627 = vmax.f32 %v1563, 0.0
        %v1628 = vmax.f32 %v1564, 0.0
        %v1629 = vmax.f32 %v1565, 0.0
        %v1630 = vmax.f32 %v1566, 0.0
        %v1631 = vlaneseq
        %vm1632 = vcmp.ge.s32.totalorder %v1631, 0
        %vm1633 = vcmp.lt.s32.totalorder %v1631, 224
        %vm1634 = vmand %vm1632, %vm1633
        %1635 = vst.msk [vmem:[#allocation2] ss:$8 sm:$0x3] %vm1634, 0.0
        %1636 = vst.msk [vmem:[#allocation2] ss:$8 sm:$0x0] %vm1634, 0.0
        %vm1645 = vcmask 1040384
        %v1646 = vrot.slane %v1567, 7
        %v1647 = vrot.slane %v1568, 7
        %v1648 = vrot.slane %v1569, 7
        %v1649 = vsel %vm1645, %v1646, %v1648
        %v1650 = vrot.slane %v1570, 7
        %v1651 = vsel %vm1645, %v1647, %v1650
        %v1652 = vrot.slane %v1571, 7
        %v1653 = vsel %vm1645, %v1648, %v1652
        %v1654 = vrot.slane %v1572, 7
        %v1655 = vsel %vm1645, %v1650, %v1654
        %v1656 = vrot.slane %v1573, 7
        %v1657 = vsel %vm1645, %v1652, %v1656
        %v1658 = vrot.slane %v1574, 7
        %v1659 = vsel %vm1645, %v1654, %v1658
        %1668 = vst [vmem:[#allocation2] sm:$0xfe] %v1646
        %vm1669 = vcmask 785409
        %1670 = vst.msk [vmem:[#allocation2 + $0x8] sm:$0xfe] %vm1669, %v1647
        %1671 = vst [vmem:[#allocation2 + $0x10] sm:$0xff] %v1649
        %vm1672 = vcmask 785408
        %1673 = vst.msk [vmem:[#allocation2 + $0x18] sm:$0xff] %vm1672, %v1651
        %1674 = vst [vmem:[#allocation2 + $0x20] sm:$0xff] %v1653
        %1675 = vst.msk [vmem:[#allocation2 + $0x28] sm:$0xff] %vm1672, %v1655
        %1676 = vst [vmem:[#allocation2 + $0x30] sm:$0x1f] %v1657
        %vm1677 = vcmask 782336
        %1678 = vst.msk [vmem:[#allocation2 + $0x38] sm:$0x1f] %vm1677, %v1659
        %1679 = vst [vmem:[#allocation2 + $0x30] sm:$0xe0] 0.0
        %vm1680 = vcmask 785413
        %1681 = vst.msk [vmem:[#allocation2 + $0x38] sm:$0xe0] %vm1680, 0.0
        %s1682 = scalar_lea.vmem [#allocation2], 64
        %1683 = vst.msk [vmem:[%s1682] ss:$8 sm:$0x3] %vm1634, 0.0
        %1684 = vst.msk [vmem:[%s1682] ss:$8 sm:$0x0] %vm1634, 0.0
        %v1693 = vrot.slane %v1575, 7
        %v1694 = vrot.slane %v1576, 7
        %v1695 = vrot.slane %v1577, 7
        %v1696 = vsel %vm1645, %v1693, %v1695
        %v1697 = vrot.slane %v1578, 7
        %v1698 = vsel %vm1645, %v1694, %v1697
        %v1699 = vrot.slane %v1579, 7
        %v1700 = vsel %vm1645, %v1695, %v1699
        %v1701 = vrot.slane %v1580, 7
        %v1702 = vsel %vm1645, %v1697, %v1701
        %v1703 = vrot.slane %v1581, 7
        %v1704 = vsel %vm1645, %v1699, %v1703
        %v1705 = vrot.slane %v1582, 7
        %v1706 = vsel %vm1645, %v1701, %v1705
        %1715 = vst [vmem:[#allocation2 + $0x40] sm:$0xfe] %v1693
        %1716 = vst.msk [vmem:[#allocation2 + $0x48] sm:$0xfe] %vm1669, %v1694
        %1717 = vst [vmem:[#allocation2 + $0x50] sm:$0xff] %v1696
        %1718 = vst.msk [vmem:[#allocation2 + $0x58] sm:$0xff] %vm1672, %v1698
        %1719 = vst [vmem:[#allocation2 + $0x60] sm:$0xff] %v1700
        %1720 = vst.msk [vmem:[#allocation2 + $0x68] sm:$0xff] %vm1672, %v1702
        %1721 = vst [vmem:[#allocation2 + $0x70] sm:$0x1f] %v1704
        %1722 = vst.msk [vmem:[#allocation2 + $0x78] sm:$0x1f] %vm1677, %v1706
        %1723 = vst [vmem:[#allocation2 + $0x70] sm:$0xe0] 0.0
        %1724 = vst.msk [vmem:[#allocation2 + $0x78] sm:$0xe0] %vm1680, 0.0
        %s1725 = scalar_lea.vmem [#allocation2], 128
        %1726 = vst.msk [vmem:[%s1725] ss:$8 sm:$0x3] %vm1634, 0.0
        %1727 = vst.msk [vmem:[%s1725] ss:$8 sm:$0x0] %vm1634, 0.0
        %v1736 = vrot.slane %v1583, 7
        %v1737 = vrot.slane %v1584, 7
        %v1738 = vrot.slane %v1585, 7
        %v1739 = vsel %vm1645, %v1736, %v1738
        %v1740 = vrot.slane %v1586, 7
        %v1741 = vsel %vm1645, %v1737, %v1740
        %v1742 = vrot.slane %v1587, 7
        %v1743 = vsel %vm1645, %v1738, %v1742
        %v1744 = vrot.slane %v1588, 7
        %v1745 = vsel %vm1645, %v1740, %v1744
        %v1746 = vrot.slane %v1589, 7
        %v1747 = vsel %vm1645, %v1742, %v1746
        %v1748 = vrot.slane %v1590, 7
        %v1749 = vsel %vm1645, %v1744, %v1748
        %1758 = vst [vmem:[#allocation2 + $0x80] sm:$0xfe] %v1736
        %1759 = vst.msk [vmem:[#allocation2 + $0x88] sm:$0xfe] %vm1669, %v1737
        %1760 = vst [vmem:[#allocation2 + $0x90] sm:$0xff] %v1739
        %1761 = vst.msk [vmem:[#allocation2 + $0x98] sm:$0xff] %vm1672, %v1741
        %1762 = vst [vmem:[#allocation2 + $0xa0] sm:$0xff] %v1743
        %1763 = vst.msk [vmem:[#allocation2 + $0xa8] sm:$0xff] %vm1672, %v1745
        %1764 = vst [vmem:[#allocation2 + $0xb0] sm:$0x1f] %v1747
        %1765 = vst.msk [vmem:[#allocation2 + $0xb8] sm:$0x1f] %vm1677, %v1749
        %1766 = vst [vmem:[#allocation2 + $0xb0] sm:$0xe0] 0.0
        %1767 = vst.msk [vmem:[#allocation2 + $0xb8] sm:$0xe0] %vm1680, 0.0
        %s1768 = scalar_lea.vmem [#allocation2], 192
        %1769 = vst.msk [vmem:[%s1768] ss:$8 sm:$0x3] %vm1634, 0.0
        %1770 = vst.msk [vmem:[%s1768] ss:$8 sm:$0x0] %vm1634, 0.0
        %v1779 = vrot.slane %v1591, 7
        %v1780 = vrot.slane %v1592, 7
        %v1781 = vrot.slane %v1593, 7
        %v1782 = vsel %vm1645, %v1779, %v1781
        %v1783 = vrot.slane %v1594, 7
        %v1784 = vsel %vm1645, %v1780, %v1783
        %v1785 = vrot.slane %v1595, 7
        %v1786 = vsel %vm1645, %v1781, %v1785
        %v1787 = vrot.slane %v1596, 7
        %v1788 = vsel %vm1645, %v1783, %v1787
        %v1789 = vrot.slane %v1597, 7
        %v1790 = vsel %vm1645, %v1785, %v1789
        %v1791 = vrot.slane %v1598, 7
        %v1792 = vsel %vm1645, %v1787, %v1791
        %1801 = vst [vmem:[#allocation2 + $0xc0] sm:$0xfe] %v1779
        %1802 = vst.msk [vmem:[#allocation2 + $0xc8] sm:$0xfe] %vm1669, %v1780
        %1803 = vst [vmem:[#allocation2 + $0xd0] sm:$0xff] %v1782
        %1804 = vst.msk [vmem:[#allocation2 + $0xd8] sm:$0xff] %vm1672, %v1784
        %1805 = vst [vmem:[#allocation2 + $0xe0] sm:$0xff] %v1786
        %1806 = vst.msk [vmem:[#allocation2 + $0xe8] sm:$0xff] %vm1672, %v1788
        %1807 = vst [vmem:[#allocation2 + $0xf0] sm:$0x1f] %v1790
        %1808 = vst.msk [vmem:[#allocation2 + $0xf8] sm:$0x1f] %vm1677, %v1792
        %1809 = vst [vmem:[#allocation2 + $0xf0] sm:$0xe0] 0.0
        %1810 = vst.msk [vmem:[#allocation2 + $0xf8] sm:$0xe0] %vm1680, 0.0
        %s1811 = scalar_lea.vmem [#allocation2], 256
        %1812 = vst.msk [vmem:[%s1811] ss:$8 sm:$0x3] %vm1634, 0.0
        %1813 = vst.msk [vmem:[%s1811] ss:$8 sm:$0x0] %vm1634, 0.0
        %v1822 = vrot.slane %v1599, 7
        %v1823 = vrot.slane %v1600, 7
        %v1824 = vrot.slane %v1601, 7
        %v1825 = vsel %vm1645, %v1822, %v1824
        %v1826 = vrot.slane %v1602, 7
        %v1827 = vsel %vm1645, %v1823, %v1826
        %v1828 = vrot.slane %v1603, 7
        %v1829 = vsel %vm1645, %v1824, %v1828
        %v1830 = vrot.slane %v1604, 7
        %v1831 = vsel %vm1645, %v1826, %v1830
        %v1832 = vrot.slane %v1605, 7
        %v1833 = vsel %vm1645, %v1828, %v1832
        %v1834 = vrot.slane %v1606, 7
        %v1835 = vsel %vm1645, %v1830, %v1834
        %1844 = vst [vmem:[#allocation2 + $0x100] sm:$0xfe] %v1822
        %1845 = vst.msk [vmem:[#allocation2 + $0x108] sm:$0xfe] %vm1669, %v1823
        %1846 = vst [vmem:[#allocation2 + $0x110] sm:$0xff] %v1825
        %1847 = vst.msk [vmem:[#allocation2 + $0x118] sm:$0xff] %vm1672, %v1827
        %1848 = vst [vmem:[#allocation2 + $0x120] sm:$0xff] %v1829
        %1849 = vst.msk [vmem:[#allocation2 + $0x128] sm:$0xff] %vm1672, %v1831
        %1850 = vst [vmem:[#allocation2 + $0x130] sm:$0x1f] %v1833
        %1851 = vst.msk [vmem:[#allocation2 + $0x138] sm:$0x1f] %vm1677, %v1835
        %1852 = vst [vmem:[#allocation2 + $0x130] sm:$0xe0] 0.0
        %1853 = vst.msk [vmem:[#allocation2 + $0x138] sm:$0xe0] %vm1680, 0.0
        %s1854 = scalar_lea.vmem [#allocation2], 320
        %1855 = vst.msk [vmem:[%s1854] ss:$8 sm:$0x3] %vm1634, 0.0
        %1856 = vst.msk [vmem:[%s1854] ss:$8 sm:$0x0] %vm1634, 0.0
        %v1865 = vrot.slane %v1607, 7
        %v1866 = vrot.slane %v1608, 7
        %v1867 = vrot.slane %v1609, 7
        %v1868 = vsel %vm1645, %v1865, %v1867
        %v1869 = vrot.slane %v1610, 7
        %v1870 = vsel %vm1645, %v1866, %v1869
        %v1871 = vrot.slane %v1611, 7
        %v1872 = vsel %vm1645, %v1867, %v1871
        %v1873 = vrot.slane %v1612, 7
        %v1874 = vsel %vm1645, %v1869, %v1873
        %v1875 = vrot.slane %v1613, 7
        %v1876 = vsel %vm1645, %v1871, %v1875
        %v1877 = vrot.slane %v1614, 7
        %v1878 = vsel %vm1645, %v1873, %v1877
        %1887 = vst [vmem:[#allocation2 + $0x140] sm:$0xfe] %v1865
        %1888 = vst.msk [vmem:[#allocation2 + $0x148] sm:$0xfe] %vm1669, %v1866
        %1889 = vst [vmem:[#allocation2 + $0x150] sm:$0xff] %v1868
        %1890 = vst.msk [vmem:[#allocation2 + $0x158] sm:$0xff] %vm1672, %v1870
        %1891 = vst [vmem:[#allocation2 + $0x160] sm:$0xff] %v1872
        %1892 = vst.msk [vmem:[#allocation2 + $0x168] sm:$0xff] %vm1672, %v1874
        %1893 = vst [vmem:[#allocation2 + $0x170] sm:$0x1f] %v1876
        %1894 = vst.msk [vmem:[#allocation2 + $0x178] sm:$0x1f] %vm1677, %v1878
        %1895 = vst [vmem:[#allocation2 + $0x170] sm:$0xe0] 0.0
        %1896 = vst.msk [vmem:[#allocation2 + $0x178] sm:$0xe0] %vm1680, 0.0
        %s1897 = scalar_lea.vmem [#allocation2], 384
        %1898 = vst.msk [vmem:[%s1897] ss:$8 sm:$0x3] %vm1634, 0.0
        %1899 = vst.msk [vmem:[%s1897] ss:$8 sm:$0x0] %vm1634, 0.0
        %v1908 = vrot.slane %v1615, 7
        %v1909 = vrot.slane %v1616, 7
        %v1910 = vrot.slane %v1617, 7
        %v1911 = vsel %vm1645, %v1908, %v1910
        %v1912 = vrot.slane %v1618, 7
        %v1913 = vsel %vm1645, %v1909, %v1912
        %v1914 = vrot.slane %v1619, 7
        %v1915 = vsel %vm1645, %v1910, %v1914
        %v1916 = vrot.slane %v1620, 7
        %v1917 = vsel %vm1645, %v1912, %v1916
        %v1918 = vrot.slane %v1621, 7
        %v1919 = vsel %vm1645, %v1914, %v1918
        %v1920 = vrot.slane %v1622, 7
        %v1921 = vsel %vm1645, %v1916, %v1920
        %1930 = vst [vmem:[#allocation2 + $0x180] sm:$0xfe] %v1908
        %1931 = vst.msk [vmem:[#allocation2 + $0x188] sm:$0xfe] %vm1669, %v1909
        %1932 = vst [vmem:[#allocation2 + $0x190] sm:$0xff] %v1911
        %1933 = vst.msk [vmem:[#allocation2 + $0x198] sm:$0xff] %vm1672, %v1913
        %1934 = vst [vmem:[#allocation2 + $0x1a0] sm:$0xff] %v1915
        %1935 = vst.msk [vmem:[#allocation2 + $0x1a8] sm:$0xff] %vm1672, %v1917
        %1936 = vst [vmem:[#allocation2 + $0x1b0] sm:$0x1f] %v1919
        %1937 = vst.msk [vmem:[#allocation2 + $0x1b8] sm:$0x1f] %vm1677, %v1921
        %1938 = vst [vmem:[#allocation2 + $0x1b0] sm:$0xe0] 0.0
        %1939 = vst.msk [vmem:[#allocation2 + $0x1b8] sm:$0xe0] %vm1680, 0.0
        %s1940 = scalar_lea.vmem [#allocation2], 448
        %1941 = vst.msk [vmem:[%s1940] ss:$8 sm:$0x3] %vm1634, 0.0
        %1942 = vst.msk [vmem:[%s1940] ss:$8 sm:$0x0] %vm1634, 0.0
        %v1951 = vrot.slane %v1623, 7
        %v1952 = vrot.slane %v1624, 7
        %v1953 = vrot.slane %v1625, 7
        %v1954 = vsel %vm1645, %v1951, %v1953
        %v1955 = vrot.slane %v1626, 7
        %v1956 = vsel %vm1645, %v1952, %v1955
        %v1957 = vrot.slane %v1627, 7
        %v1958 = vsel %vm1645, %v1953, %v1957
        %v1959 = vrot.slane %v1628, 7
        %v1960 = vsel %vm1645, %v1955, %v1959
        %v1961 = vrot.slane %v1629, 7
        %v1962 = vsel %vm1645, %v1957, %v1961
        %v1963 = vrot.slane %v1630, 7
        %v1964 = vsel %vm1645, %v1959, %v1963
        %1973 = vst [vmem:[#allocation2 + $0x1c0] sm:$0xfe] %v1951
        %1974 = vst.msk [vmem:[#allocation2 + $0x1c8] sm:$0xfe] %vm1669, %v1952
        %1975 = vst [vmem:[#allocation2 + $0x1d0] sm:$0xff] %v1954
        %1976 = vst.msk [vmem:[#allocation2 + $0x1d8] sm:$0xff] %vm1672, %v1956
        %1977 = vst [vmem:[#allocation2 + $0x1e0] sm:$0xff] %v1958
        %1978 = vst.msk [vmem:[#allocation2 + $0x1e8] sm:$0xff] %vm1672, %v1960
        %1979 = vst [vmem:[#allocation2 + $0x1f0] sm:$0x1f] %v1962
        %1980 = vst.msk [vmem:[#allocation2 + $0x1f8] sm:$0x1f] %vm1677, %v1964
        %1981 = vst [vmem:[#allocation2 + $0x1f0] sm:$0xe0] 0.0
        %1982 = vst.msk [vmem:[#allocation2 + $0x1f8] sm:$0xe0] %vm1680, 0.0
        %v1983 = vld [vmem:[#allocation2] sm:$0xff]
        %v1984 = vld [vmem:[#allocation2 + $0x8] sm:$0xff]
        %v1985 = vld [vmem:[#allocation2 + $0x10] sm:$0xff]
        %v1986 = vld [vmem:[#allocation2 + $0x18] sm:$0xff]
        %v1987 = vld [vmem:[#allocation2 + $0x20] sm:$0xff]
        %v1988 = vld [vmem:[#allocation2 + $0x28] sm:$0xff]
        %v1989 = vld [vmem:[#allocation2 + $0x30] sm:$0xff]
        %v1990 = vld [vmem:[#allocation2 + $0x38] sm:$0xff]
        %v1991 = vld [vmem:[#allocation2 + $0x40] sm:$0xff]
        %v1992 = vld [vmem:[#allocation2 + $0x48] sm:$0xff]
        %v1993 = vld [vmem:[#allocation2 + $0x50] sm:$0xff]
        %v1994 = vld [vmem:[#allocation2 + $0x58] sm:$0xff]
        %v1995 = vld [vmem:[#allocation2 + $0x60] sm:$0xff]
        %v1996 = vld [vmem:[#allocation2 + $0x68] sm:$0xff]
        %v1997 = vld [vmem:[#allocation2 + $0x70] sm:$0xff]
        %v1998 = vld [vmem:[#allocation2 + $0x78] sm:$0xff]
        %v1999 = vld [vmem:[#allocation2 + $0x80] sm:$0xff]
        %v2000 = vld [vmem:[#allocation2 + $0x88] sm:$0xff]
        %v2001 = vld [vmem:[#allocation2 + $0x90] sm:$0xff]
        %v2002 = vld [vmem:[#allocation2 + $0x98] sm:$0xff]
        %v2003 = vld [vmem:[#allocation2 + $0xa0] sm:$0xff]
        %v2004 = vld [vmem:[#allocation2 + $0xa8] sm:$0xff]
        %v2005 = vld [vmem:[#allocation2 + $0xb0] sm:$0xff]
        %v2006 = vld [vmem:[#allocation2 + $0xb8] sm:$0xff]
        %v2007 = vld [vmem:[#allocation2 + $0xc0] sm:$0xff]
        %v2008 = vld [vmem:[#allocation2 + $0xc8] sm:$0xff]
        %v2009 = vld [vmem:[#allocation2 + $0xd0] sm:$0xff]
        %v2010 = vld [vmem:[#allocation2 + $0xd8] sm:$0xff]
        %v2011 = vld [vmem:[#allocation2 + $0xe0] sm:$0xff]
        %v2012 = vld [vmem:[#allocation2 + $0xe8] sm:$0xff]
        %v2013 = vld [vmem:[#allocation2 + $0xf0] sm:$0xff]
        %v2014 = vld [vmem:[#allocation2 + $0xf8] sm:$0xff]
        %v2015 = vld [vmem:[#allocation2 + $0x100] sm:$0xff]
        %v2016 = vld [vmem:[#allocation2 + $0x108] sm:$0xff]
        %v2017 = vld [vmem:[#allocation2 + $0x110] sm:$0xff]
        %v2018 = vld [vmem:[#allocation2 + $0x118] sm:$0xff]
        %v2019 = vld [vmem:[#allocation2 + $0x120] sm:$0xff]
        %v2020 = vld [vmem:[#allocation2 + $0x128] sm:$0xff]
        %v2021 = vld [vmem:[#allocation2 + $0x130] sm:$0xff]
        %v2022 = vld [vmem:[#allocation2 + $0x138] sm:$0xff]
        %v2023 = vld [vmem:[#allocation2 + $0x140] sm:$0xff]
        %v2024 = vld [vmem:[#allocation2 + $0x148] sm:$0xff]
        %v2025 = vld [vmem:[#allocation2 + $0x150] sm:$0xff]
        %v2026 = vld [vmem:[#allocation2 + $0x158] sm:$0xff]
        %v2027 = vld [vmem:[#allocation2 + $0x160] sm:$0xff]
        %v2028 = vld [vmem:[#allocation2 + $0x168] sm:$0xff]
        %v2029 = vld [vmem:[#allocation2 + $0x170] sm:$0xff]
        %v2030 = vld [vmem:[#allocation2 + $0x178] sm:$0xff]
        %v2031 = vld [vmem:[#allocation2 + $0x180] sm:$0xff]
        %v2032 = vld [vmem:[#allocation2 + $0x188] sm:$0xff]
        %v2033 = vld [vmem:[#allocation2 + $0x190] sm:$0xff]
        %v2034 = vld [vmem:[#allocation2 + $0x198] sm:$0xff]
        %v2035 = vld [vmem:[#allocation2 + $0x1a0] sm:$0xff]
        %v2036 = vld [vmem:[#allocation2 + $0x1a8] sm:$0xff]
        %v2037 = vld [vmem:[#allocation2 + $0x1b0] sm:$0xff]
        %v2038 = vld [vmem:[#allocation2 + $0x1b8] sm:$0xff]
        %v2039 = vld [vmem:[#allocation2 + $0x1c0] sm:$0xff]
        %v2040 = vld [vmem:[#allocation2 + $0x1c8] sm:$0xff]
        %v2041 = vld [vmem:[#allocation2 + $0x1d0] sm:$0xff]
        %v2042 = vld [vmem:[#allocation2 + $0x1d8] sm:$0xff]
        %v2043 = vld [vmem:[#allocation2 + $0x1e0] sm:$0xff]
        %v2044 = vld [vmem:[#allocation2 + $0x1e8] sm:$0xff]
        %v2045 = vld [vmem:[#allocation2 + $0x1f0] sm:$0x3f]
        %v2046 = vld [vmem:[#allocation2 + $0x1f8] sm:$0x3f]
        %v2047 = vpack.c.bf16 %v1985, %v1983
        %v2048 = vpack.c.bf16 %v1986, %v1984
        %v2049 = vpack.c.bf16 %v1989, %v1987
        %v2050 = vpack.c.bf16 %v1990, %v1988
        %v2051 = vpack.c.bf16 %v1993, %v1991
        %v2052 = vpack.c.bf16 %v1994, %v1992
        %v2053 = vpack.c.bf16 %v1997, %v1995
        %v2054 = vpack.c.bf16 %v1998, %v1996
        %v2055 = vpack.c.bf16 %v2001, %v1999
        %v2056 = vpack.c.bf16 %v2002, %v2000
        %v2057 = vpack.c.bf16 %v2005, %v2003
        %v2058 = vpack.c.bf16 %v2006, %v2004
        %v2059 = vpack.c.bf16 %v2009, %v2007
        %v2060 = vpack.c.bf16 %v2010, %v2008
        %v2061 = vpack.c.bf16 %v2013, %v2011
        %v2062 = vpack.c.bf16 %v2014, %v2012
        %v2063 = vpack.c.bf16 %v2017, %v2015
        %v2064 = vpack.c.bf16 %v2018, %v2016
        %v2065 = vpack.c.bf16 %v2021, %v2019
        %v2066 = vpack.c.bf16 %v2022, %v2020
        %v2067 = vpack.c.bf16 %v2025, %v2023
        %v2068 = vpack.c.bf16 %v2026, %v2024
        %v2069 = vpack.c.bf16 %v2029, %v2027
        %v2070 = vpack.c.bf16 %v2030, %v2028
        %v2071 = vpack.c.bf16 %v2033, %v2031
        %v2072 = vpack.c.bf16 %v2034, %v2032
        %v2073 = vpack.c.bf16 %v2037, %v2035
        %v2074 = vpack.c.bf16 %v2038, %v2036
        %v2075 = vpack.c.bf16 %v2041, %v2039
        %v2076 = vpack.c.bf16 %v2042, %v2040
        %v2077 = vpack.c.bf16 %v2045, %v2043
        %v2078 = vpack.c.bf16 %v2046, %v2044
        %v2079 = vld [vmem:[%s3] sm:$0xff]
        %v2080 = vld [vmem:[%s3 + $0x8] sm:$0xff]
        %v2081 = vld [vmem:[%s3 + $0x10] sm:$0xff]
        %v2082 = vld [vmem:[%s3 + $0x18] sm:$0xff]
        %v2083 = vld [vmem:[%s3 + $0x20] sm:$0xff]
        %v2084 = vld [vmem:[%s3 + $0x28] sm:$0xff]
        %v2085 = vld [vmem:[%s3 + $0x30] sm:$0xff]
        %v2086 = vld [vmem:[%s3 + $0x38] sm:$0xff]
        %v2087 = vld [vmem:[%s3 + $0x40] sm:$0xff]
        %v2088 = vld [vmem:[%s3 + $0x48] sm:$0xff]
        %v2089 = vld [vmem:[%s3 + $0x50] sm:$0xff]
        %v2090 = vld [vmem:[%s3 + $0x58] sm:$0xff]
        %v2091 = vld [vmem:[%s3 + $0x60] sm:$0xff]
        %v2092 = vld [vmem:[%s3 + $0x68] sm:$0xff]
        %v2093 = vld [vmem:[%s3 + $0x70] sm:$0xff]
        %v2094 = vld [vmem:[%s3 + $0x78] sm:$0xff]
        %v2095 = vld [vmem:[%s3 + $0x80] sm:$0xff]
        %v2096 = vld [vmem:[%s3 + $0x88] sm:$0xff]
        %v2097 = vld [vmem:[%s3 + $0x90] sm:$0xff]
        %v2098 = vld [vmem:[%s3 + $0x98] sm:$0xff]
        %v2099 = vld [vmem:[%s3 + $0xa0] sm:$0xff]
        %v2100 = vld [vmem:[%s3 + $0xa8] sm:$0xff]
        %v2101 = vld [vmem:[%s3 + $0xb0] sm:$0xff]
        %v2102 = vld [vmem:[%s3 + $0xb8] sm:$0xff]
        %v2103 = vld [vmem:[%s3 + $0xc0] sm:$0xff]
        %v2104 = vld [vmem:[%s3 + $0xc8] sm:$0xff]
        %v2105 = vld [vmem:[%s3 + $0xd0] sm:$0xff]
        %v2106 = vld [vmem:[%s3 + $0xd8] sm:$0xff]
        %v2107 = vld [vmem:[%s3 + $0xe0] sm:$0xff]
        %v2108 = vld [vmem:[%s3 + $0xe8] sm:$0xff]
        %v2109 = vld [vmem:[%s3 + $0xf0] sm:$0xff]
        %v2110 = vld [vmem:[%s3 + $0xf8] sm:$0xff]
        %v2111 = vld [vmem:[%s3 + $0x100] sm:$0xff]
        %v2112 = vld [vmem:[%s3 + $0x108] sm:$0xff]
        %v2113 = vld [vmem:[%s3 + $0x110] sm:$0xff]
        %v2114 = vld [vmem:[%s3 + $0x118] sm:$0xff]
        %v2115 = vld [vmem:[%s3 + $0x120] sm:$0xff]
        %v2116 = vld [vmem:[%s3 + $0x128] sm:$0xff]
        %v2117 = vld [vmem:[%s3 + $0x130] sm:$0xff]
        %v2118 = vld [vmem:[%s3 + $0x138] sm:$0xff]
        %v2119 = vld [vmem:[%s3 + $0x140] sm:$0xff]
        %v2120 = vld [vmem:[%s3 + $0x148] sm:$0xff]
        %v2121 = vld [vmem:[%s3 + $0x150] sm:$0xff]
        %v2122 = vld [vmem:[%s3 + $0x158] sm:$0xff]
        %v2123 = vld [vmem:[%s3 + $0x160] sm:$0xff]
        %v2124 = vld [vmem:[%s3 + $0x168] sm:$0xff]
        %v2125 = vld [vmem:[%s3 + $0x170] sm:$0xff]
        %v2126 = vld [vmem:[%s3 + $0x178] sm:$0xff]
        %v2127 = vld [vmem:[%s3 + $0x180] sm:$0xff]
        %v2128 = vld [vmem:[%s3 + $0x188] sm:$0xff]
        %v2129 = vld [vmem:[%s3 + $0x190] sm:$0xff]
        %v2130 = vld [vmem:[%s3 + $0x198] sm:$0xff]
        %v2131 = vld [vmem:[%s3 + $0x1a0] sm:$0xff]
        %v2132 = vld [vmem:[%s3 + $0x1a8] sm:$0xff]
        %v2133 = vld [vmem:[%s3 + $0x1b0] sm:$0xff]
        %v2134 = vld [vmem:[%s3 + $0x1b8] sm:$0xff]
        %v2135 = vld [vmem:[#allocation2] sm:$0xfe]
        %v2136 = vld [vmem:[#allocation2 + $0x8] sm:$0xfe]
        %v2137 = vld [vmem:[#allocation2 + $0x1f0] sm:$0x7f]
        %v2138 = vld [vmem:[#allocation2 + $0x1f8] sm:$0x7f]
        %v2139 = vpack.c.bf16 %v1985, %v2135
        %v2140 = vpack.c.bf16 %v1986, %v2136
        %v2141 = vpack.c.bf16 %v2137, %v2043
        %v2142 = vpack.c.bf16 %v2138, %v2044
        %s2143 = scalar_lea.vmem %s3, 448
        %v2144 = vld [vmem:[%s2143] sm:$0xff]
        %v2145 = vld [vmem:[%s2143 + $0x8] sm:$0xff]
        %v2146 = vld [vmem:[%s2143 + $0x10] sm:$0xff]
        %v2147 = vld [vmem:[%s2143 + $0x18] sm:$0xff]
        %v2148 = vld [vmem:[%s2143 + $0x20] sm:$0xff]
        %v2149 = vld [vmem:[%s2143 + $0x28] sm:$0xff]
        %v2150 = vld [vmem:[%s2143 + $0x30] sm:$0xff]
        %v2151 = vld [vmem:[%s2143 + $0x38] sm:$0xff]
        %v2152 = vld [vmem:[%s2143 + $0x40] sm:$0xff]
        %v2153 = vld [vmem:[%s2143 + $0x48] sm:$0xff]
        %v2154 = vld [vmem:[%s2143 + $0x50] sm:$0xff]
        %v2155 = vld [vmem:[%s2143 + $0x58] sm:$0xff]
        %v2156 = vld [vmem:[%s2143 + $0x60] sm:$0xff]
        %v2157 = vld [vmem:[%s2143 + $0x68] sm:$0xff]
        %v2158 = vld [vmem:[%s2143 + $0x70] sm:$0xff]
        %v2159 = vld [vmem:[%s2143 + $0x78] sm:$0xff]
        %v2160 = vld [vmem:[%s2143 + $0x80] sm:$0xff]
        %v2161 = vld [vmem:[%s2143 + $0x88] sm:$0xff]
        %v2162 = vld [vmem:[%s2143 + $0x90] sm:$0xff]
        %v2163 = vld [vmem:[%s2143 + $0x98] sm:$0xff]
        %v2164 = vld [vmem:[%s2143 + $0xa0] sm:$0xff]
        %v2165 = vld [vmem:[%s2143 + $0xa8] sm:$0xff]
        %v2166 = vld [vmem:[%s2143 + $0xb0] sm:$0xff]
        %v2167 = vld [vmem:[%s2143 + $0xb8] sm:$0xff]
        %v2168 = vld [vmem:[%s2143 + $0xc0] sm:$0xff]
        %v2169 = vld [vmem:[%s2143 + $0xc8] sm:$0xff]
        %v2170 = vld [vmem:[%s2143 + $0xd0] sm:$0xff]
        %v2171 = vld [vmem:[%s2143 + $0xd8] sm:$0xff]
        %v2172 = vld [vmem:[%s2143 + $0xe0] sm:$0xff]
        %v2173 = vld [vmem:[%s2143 + $0xe8] sm:$0xff]
        %v2174 = vld [vmem:[%s2143 + $0xf0] sm:$0xff]
        %v2175 = vld [vmem:[%s2143 + $0xf8] sm:$0xff]
        %v2176 = vld [vmem:[%s2143 + $0x100] sm:$0xff]
        %v2177 = vld [vmem:[%s2143 + $0x108] sm:$0xff]
        %v2178 = vld [vmem:[%s2143 + $0x110] sm:$0xff]
        %v2179 = vld [vmem:[%s2143 + $0x118] sm:$0xff]
        %v2180 = vld [vmem:[%s2143 + $0x120] sm:$0xff]
        %v2181 = vld [vmem:[%s2143 + $0x128] sm:$0xff]
        %v2182 = vld [vmem:[%s2143 + $0x130] sm:$0xff]
        %v2183 = vld [vmem:[%s2143 + $0x138] sm:$0xff]
        %v2184 = vld [vmem:[%s2143 + $0x140] sm:$0xff]
        %v2185 = vld [vmem:[%s2143 + $0x148] sm:$0xff]
        %v2186 = vld [vmem:[%s2143 + $0x150] sm:$0xff]
        %v2187 = vld [vmem:[%s2143 + $0x158] sm:$0xff]
        %v2188 = vld [vmem:[%s2143 + $0x160] sm:$0xff]
        %v2189 = vld [vmem:[%s2143 + $0x168] sm:$0xff]
        %v2190 = vld [vmem:[%s2143 + $0x170] sm:$0xff]
        %v2191 = vld [vmem:[%s2143 + $0x178] sm:$0xff]
        %v2192 = vld [vmem:[%s2143 + $0x180] sm:$0xff]
        %v2193 = vld [vmem:[%s2143 + $0x188] sm:$0xff]
        %v2194 = vld [vmem:[%s2143 + $0x190] sm:$0xff]
        %v2195 = vld [vmem:[%s2143 + $0x198] sm:$0xff]
        %v2196 = vld [vmem:[%s2143 + $0x1a0] sm:$0xff]
        %v2197 = vld [vmem:[%s2143 + $0x1a8] sm:$0xff]
        %v2198 = vld [vmem:[%s2143 + $0x1b0] sm:$0xff]
        %v2199 = vld [vmem:[%s2143 + $0x1b8] sm:$0xff]
        %vm2200 = vsmask.f32 7424
        %v2202 = vshrl.u32 %v2139, 16
        %v2204 = vshll.u32 %v2139, 16
        %v2206 = vrot.slane %v2204, 1
        %v2207 = vor.u32 %v2202, %v2206
        %v2209 = vshll.u32 %v2049, 16
        %v2211 = vrot.slane %v2209, 1
        %v2212 = vsel %vm2200, %v2207, %v2211
        %v2214 = vshrl.u32 %v2140, 16
        %v2216 = vshll.u32 %v2140, 16
        %v2218 = vrot.slane %v2216, 1
        %v2219 = vor.u32 %v2214, %v2218
        %v2221 = vshll.u32 %v2050, 16
        %v2223 = vrot.slane %v2221, 1
        %v2224 = vsel %vm2200, %v2219, %v2223
        %v2225 = vshrl.u32 %v2049, 16
        %v2227 = vor.u32 %v2225, %v2211
        %v2229 = vshll.u32 %v2051, 16
        %v2231 = vrot.slane %v2229, 1
        %v2232 = vsel %vm2200, %v2227, %v2231
        %v2233 = vshrl.u32 %v2050, 16
        %v2235 = vor.u32 %v2233, %v2223
        %v2237 = vshll.u32 %v2052, 16
        %v2239 = vrot.slane %v2237, 1
        %v2240 = vsel %vm2200, %v2235, %v2239
        %v2241 = vshrl.u32 %v2051, 16
        %v2243 = vor.u32 %v2241, %v2231
        %v2245 = vshll.u32 %v2053, 16
        %v2247 = vrot.slane %v2245, 1
        %v2248 = vsel %vm2200, %v2243, %v2247
        %v2249 = vshrl.u32 %v2052, 16
        %v2251 = vor.u32 %v2249, %v2239
        %v2253 = vshll.u32 %v2054, 16
        %v2255 = vrot.slane %v2253, 1
        %v2256 = vsel %vm2200, %v2251, %v2255
        %v2257 = vshrl.u32 %v2053, 16
        %v2259 = vor.u32 %v2257, %v2247
        %v2261 = vshll.u32 %v2055, 16
        %v2263 = vrot.slane %v2261, 1
        %v2264 = vsel %vm2200, %v2259, %v2263
        %v2265 = vshrl.u32 %v2054, 16
        %v2267 = vor.u32 %v2265, %v2255
        %v2269 = vshll.u32 %v2056, 16
        %v2271 = vrot.slane %v2269, 1
        %v2272 = vsel %vm2200, %v2267, %v2271
        %v2273 = vshrl.u32 %v2055, 16
        %v2275 = vor.u32 %v2273, %v2263
        %v2277 = vshll.u32 %v2057, 16
        %v2279 = vrot.slane %v2277, 1
        %v2280 = vsel %vm2200, %v2275, %v2279
        %v2281 = vshrl.u32 %v2056, 16
        %v2283 = vor.u32 %v2281, %v2271
        %v2285 = vshll.u32 %v2058, 16
        %v2287 = vrot.slane %v2285, 1
        %v2288 = vsel %vm2200, %v2283, %v2287
        %v2289 = vshrl.u32 %v2057, 16
        %v2291 = vor.u32 %v2289, %v2279
        %v2293 = vshll.u32 %v2059, 16
        %v2295 = vrot.slane %v2293, 1
        %v2296 = vsel %vm2200, %v2291, %v2295
        %v2297 = vshrl.u32 %v2058, 16
        %v2299 = vor.u32 %v2297, %v2287
        %v2301 = vshll.u32 %v2060, 16
        %v2303 = vrot.slane %v2301, 1
        %v2304 = vsel %vm2200, %v2299, %v2303
        %v2305 = vshrl.u32 %v2059, 16
        %v2307 = vor.u32 %v2305, %v2295
        %v2309 = vshll.u32 %v2061, 16
        %v2311 = vrot.slane %v2309, 1
        %v2312 = vsel %vm2200, %v2307, %v2311
        %v2313 = vshrl.u32 %v2060, 16
        %v2315 = vor.u32 %v2313, %v2303
        %v2317 = vshll.u32 %v2062, 16
        %v2319 = vrot.slane %v2317, 1
        %v2320 = vsel %vm2200, %v2315, %v2319
        %v2321 = vshrl.u32 %v2061, 16
        %v2323 = vor.u32 %v2321, %v2311
        %v2325 = vshll.u32 %v2063, 16
        %v2327 = vrot.slane %v2325, 1
        %v2328 = vsel %vm2200, %v2323, %v2327
        %v2329 = vshrl.u32 %v2062, 16
        %v2331 = vor.u32 %v2329, %v2319
        %v2333 = vshll.u32 %v2064, 16
        %v2335 = vrot.slane %v2333, 1
        %v2336 = vsel %vm2200, %v2331, %v2335
        %v2337 = vshrl.u32 %v2063, 16
        %v2339 = vor.u32 %v2337, %v2327
        %v2341 = vshll.u32 %v2065, 16
        %v2343 = vrot.slane %v2341, 1
        %v2344 = vsel %vm2200, %v2339, %v2343
        %v2345 = vshrl.u32 %v2064, 16
        %v2347 = vor.u32 %v2345, %v2335
        %v2349 = vshll.u32 %v2066, 16
        %v2351 = vrot.slane %v2349, 1
        %v2352 = vsel %vm2200, %v2347, %v2351
        %v2353 = vshrl.u32 %v2065, 16
        %v2355 = vor.u32 %v2353, %v2343
        %v2357 = vshll.u32 %v2067, 16
        %v2359 = vrot.slane %v2357, 1
        %v2360 = vsel %vm2200, %v2355, %v2359
        %v2361 = vshrl.u32 %v2066, 16
        %v2363 = vor.u32 %v2361, %v2351
        %v2365 = vshll.u32 %v2068, 16
        %v2367 = vrot.slane %v2365, 1
        %v2368 = vsel %vm2200, %v2363, %v2367
        %v2369 = vshrl.u32 %v2067, 16
        %v2371 = vor.u32 %v2369, %v2359
        %v2373 = vshll.u32 %v2069, 16
        %v2375 = vrot.slane %v2373, 1
        %v2376 = vsel %vm2200, %v2371, %v2375
        %v2377 = vshrl.u32 %v2068, 16
        %v2379 = vor.u32 %v2377, %v2367
        %v2381 = vshll.u32 %v2070, 16
        %v2383 = vrot.slane %v2381, 1
        %v2384 = vsel %vm2200, %v2379, %v2383
        %v2385 = vshrl.u32 %v2069, 16
        %v2387 = vor.u32 %v2385, %v2375
        %v2389 = vshll.u32 %v2071, 16
        %v2391 = vrot.slane %v2389, 1
        %v2392 = vsel %vm2200, %v2387, %v2391
        %v2393 = vshrl.u32 %v2070, 16
        %v2395 = vor.u32 %v2393, %v2383
        %v2397 = vshll.u32 %v2072, 16
        %v2399 = vrot.slane %v2397, 1
        %v2400 = vsel %vm2200, %v2395, %v2399
        %v2401 = vshrl.u32 %v2071, 16
        %v2403 = vor.u32 %v2401, %v2391
        %v2405 = vshll.u32 %v2073, 16
        %v2407 = vrot.slane %v2405, 1
        %v2408 = vsel %vm2200, %v2403, %v2407
        %v2409 = vshrl.u32 %v2072, 16
        %v2411 = vor.u32 %v2409, %v2399
        %v2413 = vshll.u32 %v2074, 16
        %v2415 = vrot.slane %v2413, 1
        %v2416 = vsel %vm2200, %v2411, %v2415
        %v2417 = vshrl.u32 %v2073, 16
        %v2419 = vor.u32 %v2417, %v2407
        %v2421 = vshll.u32 %v2075, 16
        %v2423 = vrot.slane %v2421, 1
        %v2424 = vsel %vm2200, %v2419, %v2423
        %v2425 = vshrl.u32 %v2074, 16
        %v2427 = vor.u32 %v2425, %v2415
        %v2429 = vshll.u32 %v2076, 16
        %v2431 = vrot.slane %v2429, 1
        %v2432 = vsel %vm2200, %v2427, %v2431
        %v2433 = vshrl.u32 %v2075, 16
        %v2435 = vor.u32 %v2433, %v2423
        %v2437 = vshll.u32 %v2141, 16
        %v2439 = vrot.slane %v2437, 1
        %v2440 = vsel %vm2200, %v2435, %v2439
        %v2441 = vshrl.u32 %v2076, 16
        %v2443 = vor.u32 %v2441, %v2431
        %v2445 = vshll.u32 %v2142, 16
        %v2447 = vrot.slane %v2445, 1
        %v2448 = vsel %vm2200, %v2443, %v2447
        %v2449 = vshrl.u32 %v2141, 16
        %v2451 = vor.u32 %v2449, %v2439
        %v2452 = vshrl.u32 %v2142, 16
        %v2454 = vor.u32 %v2452, %v2447
        %v2527 = vunpack.c.l.b16 %v2144
        %v2528 = vunpack.c.h.b16 %v2144
        %v2529 = vunpack.c.l.b16 %v2145
        %v2530 = vunpack.c.h.b16 %v2145
        %v2531 = vunpack.c.l.b16 %v2146
        %v2532 = vunpack.c.h.b16 %v2146
        %v2533 = vunpack.c.l.b16 %v2147
        %v2534 = vunpack.c.h.b16 %v2147
        %v2535 = vunpack.c.l.b16 %v2148
        %v2536 = vunpack.c.h.b16 %v2148
        %v2537 = vunpack.c.l.b16 %v2149
        %v2538 = vunpack.c.h.b16 %v2149
        %v2539 = vunpack.c.l.b16 %v2150
        %v2540 = vunpack.c.h.b16 %v2150
        %v2541 = vunpack.c.l.b16 %v2151
        %v2542 = vunpack.c.h.b16 %v2151
        %v2543 = vunpack.c.l.b16 %v2152
        %v2544 = vunpack.c.h.b16 %v2152
        %v2545 = vunpack.c.l.b16 %v2153
        %v2546 = vunpack.c.h.b16 %v2153
        %v2547 = vunpack.c.l.b16 %v2154
        %v2548 = vunpack.c.h.b16 %v2154
        %v2549 = vunpack.c.l.b16 %v2155
        %v2550 = vunpack.c.h.b16 %v2155
        %v2551 = vunpack.c.l.b16 %v2156
        %v2552 = vunpack.c.h.b16 %v2156
        %v2553 = vunpack.c.l.b16 %v2157
        %v2554 = vunpack.c.h.b16 %v2157
        %v2555 = vunpack.c.l.b16 %v2158
        %v2556 = vunpack.c.h.b16 %v2158
        %v2557 = vunpack.c.l.b16 %v2159
        %v2558 = vunpack.c.h.b16 %v2159
        %v2559 = vunpack.c.l.b16 %v2160
        %v2560 = vunpack.c.h.b16 %v2160
        %v2561 = vunpack.c.l.b16 %v2161
        %v2562 = vunpack.c.h.b16 %v2161
        %v2563 = vunpack.c.l.b16 %v2162
        %v2564 = vunpack.c.h.b16 %v2162
        %v2565 = vunpack.c.l.b16 %v2163
        %v2566 = vunpack.c.h.b16 %v2163
        %v2567 = vunpack.c.l.b16 %v2164
        %v2568 = vunpack.c.h.b16 %v2164
        %v2569 = vunpack.c.l.b16 %v2165
        %v2570 = vunpack.c.h.b16 %v2165
        %v2571 = vunpack.c.l.b16 %v2166
        %v2572 = vunpack.c.h.b16 %v2166
        %v2573 = vunpack.c.l.b16 %v2167
        %v2574 = vunpack.c.h.b16 %v2167
        %v2575 = vunpack.c.l.b16 %v2168
        %v2576 = vunpack.c.h.b16 %v2168
        %v2577 = vunpack.c.l.b16 %v2169
        %v2578 = vunpack.c.h.b16 %v2169
        %v2579 = vunpack.c.l.b16 %v2170
        %v2580 = vunpack.c.h.b16 %v2170
        %v2581 = vunpack.c.l.b16 %v2171
        %v2582 = vunpack.c.h.b16 %v2171
        %v2583 = vunpack.c.l.b16 %v2172
        %v2584 = vunpack.c.h.b16 %v2172
        %v2585 = vunpack.c.l.b16 %v2173
        %v2586 = vunpack.c.h.b16 %v2173
        %v2587 = vunpack.c.l.b16 %v2174
        %v2588 = vunpack.c.h.b16 %v2174
        %v2589 = vunpack.c.l.b16 %v2175
        %v2590 = vunpack.c.h.b16 %v2175
        %v2591 = vunpack.c.l.b16 %v2176
        %v2592 = vunpack.c.h.b16 %v2176
        %v2593 = vunpack.c.l.b16 %v2177
        %v2594 = vunpack.c.h.b16 %v2177
        %v2595 = vunpack.c.l.b16 %v2178
        %v2596 = vunpack.c.h.b16 %v2178
        %v2597 = vunpack.c.l.b16 %v2179
        %v2598 = vunpack.c.h.b16 %v2179
        %v2599 = vunpack.c.l.b16 %v2180
        %v2600 = vunpack.c.h.b16 %v2180
        %v2601 = vunpack.c.l.b16 %v2181
        %v2602 = vunpack.c.h.b16 %v2181
        %v2603 = vunpack.c.l.b16 %v2182
        %v2604 = vunpack.c.h.b16 %v2182
        %v2605 = vunpack.c.l.b16 %v2183
        %v2606 = vunpack.c.h.b16 %v2183
        %v2607 = vunpack.c.l.b16 %v2184
        %v2608 = vunpack.c.h.b16 %v2184
        %v2609 = vunpack.c.l.b16 %v2185
        %v2610 = vunpack.c.h.b16 %v2185
        %v2611 = vunpack.c.l.b16 %v2186
        %v2612 = vunpack.c.h.b16 %v2186
        %v2613 = vunpack.c.l.b16 %v2187
        %v2614 = vunpack.c.h.b16 %v2187
        %v2615 = vunpack.c.l.b16 %v2188
        %v2616 = vunpack.c.h.b16 %v2188
        %v2617 = vunpack.c.l.b16 %v2189
        %v2618 = vunpack.c.h.b16 %v2189
        %v2619 = vunpack.c.l.b16 %v2190
        %v2620 = vunpack.c.h.b16 %v2190
        %v2621 = vunpack.c.l.b16 %v2191
        %v2622 = vunpack.c.h.b16 %v2191
        %v2623 = vunpack.c.l.b16 %v2192
        %v2624 = vunpack.c.h.b16 %v2192
        %v2625 = vunpack.c.l.b16 %v2193
        %v2626 = vunpack.c.h.b16 %v2193
        %v2627 = vunpack.c.l.b16 %v2194
        %v2628 = vunpack.c.h.b16 %v2194
        %v2629 = vunpack.c.l.b16 %v2195
        %v2630 = vunpack.c.h.b16 %v2195
        %v2631 = vunpack.c.l.b16 %v2196
        %v2632 = vunpack.c.h.b16 %v2196
        %v2633 = vunpack.c.l.b16 %v2197
        %v2634 = vunpack.c.h.b16 %v2197
        %v2635 = vunpack.c.l.b16 %v2198
        %v2636 = vunpack.c.h.b16 %v2198
        %v2637 = vunpack.c.l.b16 %v2199
        %v2638 = vunpack.c.h.b16 %v2199
        %v2639 = vpack.c.b16 %v2531, %v2527
        %v2640 = vpack.c.b16 %v2532, %v2528
        %v2641 = vpack.c.b16 %v2533, %v2529
        %v2642 = vpack.c.b16 %v2534, %v2530
        %v2643 = vpack.c.b16 %v2539, %v2535
        %v2644 = vpack.c.b16 %v2540, %v2536
        %v2645 = vpack.c.b16 %v2541, %v2537
        %v2646 = vpack.c.b16 %v2542, %v2538
        %v2647 = vpack.c.b16 %v2547, %v2543
        %v2648 = vpack.c.b16 %v2548, %v2544
        %v2649 = vpack.c.b16 %v2549, %v2545
        %v2650 = vpack.c.b16 %v2550, %v2546
        %v2651 = vpack.c.b16 %v2555, %v2551
        %v2652 = vpack.c.b16 %v2556, %v2552
        %v2653 = vpack.c.b16 %v2557, %v2553
        %v2654 = vpack.c.b16 %v2558, %v2554
        %v2655 = vpack.c.b16 %v2563, %v2559
        %v2656 = vpack.c.b16 %v2564, %v2560
        %v2657 = vpack.c.b16 %v2565, %v2561
        %v2658 = vpack.c.b16 %v2566, %v2562
        %v2659 = vpack.c.b16 %v2571, %v2567
        %v2660 = vpack.c.b16 %v2572, %v2568
        %v2661 = vpack.c.b16 %v2573, %v2569
        %v2662 = vpack.c.b16 %v2574, %v2570
        %v2663 = vpack.c.b16 %v2579, %v2575
        %v2664 = vpack.c.b16 %v2580, %v2576
        %v2665 = vpack.c.b16 %v2581, %v2577
        %v2666 = vpack.c.b16 %v2582, %v2578
        %v2667 = vpack.c.b16 %v2587, %v2583
        %v2668 = vpack.c.b16 %v2588, %v2584
        %v2669 = vpack.c.b16 %v2589, %v2585
        %v2670 = vpack.c.b16 %v2590, %v2586
        %v2671 = vpack.c.b16 %v2595, %v2591
        %v2672 = vpack.c.b16 %v2596, %v2592
        %v2673 = vpack.c.b16 %v2597, %v2593
        %v2674 = vpack.c.b16 %v2598, %v2594
        %v2675 = vpack.c.b16 %v2603, %v2599
        %v2676 = vpack.c.b16 %v2604, %v2600
        %v2677 = vpack.c.b16 %v2605, %v2601
        %v2678 = vpack.c.b16 %v2606, %v2602
        %v2679 = vpack.c.b16 %v2611, %v2607
        %v2680 = vpack.c.b16 %v2612, %v2608
        %v2681 = vpack.c.b16 %v2613, %v2609
        %v2682 = vpack.c.b16 %v2614, %v2610
        %v2683 = vpack.c.b16 %v2619, %v2615
        %v2684 = vpack.c.b16 %v2620, %v2616
        %v2685 = vpack.c.b16 %v2621, %v2617
        %v2686 = vpack.c.b16 %v2622, %v2618
        %v2687 = vpack.c.b16 %v2627, %v2623
        %v2688 = vpack.c.b16 %v2628, %v2624
        %v2689 = vpack.c.b16 %v2629, %v2625
        %v2690 = vpack.c.b16 %v2630, %v2626
        %v2691 = vpack.c.b16 %v2635, %v2631
        %v2692 = vpack.c.b16 %v2636, %v2632
        %v2693 = vpack.c.b16 %v2637, %v2633
        %v2694 = vpack.c.b16 %v2638, %v2634
        %v2752 = vsel %vm1672, %v2224, 0
        %v2755 = vsel %vm1672, %v2240, 0
        %v2758 = vsel %vm1672, %v2256, 0
        %v2761 = vsel %vm1672, %v2272, 0
        %v2764 = vsel %vm1672, %v2288, 0
        %v2767 = vsel %vm1672, %v2304, 0
        %v2770 = vsel %vm1672, %v2320, 0
        %v2773 = vsel %vm1672, %v2336, 0
        %v2776 = vsel %vm1672, %v2352, 0
        %v2779 = vsel %vm1672, %v2368, 0
        %v2782 = vsel %vm1672, %v2384, 0
        %v2785 = vsel %vm1672, %v2400, 0
        %v2788 = vsel %vm1672, %v2416, 0
        %v2791 = vsel %vm1672, %v2432, 0
        %v2794 = vsel %vm1672, %v2448, 0
        %v2797 = vsel %vm1672, %v2454, 0
        %2799 = vmatpush.bf16.msra.mxu0 %v2667
        %2800 = vmatpush.bf16.msra.mxu0 %v2663
        %2801 = vmatpush.bf16.msra.mxu0 %v2659
        %2802 = vmatpush.bf16.msra.mxu0 %v2655
        %2803 = vmatpush.bf16.msra.mxu0 %v2651
        %2804 = vmatpush.bf16.msra.mxu0 %v2647
        %2805 = vmatpush.bf16.msra.mxu0 %v2643
        %2806 = vmatpush.bf16.msra.mxu0 %v2639
        %2807 = vmatmul.bf16.gmra.mxu0 %v2212
        %v2808 = vpop.f32.mrf.mxu0
        %v2809 = vadd.f32 0.0, %v2808
        %v2810 = vpop.f32.mrf.mxu0
        %v2811 = vadd.f32 0.0, %v2810
        %2812 = vmatmul.bf16.gmra.mxu0 %v2232
        %v2813 = vpop.f32.mrf.mxu0
        %v2814 = vadd.f32 0.0, %v2813
        %v2815 = vpop.f32.mrf.mxu0
        %v2816 = vadd.f32 0.0, %v2815
        %2817 = vmatmul.bf16.gmra.mxu0 %v2248
        %v2818 = vpop.f32.mrf.mxu0
        %v2819 = vadd.f32 0.0, %v2818
        %v2820 = vpop.f32.mrf.mxu0
        %v2821 = vadd.f32 0.0, %v2820
        %2822 = vmatmul.bf16.gmra.mxu0 %v2264
        %v2823 = vpop.f32.mrf.mxu0
        %v2824 = vadd.f32 0.0, %v2823
        %v2825 = vpop.f32.mrf.mxu0
        %v2826 = vadd.f32 0.0, %v2825
        %2827 = vmatmul.bf16.gmra.mxu0 %v2280
        %v2828 = vpop.f32.mrf.mxu0
        %v2829 = vadd.f32 0.0, %v2828
        %v2830 = vpop.f32.mrf.mxu0
        %v2831 = vadd.f32 0.0, %v2830
        %2832 = vmatmul.bf16.gmra.mxu0 %v2296
        %v2833 = vpop.f32.mrf.mxu0
        %v2834 = vadd.f32 0.0, %v2833
        %v2835 = vpop.f32.mrf.mxu0
        %v2836 = vadd.f32 0.0, %v2835
        %2837 = vmatmul.bf16.gmra.mxu0 %v2312
        %v2838 = vpop.f32.mrf.mxu0
        %v2839 = vadd.f32 0.0, %v2838
        %v2840 = vpop.f32.mrf.mxu0
        %v2841 = vadd.f32 0.0, %v2840
        %2842 = vmatmul.bf16.gmra.mxu0 %v2328
        %v2843 = vpop.f32.mrf.mxu0
        %v2844 = vadd.f32 0.0, %v2843
        %v2845 = vpop.f32.mrf.mxu0
        %v2846 = vadd.f32 0.0, %v2845
        %2847 = vmatmul.bf16.gmra.mxu0 %v2344
        %v2848 = vpop.f32.mrf.mxu0
        %v2849 = vadd.f32 0.0, %v2848
        %v2850 = vpop.f32.mrf.mxu0
        %v2851 = vadd.f32 0.0, %v2850
        %2852 = vmatmul.bf16.gmra.mxu0 %v2360
        %v2853 = vpop.f32.mrf.mxu0
        %v2854 = vadd.f32 0.0, %v2853
        %v2855 = vpop.f32.mrf.mxu0
        %v2856 = vadd.f32 0.0, %v2855
        %2857 = vmatmul.bf16.gmra.mxu0 %v2376
        %v2858 = vpop.f32.mrf.mxu0
        %v2859 = vadd.f32 0.0, %v2858
        %v2860 = vpop.f32.mrf.mxu0
        %v2861 = vadd.f32 0.0, %v2860
        %2862 = vmatmul.bf16.gmra.mxu0 %v2392
        %v2863 = vpop.f32.mrf.mxu0
        %v2864 = vadd.f32 0.0, %v2863
        %v2865 = vpop.f32.mrf.mxu0
        %v2866 = vadd.f32 0.0, %v2865
        %2867 = vmatmul.bf16.gmra.mxu0 %v2408
        %v2868 = vpop.f32.mrf.mxu0
        %v2869 = vadd.f32 0.0, %v2868
        %v2870 = vpop.f32.mrf.mxu0
        %v2871 = vadd.f32 0.0, %v2870
        %2872 = vmatmul.bf16.gmra.mxu0 %v2424
        %v2873 = vpop.f32.mrf.mxu0
        %v2874 = vadd.f32 0.0, %v2873
        %v2875 = vpop.f32.mrf.mxu0
        %v2876 = vadd.f32 0.0, %v2875
        %2877 = vmatmul.bf16.gmra.mxu0 %v2440
        %v2878 = vpop.f32.mrf.mxu0
        %v2879 = vadd.f32 0.0, %v2878
        %v2880 = vpop.f32.mrf.mxu0
        %v2881 = vadd.f32 0.0, %v2880
        %2882 = vmatmul.bf16.gmra.mxu0 %v2451
        %v2883 = vpop.f32.mrf.mxu0
        %v2884 = vadd.f32 0.0, %v2883
        %v2885 = vpop.f32.mrf.mxu0
        %v2886 = vadd.f32 0.0, %v2885
        %2887 = vdwg.mxu0
        %2888 = vmatpush.bf16.msra.mxu0 0
        %2889 = vmatpush.bf16.msra.mxu0 0
        %2890 = vmatpush.bf16.msra.mxu0 %v2691
        %2891 = vmatpush.bf16.msra.mxu0 %v2687
        %2892 = vmatpush.bf16.msra.mxu0 %v2683
        %2893 = vmatpush.bf16.msra.mxu0 %v2679
        %2894 = vmatpush.bf16.msra.mxu0 %v2675
        %2895 = vmatpush.bf16.msra.mxu0 %v2671
        %2896 = vmatmul.bf16.gmra.mxu0 %v2752
        %v2897 = vpop.f32.mrf.mxu0
        %v2898 = vadd.f32 %v2809, %v2897
        %v2899 = vpop.f32.mrf.mxu0
        %v2900 = vadd.f32 %v2811, %v2899
        %2901 = vmatmul.bf16.gmra.mxu0 %v2755
        %v2902 = vpop.f32.mrf.mxu0
        %v2903 = vadd.f32 %v2814, %v2902
        %v2904 = vpop.f32.mrf.mxu0
        %v2905 = vadd.f32 %v2816, %v2904
        %2906 = vmatmul.bf16.gmra.mxu0 %v2758
        %v2907 = vpop.f32.mrf.mxu0
        %v2908 = vadd.f32 %v2819, %v2907
        %v2909 = vpop.f32.mrf.mxu0
        %v2910 = vadd.f32 %v2821, %v2909
        %2911 = vmatmul.bf16.gmra.mxu0 %v2761
        %v2912 = vpop.f32.mrf.mxu0
        %v2913 = vadd.f32 %v2824, %v2912
        %v2914 = vpop.f32.mrf.mxu0
        %v2915 = vadd.f32 %v2826, %v2914
        %2916 = vmatmul.bf16.gmra.mxu0 %v2764
        %v2917 = vpop.f32.mrf.mxu0
        %v2918 = vadd.f32 %v2829, %v2917
        %v2919 = vpop.f32.mrf.mxu0
        %v2920 = vadd.f32 %v2831, %v2919
        %2921 = vmatmul.bf16.gmra.mxu0 %v2767
        %v2922 = vpop.f32.mrf.mxu0
        %v2923 = vadd.f32 %v2834, %v2922
        %v2924 = vpop.f32.mrf.mxu0
        %v2925 = vadd.f32 %v2836, %v2924
        %2926 = vmatmul.bf16.gmra.mxu0 %v2770
        %v2927 = vpop.f32.mrf.mxu0
        %v2928 = vadd.f32 %v2839, %v2927
        %v2929 = vpop.f32.mrf.mxu0
        %v2930 = vadd.f32 %v2841, %v2929
        %2931 = vmatmul.bf16.gmra.mxu0 %v2773
        %v2932 = vpop.f32.mrf.mxu0
        %v2933 = vadd.f32 %v2844, %v2932
        %v2934 = vpop.f32.mrf.mxu0
        %v2935 = vadd.f32 %v2846, %v2934
        %2936 = vmatmul.bf16.gmra.mxu0 %v2776
        %v2937 = vpop.f32.mrf.mxu0
        %v2938 = vadd.f32 %v2849, %v2937
        %v2939 = vpop.f32.mrf.mxu0
        %v2940 = vadd.f32 %v2851, %v2939
        %2941 = vmatmul.bf16.gmra.mxu0 %v2779
        %v2942 = vpop.f32.mrf.mxu0
        %v2943 = vadd.f32 %v2854, %v2942
        %v2944 = vpop.f32.mrf.mxu0
        %v2945 = vadd.f32 %v2856, %v2944
        %2946 = vmatmul.bf16.gmra.mxu0 %v2782
        %v2947 = vpop.f32.mrf.mxu0
        %v2948 = vadd.f32 %v2859, %v2947
        %v2949 = vpop.f32.mrf.mxu0
        %v2950 = vadd.f32 %v2861, %v2949
        %2951 = vmatmul.bf16.gmra.mxu0 %v2785
        %v2952 = vpop.f32.mrf.mxu0
        %v2953 = vadd.f32 %v2864, %v2952
        %v2954 = vpop.f32.mrf.mxu0
        %v2955 = vadd.f32 %v2866, %v2954
        %2956 = vmatmul.bf16.gmra.mxu0 %v2788
        %v2957 = vpop.f32.mrf.mxu0
        %v2958 = vadd.f32 %v2869, %v2957
        %v2959 = vpop.f32.mrf.mxu0
        %v2960 = vadd.f32 %v2871, %v2959
        %2961 = vmatmul.bf16.gmra.mxu0 %v2791
        %v2962 = vpop.f32.mrf.mxu0
        %v2963 = vadd.f32 %v2874, %v2962
        %v2964 = vpop.f32.mrf.mxu0
        %v2965 = vadd.f32 %v2876, %v2964
        %2966 = vmatmul.bf16.gmra.mxu0 %v2794
        %v2967 = vpop.f32.mrf.mxu0
        %v2968 = vadd.f32 %v2879, %v2967
        %v2969 = vpop.f32.mrf.mxu0
        %v2970 = vadd.f32 %v2881, %v2969
        %2971 = vmatmul.bf16.gmra.mxu0 %v2797
        %v2972 = vpop.f32.mrf.mxu0
        %v2973 = vadd.f32 %v2884, %v2972
        %v2974 = vpop.f32.mrf.mxu0
        %v2975 = vadd.f32 %v2886, %v2974
        %2976 = vdwg.mxu0
        %2977 = vmatpush.bf16.msra.mxu0 %v2668
        %2978 = vmatpush.bf16.msra.mxu0 %v2664
        %2979 = vmatpush.bf16.msra.mxu0 %v2660
        %2980 = vmatpush.bf16.msra.mxu0 %v2656
        %2981 = vmatpush.bf16.msra.mxu0 %v2652
        %2982 = vmatpush.bf16.msra.mxu0 %v2648
        %2983 = vmatpush.bf16.msra.mxu0 %v2644
        %2984 = vmatpush.bf16.msra.mxu0 %v2640
        %2985 = vmatmul.bf16.gmra.mxu0 %v2212
        %v2986 = vpop.f32.mrf.mxu0
        %v2987 = vadd.f32 0.0, %v2986
        %v2988 = vpop.f32.mrf.mxu0
        %v2989 = vadd.f32 0.0, %v2988
        %2990 = vmatmul.bf16.gmra.mxu0 %v2232
        %v2991 = vpop.f32.mrf.mxu0
        %v2992 = vadd.f32 0.0, %v2991
        %v2993 = vpop.f32.mrf.mxu0
        %v2994 = vadd.f32 0.0, %v2993
        %2995 = vmatmul.bf16.gmra.mxu0 %v2248
        %v2996 = vpop.f32.mrf.mxu0
        %v2997 = vadd.f32 0.0, %v2996
        %v2998 = vpop.f32.mrf.mxu0
        %v2999 = vadd.f32 0.0, %v2998
        %3000 = vmatmul.bf16.gmra.mxu0 %v2264
        %v3001 = vpop.f32.mrf.mxu0
        %v3002 = vadd.f32 0.0, %v3001
        %v3003 = vpop.f32.mrf.mxu0
        %v3004 = vadd.f32 0.0, %v3003
        %3005 = vmatmul.bf16.gmra.mxu0 %v2280
        %v3006 = vpop.f32.mrf.mxu0
        %v3007 = vadd.f32 0.0, %v3006
        %v3008 = vpop.f32.mrf.mxu0
        %v3009 = vadd.f32 0.0, %v3008
        %3010 = vmatmul.bf16.gmra.mxu0 %v2296
        %v3011 = vpop.f32.mrf.mxu0
        %v3012 = vadd.f32 0.0, %v3011
        %v3013 = vpop.f32.mrf.mxu0
        %v3014 = vadd.f32 0.0, %v3013
        %3015 = vmatmul.bf16.gmra.mxu0 %v2312
        %v3016 = vpop.f32.mrf.mxu0
        %v3017 = vadd.f32 0.0, %v3016
        %v3018 = vpop.f32.mrf.mxu0
        %v3019 = vadd.f32 0.0, %v3018
        %3020 = vmatmul.bf16.gmra.mxu0 %v2328
        %v3021 = vpop.f32.mrf.mxu0
        %v3022 = vadd.f32 0.0, %v3021
        %v3023 = vpop.f32.mrf.mxu0
        %v3024 = vadd.f32 0.0, %v3023
        %3025 = vmatmul.bf16.gmra.mxu0 %v2344
        %v3026 = vpop.f32.mrf.mxu0
        %v3027 = vadd.f32 0.0, %v3026
        %v3028 = vpop.f32.mrf.mxu0
        %v3029 = vadd.f32 0.0, %v3028
        %3030 = vmatmul.bf16.gmra.mxu0 %v2360
        %v3031 = vpop.f32.mrf.mxu0
        %v3032 = vadd.f32 0.0, %v3031
        %v3033 = vpop.f32.mrf.mxu0
        %v3034 = vadd.f32 0.0, %v3033
        %3035 = vmatmul.bf16.gmra.mxu0 %v2376
        %v3036 = vpop.f32.mrf.mxu0
        %v3037 = vadd.f32 0.0, %v3036
        %v3038 = vpop.f32.mrf.mxu0
        %v3039 = vadd.f32 0.0, %v3038
        %3040 = vmatmul.bf16.gmra.mxu0 %v2392
        %v3041 = vpop.f32.mrf.mxu0
        %v3042 = vadd.f32 0.0, %v3041
        %v3043 = vpop.f32.mrf.mxu0
        %v3044 = vadd.f32 0.0, %v3043
        %3045 = vmatmul.bf16.gmra.mxu0 %v2408
        %v3046 = vpop.f32.mrf.mxu0
        %v3047 = vadd.f32 0.0, %v3046
        %v3048 = vpop.f32.mrf.mxu0
        %v3049 = vadd.f32 0.0, %v3048
        %3050 = vmatmul.bf16.gmra.mxu0 %v2424
        %v3051 = vpop.f32.mrf.mxu0
        %v3052 = vadd.f32 0.0, %v3051
        %v3053 = vpop.f32.mrf.mxu0
        %v3054 = vadd.f32 0.0, %v3053
        %3055 = vmatmul.bf16.gmra.mxu0 %v2440
        %v3056 = vpop.f32.mrf.mxu0
        %v3057 = vadd.f32 0.0, %v3056
        %v3058 = vpop.f32.mrf.mxu0
        %v3059 = vadd.f32 0.0, %v3058
        %3060 = vmatmul.bf16.gmra.mxu0 %v2451
        %v3061 = vpop.f32.mrf.mxu0
        %v3062 = vadd.f32 0.0, %v3061
        %v3063 = vpop.f32.mrf.mxu0
        %v3064 = vadd.f32 0.0, %v3063
        %3065 = vdwg.mxu0
        %3066 = vmatpush.bf16.msra.mxu0 0
        %3067 = vmatpush.bf16.msra.mxu0 0
        %3068 = vmatpush.bf16.msra.mxu0 %v2692
        %3069 = vmatpush.bf16.msra.mxu0 %v2688
        %3070 = vmatpush.bf16.msra.mxu0 %v2684
        %3071 = vmatpush.bf16.msra.mxu0 %v2680
        %3072 = vmatpush.bf16.msra.mxu0 %v2676
        %3073 = vmatpush.bf16.msra.mxu0 %v2672
        %3074 = vmatmul.bf16.gmra.mxu0 %v2752
        %v3075 = vpop.f32.mrf.mxu0
        %v3076 = vadd.f32 %v2987, %v3075
        %v3077 = vpop.f32.mrf.mxu0
        %v3078 = vadd.f32 %v2989, %v3077
        %3079 = vmatmul.bf16.gmra.mxu0 %v2755
        %v3080 = vpop.f32.mrf.mxu0
        %v3081 = vadd.f32 %v2992, %v3080
        %v3082 = vpop.f32.mrf.mxu0
        %v3083 = vadd.f32 %v2994, %v3082
        %3084 = vmatmul.bf16.gmra.mxu0 %v2758
        %v3085 = vpop.f32.mrf.mxu0
        %v3086 = vadd.f32 %v2997, %v3085
        %v3087 = vpop.f32.mrf.mxu0
        %v3088 = vadd.f32 %v2999, %v3087
        %3089 = vmatmul.bf16.gmra.mxu0 %v2761
        %v3090 = vpop.f32.mrf.mxu0
        %v3091 = vadd.f32 %v3002, %v3090
        %v3092 = vpop.f32.mrf.mxu0
        %v3093 = vadd.f32 %v3004, %v3092
        %3094 = vmatmul.bf16.gmra.mxu0 %v2764
        %v3095 = vpop.f32.mrf.mxu0
        %v3096 = vadd.f32 %v3007, %v3095
        %v3097 = vpop.f32.mrf.mxu0
        %v3098 = vadd.f32 %v3009, %v3097
        %3099 = vmatmul.bf16.gmra.mxu0 %v2767
        %v3100 = vpop.f32.mrf.mxu0
        %v3101 = vadd.f32 %v3012, %v3100
        %v3102 = vpop.f32.mrf.mxu0
        %v3103 = vadd.f32 %v3014, %v3102
        %3104 = vmatmul.bf16.gmra.mxu0 %v2770
        %v3105 = vpop.f32.mrf.mxu0
        %v3106 = vadd.f32 %v3017, %v3105
        %v3107 = vpop.f32.mrf.mxu0
        %v3108 = vadd.f32 %v3019, %v3107
        %3109 = vmatmul.bf16.gmra.mxu0 %v2773
        %v3110 = vpop.f32.mrf.mxu0
        %v3111 = vadd.f32 %v3022, %v3110
        %v3112 = vpop.f32.mrf.mxu0
        %v3113 = vadd.f32 %v3024, %v3112
        %3114 = vmatmul.bf16.gmra.mxu0 %v2776
        %v3115 = vpop.f32.mrf.mxu0
        %v3116 = vadd.f32 %v3027, %v3115
        %v3117 = vpop.f32.mrf.mxu0
        %v3118 = vadd.f32 %v3029, %v3117
        %3119 = vmatmul.bf16.gmra.mxu0 %v2779
        %v3120 = vpop.f32.mrf.mxu0
        %v3121 = vadd.f32 %v3032, %v3120
        %v3122 = vpop.f32.mrf.mxu0
        %v3123 = vadd.f32 %v3034, %v3122
        %3124 = vmatmul.bf16.gmra.mxu0 %v2782
        %v3125 = vpop.f32.mrf.mxu0
        %v3126 = vadd.f32 %v3037, %v3125
        %v3127 = vpop.f32.mrf.mxu0
        %v3128 = vadd.f32 %v3039, %v3127
        %3129 = vmatmul.bf16.gmra.mxu0 %v2785
        %v3130 = vpop.f32.mrf.mxu0
        %v3131 = vadd.f32 %v3042, %v3130
        %v3132 = vpop.f32.mrf.mxu0
        %v3133 = vadd.f32 %v3044, %v3132
        %3134 = vmatmul.bf16.gmra.mxu0 %v2788
        %v3135 = vpop.f32.mrf.mxu0
        %v3136 = vadd.f32 %v3047, %v3135
        %v3137 = vpop.f32.mrf.mxu0
        %v3138 = vadd.f32 %v3049, %v3137
        %3139 = vmatmul.bf16.gmra.mxu0 %v2791
        %v3140 = vpop.f32.mrf.mxu0
        %v3141 = vadd.f32 %v3052, %v3140
        %v3142 = vpop.f32.mrf.mxu0
        %v3143 = vadd.f32 %v3054, %v3142
        %3144 = vmatmul.bf16.gmra.mxu0 %v2794
        %v3145 = vpop.f32.mrf.mxu0
        %v3146 = vadd.f32 %v3057, %v3145
        %v3147 = vpop.f32.mrf.mxu0
        %v3148 = vadd.f32 %v3059, %v3147
        %3149 = vmatmul.bf16.gmra.mxu0 %v2797
        %v3150 = vpop.f32.mrf.mxu0
        %v3151 = vadd.f32 %v3062, %v3150
        %v3152 = vpop.f32.mrf.mxu0
        %v3153 = vadd.f32 %v3064, %v3152
        %3154 = vdwg.mxu0
        %3155 = vmatpush.bf16.msra.mxu0 %v2669
        %3156 = vmatpush.bf16.msra.mxu0 %v2665
        %3157 = vmatpush.bf16.msra.mxu0 %v2661
        %3158 = vmatpush.bf16.msra.mxu0 %v2657
        %3159 = vmatpush.bf16.msra.mxu0 %v2653
        %3160 = vmatpush.bf16.msra.mxu0 %v2649
        %3161 = vmatpush.bf16.msra.mxu0 %v2645
        %3162 = vmatpush.bf16.msra.mxu0 %v2641
        %3163 = vmatmul.bf16.gmra.mxu0 %v2212
        %v3164 = vpop.f32.mrf.mxu0
        %v3165 = vadd.f32 0.0, %v3164
        %v3166 = vpop.f32.mrf.mxu0
        %v3167 = vadd.f32 0.0, %v3166
        %3168 = vmatmul.bf16.gmra.mxu0 %v2232
        %v3169 = vpop.f32.mrf.mxu0
        %v3170 = vadd.f32 0.0, %v3169
        %v3171 = vpop.f32.mrf.mxu0
        %v3172 = vadd.f32 0.0, %v3171
        %3173 = vmatmul.bf16.gmra.mxu0 %v2248
        %v3174 = vpop.f32.mrf.mxu0
        %v3175 = vadd.f32 0.0, %v3174
        %v3176 = vpop.f32.mrf.mxu0
        %v3177 = vadd.f32 0.0, %v3176
        %3178 = vmatmul.bf16.gmra.mxu0 %v2264
        %v3179 = vpop.f32.mrf.mxu0
        %v3180 = vadd.f32 0.0, %v3179
        %v3181 = vpop.f32.mrf.mxu0
        %v3182 = vadd.f32 0.0, %v3181
        %3183 = vmatmul.bf16.gmra.mxu0 %v2280
        %v3184 = vpop.f32.mrf.mxu0
        %v3185 = vadd.f32 0.0, %v3184
        %v3186 = vpop.f32.mrf.mxu0
        %v3187 = vadd.f32 0.0, %v3186
        %3188 = vmatmul.bf16.gmra.mxu0 %v2296
        %v3189 = vpop.f32.mrf.mxu0
        %v3190 = vadd.f32 0.0, %v3189
        %v3191 = vpop.f32.mrf.mxu0
        %v3192 = vadd.f32 0.0, %v3191
        %3193 = vmatmul.bf16.gmra.mxu0 %v2312
        %v3194 = vpop.f32.mrf.mxu0
        %v3195 = vadd.f32 0.0, %v3194
        %v3196 = vpop.f32.mrf.mxu0
        %v3197 = vadd.f32 0.0, %v3196
        %3198 = vmatmul.bf16.gmra.mxu0 %v2328
        %v3199 = vpop.f32.mrf.mxu0
        %v3200 = vadd.f32 0.0, %v3199
        %v3201 = vpop.f32.mrf.mxu0
        %v3202 = vadd.f32 0.0, %v3201
        %3203 = vmatmul.bf16.gmra.mxu0 %v2344
        %v3204 = vpop.f32.mrf.mxu0
        %v3205 = vadd.f32 0.0, %v3204
        %v3206 = vpop.f32.mrf.mxu0
        %v3207 = vadd.f32 0.0, %v3206
        %3208 = vmatmul.bf16.gmra.mxu0 %v2360
        %v3209 = vpop.f32.mrf.mxu0
        %v3210 = vadd.f32 0.0, %v3209
        %v3211 = vpop.f32.mrf.mxu0
        %v3212 = vadd.f32 0.0, %v3211
        %3213 = vmatmul.bf16.gmra.mxu0 %v2376
        %v3214 = vpop.f32.mrf.mxu0
        %v3215 = vadd.f32 0.0, %v3214
        %v3216 = vpop.f32.mrf.mxu0
        %v3217 = vadd.f32 0.0, %v3216
        %3218 = vmatmul.bf16.gmra.mxu0 %v2392
        %v3219 = vpop.f32.mrf.mxu0
        %v3220 = vadd.f32 0.0, %v3219
        %v3221 = vpop.f32.mrf.mxu0
        %v3222 = vadd.f32 0.0, %v3221
        %3223 = vmatmul.bf16.gmra.mxu0 %v2408
        %v3224 = vpop.f32.mrf.mxu0
        %v3225 = vadd.f32 0.0, %v3224
        %v3226 = vpop.f32.mrf.mxu0
        %v3227 = vadd.f32 0.0, %v3226
        %3228 = vmatmul.bf16.gmra.mxu0 %v2424
        %v3229 = vpop.f32.mrf.mxu0
        %v3230 = vadd.f32 0.0, %v3229
        %v3231 = vpop.f32.mrf.mxu0
        %v3232 = vadd.f32 0.0, %v3231
        %3233 = vmatmul.bf16.gmra.mxu0 %v2440
        %v3234 = vpop.f32.mrf.mxu0
        %v3235 = vadd.f32 0.0, %v3234
        %v3236 = vpop.f32.mrf.mxu0
        %v3237 = vadd.f32 0.0, %v3236
        %3238 = vmatmul.bf16.gmra.mxu0 %v2451
        %v3239 = vpop.f32.mrf.mxu0
        %v3240 = vadd.f32 0.0, %v3239
        %v3241 = vpop.f32.mrf.mxu0
        %v3242 = vadd.f32 0.0, %v3241
        %3243 = vdwg.mxu0
        %3244 = vmatpush.bf16.msra.mxu0 0
        %3245 = vmatpush.bf16.msra.mxu0 0
        %3246 = vmatpush.bf16.msra.mxu0 %v2693
        %3247 = vmatpush.bf16.msra.mxu0 %v2689
        %3248 = vmatpush.bf16.msra.mxu0 %v2685
        %3249 = vmatpush.bf16.msra.mxu0 %v2681
        %3250 = vmatpush.bf16.msra.mxu0 %v2677
        %3251 = vmatpush.bf16.msra.mxu0 %v2673
        %3252 = vmatmul.bf16.gmra.mxu0 %v2752
        %v3253 = vpop.f32.mrf.mxu0
        %v3254 = vadd.f32 %v3165, %v3253
        %v3255 = vpop.f32.mrf.mxu0
        %v3256 = vadd.f32 %v3167, %v3255
        %3257 = vmatmul.bf16.gmra.mxu0 %v2755
        %v3258 = vpop.f32.mrf.mxu0
        %v3259 = vadd.f32 %v3170, %v3258
        %v3260 = vpop.f32.mrf.mxu0
        %v3261 = vadd.f32 %v3172, %v3260
        %3262 = vmatmul.bf16.gmra.mxu0 %v2758
        %v3263 = vpop.f32.mrf.mxu0
        %v3264 = vadd.f32 %v3175, %v3263
        %v3265 = vpop.f32.mrf.mxu0
        %v3266 = vadd.f32 %v3177, %v3265
        %3267 = vmatmul.bf16.gmra.mxu0 %v2761
        %v3268 = vpop.f32.mrf.mxu0
        %v3269 = vadd.f32 %v3180, %v3268
        %v3270 = vpop.f32.mrf.mxu0
        %v3271 = vadd.f32 %v3182, %v3270
        %3272 = vmatmul.bf16.gmra.mxu0 %v2764
        %v3273 = vpop.f32.mrf.mxu0
        %v3274 = vadd.f32 %v3185, %v3273
        %v3275 = vpop.f32.mrf.mxu0
        %v3276 = vadd.f32 %v3187, %v3275
        %3277 = vmatmul.bf16.gmra.mxu0 %v2767
        %v3278 = vpop.f32.mrf.mxu0
        %v3279 = vadd.f32 %v3190, %v3278
        %v3280 = vpop.f32.mrf.mxu0
        %v3281 = vadd.f32 %v3192, %v3280
        %3282 = vmatmul.bf16.gmra.mxu0 %v2770
        %v3283 = vpop.f32.mrf.mxu0
        %v3284 = vadd.f32 %v3195, %v3283
        %v3285 = vpop.f32.mrf.mxu0
        %v3286 = vadd.f32 %v3197, %v3285
        %3287 = vmatmul.bf16.gmra.mxu0 %v2773
        %v3288 = vpop.f32.mrf.mxu0
        %v3289 = vadd.f32 %v3200, %v3288
        %v3290 = vpop.f32.mrf.mxu0
        %v3291 = vadd.f32 %v3202, %v3290
        %3292 = vmatmul.bf16.gmra.mxu0 %v2776
        %v3293 = vpop.f32.mrf.mxu0
        %v3294 = vadd.f32 %v3205, %v3293
        %v3295 = vpop.f32.mrf.mxu0
        %v3296 = vadd.f32 %v3207, %v3295
        %3297 = vmatmul.bf16.gmra.mxu0 %v2779
        %v3298 = vpop.f32.mrf.mxu0
        %v3299 = vadd.f32 %v3210, %v3298
        %v3300 = vpop.f32.mrf.mxu0
        %v3301 = vadd.f32 %v3212, %v3300
        %3302 = vmatmul.bf16.gmra.mxu0 %v2782
        %v3303 = vpop.f32.mrf.mxu0
        %v3304 = vadd.f32 %v3215, %v3303
        %v3305 = vpop.f32.mrf.mxu0
        %v3306 = vadd.f32 %v3217, %v3305
        %3307 = vmatmul.bf16.gmra.mxu0 %v2785
        %v3308 = vpop.f32.mrf.mxu0
        %v3309 = vadd.f32 %v3220, %v3308
        %v3310 = vpop.f32.mrf.mxu0
        %v3311 = vadd.f32 %v3222, %v3310
        %3312 = vmatmul.bf16.gmra.mxu0 %v2788
        %v3313 = vpop.f32.mrf.mxu0
        %v3314 = vadd.f32 %v3225, %v3313
        %v3315 = vpop.f32.mrf.mxu0
        %v3316 = vadd.f32 %v3227, %v3315
        %3317 = vmatmul.bf16.gmra.mxu0 %v2791
        %v3318 = vpop.f32.mrf.mxu0
        %v3319 = vadd.f32 %v3230, %v3318
        %v3320 = vpop.f32.mrf.mxu0
        %v3321 = vadd.f32 %v3232, %v3320
        %3322 = vmatmul.bf16.gmra.mxu0 %v2794
        %v3323 = vpop.f32.mrf.mxu0
        %v3324 = vadd.f32 %v3235, %v3323
        %v3325 = vpop.f32.mrf.mxu0
        %v3326 = vadd.f32 %v3237, %v3325
        %3327 = vmatmul.bf16.gmra.mxu0 %v2797
        %v3328 = vpop.f32.mrf.mxu0
        %v3329 = vadd.f32 %v3240, %v3328
        %v3330 = vpop.f32.mrf.mxu0
        %v3331 = vadd.f32 %v3242, %v3330
        %3332 = vdwg.mxu0
        %3333 = vmatpush.bf16.msra.mxu0 %v2670
        %3334 = vmatpush.bf16.msra.mxu0 %v2666
        %3335 = vmatpush.bf16.msra.mxu0 %v2662
        %3336 = vmatpush.bf16.msra.mxu0 %v2658
        %3337 = vmatpush.bf16.msra.mxu0 %v2654
        %3338 = vmatpush.bf16.msra.mxu0 %v2650
        %3339 = vmatpush.bf16.msra.mxu0 %v2646
        %3340 = vmatpush.bf16.msra.mxu0 %v2642
        %3341 = vmatmul.bf16.gmra.mxu0 %v2212
        %v3342 = vpop.f32.mrf.mxu0
        %v3343 = vadd.f32 0.0, %v3342
        %v3344 = vpop.f32.mrf.mxu0
        %v3345 = vadd.f32 0.0, %v3344
        %3346 = vmatmul.bf16.gmra.mxu0 %v2232
        %v3347 = vpop.f32.mrf.mxu0
        %v3348 = vadd.f32 0.0, %v3347
        %v3349 = vpop.f32.mrf.mxu0
        %v3350 = vadd.f32 0.0, %v3349
        %3351 = vmatmul.bf16.gmra.mxu0 %v2248
        %v3352 = vpop.f32.mrf.mxu0
        %v3353 = vadd.f32 0.0, %v3352
        %v3354 = vpop.f32.mrf.mxu0
        %v3355 = vadd.f32 0.0, %v3354
        %3356 = vmatmul.bf16.gmra.mxu0 %v2264
        %v3357 = vpop.f32.mrf.mxu0
        %v3358 = vadd.f32 0.0, %v3357
        %v3359 = vpop.f32.mrf.mxu0
        %v3360 = vadd.f32 0.0, %v3359
        %3361 = vmatmul.bf16.gmra.mxu0 %v2280
        %v3362 = vpop.f32.mrf.mxu0
        %v3363 = vadd.f32 0.0, %v3362
        %v3364 = vpop.f32.mrf.mxu0
        %v3365 = vadd.f32 0.0, %v3364
        %3366 = vmatmul.bf16.gmra.mxu0 %v2296
        %v3367 = vpop.f32.mrf.mxu0
        %v3368 = vadd.f32 0.0, %v3367
        %v3369 = vpop.f32.mrf.mxu0
        %v3370 = vadd.f32 0.0, %v3369
        %3371 = vmatmul.bf16.gmra.mxu0 %v2312
        %v3372 = vpop.f32.mrf.mxu0
        %v3373 = vadd.f32 0.0, %v3372
        %v3374 = vpop.f32.mrf.mxu0
        %v3375 = vadd.f32 0.0, %v3374
        %3376 = vmatmul.bf16.gmra.mxu0 %v2328
        %v3377 = vpop.f32.mrf.mxu0
        %v3378 = vadd.f32 0.0, %v3377
        %v3379 = vpop.f32.mrf.mxu0
        %v3380 = vadd.f32 0.0, %v3379
        %3381 = vmatmul.bf16.gmra.mxu0 %v2344
        %v3382 = vpop.f32.mrf.mxu0
        %v3383 = vadd.f32 0.0, %v3382
        %v3384 = vpop.f32.mrf.mxu0
        %v3385 = vadd.f32 0.0, %v3384
        %3386 = vmatmul.bf16.gmra.mxu0 %v2360
        %v3387 = vpop.f32.mrf.mxu0
        %v3388 = vadd.f32 0.0, %v3387
        %v3389 = vpop.f32.mrf.mxu0
        %v3390 = vadd.f32 0.0, %v3389
        %3391 = vmatmul.bf16.gmra.mxu0 %v2376
        %v3392 = vpop.f32.mrf.mxu0
        %v3393 = vadd.f32 0.0, %v3392
        %v3394 = vpop.f32.mrf.mxu0
        %v3395 = vadd.f32 0.0, %v3394
        %3396 = vmatmul.bf16.gmra.mxu0 %v2392
        %v3397 = vpop.f32.mrf.mxu0
        %v3398 = vadd.f32 0.0, %v3397
        %v3399 = vpop.f32.mrf.mxu0
        %v3400 = vadd.f32 0.0, %v3399
        %3401 = vmatmul.bf16.gmra.mxu0 %v2408
        %v3402 = vpop.f32.mrf.mxu0
        %v3403 = vadd.f32 0.0, %v3402
        %v3404 = vpop.f32.mrf.mxu0
        %v3405 = vadd.f32 0.0, %v3404
        %3406 = vmatmul.bf16.gmra.mxu0 %v2424
        %v3407 = vpop.f32.mrf.mxu0
        %v3408 = vadd.f32 0.0, %v3407
        %v3409 = vpop.f32.mrf.mxu0
        %v3410 = vadd.f32 0.0, %v3409
        %3411 = vmatmul.bf16.gmra.mxu0 %v2440
        %v3412 = vpop.f32.mrf.mxu0
        %v3413 = vadd.f32 0.0, %v3412
        %v3414 = vpop.f32.mrf.mxu0
        %v3415 = vadd.f32 0.0, %v3414
        %3416 = vmatmul.bf16.gmra.mxu0 %v2451
        %v3417 = vpop.f32.mrf.mxu0
        %v3418 = vadd.f32 0.0, %v3417
        %v3419 = vpop.f32.mrf.mxu0
        %v3420 = vadd.f32 0.0, %v3419
        %3421 = vdwg.mxu0
        %3422 = vmatpush.bf16.msra.mxu0 0
        %3423 = vmatpush.bf16.msra.mxu0 0
        %3424 = vmatpush.bf16.msra.mxu0 %v2694
        %3425 = vmatpush.bf16.msra.mxu0 %v2690
        %3426 = vmatpush.bf16.msra.mxu0 %v2686
        %3427 = vmatpush.bf16.msra.mxu0 %v2682
        %3428 = vmatpush.bf16.msra.mxu0 %v2678
        %3429 = vmatpush.bf16.msra.mxu0 %v2674
        %3430 = vmatmul.bf16.gmra.mxu0 %v2752
        %v3431 = vpop.f32.mrf.mxu0
        %v3432 = vadd.f32 %v3343, %v3431
        %v3433 = vpop.f32.mrf.mxu0
        %v3434 = vadd.f32 %v3345, %v3433
        %3435 = vmatmul.bf16.gmra.mxu0 %v2755
        %v3436 = vpop.f32.mrf.mxu0
        %v3437 = vadd.f32 %v3348, %v3436
        %v3438 = vpop.f32.mrf.mxu0
        %v3439 = vadd.f32 %v3350, %v3438
        %3440 = vmatmul.bf16.gmra.mxu0 %v2758
        %v3441 = vpop.f32.mrf.mxu0
        %v3442 = vadd.f32 %v3353, %v3441
        %v3443 = vpop.f32.mrf.mxu0
        %v3444 = vadd.f32 %v3355, %v3443
        %3445 = vmatmul.bf16.gmra.mxu0 %v2761
        %v3446 = vpop.f32.mrf.mxu0
        %v3447 = vadd.f32 %v3358, %v3446
        %v3448 = vpop.f32.mrf.mxu0
        %v3449 = vadd.f32 %v3360, %v3448
        %3450 = vmatmul.bf16.gmra.mxu0 %v2764
        %v3451 = vpop.f32.mrf.mxu0
        %v3452 = vadd.f32 %v3363, %v3451
        %v3453 = vpop.f32.mrf.mxu0
        %v3454 = vadd.f32 %v3365, %v3453
        %3455 = vmatmul.bf16.gmra.mxu0 %v2767
        %v3456 = vpop.f32.mrf.mxu0
        %v3457 = vadd.f32 %v3368, %v3456
        %v3458 = vpop.f32.mrf.mxu0
        %v3459 = vadd.f32 %v3370, %v3458
        %3460 = vmatmul.bf16.gmra.mxu0 %v2770
        %v3461 = vpop.f32.mrf.mxu0
        %v3462 = vadd.f32 %v3373, %v3461
        %v3463 = vpop.f32.mrf.mxu0
        %v3464 = vadd.f32 %v3375, %v3463
        %3465 = vmatmul.bf16.gmra.mxu0 %v2773
        %v3466 = vpop.f32.mrf.mxu0
        %v3467 = vadd.f32 %v3378, %v3466
        %v3468 = vpop.f32.mrf.mxu0
        %v3469 = vadd.f32 %v3380, %v3468
        %3470 = vmatmul.bf16.gmra.mxu0 %v2776
        %v3471 = vpop.f32.mrf.mxu0
        %v3472 = vadd.f32 %v3383, %v3471
        %v3473 = vpop.f32.mrf.mxu0
        %v3474 = vadd.f32 %v3385, %v3473
        %3475 = vmatmul.bf16.gmra.mxu0 %v2779
        %v3476 = vpop.f32.mrf.mxu0
        %v3477 = vadd.f32 %v3388, %v3476
        %v3478 = vpop.f32.mrf.mxu0
        %v3479 = vadd.f32 %v3390, %v3478
        %3480 = vmatmul.bf16.gmra.mxu0 %v2782
        %v3481 = vpop.f32.mrf.mxu0
        %v3482 = vadd.f32 %v3393, %v3481
        %v3483 = vpop.f32.mrf.mxu0
        %v3484 = vadd.f32 %v3395, %v3483
        %3485 = vmatmul.bf16.gmra.mxu0 %v2785
        %v3486 = vpop.f32.mrf.mxu0
        %v3487 = vadd.f32 %v3398, %v3486
        %v3488 = vpop.f32.mrf.mxu0
        %v3489 = vadd.f32 %v3400, %v3488
        %3490 = vmatmul.bf16.gmra.mxu0 %v2788
        %v3491 = vpop.f32.mrf.mxu0
        %v3492 = vadd.f32 %v3403, %v3491
        %v3493 = vpop.f32.mrf.mxu0
        %v3494 = vadd.f32 %v3405, %v3493
        %3495 = vmatmul.bf16.gmra.mxu0 %v2791
        %v3496 = vpop.f32.mrf.mxu0
        %v3497 = vadd.f32 %v3408, %v3496
        %v3498 = vpop.f32.mrf.mxu0
        %v3499 = vadd.f32 %v3410, %v3498
        %3500 = vmatmul.bf16.gmra.mxu0 %v2794
        %v3501 = vpop.f32.mrf.mxu0
        %v3502 = vadd.f32 %v3413, %v3501
        %v3503 = vpop.f32.mrf.mxu0
        %v3504 = vadd.f32 %v3415, %v3503
        %3505 = vmatmul.bf16.gmra.mxu0 %v2797
        %v3506 = vpop.f32.mrf.mxu0
        %v3507 = vadd.f32 %v3418, %v3506
        %v3508 = vpop.f32.mrf.mxu0
        %v3509 = vadd.f32 %v3420, %v3508
        %3510 = vdwg.mxu0
        %v3567 = vunpack.c.l.b16 %v2079
        %v3568 = vunpack.c.h.b16 %v2079
        %v3569 = vunpack.c.l.b16 %v2080
        %v3570 = vunpack.c.h.b16 %v2080
        %v3571 = vunpack.c.l.b16 %v2081
        %v3572 = vunpack.c.h.b16 %v2081
        %v3573 = vunpack.c.l.b16 %v2082
        %v3574 = vunpack.c.h.b16 %v2082
        %v3575 = vunpack.c.l.b16 %v2083
        %v3576 = vunpack.c.h.b16 %v2083
        %v3577 = vunpack.c.l.b16 %v2084
        %v3578 = vunpack.c.h.b16 %v2084
        %v3579 = vunpack.c.l.b16 %v2085
        %v3580 = vunpack.c.h.b16 %v2085
        %v3581 = vunpack.c.l.b16 %v2086
        %v3582 = vunpack.c.h.b16 %v2086
        %v3583 = vunpack.c.l.b16 %v2087
        %v3584 = vunpack.c.h.b16 %v2087
        %v3585 = vunpack.c.l.b16 %v2088
        %v3586 = vunpack.c.h.b16 %v2088
        %v3587 = vunpack.c.l.b16 %v2089
        %v3588 = vunpack.c.h.b16 %v2089
        %v3589 = vunpack.c.l.b16 %v2090
        %v3590 = vunpack.c.h.b16 %v2090
        %v3591 = vunpack.c.l.b16 %v2091
        %v3592 = vunpack.c.h.b16 %v2091
        %v3593 = vunpack.c.l.b16 %v2092
        %v3594 = vunpack.c.h.b16 %v2092
        %v3595 = vunpack.c.l.b16 %v2093
        %v3596 = vunpack.c.h.b16 %v2093
        %v3597 = vunpack.c.l.b16 %v2094
        %v3598 = vunpack.c.h.b16 %v2094
        %v3599 = vunpack.c.l.b16 %v2095
        %v3600 = vunpack.c.h.b16 %v2095
        %v3601 = vunpack.c.l.b16 %v2096
        %v3602 = vunpack.c.h.b16 %v2096
        %v3603 = vunpack.c.l.b16 %v2097
        %v3604 = vunpack.c.h.b16 %v2097
        %v3605 = vunpack.c.l.b16 %v2098
        %v3606 = vunpack.c.h.b16 %v2098
        %v3607 = vunpack.c.l.b16 %v2099
        %v3608 = vunpack.c.h.b16 %v2099
        %v3609 = vunpack.c.l.b16 %v2100
        %v3610 = vunpack.c.h.b16 %v2100
        %v3611 = vunpack.c.l.b16 %v2101
        %v3612 = vunpack.c.h.b16 %v2101
        %v3613 = vunpack.c.l.b16 %v2102
        %v3614 = vunpack.c.h.b16 %v2102
        %v3615 = vunpack.c.l.b16 %v2103
        %v3616 = vunpack.c.h.b16 %v2103
        %v3617 = vunpack.c.l.b16 %v2104
        %v3618 = vunpack.c.h.b16 %v2104
        %v3619 = vunpack.c.l.b16 %v2105
        %v3620 = vunpack.c.h.b16 %v2105
        %v3621 = vunpack.c.l.b16 %v2106
        %v3622 = vunpack.c.h.b16 %v2106
        %v3623 = vunpack.c.l.b16 %v2107
        %v3624 = vunpack.c.h.b16 %v2107
        %v3625 = vunpack.c.l.b16 %v2108
        %v3626 = vunpack.c.h.b16 %v2108
        %v3627 = vunpack.c.l.b16 %v2109
        %v3628 = vunpack.c.h.b16 %v2109
        %v3629 = vunpack.c.l.b16 %v2110
        %v3630 = vunpack.c.h.b16 %v2110
        %v3631 = vunpack.c.l.b16 %v2111
        %v3632 = vunpack.c.h.b16 %v2111
        %v3633 = vunpack.c.l.b16 %v2112
        %v3634 = vunpack.c.h.b16 %v2112
        %v3635 = vunpack.c.l.b16 %v2113
        %v3636 = vunpack.c.h.b16 %v2113
        %v3637 = vunpack.c.l.b16 %v2114
        %v3638 = vunpack.c.h.b16 %v2114
        %v3639 = vunpack.c.l.b16 %v2115
        %v3640 = vunpack.c.h.b16 %v2115
        %v3641 = vunpack.c.l.b16 %v2116
        %v3642 = vunpack.c.h.b16 %v2116
        %v3643 = vunpack.c.l.b16 %v2117
        %v3644 = vunpack.c.h.b16 %v2117
        %v3645 = vunpack.c.l.b16 %v2118
        %v3646 = vunpack.c.h.b16 %v2118
        %v3647 = vunpack.c.l.b16 %v2119
        %v3648 = vunpack.c.h.b16 %v2119
        %v3649 = vunpack.c.l.b16 %v2120
        %v3650 = vunpack.c.h.b16 %v2120
        %v3651 = vunpack.c.l.b16 %v2121
        %v3652 = vunpack.c.h.b16 %v2121
        %v3653 = vunpack.c.l.b16 %v2122
        %v3654 = vunpack.c.h.b16 %v2122
        %v3655 = vunpack.c.l.b16 %v2123
        %v3656 = vunpack.c.h.b16 %v2123
        %v3657 = vunpack.c.l.b16 %v2124
        %v3658 = vunpack.c.h.b16 %v2124
        %v3659 = vunpack.c.l.b16 %v2125
        %v3660 = vunpack.c.h.b16 %v2125
        %v3661 = vunpack.c.l.b16 %v2126
        %v3662 = vunpack.c.h.b16 %v2126
        %v3663 = vunpack.c.l.b16 %v2127
        %v3664 = vunpack.c.h.b16 %v2127
        %v3665 = vunpack.c.l.b16 %v2128
        %v3666 = vunpack.c.h.b16 %v2128
        %v3667 = vunpack.c.l.b16 %v2129
        %v3668 = vunpack.c.h.b16 %v2129
        %v3669 = vunpack.c.l.b16 %v2130
        %v3670 = vunpack.c.h.b16 %v2130
        %v3671 = vunpack.c.l.b16 %v2131
        %v3672 = vunpack.c.h.b16 %v2131
        %v3673 = vunpack.c.l.b16 %v2132
        %v3674 = vunpack.c.h.b16 %v2132
        %v3675 = vunpack.c.l.b16 %v2133
        %v3676 = vunpack.c.h.b16 %v2133
        %v3677 = vunpack.c.l.b16 %v2134
        %v3678 = vunpack.c.h.b16 %v2134
        %v3679 = vpack.c.b16 %v3571, %v3567
        %v3680 = vpack.c.b16 %v3572, %v3568
        %v3681 = vpack.c.b16 %v3573, %v3569
        %v3682 = vpack.c.b16 %v3574, %v3570
        %v3683 = vpack.c.b16 %v3579, %v3575
        %v3684 = vpack.c.b16 %v3580, %v3576
        %v3685 = vpack.c.b16 %v3581, %v3577
        %v3686 = vpack.c.b16 %v3582, %v3578
        %v3687 = vpack.c.b16 %v3587, %v3583
        %v3688 = vpack.c.b16 %v3588, %v3584
        %v3689 = vpack.c.b16 %v3589, %v3585
        %v3690 = vpack.c.b16 %v3590, %v3586
        %v3691 = vpack.c.b16 %v3595, %v3591
        %v3692 = vpack.c.b16 %v3596, %v3592
        %v3693 = vpack.c.b16 %v3597, %v3593
        %v3694 = vpack.c.b16 %v3598, %v3594
        %v3695 = vpack.c.b16 %v3603, %v3599
        %v3696 = vpack.c.b16 %v3604, %v3600
        %v3697 = vpack.c.b16 %v3605, %v3601
        %v3698 = vpack.c.b16 %v3606, %v3602
        %v3699 = vpack.c.b16 %v3611, %v3607
        %v3700 = vpack.c.b16 %v3612, %v3608
        %v3701 = vpack.c.b16 %v3613, %v3609
        %v3702 = vpack.c.b16 %v3614, %v3610
        %v3703 = vpack.c.b16 %v3619, %v3615
        %v3704 = vpack.c.b16 %v3620, %v3616
        %v3705 = vpack.c.b16 %v3621, %v3617
        %v3706 = vpack.c.b16 %v3622, %v3618
        %v3707 = vpack.c.b16 %v3627, %v3623
        %v3708 = vpack.c.b16 %v3628, %v3624
        %v3709 = vpack.c.b16 %v3629, %v3625
        %v3710 = vpack.c.b16 %v3630, %v3626
        %v3711 = vpack.c.b16 %v3635, %v3631
        %v3712 = vpack.c.b16 %v3636, %v3632
        %v3713 = vpack.c.b16 %v3637, %v3633
        %v3714 = vpack.c.b16 %v3638, %v3634
        %v3715 = vpack.c.b16 %v3643, %v3639
        %v3716 = vpack.c.b16 %v3644, %v3640
        %v3717 = vpack.c.b16 %v3645, %v3641
        %v3718 = vpack.c.b16 %v3646, %v3642
        %v3719 = vpack.c.b16 %v3651, %v3647
        %v3720 = vpack.c.b16 %v3652, %v3648
        %v3721 = vpack.c.b16 %v3653, %v3649
        %v3722 = vpack.c.b16 %v3654, %v3650
        %v3723 = vpack.c.b16 %v3659, %v3655
        %v3724 = vpack.c.b16 %v3660, %v3656
        %v3725 = vpack.c.b16 %v3661, %v3657
        %v3726 = vpack.c.b16 %v3662, %v3658
        %v3727 = vpack.c.b16 %v3667, %v3663
        %v3728 = vpack.c.b16 %v3668, %v3664
        %v3729 = vpack.c.b16 %v3669, %v3665
        %v3730 = vpack.c.b16 %v3670, %v3666
        %v3731 = vpack.c.b16 %v3675, %v3671
        %v3732 = vpack.c.b16 %v3676, %v3672
        %v3733 = vpack.c.b16 %v3677, %v3673
        %v3734 = vpack.c.b16 %v3678, %v3674
        %v3792 = vsel %vm1672, %v2048, 0
        %v3794 = vsel %vm1672, %v2050, 0
        %v3796 = vsel %vm1672, %v2052, 0
        %v3798 = vsel %vm1672, %v2054, 0
        %v3800 = vsel %vm1672, %v2056, 0
        %v3802 = vsel %vm1672, %v2058, 0
        %v3804 = vsel %vm1672, %v2060, 0
        %v3806 = vsel %vm1672, %v2062, 0
        %v3808 = vsel %vm1672, %v2064, 0
        %v3810 = vsel %vm1672, %v2066, 0
        %v3812 = vsel %vm1672, %v2068, 0
        %v3814 = vsel %vm1672, %v2070, 0
        %v3816 = vsel %vm1672, %v2072, 0
        %v3818 = vsel %vm1672, %v2074, 0
        %v3820 = vsel %vm1672, %v2076, 0
        %v3823 = vsel %vm1672, %v2078, 0
        %3825 = vmatpush.bf16.msra.mxu0 %v3707
        %3826 = vmatpush.bf16.msra.mxu0 %v3703
        %3827 = vmatpush.bf16.msra.mxu0 %v3699
        %3828 = vmatpush.bf16.msra.mxu0 %v3695
        %3829 = vmatpush.bf16.msra.mxu0 %v3691
        %3830 = vmatpush.bf16.msra.mxu0 %v3687
        %3831 = vmatpush.bf16.msra.mxu0 %v3683
        %3832 = vmatpush.bf16.msra.mxu0 %v3679
        %3833 = vmatmul.bf16.gmra.mxu0 %v2047
        %v3834 = vpop.f32.mrf.mxu0
        %v3835 = vadd.f32 %v2898, %v3834
        %v3836 = vpop.f32.mrf.mxu0
        %v3837 = vadd.f32 %v2900, %v3836
        %3838 = vmatmul.bf16.gmra.mxu0 %v2049
        %v3839 = vpop.f32.mrf.mxu0
        %v3840 = vadd.f32 %v2903, %v3839
        %v3841 = vpop.f32.mrf.mxu0
        %v3842 = vadd.f32 %v2905, %v3841
        %3843 = vmatmul.bf16.gmra.mxu0 %v2051
        %v3844 = vpop.f32.mrf.mxu0
        %v3845 = vadd.f32 %v2908, %v3844
        %v3846 = vpop.f32.mrf.mxu0
        %v3847 = vadd.f32 %v2910, %v3846
        %3848 = vmatmul.bf16.gmra.mxu0 %v2053
        %v3849 = vpop.f32.mrf.mxu0
        %v3850 = vadd.f32 %v2913, %v3849
        %v3851 = vpop.f32.mrf.mxu0
        %v3852 = vadd.f32 %v2915, %v3851
        %3853 = vmatmul.bf16.gmra.mxu0 %v2055
        %v3854 = vpop.f32.mrf.mxu0
        %v3855 = vadd.f32 %v2918, %v3854
        %v3856 = vpop.f32.mrf.mxu0
        %v3857 = vadd.f32 %v2920, %v3856
        %3858 = vmatmul.bf16.gmra.mxu0 %v2057
        %v3859 = vpop.f32.mrf.mxu0
        %v3860 = vadd.f32 %v2923, %v3859
        %v3861 = vpop.f32.mrf.mxu0
        %v3862 = vadd.f32 %v2925, %v3861
        %3863 = vmatmul.bf16.gmra.mxu0 %v2059
        %v3864 = vpop.f32.mrf.mxu0
        %v3865 = vadd.f32 %v2928, %v3864
        %v3866 = vpop.f32.mrf.mxu0
        %v3867 = vadd.f32 %v2930, %v3866
        %3868 = vmatmul.bf16.gmra.mxu0 %v2061
        %v3869 = vpop.f32.mrf.mxu0
        %v3870 = vadd.f32 %v2933, %v3869
        %v3871 = vpop.f32.mrf.mxu0
        %v3872 = vadd.f32 %v2935, %v3871
        %3873 = vmatmul.bf16.gmra.mxu0 %v2063
        %v3874 = vpop.f32.mrf.mxu0
        %v3875 = vadd.f32 %v2938, %v3874
        %v3876 = vpop.f32.mrf.mxu0
        %v3877 = vadd.f32 %v2940, %v3876
        %3878 = vmatmul.bf16.gmra.mxu0 %v2065
        %v3879 = vpop.f32.mrf.mxu0
        %v3880 = vadd.f32 %v2943, %v3879
        %v3881 = vpop.f32.mrf.mxu0
        %v3882 = vadd.f32 %v2945, %v3881
        %3883 = vmatmul.bf16.gmra.mxu0 %v2067
        %v3884 = vpop.f32.mrf.mxu0
        %v3885 = vadd.f32 %v2948, %v3884
        %v3886 = vpop.f32.mrf.mxu0
        %v3887 = vadd.f32 %v2950, %v3886
        %3888 = vmatmul.bf16.gmra.mxu0 %v2069
        %v3889 = vpop.f32.mrf.mxu0
        %v3890 = vadd.f32 %v2953, %v3889
        %v3891 = vpop.f32.mrf.mxu0
        %v3892 = vadd.f32 %v2955, %v3891
        %3893 = vmatmul.bf16.gmra.mxu0 %v2071
        %v3894 = vpop.f32.mrf.mxu0
        %v3895 = vadd.f32 %v2958, %v3894
        %v3896 = vpop.f32.mrf.mxu0
        %v3897 = vadd.f32 %v2960, %v3896
        %3898 = vmatmul.bf16.gmra.mxu0 %v2073
        %v3899 = vpop.f32.mrf.mxu0
        %v3900 = vadd.f32 %v2963, %v3899
        %v3901 = vpop.f32.mrf.mxu0
        %v3902 = vadd.f32 %v2965, %v3901
        %3903 = vmatmul.bf16.gmra.mxu0 %v2075
        %v3904 = vpop.f32.mrf.mxu0
        %v3905 = vadd.f32 %v2968, %v3904
        %v3906 = vpop.f32.mrf.mxu0
        %v3907 = vadd.f32 %v2970, %v3906
        %3908 = vmatmul.bf16.gmra.mxu0 %v2077
        %v3909 = vpop.f32.mrf.mxu0
        %v3910 = vadd.f32 %v2973, %v3909
        %v3911 = vpop.f32.mrf.mxu0
        %v3912 = vadd.f32 %v2975, %v3911
        %3913 = vdwg.mxu0
        %3914 = vmatpush.bf16.msra.mxu0 0
        %3915 = vmatpush.bf16.msra.mxu0 0
        %3916 = vmatpush.bf16.msra.mxu0 %v3731
        %3917 = vmatpush.bf16.msra.mxu0 %v3727
        %3918 = vmatpush.bf16.msra.mxu0 %v3723
        %3919 = vmatpush.bf16.msra.mxu0 %v3719
        %3920 = vmatpush.bf16.msra.mxu0 %v3715
        %3921 = vmatpush.bf16.msra.mxu0 %v3711
        %3922 = vmatmul.bf16.gmra.mxu0 %v3792
        %v3923 = vpop.f32.mrf.mxu0
        %v3924 = vadd.f32 %v3835, %v3923
        %v3925 = vpop.f32.mrf.mxu0
        %v3926 = vadd.f32 %v3837, %v3925
        %3927 = vmatmul.bf16.gmra.mxu0 %v3794
        %v3928 = vpop.f32.mrf.mxu0
        %v3929 = vadd.f32 %v3840, %v3928
        %v3930 = vpop.f32.mrf.mxu0
        %v3931 = vadd.f32 %v3842, %v3930
        %3932 = vmatmul.bf16.gmra.mxu0 %v3796
        %v3933 = vpop.f32.mrf.mxu0
        %v3934 = vadd.f32 %v3845, %v3933
        %v3935 = vpop.f32.mrf.mxu0
        %v3936 = vadd.f32 %v3847, %v3935
        %3937 = vmatmul.bf16.gmra.mxu0 %v3798
        %v3938 = vpop.f32.mrf.mxu0
        %v3939 = vadd.f32 %v3850, %v3938
        %v3940 = vpop.f32.mrf.mxu0
        %v3941 = vadd.f32 %v3852, %v3940
        %3942 = vmatmul.bf16.gmra.mxu0 %v3800
        %v3943 = vpop.f32.mrf.mxu0
        %v3944 = vadd.f32 %v3855, %v3943
        %v3945 = vpop.f32.mrf.mxu0
        %v3946 = vadd.f32 %v3857, %v3945
        %3947 = vmatmul.bf16.gmra.mxu0 %v3802
        %v3948 = vpop.f32.mrf.mxu0
        %v3949 = vadd.f32 %v3860, %v3948
        %v3950 = vpop.f32.mrf.mxu0
        %v3951 = vadd.f32 %v3862, %v3950
        %3952 = vmatmul.bf16.gmra.mxu0 %v3804
        %v3953 = vpop.f32.mrf.mxu0
        %v3954 = vadd.f32 %v3865, %v3953
        %v3955 = vpop.f32.mrf.mxu0
        %v3956 = vadd.f32 %v3867, %v3955
        %3957 = vmatmul.bf16.gmra.mxu0 %v3806
        %v3958 = vpop.f32.mrf.mxu0
        %v3959 = vadd.f32 %v3870, %v3958
        %v3960 = vpop.f32.mrf.mxu0
        %v3961 = vadd.f32 %v3872, %v3960
        %3962 = vmatmul.bf16.gmra.mxu0 %v3808
        %v3963 = vpop.f32.mrf.mxu0
        %v3964 = vadd.f32 %v3875, %v3963
        %v3965 = vpop.f32.mrf.mxu0
        %v3966 = vadd.f32 %v3877, %v3965
        %3967 = vmatmul.bf16.gmra.mxu0 %v3810
        %v3968 = vpop.f32.mrf.mxu0
        %v3969 = vadd.f32 %v3880, %v3968
        %v3970 = vpop.f32.mrf.mxu0
        %v3971 = vadd.f32 %v3882, %v3970
        %3972 = vmatmul.bf16.gmra.mxu0 %v3812
        %v3973 = vpop.f32.mrf.mxu0
        %v3974 = vadd.f32 %v3885, %v3973
        %v3975 = vpop.f32.mrf.mxu0
        %v3976 = vadd.f32 %v3887, %v3975
        %3977 = vmatmul.bf16.gmra.mxu0 %v3814
        %v3978 = vpop.f32.mrf.mxu0
        %v3979 = vadd.f32 %v3890, %v3978
        %v3980 = vpop.f32.mrf.mxu0
        %v3981 = vadd.f32 %v3892, %v3980
        %3982 = vmatmul.bf16.gmra.mxu0 %v3816
        %v3983 = vpop.f32.mrf.mxu0
        %v3984 = vadd.f32 %v3895, %v3983
        %v3985 = vpop.f32.mrf.mxu0
        %v3986 = vadd.f32 %v3897, %v3985
        %3987 = vmatmul.bf16.gmra.mxu0 %v3818
        %v3988 = vpop.f32.mrf.mxu0
        %v3989 = vadd.f32 %v3900, %v3988
        %v3990 = vpop.f32.mrf.mxu0
        %v3991 = vadd.f32 %v3902, %v3990
        %3992 = vmatmul.bf16.gmra.mxu0 %v3820
        %v3993 = vpop.f32.mrf.mxu0
        %v3994 = vadd.f32 %v3905, %v3993
        %v3995 = vpop.f32.mrf.mxu0
        %v3996 = vadd.f32 %v3907, %v3995
        %3997 = vmatmul.bf16.gmra.mxu0 %v3823
        %v3998 = vpop.f32.mrf.mxu0
        %v3999 = vadd.f32 %v3910, %v3998
        %v4000 = vpop.f32.mrf.mxu0
        %v4001 = vadd.f32 %v3912, %v4000
        %4002 = vdwg.mxu0
        %4003 = vmatpush.bf16.msra.mxu0 %v3708
        %4004 = vmatpush.bf16.msra.mxu0 %v3704
        %4005 = vmatpush.bf16.msra.mxu0 %v3700
        %4006 = vmatpush.bf16.msra.mxu0 %v3696
        %4007 = vmatpush.bf16.msra.mxu0 %v3692
        %4008 = vmatpush.bf16.msra.mxu0 %v3688
        %4009 = vmatpush.bf16.msra.mxu0 %v3684
        %4010 = vmatpush.bf16.msra.mxu0 %v3680
        %4011 = vmatmul.bf16.gmra.mxu0 %v2047
        %v4012 = vpop.f32.mrf.mxu0
        %v4013 = vadd.f32 %v3076, %v4012
        %v4014 = vpop.f32.mrf.mxu0
        %v4015 = vadd.f32 %v3078, %v4014
        %4016 = vmatmul.bf16.gmra.mxu0 %v2049
        %v4017 = vpop.f32.mrf.mxu0
        %v4018 = vadd.f32 %v3081, %v4017
        %v4019 = vpop.f32.mrf.mxu0
        %v4020 = vadd.f32 %v3083, %v4019
        %4021 = vmatmul.bf16.gmra.mxu0 %v2051
        %v4022 = vpop.f32.mrf.mxu0
        %v4023 = vadd.f32 %v3086, %v4022
        %v4024 = vpop.f32.mrf.mxu0
        %v4025 = vadd.f32 %v3088, %v4024
        %4026 = vmatmul.bf16.gmra.mxu0 %v2053
        %v4027 = vpop.f32.mrf.mxu0
        %v4028 = vadd.f32 %v3091, %v4027
        %v4029 = vpop.f32.mrf.mxu0
        %v4030 = vadd.f32 %v3093, %v4029
        %4031 = vmatmul.bf16.gmra.mxu0 %v2055
        %v4032 = vpop.f32.mrf.mxu0
        %v4033 = vadd.f32 %v3096, %v4032
        %v4034 = vpop.f32.mrf.mxu0
        %v4035 = vadd.f32 %v3098, %v4034
        %4036 = vmatmul.bf16.gmra.mxu0 %v2057
        %v4037 = vpop.f32.mrf.mxu0
        %v4038 = vadd.f32 %v3101, %v4037
        %v4039 = vpop.f32.mrf.mxu0
        %v4040 = vadd.f32 %v3103, %v4039
        %4041 = vmatmul.bf16.gmra.mxu0 %v2059
        %v4042 = vpop.f32.mrf.mxu0
        %v4043 = vadd.f32 %v3106, %v4042
        %v4044 = vpop.f32.mrf.mxu0
        %v4045 = vadd.f32 %v3108, %v4044
        %4046 = vmatmul.bf16.gmra.mxu0 %v2061
        %v4047 = vpop.f32.mrf.mxu0
        %v4048 = vadd.f32 %v3111, %v4047
        %v4049 = vpop.f32.mrf.mxu0
        %v4050 = vadd.f32 %v3113, %v4049
        %4051 = vmatmul.bf16.gmra.mxu0 %v2063
        %v4052 = vpop.f32.mrf.mxu0
        %v4053 = vadd.f32 %v3116, %v4052
        %v4054 = vpop.f32.mrf.mxu0
        %v4055 = vadd.f32 %v3118, %v4054
        %4056 = vmatmul.bf16.gmra.mxu0 %v2065
        %v4057 = vpop.f32.mrf.mxu0
        %v4058 = vadd.f32 %v3121, %v4057
        %v4059 = vpop.f32.mrf.mxu0
        %v4060 = vadd.f32 %v3123, %v4059
        %4061 = vmatmul.bf16.gmra.mxu0 %v2067
        %v4062 = vpop.f32.mrf.mxu0
        %v4063 = vadd.f32 %v3126, %v4062
        %v4064 = vpop.f32.mrf.mxu0
        %v4065 = vadd.f32 %v3128, %v4064
        %4066 = vmatmul.bf16.gmra.mxu0 %v2069
        %v4067 = vpop.f32.mrf.mxu0
        %v4068 = vadd.f32 %v3131, %v4067
        %v4069 = vpop.f32.mrf.mxu0
        %v4070 = vadd.f32 %v3133, %v4069
        %4071 = vmatmul.bf16.gmra.mxu0 %v2071
        %v4072 = vpop.f32.mrf.mxu0
        %v4073 = vadd.f32 %v3136, %v4072
        %v4074 = vpop.f32.mrf.mxu0
        %v4075 = vadd.f32 %v3138, %v4074
        %4076 = vmatmul.bf16.gmra.mxu0 %v2073
        %v4077 = vpop.f32.mrf.mxu0
        %v4078 = vadd.f32 %v3141, %v4077
        %v4079 = vpop.f32.mrf.mxu0
        %v4080 = vadd.f32 %v3143, %v4079
        %4081 = vmatmul.bf16.gmra.mxu0 %v2075
        %v4082 = vpop.f32.mrf.mxu0
        %v4083 = vadd.f32 %v3146, %v4082
        %v4084 = vpop.f32.mrf.mxu0
        %v4085 = vadd.f32 %v3148, %v4084
        %4086 = vmatmul.bf16.gmra.mxu0 %v2077
        %v4087 = vpop.f32.mrf.mxu0
        %v4088 = vadd.f32 %v3151, %v4087
        %v4089 = vpop.f32.mrf.mxu0
        %v4090 = vadd.f32 %v3153, %v4089
        %4091 = vdwg.mxu0
        %4092 = vmatpush.bf16.msra.mxu0 0
        %4093 = vmatpush.bf16.msra.mxu0 0
        %4094 = vmatpush.bf16.msra.mxu0 %v3732
        %4095 = vmatpush.bf16.msra.mxu0 %v3728
        %4096 = vmatpush.bf16.msra.mxu0 %v3724
        %4097 = vmatpush.bf16.msra.mxu0 %v3720
        %4098 = vmatpush.bf16.msra.mxu0 %v3716
        %4099 = vmatpush.bf16.msra.mxu0 %v3712
        %4100 = vmatmul.bf16.gmra.mxu0 %v3792
        %v4101 = vpop.f32.mrf.mxu0
        %v4102 = vadd.f32 %v4013, %v4101
        %v4103 = vpop.f32.mrf.mxu0
        %v4104 = vadd.f32 %v4015, %v4103
        %4105 = vmatmul.bf16.gmra.mxu0 %v3794
        %v4106 = vpop.f32.mrf.mxu0
        %v4107 = vadd.f32 %v4018, %v4106
        %v4108 = vpop.f32.mrf.mxu0
        %v4109 = vadd.f32 %v4020, %v4108
        %4110 = vmatmul.bf16.gmra.mxu0 %v3796
        %v4111 = vpop.f32.mrf.mxu0
        %v4112 = vadd.f32 %v4023, %v4111
        %v4113 = vpop.f32.mrf.mxu0
        %v4114 = vadd.f32 %v4025, %v4113
        %4115 = vmatmul.bf16.gmra.mxu0 %v3798
        %v4116 = vpop.f32.mrf.mxu0
        %v4117 = vadd.f32 %v4028, %v4116
        %v4118 = vpop.f32.mrf.mxu0
        %v4119 = vadd.f32 %v4030, %v4118
        %4120 = vmatmul.bf16.gmra.mxu0 %v3800
        %v4121 = vpop.f32.mrf.mxu0
        %v4122 = vadd.f32 %v4033, %v4121
        %v4123 = vpop.f32.mrf.mxu0
        %v4124 = vadd.f32 %v4035, %v4123
        %4125 = vmatmul.bf16.gmra.mxu0 %v3802
        %v4126 = vpop.f32.mrf.mxu0
        %v4127 = vadd.f32 %v4038, %v4126
        %v4128 = vpop.f32.mrf.mxu0
        %v4129 = vadd.f32 %v4040, %v4128
        %4130 = vmatmul.bf16.gmra.mxu0 %v3804
        %v4131 = vpop.f32.mrf.mxu0
        %v4132 = vadd.f32 %v4043, %v4131
        %v4133 = vpop.f32.mrf.mxu0
        %v4134 = vadd.f32 %v4045, %v4133
        %4135 = vmatmul.bf16.gmra.mxu0 %v3806
        %v4136 = vpop.f32.mrf.mxu0
        %v4137 = vadd.f32 %v4048, %v4136
        %v4138 = vpop.f32.mrf.mxu0
        %v4139 = vadd.f32 %v4050, %v4138
        %4140 = vmatmul.bf16.gmra.mxu0 %v3808
        %v4141 = vpop.f32.mrf.mxu0
        %v4142 = vadd.f32 %v4053, %v4141
        %v4143 = vpop.f32.mrf.mxu0
        %v4144 = vadd.f32 %v4055, %v4143
        %4145 = vmatmul.bf16.gmra.mxu0 %v3810
        %v4146 = vpop.f32.mrf.mxu0
        %v4147 = vadd.f32 %v4058, %v4146
        %v4148 = vpop.f32.mrf.mxu0
        %v4149 = vadd.f32 %v4060, %v4148
        %4150 = vmatmul.bf16.gmra.mxu0 %v3812
        %v4151 = vpop.f32.mrf.mxu0
        %v4152 = vadd.f32 %v4063, %v4151
        %v4153 = vpop.f32.mrf.mxu0
        %v4154 = vadd.f32 %v4065, %v4153
        %4155 = vmatmul.bf16.gmra.mxu0 %v3814
        %v4156 = vpop.f32.mrf.mxu0
        %v4157 = vadd.f32 %v4068, %v4156
        %v4158 = vpop.f32.mrf.mxu0
        %v4159 = vadd.f32 %v4070, %v4158
        %4160 = vmatmul.bf16.gmra.mxu0 %v3816
        %v4161 = vpop.f32.mrf.mxu0
        %v4162 = vadd.f32 %v4073, %v4161
        %v4163 = vpop.f32.mrf.mxu0
        %v4164 = vadd.f32 %v4075, %v4163
        %4165 = vmatmul.bf16.gmra.mxu0 %v3818
        %v4166 = vpop.f32.mrf.mxu0
        %v4167 = vadd.f32 %v4078, %v4166
        %v4168 = vpop.f32.mrf.mxu0
        %v4169 = vadd.f32 %v4080, %v4168
        %4170 = vmatmul.bf16.gmra.mxu0 %v3820
        %v4171 = vpop.f32.mrf.mxu0
        %v4172 = vadd.f32 %v4083, %v4171
        %v4173 = vpop.f32.mrf.mxu0
        %v4174 = vadd.f32 %v4085, %v4173
        %4175 = vmatmul.bf16.gmra.mxu0 %v3823
        %v4176 = vpop.f32.mrf.mxu0
        %v4177 = vadd.f32 %v4088, %v4176
        %v4178 = vpop.f32.mrf.mxu0
        %v4179 = vadd.f32 %v4090, %v4178
        %4180 = vdwg.mxu0
        %4181 = vmatpush.bf16.msra.mxu0 %v3709
        %4182 = vmatpush.bf16.msra.mxu0 %v3705
        %4183 = vmatpush.bf16.msra.mxu0 %v3701
        %4184 = vmatpush.bf16.msra.mxu0 %v3697
        %4185 = vmatpush.bf16.msra.mxu0 %v3693
        %4186 = vmatpush.bf16.msra.mxu0 %v3689
        %4187 = vmatpush.bf16.msra.mxu0 %v3685
        %4188 = vmatpush.bf16.msra.mxu0 %v3681
        %4189 = vmatmul.bf16.gmra.mxu0 %v2047
        %v4190 = vpop.f32.mrf.mxu0
        %v4191 = vadd.f32 %v3254, %v4190
        %v4192 = vpop.f32.mrf.mxu0
        %v4193 = vadd.f32 %v3256, %v4192
        %4194 = vmatmul.bf16.gmra.mxu0 %v2049
        %v4195 = vpop.f32.mrf.mxu0
        %v4196 = vadd.f32 %v3259, %v4195
        %v4197 = vpop.f32.mrf.mxu0
        %v4198 = vadd.f32 %v3261, %v4197
        %4199 = vmatmul.bf16.gmra.mxu0 %v2051
        %v4200 = vpop.f32.mrf.mxu0
        %v4201 = vadd.f32 %v3264, %v4200
        %v4202 = vpop.f32.mrf.mxu0
        %v4203 = vadd.f32 %v3266, %v4202
        %4204 = vmatmul.bf16.gmra.mxu0 %v2053
        %v4205 = vpop.f32.mrf.mxu0
        %v4206 = vadd.f32 %v3269, %v4205
        %v4207 = vpop.f32.mrf.mxu0
        %v4208 = vadd.f32 %v3271, %v4207
        %4209 = vmatmul.bf16.gmra.mxu0 %v2055
        %v4210 = vpop.f32.mrf.mxu0
        %v4211 = vadd.f32 %v3274, %v4210
        %v4212 = vpop.f32.mrf.mxu0
        %v4213 = vadd.f32 %v3276, %v4212
        %4214 = vmatmul.bf16.gmra.mxu0 %v2057
        %v4215 = vpop.f32.mrf.mxu0
        %v4216 = vadd.f32 %v3279, %v4215
        %v4217 = vpop.f32.mrf.mxu0
        %v4218 = vadd.f32 %v3281, %v4217
        %4219 = vmatmul.bf16.gmra.mxu0 %v2059
        %v4220 = vpop.f32.mrf.mxu0
        %v4221 = vadd.f32 %v3284, %v4220
        %v4222 = vpop.f32.mrf.mxu0
        %v4223 = vadd.f32 %v3286, %v4222
        %4224 = vmatmul.bf16.gmra.mxu0 %v2061
        %v4225 = vpop.f32.mrf.mxu0
        %v4226 = vadd.f32 %v3289, %v4225
        %v4227 = vpop.f32.mrf.mxu0
        %v4228 = vadd.f32 %v3291, %v4227
        %4229 = vmatmul.bf16.gmra.mxu0 %v2063
        %v4230 = vpop.f32.mrf.mxu0
        %v4231 = vadd.f32 %v3294, %v4230
        %v4232 = vpop.f32.mrf.mxu0
        %v4233 = vadd.f32 %v3296, %v4232
        %4234 = vmatmul.bf16.gmra.mxu0 %v2065
        %v4235 = vpop.f32.mrf.mxu0
        %v4236 = vadd.f32 %v3299, %v4235
        %v4237 = vpop.f32.mrf.mxu0
        %v4238 = vadd.f32 %v3301, %v4237
        %4239 = vmatmul.bf16.gmra.mxu0 %v2067
        %v4240 = vpop.f32.mrf.mxu0
        %v4241 = vadd.f32 %v3304, %v4240
        %v4242 = vpop.f32.mrf.mxu0
        %v4243 = vadd.f32 %v3306, %v4242
        %4244 = vmatmul.bf16.gmra.mxu0 %v2069
        %v4245 = vpop.f32.mrf.mxu0
        %v4246 = vadd.f32 %v3309, %v4245
        %v4247 = vpop.f32.mrf.mxu0
        %v4248 = vadd.f32 %v3311, %v4247
        %4249 = vmatmul.bf16.gmra.mxu0 %v2071
        %v4250 = vpop.f32.mrf.mxu0
        %v4251 = vadd.f32 %v3314, %v4250
        %v4252 = vpop.f32.mrf.mxu0
        %v4253 = vadd.f32 %v3316, %v4252
        %4254 = vmatmul.bf16.gmra.mxu0 %v2073
        %v4255 = vpop.f32.mrf.mxu0
        %v4256 = vadd.f32 %v3319, %v4255
        %v4257 = vpop.f32.mrf.mxu0
        %v4258 = vadd.f32 %v3321, %v4257
        %4259 = vmatmul.bf16.gmra.mxu0 %v2075
        %v4260 = vpop.f32.mrf.mxu0
        %v4261 = vadd.f32 %v3324, %v4260
        %v4262 = vpop.f32.mrf.mxu0
        %v4263 = vadd.f32 %v3326, %v4262
        %4264 = vmatmul.bf16.gmra.mxu0 %v2077
        %v4265 = vpop.f32.mrf.mxu0
        %v4266 = vadd.f32 %v3329, %v4265
        %v4267 = vpop.f32.mrf.mxu0
        %v4268 = vadd.f32 %v3331, %v4267
        %4269 = vdwg.mxu0
        %4270 = vmatpush.bf16.msra.mxu0 0
        %4271 = vmatpush.bf16.msra.mxu0 0
        %4272 = vmatpush.bf16.msra.mxu0 %v3733
        %4273 = vmatpush.bf16.msra.mxu0 %v3729
        %4274 = vmatpush.bf16.msra.mxu0 %v3725
        %4275 = vmatpush.bf16.msra.mxu0 %v3721
        %4276 = vmatpush.bf16.msra.mxu0 %v3717
        %4277 = vmatpush.bf16.msra.mxu0 %v3713
        %4278 = vmatmul.bf16.gmra.mxu0 %v3792
        %v4279 = vpop.f32.mrf.mxu0
        %v4280 = vadd.f32 %v4191, %v4279
        %v4281 = vpop.f32.mrf.mxu0
        %v4282 = vadd.f32 %v4193, %v4281
        %4283 = vmatmul.bf16.gmra.mxu0 %v3794
        %v4284 = vpop.f32.mrf.mxu0
        %v4285 = vadd.f32 %v4196, %v4284
        %v4286 = vpop.f32.mrf.mxu0
        %v4287 = vadd.f32 %v4198, %v4286
        %4288 = vmatmul.bf16.gmra.mxu0 %v3796
        %v4289 = vpop.f32.mrf.mxu0
        %v4290 = vadd.f32 %v4201, %v4289
        %v4291 = vpop.f32.mrf.mxu0
        %v4292 = vadd.f32 %v4203, %v4291
        %4293 = vmatmul.bf16.gmra.mxu0 %v3798
        %v4294 = vpop.f32.mrf.mxu0
        %v4295 = vadd.f32 %v4206, %v4294
        %v4296 = vpop.f32.mrf.mxu0
        %v4297 = vadd.f32 %v4208, %v4296
        %4298 = vmatmul.bf16.gmra.mxu0 %v3800
        %v4299 = vpop.f32.mrf.mxu0
        %v4300 = vadd.f32 %v4211, %v4299
        %v4301 = vpop.f32.mrf.mxu0
        %v4302 = vadd.f32 %v4213, %v4301
        %4303 = vmatmul.bf16.gmra.mxu0 %v3802
        %v4304 = vpop.f32.mrf.mxu0
        %v4305 = vadd.f32 %v4216, %v4304
        %v4306 = vpop.f32.mrf.mxu0
        %v4307 = vadd.f32 %v4218, %v4306
        %4308 = vmatmul.bf16.gmra.mxu0 %v3804
        %v4309 = vpop.f32.mrf.mxu0
        %v4310 = vadd.f32 %v4221, %v4309
        %v4311 = vpop.f32.mrf.mxu0
        %v4312 = vadd.f32 %v4223, %v4311
        %4313 = vmatmul.bf16.gmra.mxu0 %v3806
        %v4314 = vpop.f32.mrf.mxu0
        %v4315 = vadd.f32 %v4226, %v4314
        %v4316 = vpop.f32.mrf.mxu0
        %v4317 = vadd.f32 %v4228, %v4316
        %4318 = vmatmul.bf16.gmra.mxu0 %v3808
        %v4319 = vpop.f32.mrf.mxu0
        %v4320 = vadd.f32 %v4231, %v4319
        %v4321 = vpop.f32.mrf.mxu0
        %v4322 = vadd.f32 %v4233, %v4321
        %4323 = vmatmul.bf16.gmra.mxu0 %v3810
        %v4324 = vpop.f32.mrf.mxu0
        %v4325 = vadd.f32 %v4236, %v4324
        %v4326 = vpop.f32.mrf.mxu0
        %v4327 = vadd.f32 %v4238, %v4326
        %4328 = vmatmul.bf16.gmra.mxu0 %v3812
        %v4329 = vpop.f32.mrf.mxu0
        %v4330 = vadd.f32 %v4241, %v4329
        %v4331 = vpop.f32.mrf.mxu0
        %v4332 = vadd.f32 %v4243, %v4331
        %4333 = vmatmul.bf16.gmra.mxu0 %v3814
        %v4334 = vpop.f32.mrf.mxu0
        %v4335 = vadd.f32 %v4246, %v4334
        %v4336 = vpop.f32.mrf.mxu0
        %v4337 = vadd.f32 %v4248, %v4336
        %4338 = vmatmul.bf16.gmra.mxu0 %v3816
        %v4339 = vpop.f32.mrf.mxu0
        %v4340 = vadd.f32 %v4251, %v4339
        %v4341 = vpop.f32.mrf.mxu0
        %v4342 = vadd.f32 %v4253, %v4341
        %4343 = vmatmul.bf16.gmra.mxu0 %v3818
        %v4344 = vpop.f32.mrf.mxu0
        %v4345 = vadd.f32 %v4256, %v4344
        %v4346 = vpop.f32.mrf.mxu0
        %v4347 = vadd.f32 %v4258, %v4346
        %4348 = vmatmul.bf16.gmra.mxu0 %v3820
        %v4349 = vpop.f32.mrf.mxu0
        %v4350 = vadd.f32 %v4261, %v4349
        %v4351 = vpop.f32.mrf.mxu0
        %v4352 = vadd.f32 %v4263, %v4351
        %4353 = vmatmul.bf16.gmra.mxu0 %v3823
        %v4354 = vpop.f32.mrf.mxu0
        %v4355 = vadd.f32 %v4266, %v4354
        %v4356 = vpop.f32.mrf.mxu0
        %v4357 = vadd.f32 %v4268, %v4356
        %4358 = vdwg.mxu0
        %4359 = vmatpush.bf16.msra.mxu0 %v3710
        %4360 = vmatpush.bf16.msra.mxu0 %v3706
        %4361 = vmatpush.bf16.msra.mxu0 %v3702
        %4362 = vmatpush.bf16.msra.mxu0 %v3698
        %4363 = vmatpush.bf16.msra.mxu0 %v3694
        %4364 = vmatpush.bf16.msra.mxu0 %v3690
        %4365 = vmatpush.bf16.msra.mxu0 %v3686
        %4366 = vmatpush.bf16.msra.mxu0 %v3682
        %4367 = vmatmul.bf16.gmra.mxu0 %v2047
        %v4368 = vpop.f32.mrf.mxu0
        %v4369 = vadd.f32 %v3432, %v4368
        %v4370 = vpop.f32.mrf.mxu0
        %v4371 = vadd.f32 %v3434, %v4370
        %4372 = vmatmul.bf16.gmra.mxu0 %v2049
        %v4373 = vpop.f32.mrf.mxu0
        %v4374 = vadd.f32 %v3437, %v4373
        %v4375 = vpop.f32.mrf.mxu0
        %v4376 = vadd.f32 %v3439, %v4375
        %4377 = vmatmul.bf16.gmra.mxu0 %v2051
        %v4378 = vpop.f32.mrf.mxu0
        %v4379 = vadd.f32 %v3442, %v4378
        %v4380 = vpop.f32.mrf.mxu0
        %v4381 = vadd.f32 %v3444, %v4380
        %4382 = vmatmul.bf16.gmra.mxu0 %v2053
        %v4383 = vpop.f32.mrf.mxu0
        %v4384 = vadd.f32 %v3447, %v4383
        %v4385 = vpop.f32.mrf.mxu0
        %v4386 = vadd.f32 %v3449, %v4385
        %4387 = vmatmul.bf16.gmra.mxu0 %v2055
        %v4388 = vpop.f32.mrf.mxu0
        %v4389 = vadd.f32 %v3452, %v4388
        %v4390 = vpop.f32.mrf.mxu0
        %v4391 = vadd.f32 %v3454, %v4390
        %4392 = vmatmul.bf16.gmra.mxu0 %v2057
        %v4393 = vpop.f32.mrf.mxu0
        %v4394 = vadd.f32 %v3457, %v4393
        %v4395 = vpop.f32.mrf.mxu0
        %v4396 = vadd.f32 %v3459, %v4395
        %4397 = vmatmul.bf16.gmra.mxu0 %v2059
        %v4398 = vpop.f32.mrf.mxu0
        %v4399 = vadd.f32 %v3462, %v4398
        %v4400 = vpop.f32.mrf.mxu0
        %v4401 = vadd.f32 %v3464, %v4400
        %4402 = vmatmul.bf16.gmra.mxu0 %v2061
        %v4403 = vpop.f32.mrf.mxu0
        %v4404 = vadd.f32 %v3467, %v4403
        %v4405 = vpop.f32.mrf.mxu0
        %v4406 = vadd.f32 %v3469, %v4405
        %4407 = vmatmul.bf16.gmra.mxu0 %v2063
        %v4408 = vpop.f32.mrf.mxu0
        %v4409 = vadd.f32 %v3472, %v4408
        %v4410 = vpop.f32.mrf.mxu0
        %v4411 = vadd.f32 %v3474, %v4410
        %4412 = vmatmul.bf16.gmra.mxu0 %v2065
        %v4413 = vpop.f32.mrf.mxu0
        %v4414 = vadd.f32 %v3477, %v4413
        %v4415 = vpop.f32.mrf.mxu0
        %v4416 = vadd.f32 %v3479, %v4415
        %4417 = vmatmul.bf16.gmra.mxu0 %v2067
        %v4418 = vpop.f32.mrf.mxu0
        %v4419 = vadd.f32 %v3482, %v4418
        %v4420 = vpop.f32.mrf.mxu0
        %v4421 = vadd.f32 %v3484, %v4420
        %4422 = vmatmul.bf16.gmra.mxu0 %v2069
        %v4423 = vpop.f32.mrf.mxu0
        %v4424 = vadd.f32 %v3487, %v4423
        %v4425 = vpop.f32.mrf.mxu0
        %v4426 = vadd.f32 %v3489, %v4425
        %4427 = vmatmul.bf16.gmra.mxu0 %v2071
        %v4428 = vpop.f32.mrf.mxu0
        %v4429 = vadd.f32 %v3492, %v4428
        %v4430 = vpop.f32.mrf.mxu0
        %v4431 = vadd.f32 %v3494, %v4430
        %4432 = vmatmul.bf16.gmra.mxu0 %v2073
        %v4433 = vpop.f32.mrf.mxu0
        %v4434 = vadd.f32 %v3497, %v4433
        %v4435 = vpop.f32.mrf.mxu0
        %v4436 = vadd.f32 %v3499, %v4435
        %4437 = vmatmul.bf16.gmra.mxu0 %v2075
        %v4438 = vpop.f32.mrf.mxu0
        %v4439 = vadd.f32 %v3502, %v4438
        %v4440 = vpop.f32.mrf.mxu0
        %v4441 = vadd.f32 %v3504, %v4440
        %4442 = vmatmul.bf16.gmra.mxu0 %v2077
        %v4443 = vpop.f32.mrf.mxu0
        %v4444 = vadd.f32 %v3507, %v4443
        %v4445 = vpop.f32.mrf.mxu0
        %v4446 = vadd.f32 %v3509, %v4445
        %4447 = vdwg.mxu0
        %4448 = vmatpush.bf16.msra.mxu0 0
        %4449 = vmatpush.bf16.msra.mxu0 0
        %4450 = vmatpush.bf16.msra.mxu0 %v3734
        %4451 = vmatpush.bf16.msra.mxu0 %v3730
        %4452 = vmatpush.bf16.msra.mxu0 %v3726
        %4453 = vmatpush.bf16.msra.mxu0 %v3722
        %4454 = vmatpush.bf16.msra.mxu0 %v3718
        %4455 = vmatpush.bf16.msra.mxu0 %v3714
        %4456 = vmatmul.bf16.gmra.mxu0 %v3792
        %v4457 = vpop.f32.mrf.mxu0
        %v4458 = vadd.f32 %v4369, %v4457
        %v4459 = vpop.f32.mrf.mxu0
        %v4460 = vadd.f32 %v4371, %v4459
        %4461 = vmatmul.bf16.gmra.mxu0 %v3794
        %v4462 = vpop.f32.mrf.mxu0
        %v4463 = vadd.f32 %v4374, %v4462
        %v4464 = vpop.f32.mrf.mxu0
        %v4465 = vadd.f32 %v4376, %v4464
        %4466 = vmatmul.bf16.gmra.mxu0 %v3796
        %v4467 = vpop.f32.mrf.mxu0
        %v4468 = vadd.f32 %v4379, %v4467
        %v4469 = vpop.f32.mrf.mxu0
        %v4470 = vadd.f32 %v4381, %v4469
        %4471 = vmatmul.bf16.gmra.mxu0 %v3798
        %v4472 = vpop.f32.mrf.mxu0
        %v4473 = vadd.f32 %v4384, %v4472
        %v4474 = vpop.f32.mrf.mxu0
        %v4475 = vadd.f32 %v4386, %v4474
        %4476 = vmatmul.bf16.gmra.mxu0 %v3800
        %v4477 = vpop.f32.mrf.mxu0
        %v4478 = vadd.f32 %v4389, %v4477
        %v4479 = vpop.f32.mrf.mxu0
        %v4480 = vadd.f32 %v4391, %v4479
        %4481 = vmatmul.bf16.gmra.mxu0 %v3802
        %v4482 = vpop.f32.mrf.mxu0
        %v4483 = vadd.f32 %v4394, %v4482
        %v4484 = vpop.f32.mrf.mxu0
        %v4485 = vadd.f32 %v4396, %v4484
        %4486 = vmatmul.bf16.gmra.mxu0 %v3804
        %v4487 = vpop.f32.mrf.mxu0
        %v4488 = vadd.f32 %v4399, %v4487
        %v4489 = vpop.f32.mrf.mxu0
        %v4490 = vadd.f32 %v4401, %v4489
        %4491 = vmatmul.bf16.gmra.mxu0 %v3806
        %v4492 = vpop.f32.mrf.mxu0
        %v4493 = vadd.f32 %v4404, %v4492
        %v4494 = vpop.f32.mrf.mxu0
        %v4495 = vadd.f32 %v4406, %v4494
        %4496 = vmatmul.bf16.gmra.mxu0 %v3808
        %v4497 = vpop.f32.mrf.mxu0
        %v4498 = vadd.f32 %v4409, %v4497
        %v4499 = vpop.f32.mrf.mxu0
        %v4500 = vadd.f32 %v4411, %v4499
        %4501 = vmatmul.bf16.gmra.mxu0 %v3810
        %v4502 = vpop.f32.mrf.mxu0
        %v4503 = vadd.f32 %v4414, %v4502
        %v4504 = vpop.f32.mrf.mxu0
        %v4505 = vadd.f32 %v4416, %v4504
        %4506 = vmatmul.bf16.gmra.mxu0 %v3812
        %v4507 = vpop.f32.mrf.mxu0
        %v4508 = vadd.f32 %v4419, %v4507
        %v4509 = vpop.f32.mrf.mxu0
        %v4510 = vadd.f32 %v4421, %v4509
        %4511 = vmatmul.bf16.gmra.mxu0 %v3814
        %v4512 = vpop.f32.mrf.mxu0
        %v4513 = vadd.f32 %v4424, %v4512
        %v4514 = vpop.f32.mrf.mxu0
        %v4515 = vadd.f32 %v4426, %v4514
        %4516 = vmatmul.bf16.gmra.mxu0 %v3816
        %v4517 = vpop.f32.mrf.mxu0
        %v4518 = vadd.f32 %v4429, %v4517
        %v4519 = vpop.f32.mrf.mxu0
        %v4520 = vadd.f32 %v4431, %v4519
        %4521 = vmatmul.bf16.gmra.mxu0 %v3818
        %v4522 = vpop.f32.mrf.mxu0
        %v4523 = vadd.f32 %v4434, %v4522
        %v4524 = vpop.f32.mrf.mxu0
        %v4525 = vadd.f32 %v4436, %v4524
        %4526 = vmatmul.bf16.gmra.mxu0 %v3820
        %v4527 = vpop.f32.mrf.mxu0
        %v4528 = vadd.f32 %v4439, %v4527
        %v4529 = vpop.f32.mrf.mxu0
        %v4530 = vadd.f32 %v4441, %v4529
        %4531 = vmatmul.bf16.gmra.mxu0 %v3823
        %v4532 = vpop.f32.mrf.mxu0
        %v4533 = vadd.f32 %v4444, %v4532
        %v4534 = vpop.f32.mrf.mxu0
        %v4535 = vadd.f32 %v4446, %v4534
        %4536 = vdwg.mxu0
        %v4537 = vld [vmem:[#allocation2] sm:$0xfc]
        %v4538 = vld [vmem:[#allocation2 + $0x8] sm:$0xfc]
        %v4539 = vld [vmem:[#allocation2 + $0x1f0] sm:$0xff]
        %v4540 = vld [vmem:[#allocation2 + $0x1f8] sm:$0xff]
        %v4541 = vpack.c.bf16 %v1985, %v4537
        %v4542 = vpack.c.bf16 %v1986, %v4538
        %v4543 = vpack.c.bf16 %v4539, %v2043
        %v4544 = vpack.c.bf16 %v4540, %v2044
        %s4545 = scalar_lea.vmem %s3, 896
        %v4546 = vld [vmem:[%s4545] sm:$0xff]
        %v4547 = vld [vmem:[%s4545 + $0x8] sm:$0xff]
        %v4548 = vld [vmem:[%s4545 + $0x10] sm:$0xff]
        %v4549 = vld [vmem:[%s4545 + $0x18] sm:$0xff]
        %v4550 = vld [vmem:[%s4545 + $0x20] sm:$0xff]
        %v4551 = vld [vmem:[%s4545 + $0x28] sm:$0xff]
        %v4552 = vld [vmem:[%s4545 + $0x30] sm:$0xff]
        %v4553 = vld [vmem:[%s4545 + $0x38] sm:$0xff]
        %v4554 = vld [vmem:[%s4545 + $0x40] sm:$0xff]
        %v4555 = vld [vmem:[%s4545 + $0x48] sm:$0xff]
        %v4556 = vld [vmem:[%s4545 + $0x50] sm:$0xff]
        %v4557 = vld [vmem:[%s4545 + $0x58] sm:$0xff]
        %v4558 = vld [vmem:[%s4545 + $0x60] sm:$0xff]
        %v4559 = vld [vmem:[%s4545 + $0x68] sm:$0xff]
        %v4560 = vld [vmem:[%s4545 + $0x70] sm:$0xff]
        %v4561 = vld [vmem:[%s4545 + $0x78] sm:$0xff]
        %v4562 = vld [vmem:[%s4545 + $0x80] sm:$0xff]
        %v4563 = vld [vmem:[%s4545 + $0x88] sm:$0xff]
        %v4564 = vld [vmem:[%s4545 + $0x90] sm:$0xff]
        %v4565 = vld [vmem:[%s4545 + $0x98] sm:$0xff]
        %v4566 = vld [vmem:[%s4545 + $0xa0] sm:$0xff]
        %v4567 = vld [vmem:[%s4545 + $0xa8] sm:$0xff]
        %v4568 = vld [vmem:[%s4545 + $0xb0] sm:$0xff]
        %v4569 = vld [vmem:[%s4545 + $0xb8] sm:$0xff]
        %v4570 = vld [vmem:[%s4545 + $0xc0] sm:$0xff]
        %v4571 = vld [vmem:[%s4545 + $0xc8] sm:$0xff]
        %v4572 = vld [vmem:[%s4545 + $0xd0] sm:$0xff]
        %v4573 = vld [vmem:[%s4545 + $0xd8] sm:$0xff]
        %v4574 = vld [vmem:[%s4545 + $0xe0] sm:$0xff]
        %v4575 = vld [vmem:[%s4545 + $0xe8] sm:$0xff]
        %v4576 = vld [vmem:[%s4545 + $0xf0] sm:$0xff]
        %v4577 = vld [vmem:[%s4545 + $0xf8] sm:$0xff]
        %v4578 = vld [vmem:[%s4545 + $0x100] sm:$0xff]
        %v4579 = vld [vmem:[%s4545 + $0x108] sm:$0xff]
        %v4580 = vld [vmem:[%s4545 + $0x110] sm:$0xff]
        %v4581 = vld [vmem:[%s4545 + $0x118] sm:$0xff]
        %v4582 = vld [vmem:[%s4545 + $0x120] sm:$0xff]
        %v4583 = vld [vmem:[%s4545 + $0x128] sm:$0xff]
        %v4584 = vld [vmem:[%s4545 + $0x130] sm:$0xff]
        %v4585 = vld [vmem:[%s4545 + $0x138] sm:$0xff]
        %v4586 = vld [vmem:[%s4545 + $0x140] sm:$0xff]
        %v4587 = vld [vmem:[%s4545 + $0x148] sm:$0xff]
        %v4588 = vld [vmem:[%s4545 + $0x150] sm:$0xff]
        %v4589 = vld [vmem:[%s4545 + $0x158] sm:$0xff]
        %v4590 = vld [vmem:[%s4545 + $0x160] sm:$0xff]
        %v4591 = vld [vmem:[%s4545 + $0x168] sm:$0xff]
        %v4592 = vld [vmem:[%s4545 + $0x170] sm:$0xff]
        %v4593 = vld [vmem:[%s4545 + $0x178] sm:$0xff]
        %v4594 = vld [vmem:[%s4545 + $0x180] sm:$0xff]
        %v4595 = vld [vmem:[%s4545 + $0x188] sm:$0xff]
        %v4596 = vld [vmem:[%s4545 + $0x190] sm:$0xff]
        %v4597 = vld [vmem:[%s4545 + $0x198] sm:$0xff]
        %v4598 = vld [vmem:[%s4545 + $0x1a0] sm:$0xff]
        %v4599 = vld [vmem:[%s4545 + $0x1a8] sm:$0xff]
        %v4600 = vld [vmem:[%s4545 + $0x1b0] sm:$0xff]
        %v4601 = vld [vmem:[%s4545 + $0x1b8] sm:$0xff]
        %vm4634 = vcmask 1046528
        %v4635 = vrot.slane %v4541, 1
        %v4636 = vrot.slane %v2049, 1
        %v4637 = vsel %vm4634, %v4635, %v4636
        %v4638 = vrot.slane %v4542, 1
        %v4639 = vrot.slane %v2050, 1
        %v4640 = vsel %vm4634, %v4638, %v4639
        %v4641 = vrot.slane %v2051, 1
        %v4642 = vsel %vm4634, %v4636, %v4641
        %v4643 = vrot.slane %v2052, 1
        %v4644 = vsel %vm4634, %v4639, %v4643
        %v4645 = vrot.slane %v2053, 1
        %v4646 = vsel %vm4634, %v4641, %v4645
        %v4647 = vrot.slane %v2054, 1
        %v4648 = vsel %vm4634, %v4643, %v4647
        %v4649 = vrot.slane %v2055, 1
        %v4650 = vsel %vm4634, %v4645, %v4649
        %v4651 = vrot.slane %v2056, 1
        %v4652 = vsel %vm4634, %v4647, %v4651
        %v4653 = vrot.slane %v2057, 1
        %v4654 = vsel %vm4634, %v4649, %v4653
        %v4655 = vrot.slane %v2058, 1
        %v4656 = vsel %vm4634, %v4651, %v4655
        %v4657 = vrot.slane %v2059, 1
        %v4658 = vsel %vm4634, %v4653, %v4657
        %v4659 = vrot.slane %v2060, 1
        %v4660 = vsel %vm4634, %v4655, %v4659
        %v4661 = vrot.slane %v2061, 1
        %v4662 = vsel %vm4634, %v4657, %v4661
        %v4663 = vrot.slane %v2062, 1
        %v4664 = vsel %vm4634, %v4659, %v4663
        %v4665 = vrot.slane %v2063, 1
        %v4666 = vsel %vm4634, %v4661, %v4665
        %v4667 = vrot.slane %v2064, 1
        %v4668 = vsel %vm4634, %v4663, %v4667
        %v4669 = vrot.slane %v2065, 1
        %v4670 = vsel %vm4634, %v4665, %v4669
        %v4671 = vrot.slane %v2066, 1
        %v4672 = vsel %vm4634, %v4667, %v4671
        %v4673 = vrot.slane %v2067, 1
        %v4674 = vsel %vm4634, %v4669, %v4673
        %v4675 = vrot.slane %v2068, 1
        %v4676 = vsel %vm4634, %v4671, %v4675
        %v4677 = vrot.slane %v2069, 1
        %v4678 = vsel %vm4634, %v4673, %v4677
        %v4679 = vrot.slane %v2070, 1
        %v4680 = vsel %vm4634, %v4675, %v4679
        %v4681 = vrot.slane %v2071, 1
        %v4682 = vsel %vm4634, %v4677, %v4681
        %v4683 = vrot.slane %v2072, 1
        %v4684 = vsel %vm4634, %v4679, %v4683
        %v4685 = vrot.slane %v2073, 1
        %v4686 = vsel %vm4634, %v4681, %v4685
        %v4687 = vrot.slane %v2074, 1
        %v4688 = vsel %vm4634, %v4683, %v4687
        %v4689 = vrot.slane %v2075, 1
        %v4690 = vsel %vm4634, %v4685, %v4689
        %v4691 = vrot.slane %v2076, 1
        %v4692 = vsel %vm4634, %v4687, %v4691
        %v4693 = vrot.slane %v4543, 1
        %v4694 = vsel %vm4634, %v4689, %v4693
        %v4695 = vrot.slane %v4544, 1
        %v4696 = vsel %vm4634, %v4691, %v4695
        %v4769 = vunpack.c.l.b16 %v4546
        %v4770 = vunpack.c.h.b16 %v4546
        %v4771 = vunpack.c.l.b16 %v4547
        %v4772 = vunpack.c.h.b16 %v4547
        %v4773 = vunpack.c.l.b16 %v4548
        %v4774 = vunpack.c.h.b16 %v4548
        %v4775 = vunpack.c.l.b16 %v4549
        %v4776 = vunpack.c.h.b16 %v4549
        %v4777 = vunpack.c.l.b16 %v4550
        %v4778 = vunpack.c.h.b16 %v4550
        %v4779 = vunpack.c.l.b16 %v4551
        %v4780 = vunpack.c.h.b16 %v4551
        %v4781 = vunpack.c.l.b16 %v4552
        %v4782 = vunpack.c.h.b16 %v4552
        %v4783 = vunpack.c.l.b16 %v4553
        %v4784 = vunpack.c.h.b16 %v4553
        %v4785 = vunpack.c.l.b16 %v4554
        %v4786 = vunpack.c.h.b16 %v4554
        %v4787 = vunpack.c.l.b16 %v4555
        %v4788 = vunpack.c.h.b16 %v4555
        %v4789 = vunpack.c.l.b16 %v4556
        %v4790 = vunpack.c.h.b16 %v4556
        %v4791 = vunpack.c.l.b16 %v4557
        %v4792 = vunpack.c.h.b16 %v4557
        %v4793 = vunpack.c.l.b16 %v4558
        %v4794 = vunpack.c.h.b16 %v4558
        %v4795 = vunpack.c.l.b16 %v4559
        %v4796 = vunpack.c.h.b16 %v4559
        %v4797 = vunpack.c.l.b16 %v4560
        %v4798 = vunpack.c.h.b16 %v4560
        %v4799 = vunpack.c.l.b16 %v4561
        %v4800 = vunpack.c.h.b16 %v4561
        %v4801 = vunpack.c.l.b16 %v4562
        %v4802 = vunpack.c.h.b16 %v4562
        %v4803 = vunpack.c.l.b16 %v4563
        %v4804 = vunpack.c.h.b16 %v4563
        %v4805 = vunpack.c.l.b16 %v4564
        %v4806 = vunpack.c.h.b16 %v4564
        %v4807 = vunpack.c.l.b16 %v4565
        %v4808 = vunpack.c.h.b16 %v4565
        %v4809 = vunpack.c.l.b16 %v4566
        %v4810 = vunpack.c.h.b16 %v4566
        %v4811 = vunpack.c.l.b16 %v4567
        %v4812 = vunpack.c.h.b16 %v4567
        %v4813 = vunpack.c.l.b16 %v4568
        %v4814 = vunpack.c.h.b16 %v4568
        %v4815 = vunpack.c.l.b16 %v4569
        %v4816 = vunpack.c.h.b16 %v4569
        %v4817 = vunpack.c.l.b16 %v4570
        %v4818 = vunpack.c.h.b16 %v4570
        %v4819 = vunpack.c.l.b16 %v4571
        %v4820 = vunpack.c.h.b16 %v4571
        %v4821 = vunpack.c.l.b16 %v4572
        %v4822 = vunpack.c.h.b16 %v4572
        %v4823 = vunpack.c.l.b16 %v4573
        %v4824 = vunpack.c.h.b16 %v4573
        %v4825 = vunpack.c.l.b16 %v4574
        %v4826 = vunpack.c.h.b16 %v4574
        %v4827 = vunpack.c.l.b16 %v4575
        %v4828 = vunpack.c.h.b16 %v4575
        %v4829 = vunpack.c.l.b16 %v4576
        %v4830 = vunpack.c.h.b16 %v4576
        %v4831 = vunpack.c.l.b16 %v4577
        %v4832 = vunpack.c.h.b16 %v4577
        %v4833 = vunpack.c.l.b16 %v4578
        %v4834 = vunpack.c.h.b16 %v4578
        %v4835 = vunpack.c.l.b16 %v4579
        %v4836 = vunpack.c.h.b16 %v4579
        %v4837 = vunpack.c.l.b16 %v4580
        %v4838 = vunpack.c.h.b16 %v4580
        %v4839 = vunpack.c.l.b16 %v4581
        %v4840 = vunpack.c.h.b16 %v4581
        %v4841 = vunpack.c.l.b16 %v4582
        %v4842 = vunpack.c.h.b16 %v4582
        %v4843 = vunpack.c.l.b16 %v4583
        %v4844 = vunpack.c.h.b16 %v4583
        %v4845 = vunpack.c.l.b16 %v4584
        %v4846 = vunpack.c.h.b16 %v4584
        %v4847 = vunpack.c.l.b16 %v4585
        %v4848 = vunpack.c.h.b16 %v4585
        %v4849 = vunpack.c.l.b16 %v4586
        %v4850 = vunpack.c.h.b16 %v4586
        %v4851 = vunpack.c.l.b16 %v4587
        %v4852 = vunpack.c.h.b16 %v4587
        %v4853 = vunpack.c.l.b16 %v4588
        %v4854 = vunpack.c.h.b16 %v4588
        %v4855 = vunpack.c.l.b16 %v4589
        %v4856 = vunpack.c.h.b16 %v4589
        %v4857 = vunpack.c.l.b16 %v4590
        %v4858 = vunpack.c.h.b16 %v4590
        %v4859 = vunpack.c.l.b16 %v4591
        %v4860 = vunpack.c.h.b16 %v4591
        %v4861 = vunpack.c.l.b16 %v4592
        %v4862 = vunpack.c.h.b16 %v4592
        %v4863 = vunpack.c.l.b16 %v4593
        %v4864 = vunpack.c.h.b16 %v4593
        %v4865 = vunpack.c.l.b16 %v4594
        %v4866 = vunpack.c.h.b16 %v4594
        %v4867 = vunpack.c.l.b16 %v4595
        %v4868 = vunpack.c.h.b16 %v4595
        %v4869 = vunpack.c.l.b16 %v4596
        %v4870 = vunpack.c.h.b16 %v4596
        %v4871 = vunpack.c.l.b16 %v4597
        %v4872 = vunpack.c.h.b16 %v4597
        %v4873 = vunpack.c.l.b16 %v4598
        %v4874 = vunpack.c.h.b16 %v4598
        %v4875 = vunpack.c.l.b16 %v4599
        %v4876 = vunpack.c.h.b16 %v4599
        %v4877 = vunpack.c.l.b16 %v4600
        %v4878 = vunpack.c.h.b16 %v4600
        %v4879 = vunpack.c.l.b16 %v4601
        %v4880 = vunpack.c.h.b16 %v4601
        %v4881 = vpack.c.b16 %v4773, %v4769
        %v4882 = vpack.c.b16 %v4774, %v4770
        %v4883 = vpack.c.b16 %v4775, %v4771
        %v4884 = vpack.c.b16 %v4776, %v4772
        %v4885 = vpack.c.b16 %v4781, %v4777
        %v4886 = vpack.c.b16 %v4782, %v4778
        %v4887 = vpack.c.b16 %v4783, %v4779
        %v4888 = vpack.c.b16 %v4784, %v4780
        %v4889 = vpack.c.b16 %v4789, %v4785
        %v4890 = vpack.c.b16 %v4790, %v4786
        %v4891 = vpack.c.b16 %v4791, %v4787
        %v4892 = vpack.c.b16 %v4792, %v4788
        %v4893 = vpack.c.b16 %v4797, %v4793
        %v4894 = vpack.c.b16 %v4798, %v4794
        %v4895 = vpack.c.b16 %v4799, %v4795
        %v4896 = vpack.c.b16 %v4800, %v4796
        %v4897 = vpack.c.b16 %v4805, %v4801
        %v4898 = vpack.c.b16 %v4806, %v4802
        %v4899 = vpack.c.b16 %v4807, %v4803
        %v4900 = vpack.c.b16 %v4808, %v4804
        %v4901 = vpack.c.b16 %v4813, %v4809
        %v4902 = vpack.c.b16 %v4814, %v4810
        %v4903 = vpack.c.b16 %v4815, %v4811
        %v4904 = vpack.c.b16 %v4816, %v4812
        %v4905 = vpack.c.b16 %v4821, %v4817
        %v4906 = vpack.c.b16 %v4822, %v4818
        %v4907 = vpack.c.b16 %v4823, %v4819
        %v4908 = vpack.c.b16 %v4824, %v4820
        %v4909 = vpack.c.b16 %v4829, %v4825
        %v4910 = vpack.c.b16 %v4830, %v4826
        %v4911 = vpack.c.b16 %v4831, %v4827
        %v4912 = vpack.c.b16 %v4832, %v4828
        %v4913 = vpack.c.b16 %v4837, %v4833
        %v4914 = vpack.c.b16 %v4838, %v4834
        %v4915 = vpack.c.b16 %v4839, %v4835
        %v4916 = vpack.c.b16 %v4840, %v4836
        %v4917 = vpack.c.b16 %v4845, %v4841
        %v4918 = vpack.c.b16 %v4846, %v4842
        %v4919 = vpack.c.b16 %v4847, %v4843
        %v4920 = vpack.c.b16 %v4848, %v4844
        %v4921 = vpack.c.b16 %v4853, %v4849
        %v4922 = vpack.c.b16 %v4854, %v4850
        %v4923 = vpack.c.b16 %v4855, %v4851
        %v4924 = vpack.c.b16 %v4856, %v4852
        %v4925 = vpack.c.b16 %v4861, %v4857
        %v4926 = vpack.c.b16 %v4862, %v4858
        %v4927 = vpack.c.b16 %v4863, %v4859
        %v4928 = vpack.c.b16 %v4864, %v4860
        %v4929 = vpack.c.b16 %v4869, %v4865
        %v4930 = vpack.c.b16 %v4870, %v4866
        %v4931 = vpack.c.b16 %v4871, %v4867
        %v4932 = vpack.c.b16 %v4872, %v4868
        %v4933 = vpack.c.b16 %v4877, %v4873
        %v4934 = vpack.c.b16 %v4878, %v4874
        %v4935 = vpack.c.b16 %v4879, %v4875
        %v4936 = vpack.c.b16 %v4880, %v4876
        %v4994 = vsel %vm1672, %v4640, 0
        %v4997 = vsel %vm1672, %v4644, 0
        %v5000 = vsel %vm1672, %v4648, 0
        %v5003 = vsel %vm1672, %v4652, 0
        %v5006 = vsel %vm1672, %v4656, 0
        %v5009 = vsel %vm1672, %v4660, 0
        %v5012 = vsel %vm1672, %v4664, 0
        %v5015 = vsel %vm1672, %v4668, 0
        %v5018 = vsel %vm1672, %v4672, 0
        %v5021 = vsel %vm1672, %v4676, 0
        %v5024 = vsel %vm1672, %v4680, 0
        %v5027 = vsel %vm1672, %v4684, 0
        %v5030 = vsel %vm1672, %v4688, 0
        %v5033 = vsel %vm1672, %v4692, 0
        %v5036 = vsel %vm1672, %v4696, 0
        %v5039 = vsel %vm1672, %v4695, 0
        %5041 = vmatpush.bf16.msra.mxu0 %v4909
        %5042 = vmatpush.bf16.msra.mxu0 %v4905
        %5043 = vmatpush.bf16.msra.mxu0 %v4901
        %5044 = vmatpush.bf16.msra.mxu0 %v4897
        %5045 = vmatpush.bf16.msra.mxu0 %v4893
        %5046 = vmatpush.bf16.msra.mxu0 %v4889
        %5047 = vmatpush.bf16.msra.mxu0 %v4885
        %5048 = vmatpush.bf16.msra.mxu0 %v4881
        %5049 = vmatmul.bf16.gmra.mxu0 %v4637
        %v5050 = vpop.f32.mrf.mxu0
        %v5051 = vadd.f32 0.0, %v5050
        %v5052 = vpop.f32.mrf.mxu0
        %v5053 = vadd.f32 0.0, %v5052
        %5054 = vmatmul.bf16.gmra.mxu0 %v4642
        %v5055 = vpop.f32.mrf.mxu0
        %v5056 = vadd.f32 0.0, %v5055
        %v5057 = vpop.f32.mrf.mxu0
        %v5058 = vadd.f32 0.0, %v5057
        %5059 = vmatmul.bf16.gmra.mxu0 %v4646
        %v5060 = vpop.f32.mrf.mxu0
        %v5061 = vadd.f32 0.0, %v5060
        %v5062 = vpop.f32.mrf.mxu0
        %v5063 = vadd.f32 0.0, %v5062
        %5064 = vmatmul.bf16.gmra.mxu0 %v4650
        %v5065 = vpop.f32.mrf.mxu0
        %v5066 = vadd.f32 0.0, %v5065
        %v5067 = vpop.f32.mrf.mxu0
        %v5068 = vadd.f32 0.0, %v5067
        %5069 = vmatmul.bf16.gmra.mxu0 %v4654
        %v5070 = vpop.f32.mrf.mxu0
        %v5071 = vadd.f32 0.0, %v5070
        %v5072 = vpop.f32.mrf.mxu0
        %v5073 = vadd.f32 0.0, %v5072
        %5074 = vmatmul.bf16.gmra.mxu0 %v4658
        %v5075 = vpop.f32.mrf.mxu0
        %v5076 = vadd.f32 0.0, %v5075
        %v5077 = vpop.f32.mrf.mxu0
        %v5078 = vadd.f32 0.0, %v5077
        %5079 = vmatmul.bf16.gmra.mxu0 %v4662
        %v5080 = vpop.f32.mrf.mxu0
        %v5081 = vadd.f32 0.0, %v5080
        %v5082 = vpop.f32.mrf.mxu0
        %v5083 = vadd.f32 0.0, %v5082
        %5084 = vmatmul.bf16.gmra.mxu0 %v4666
        %v5085 = vpop.f32.mrf.mxu0
        %v5086 = vadd.f32 0.0, %v5085
        %v5087 = vpop.f32.mrf.mxu0
        %v5088 = vadd.f32 0.0, %v5087
        %5089 = vmatmul.bf16.gmra.mxu0 %v4670
        %v5090 = vpop.f32.mrf.mxu0
        %v5091 = vadd.f32 0.0, %v5090
        %v5092 = vpop.f32.mrf.mxu0
        %v5093 = vadd.f32 0.0, %v5092
        %5094 = vmatmul.bf16.gmra.mxu0 %v4674
        %v5095 = vpop.f32.mrf.mxu0
        %v5096 = vadd.f32 0.0, %v5095
        %v5097 = vpop.f32.mrf.mxu0
        %v5098 = vadd.f32 0.0, %v5097
        %5099 = vmatmul.bf16.gmra.mxu0 %v4678
        %v5100 = vpop.f32.mrf.mxu0
        %v5101 = vadd.f32 0.0, %v5100
        %v5102 = vpop.f32.mrf.mxu0
        %v5103 = vadd.f32 0.0, %v5102
        %5104 = vmatmul.bf16.gmra.mxu0 %v4682
        %v5105 = vpop.f32.mrf.mxu0
        %v5106 = vadd.f32 0.0, %v5105
        %v5107 = vpop.f32.mrf.mxu0
        %v5108 = vadd.f32 0.0, %v5107
        %5109 = vmatmul.bf16.gmra.mxu0 %v4686
        %v5110 = vpop.f32.mrf.mxu0
        %v5111 = vadd.f32 0.0, %v5110
        %v5112 = vpop.f32.mrf.mxu0
        %v5113 = vadd.f32 0.0, %v5112
        %5114 = vmatmul.bf16.gmra.mxu0 %v4690
        %v5115 = vpop.f32.mrf.mxu0
        %v5116 = vadd.f32 0.0, %v5115
        %v5117 = vpop.f32.mrf.mxu0
        %v5118 = vadd.f32 0.0, %v5117
        %5119 = vmatmul.bf16.gmra.mxu0 %v4694
        %v5120 = vpop.f32.mrf.mxu0
        %v5121 = vadd.f32 0.0, %v5120
        %v5122 = vpop.f32.mrf.mxu0
        %v5123 = vadd.f32 0.0, %v5122
        %5124 = vmatmul.bf16.gmra.mxu0 %v4693
        %v5125 = vpop.f32.mrf.mxu0
        %v5126 = vadd.f32 0.0, %v5125
        %v5127 = vpop.f32.mrf.mxu0
        %v5128 = vadd.f32 0.0, %v5127
        %5129 = vdwg.mxu0
        %5130 = vmatpush.bf16.msra.mxu0 0
        %5131 = vmatpush.bf16.msra.mxu0 0
        %5132 = vmatpush.bf16.msra.mxu0 %v4933
        %5133 = vmatpush.bf16.msra.mxu0 %v4929
        %5134 = vmatpush.bf16.msra.mxu0 %v4925
        %5135 = vmatpush.bf16.msra.mxu0 %v4921
        %5136 = vmatpush.bf16.msra.mxu0 %v4917
        %5137 = vmatpush.bf16.msra.mxu0 %v4913
        %5138 = vmatmul.bf16.gmra.mxu0 %v4994
        %v5139 = vpop.f32.mrf.mxu0
        %v5140 = vadd.f32 %v5051, %v5139
        %v5141 = vpop.f32.mrf.mxu0
        %v5142 = vadd.f32 %v5053, %v5141
        %5143 = vmatmul.bf16.gmra.mxu0 %v4997
        %v5144 = vpop.f32.mrf.mxu0
        %v5145 = vadd.f32 %v5056, %v5144
        %v5146 = vpop.f32.mrf.mxu0
        %v5147 = vadd.f32 %v5058, %v5146
        %5148 = vmatmul.bf16.gmra.mxu0 %v5000
        %v5149 = vpop.f32.mrf.mxu0
        %v5150 = vadd.f32 %v5061, %v5149
        %v5151 = vpop.f32.mrf.mxu0
        %v5152 = vadd.f32 %v5063, %v5151
        %5153 = vmatmul.bf16.gmra.mxu0 %v5003
        %v5154 = vpop.f32.mrf.mxu0
        %v5155 = vadd.f32 %v5066, %v5154
        %v5156 = vpop.f32.mrf.mxu0
        %v5157 = vadd.f32 %v5068, %v5156
        %5158 = vmatmul.bf16.gmra.mxu0 %v5006
        %v5159 = vpop.f32.mrf.mxu0
        %v5160 = vadd.f32 %v5071, %v5159
        %v5161 = vpop.f32.mrf.mxu0
        %v5162 = vadd.f32 %v5073, %v5161
        %5163 = vmatmul.bf16.gmra.mxu0 %v5009
        %v5164 = vpop.f32.mrf.mxu0
        %v5165 = vadd.f32 %v5076, %v5164
        %v5166 = vpop.f32.mrf.mxu0
        %v5167 = vadd.f32 %v5078, %v5166
        %5168 = vmatmul.bf16.gmra.mxu0 %v5012
        %v5169 = vpop.f32.mrf.mxu0
        %v5170 = vadd.f32 %v5081, %v5169
        %v5171 = vpop.f32.mrf.mxu0
        %v5172 = vadd.f32 %v5083, %v5171
        %5173 = vmatmul.bf16.gmra.mxu0 %v5015
        %v5174 = vpop.f32.mrf.mxu0
        %v5175 = vadd.f32 %v5086, %v5174
        %v5176 = vpop.f32.mrf.mxu0
        %v5177 = vadd.f32 %v5088, %v5176
        %5178 = vmatmul.bf16.gmra.mxu0 %v5018
        %v5179 = vpop.f32.mrf.mxu0
        %v5180 = vadd.f32 %v5091, %v5179
        %v5181 = vpop.f32.mrf.mxu0
        %v5182 = vadd.f32 %v5093, %v5181
        %5183 = vmatmul.bf16.gmra.mxu0 %v5021
        %v5184 = vpop.f32.mrf.mxu0
        %v5185 = vadd.f32 %v5096, %v5184
        %v5186 = vpop.f32.mrf.mxu0
        %v5187 = vadd.f32 %v5098, %v5186
        %5188 = vmatmul.bf16.gmra.mxu0 %v5024
        %v5189 = vpop.f32.mrf.mxu0
        %v5190 = vadd.f32 %v5101, %v5189
        %v5191 = vpop.f32.mrf.mxu0
        %v5192 = vadd.f32 %v5103, %v5191
        %5193 = vmatmul.bf16.gmra.mxu0 %v5027
        %v5194 = vpop.f32.mrf.mxu0
        %v5195 = vadd.f32 %v5106, %v5194
        %v5196 = vpop.f32.mrf.mxu0
        %v5197 = vadd.f32 %v5108, %v5196
        %5198 = vmatmul.bf16.gmra.mxu0 %v5030
        %v5199 = vpop.f32.mrf.mxu0
        %v5200 = vadd.f32 %v5111, %v5199
        %v5201 = vpop.f32.mrf.mxu0
        %v5202 = vadd.f32 %v5113, %v5201
        %5203 = vmatmul.bf16.gmra.mxu0 %v5033
        %v5204 = vpop.f32.mrf.mxu0
        %v5205 = vadd.f32 %v5116, %v5204
        %v5206 = vpop.f32.mrf.mxu0
        %v5207 = vadd.f32 %v5118, %v5206
        %5208 = vmatmul.bf16.gmra.mxu0 %v5036
        %v5209 = vpop.f32.mrf.mxu0
        %v5210 = vadd.f32 %v5121, %v5209
        %v5211 = vpop.f32.mrf.mxu0
        %v5212 = vadd.f32 %v5123, %v5211
        %5213 = vmatmul.bf16.gmra.mxu0 %v5039
        %v5214 = vpop.f32.mrf.mxu0
        %v5215 = vadd.f32 %v5126, %v5214
        %v5216 = vpop.f32.mrf.mxu0
        %v5217 = vadd.f32 %v5128, %v5216
        %5218 = vdwg.mxu0
        %5219 = vmatpush.bf16.msra.mxu0 %v4910
        %5220 = vmatpush.bf16.msra.mxu0 %v4906
        %5221 = vmatpush.bf16.msra.mxu0 %v4902
        %5222 = vmatpush.bf16.msra.mxu0 %v4898
        %5223 = vmatpush.bf16.msra.mxu0 %v4894
        %5224 = vmatpush.bf16.msra.mxu0 %v4890
        %5225 = vmatpush.bf16.msra.mxu0 %v4886
        %5226 = vmatpush.bf16.msra.mxu0 %v4882
        %5227 = vmatmul.bf16.gmra.mxu0 %v4637
        %v5228 = vpop.f32.mrf.mxu0
        %v5229 = vadd.f32 0.0, %v5228
        %v5230 = vpop.f32.mrf.mxu0
        %v5231 = vadd.f32 0.0, %v5230
        %5232 = vmatmul.bf16.gmra.mxu0 %v4642
        %v5233 = vpop.f32.mrf.mxu0
        %v5234 = vadd.f32 0.0, %v5233
        %v5235 = vpop.f32.mrf.mxu0
        %v5236 = vadd.f32 0.0, %v5235
        %5237 = vmatmul.bf16.gmra.mxu0 %v4646
        %v5238 = vpop.f32.mrf.mxu0
        %v5239 = vadd.f32 0.0, %v5238
        %v5240 = vpop.f32.mrf.mxu0
        %v5241 = vadd.f32 0.0, %v5240
        %5242 = vmatmul.bf16.gmra.mxu0 %v4650
        %v5243 = vpop.f32.mrf.mxu0
        %v5244 = vadd.f32 0.0, %v5243
        %v5245 = vpop.f32.mrf.mxu0
        %v5246 = vadd.f32 0.0, %v5245
        %5247 = vmatmul.bf16.gmra.mxu0 %v4654
        %v5248 = vpop.f32.mrf.mxu0
        %v5249 = vadd.f32 0.0, %v5248
        %v5250 = vpop.f32.mrf.mxu0
        %v5251 = vadd.f32 0.0, %v5250
        %5252 = vmatmul.bf16.gmra.mxu0 %v4658
        %v5253 = vpop.f32.mrf.mxu0
        %v5254 = vadd.f32 0.0, %v5253
        %v5255 = vpop.f32.mrf.mxu0
        %v5256 = vadd.f32 0.0, %v5255
        %5257 = vmatmul.bf16.gmra.mxu0 %v4662
        %v5258 = vpop.f32.mrf.mxu0
        %v5259 = vadd.f32 0.0, %v5258
        %v5260 = vpop.f32.mrf.mxu0
        %v5261 = vadd.f32 0.0, %v5260
        %5262 = vmatmul.bf16.gmra.mxu0 %v4666
        %v5263 = vpop.f32.mrf.mxu0
        %v5264 = vadd.f32 0.0, %v5263
        %v5265 = vpop.f32.mrf.mxu0
        %v5266 = vadd.f32 0.0, %v5265
        %5267 = vmatmul.bf16.gmra.mxu0 %v4670
        %v5268 = vpop.f32.mrf.mxu0
        %v5269 = vadd.f32 0.0, %v5268
        %v5270 = vpop.f32.mrf.mxu0
        %v5271 = vadd.f32 0.0, %v5270
        %5272 = vmatmul.bf16.gmra.mxu0 %v4674
        %v5273 = vpop.f32.mrf.mxu0
        %v5274 = vadd.f32 0.0, %v5273
        %v5275 = vpop.f32.mrf.mxu0
        %v5276 = vadd.f32 0.0, %v5275
        %5277 = vmatmul.bf16.gmra.mxu0 %v4678
        %v5278 = vpop.f32.mrf.mxu0
        %v5279 = vadd.f32 0.0, %v5278
        %v5280 = vpop.f32.mrf.mxu0
        %v5281 = vadd.f32 0.0, %v5280
        %5282 = vmatmul.bf16.gmra.mxu0 %v4682
        %v5283 = vpop.f32.mrf.mxu0
        %v5284 = vadd.f32 0.0, %v5283
        %v5285 = vpop.f32.mrf.mxu0
        %v5286 = vadd.f32 0.0, %v5285
        %5287 = vmatmul.bf16.gmra.mxu0 %v4686
        %v5288 = vpop.f32.mrf.mxu0
        %v5289 = vadd.f32 0.0, %v5288
        %v5290 = vpop.f32.mrf.mxu0
        %v5291 = vadd.f32 0.0, %v5290
        %5292 = vmatmul.bf16.gmra.mxu0 %v4690
        %v5293 = vpop.f32.mrf.mxu0
        %v5294 = vadd.f32 0.0, %v5293
        %v5295 = vpop.f32.mrf.mxu0
        %v5296 = vadd.f32 0.0, %v5295
        %5297 = vmatmul.bf16.gmra.mxu0 %v4694
        %v5298 = vpop.f32.mrf.mxu0
        %v5299 = vadd.f32 0.0, %v5298
        %v5300 = vpop.f32.mrf.mxu0
        %v5301 = vadd.f32 0.0, %v5300
        %5302 = vmatmul.bf16.gmra.mxu0 %v4693
        %v5303 = vpop.f32.mrf.mxu0
        %v5304 = vadd.f32 0.0, %v5303
        %v5305 = vpop.f32.mrf.mxu0
        %v5306 = vadd.f32 0.0, %v5305
        %5307 = vdwg.mxu0
        %5308 = vmatpush.bf16.msra.mxu0 0
        %5309 = vmatpush.bf16.msra.mxu0 0
        %5310 = vmatpush.bf16.msra.mxu0 %v4934
        %5311 = vmatpush.bf16.msra.mxu0 %v4930
        %5312 = vmatpush.bf16.msra.mxu0 %v4926
        %5313 = vmatpush.bf16.msra.mxu0 %v4922
        %5314 = vmatpush.bf16.msra.mxu0 %v4918
        %5315 = vmatpush.bf16.msra.mxu0 %v4914
        %5316 = vmatmul.bf16.gmra.mxu0 %v4994
        %v5317 = vpop.f32.mrf.mxu0
        %v5318 = vadd.f32 %v5229, %v5317
        %v5319 = vpop.f32.mrf.mxu0
        %v5320 = vadd.f32 %v5231, %v5319
        %5321 = vmatmul.bf16.gmra.mxu0 %v4997
        %v5322 = vpop.f32.mrf.mxu0
        %v5323 = vadd.f32 %v5234, %v5322
        %v5324 = vpop.f32.mrf.mxu0
        %v5325 = vadd.f32 %v5236, %v5324
        %5326 = vmatmul.bf16.gmra.mxu0 %v5000
        %v5327 = vpop.f32.mrf.mxu0
        %v5328 = vadd.f32 %v5239, %v5327
        %v5329 = vpop.f32.mrf.mxu0
        %v5330 = vadd.f32 %v5241, %v5329
        %5331 = vmatmul.bf16.gmra.mxu0 %v5003
        %v5332 = vpop.f32.mrf.mxu0
        %v5333 = vadd.f32 %v5244, %v5332
        %v5334 = vpop.f32.mrf.mxu0
        %v5335 = vadd.f32 %v5246, %v5334
        %5336 = vmatmul.bf16.gmra.mxu0 %v5006
        %v5337 = vpop.f32.mrf.mxu0
        %v5338 = vadd.f32 %v5249, %v5337
        %v5339 = vpop.f32.mrf.mxu0
        %v5340 = vadd.f32 %v5251, %v5339
        %5341 = vmatmul.bf16.gmra.mxu0 %v5009
        %v5342 = vpop.f32.mrf.mxu0
        %v5343 = vadd.f32 %v5254, %v5342
        %v5344 = vpop.f32.mrf.mxu0
        %v5345 = vadd.f32 %v5256, %v5344
        %5346 = vmatmul.bf16.gmra.mxu0 %v5012
        %v5347 = vpop.f32.mrf.mxu0
        %v5348 = vadd.f32 %v5259, %v5347
        %v5349 = vpop.f32.mrf.mxu0
        %v5350 = vadd.f32 %v5261, %v5349
        %5351 = vmatmul.bf16.gmra.mxu0 %v5015
        %v5352 = vpop.f32.mrf.mxu0
        %v5353 = vadd.f32 %v5264, %v5352
        %v5354 = vpop.f32.mrf.mxu0
        %v5355 = vadd.f32 %v5266, %v5354
        %5356 = vmatmul.bf16.gmra.mxu0 %v5018
        %v5357 = vpop.f32.mrf.mxu0
        %v5358 = vadd.f32 %v5269, %v5357
        %v5359 = vpop.f32.mrf.mxu0
        %v5360 = vadd.f32 %v5271, %v5359
        %5361 = vmatmul.bf16.gmra.mxu0 %v5021
        %v5362 = vpop.f32.mrf.mxu0
        %v5363 = vadd.f32 %v5274, %v5362
        %v5364 = vpop.f32.mrf.mxu0
        %v5365 = vadd.f32 %v5276, %v5364
        %5366 = vmatmul.bf16.gmra.mxu0 %v5024
        %v5367 = vpop.f32.mrf.mxu0
        %v5368 = vadd.f32 %v5279, %v5367
        %v5369 = vpop.f32.mrf.mxu0
        %v5370 = vadd.f32 %v5281, %v5369
        %5371 = vmatmul.bf16.gmra.mxu0 %v5027
        %v5372 = vpop.f32.mrf.mxu0
        %v5373 = vadd.f32 %v5284, %v5372
        %v5374 = vpop.f32.mrf.mxu0
        %v5375 = vadd.f32 %v5286, %v5374
        %5376 = vmatmul.bf16.gmra.mxu0 %v5030
        %v5377 = vpop.f32.mrf.mxu0
        %v5378 = vadd.f32 %v5289, %v5377
        %v5379 = vpop.f32.mrf.mxu0
        %v5380 = vadd.f32 %v5291, %v5379
        %5381 = vmatmul.bf16.gmra.mxu0 %v5033
        %v5382 = vpop.f32.mrf.mxu0
        %v5383 = vadd.f32 %v5294, %v5382
        %v5384 = vpop.f32.mrf.mxu0
        %v5385 = vadd.f32 %v5296, %v5384
        %5386 = vmatmul.bf16.gmra.mxu0 %v5036
        %v5387 = vpop.f32.mrf.mxu0
        %v5388 = vadd.f32 %v5299, %v5387
        %v5389 = vpop.f32.mrf.mxu0
        %v5390 = vadd.f32 %v5301, %v5389
        %5391 = vmatmul.bf16.gmra.mxu0 %v5039
        %v5392 = vpop.f32.mrf.mxu0
        %v5393 = vadd.f32 %v5304, %v5392
        %v5394 = vpop.f32.mrf.mxu0
        %v5395 = vadd.f32 %v5306, %v5394
        %5396 = vdwg.mxu0
        %5397 = vmatpush.bf16.msra.mxu0 %v4911
        %5398 = vmatpush.bf16.msra.mxu0 %v4907
        %5399 = vmatpush.bf16.msra.mxu0 %v4903
        %5400 = vmatpush.bf16.msra.mxu0 %v4899
        %5401 = vmatpush.bf16.msra.mxu0 %v4895
        %5402 = vmatpush.bf16.msra.mxu0 %v4891
        %5403 = vmatpush.bf16.msra.mxu0 %v4887
        %5404 = vmatpush.bf16.msra.mxu0 %v4883
        %5405 = vmatmul.bf16.gmra.mxu0 %v4637
        %v5406 = vpop.f32.mrf.mxu0
        %v5407 = vadd.f32 0.0, %v5406
        %v5408 = vpop.f32.mrf.mxu0
        %v5409 = vadd.f32 0.0, %v5408
        %5410 = vmatmul.bf16.gmra.mxu0 %v4642
        %v5411 = vpop.f32.mrf.mxu0
        %v5412 = vadd.f32 0.0, %v5411
        %v5413 = vpop.f32.mrf.mxu0
        %v5414 = vadd.f32 0.0, %v5413
        %5415 = vmatmul.bf16.gmra.mxu0 %v4646
        %v5416 = vpop.f32.mrf.mxu0
        %v5417 = vadd.f32 0.0, %v5416
        %v5418 = vpop.f32.mrf.mxu0
        %v5419 = vadd.f32 0.0, %v5418
        %5420 = vmatmul.bf16.gmra.mxu0 %v4650
        %v5421 = vpop.f32.mrf.mxu0
        %v5422 = vadd.f32 0.0, %v5421
        %v5423 = vpop.f32.mrf.mxu0
        %v5424 = vadd.f32 0.0, %v5423
        %5425 = vmatmul.bf16.gmra.mxu0 %v4654
        %v5426 = vpop.f32.mrf.mxu0
        %v5427 = vadd.f32 0.0, %v5426
        %v5428 = vpop.f32.mrf.mxu0
        %v5429 = vadd.f32 0.0, %v5428
        %5430 = vmatmul.bf16.gmra.mxu0 %v4658
        %v5431 = vpop.f32.mrf.mxu0
        %v5432 = vadd.f32 0.0, %v5431
        %v5433 = vpop.f32.mrf.mxu0
        %v5434 = vadd.f32 0.0, %v5433
        %5435 = vmatmul.bf16.gmra.mxu0 %v4662
        %v5436 = vpop.f32.mrf.mxu0
        %v5437 = vadd.f32 0.0, %v5436
        %v5438 = vpop.f32.mrf.mxu0
        %v5439 = vadd.f32 0.0, %v5438
        %5440 = vmatmul.bf16.gmra.mxu0 %v4666
        %v5441 = vpop.f32.mrf.mxu0
        %v5442 = vadd.f32 0.0, %v5441
        %v5443 = vpop.f32.mrf.mxu0
        %v5444 = vadd.f32 0.0, %v5443
        %5445 = vmatmul.bf16.gmra.mxu0 %v4670
        %v5446 = vpop.f32.mrf.mxu0
        %v5447 = vadd.f32 0.0, %v5446
        %v5448 = vpop.f32.mrf.mxu0
        %v5449 = vadd.f32 0.0, %v5448
        %5450 = vmatmul.bf16.gmra.mxu0 %v4674
        %v5451 = vpop.f32.mrf.mxu0
        %v5452 = vadd.f32 0.0, %v5451
        %v5453 = vpop.f32.mrf.mxu0
        %v5454 = vadd.f32 0.0, %v5453
        %5455 = vmatmul.bf16.gmra.mxu0 %v4678
        %v5456 = vpop.f32.mrf.mxu0
        %v5457 = vadd.f32 0.0, %v5456
        %v5458 = vpop.f32.mrf.mxu0
        %v5459 = vadd.f32 0.0, %v5458
        %5460 = vmatmul.bf16.gmra.mxu0 %v4682
        %v5461 = vpop.f32.mrf.mxu0
        %v5462 = vadd.f32 0.0, %v5461
        %v5463 = vpop.f32.mrf.mxu0
        %v5464 = vadd.f32 0.0, %v5463
        %5465 = vmatmul.bf16.gmra.mxu0 %v4686
        %v5466 = vpop.f32.mrf.mxu0
        %v5467 = vadd.f32 0.0, %v5466
        %v5468 = vpop.f32.mrf.mxu0
        %v5469 = vadd.f32 0.0, %v5468
        %5470 = vmatmul.bf16.gmra.mxu0 %v4690
        %v5471 = vpop.f32.mrf.mxu0
        %v5472 = vadd.f32 0.0, %v5471
        %v5473 = vpop.f32.mrf.mxu0
        %v5474 = vadd.f32 0.0, %v5473
        %5475 = vmatmul.bf16.gmra.mxu0 %v4694
        %v5476 = vpop.f32.mrf.mxu0
        %v5477 = vadd.f32 0.0, %v5476
        %v5478 = vpop.f32.mrf.mxu0
        %v5479 = vadd.f32 0.0, %v5478
        %5480 = vmatmul.bf16.gmra.mxu0 %v4693
        %v5481 = vpop.f32.mrf.mxu0
        %v5482 = vadd.f32 0.0, %v5481
        %v5483 = vpop.f32.mrf.mxu0
        %v5484 = vadd.f32 0.0, %v5483
        %5485 = vdwg.mxu0
        %5486 = vmatpush.bf16.msra.mxu0 0
        %5487 = vmatpush.bf16.msra.mxu0 0
        %5488 = vmatpush.bf16.msra.mxu0 %v4935
        %5489 = vmatpush.bf16.msra.mxu0 %v4931
        %5490 = vmatpush.bf16.msra.mxu0 %v4927
        %5491 = vmatpush.bf16.msra.mxu0 %v4923
        %5492 = vmatpush.bf16.msra.mxu0 %v4919
        %5493 = vmatpush.bf16.msra.mxu0 %v4915
        %5494 = vmatmul.bf16.gmra.mxu0 %v4994
        %v5495 = vpop.f32.mrf.mxu0
        %v5496 = vadd.f32 %v5407, %v5495
        %v5497 = vpop.f32.mrf.mxu0
        %v5498 = vadd.f32 %v5409, %v5497
        %5499 = vmatmul.bf16.gmra.mxu0 %v4997
        %v5500 = vpop.f32.mrf.mxu0
        %v5501 = vadd.f32 %v5412, %v5500
        %v5502 = vpop.f32.mrf.mxu0
        %v5503 = vadd.f32 %v5414, %v5502
        %5504 = vmatmul.bf16.gmra.mxu0 %v5000
        %v5505 = vpop.f32.mrf.mxu0
        %v5506 = vadd.f32 %v5417, %v5505
        %v5507 = vpop.f32.mrf.mxu0
        %v5508 = vadd.f32 %v5419, %v5507
        %5509 = vmatmul.bf16.gmra.mxu0 %v5003
        %v5510 = vpop.f32.mrf.mxu0
        %v5511 = vadd.f32 %v5422, %v5510
        %v5512 = vpop.f32.mrf.mxu0
        %v5513 = vadd.f32 %v5424, %v5512
        %5514 = vmatmul.bf16.gmra.mxu0 %v5006
        %v5515 = vpop.f32.mrf.mxu0
        %v5516 = vadd.f32 %v5427, %v5515
        %v5517 = vpop.f32.mrf.mxu0
        %v5518 = vadd.f32 %v5429, %v5517
        %5519 = vmatmul.bf16.gmra.mxu0 %v5009
        %v5520 = vpop.f32.mrf.mxu0
        %v5521 = vadd.f32 %v5432, %v5520
        %v5522 = vpop.f32.mrf.mxu0
        %v5523 = vadd.f32 %v5434, %v5522
        %5524 = vmatmul.bf16.gmra.mxu0 %v5012
        %v5525 = vpop.f32.mrf.mxu0
        %v5526 = vadd.f32 %v5437, %v5525
        %v5527 = vpop.f32.mrf.mxu0
        %v5528 = vadd.f32 %v5439, %v5527
        %5529 = vmatmul.bf16.gmra.mxu0 %v5015
        %v5530 = vpop.f32.mrf.mxu0
        %v5531 = vadd.f32 %v5442, %v5530
        %v5532 = vpop.f32.mrf.mxu0
        %v5533 = vadd.f32 %v5444, %v5532
        %5534 = vmatmul.bf16.gmra.mxu0 %v5018
        %v5535 = vpop.f32.mrf.mxu0
        %v5536 = vadd.f32 %v5447, %v5535
        %v5537 = vpop.f32.mrf.mxu0
        %v5538 = vadd.f32 %v5449, %v5537
        %5539 = vmatmul.bf16.gmra.mxu0 %v5021
        %v5540 = vpop.f32.mrf.mxu0
        %v5541 = vadd.f32 %v5452, %v5540
        %v5542 = vpop.f32.mrf.mxu0
        %v5543 = vadd.f32 %v5454, %v5542
        %5544 = vmatmul.bf16.gmra.mxu0 %v5024
        %v5545 = vpop.f32.mrf.mxu0
        %v5546 = vadd.f32 %v5457, %v5545
        %v5547 = vpop.f32.mrf.mxu0
        %v5548 = vadd.f32 %v5459, %v5547
        %5549 = vmatmul.bf16.gmra.mxu0 %v5027
        %v5550 = vpop.f32.mrf.mxu0
        %v5551 = vadd.f32 %v5462, %v5550
        %v5552 = vpop.f32.mrf.mxu0
        %v5553 = vadd.f32 %v5464, %v5552
        %5554 = vmatmul.bf16.gmra.mxu0 %v5030
        %v5555 = vpop.f32.mrf.mxu0
        %v5556 = vadd.f32 %v5467, %v5555
        %v5557 = vpop.f32.mrf.mxu0
        %v5558 = vadd.f32 %v5469, %v5557
        %5559 = vmatmul.bf16.gmra.mxu0 %v5033
        %v5560 = vpop.f32.mrf.mxu0
        %v5561 = vadd.f32 %v5472, %v5560
        %v5562 = vpop.f32.mrf.mxu0
        %v5563 = vadd.f32 %v5474, %v5562
        %5564 = vmatmul.bf16.gmra.mxu0 %v5036
        %v5565 = vpop.f32.mrf.mxu0
        %v5566 = vadd.f32 %v5477, %v5565
        %v5567 = vpop.f32.mrf.mxu0
        %v5568 = vadd.f32 %v5479, %v5567
        %5569 = vmatmul.bf16.gmra.mxu0 %v5039
        %v5570 = vpop.f32.mrf.mxu0
        %v5571 = vadd.f32 %v5482, %v5570
        %v5572 = vpop.f32.mrf.mxu0
        %v5573 = vadd.f32 %v5484, %v5572
        %5574 = vdwg.mxu0
        %5575 = vmatpush.bf16.msra.mxu0 %v4912
        %5576 = vmatpush.bf16.msra.mxu0 %v4908
        %5577 = vmatpush.bf16.msra.mxu0 %v4904
        %5578 = vmatpush.bf16.msra.mxu0 %v4900
        %5579 = vmatpush.bf16.msra.mxu0 %v4896
        %5580 = vmatpush.bf16.msra.mxu0 %v4892
        %5581 = vmatpush.bf16.msra.mxu0 %v4888
        %5582 = vmatpush.bf16.msra.mxu0 %v4884
        %5583 = vmatmul.bf16.gmra.mxu0 %v4637
        %v5584 = vpop.f32.mrf.mxu0
        %v5585 = vadd.f32 0.0, %v5584
        %v5586 = vpop.f32.mrf.mxu0
        %v5587 = vadd.f32 0.0, %v5586
        %5588 = vmatmul.bf16.gmra.mxu0 %v4642
        %v5589 = vpop.f32.mrf.mxu0
        %v5590 = vadd.f32 0.0, %v5589
        %v5591 = vpop.f32.mrf.mxu0
        %v5592 = vadd.f32 0.0, %v5591
        %5593 = vmatmul.bf16.gmra.mxu0 %v4646
        %v5594 = vpop.f32.mrf.mxu0
        %v5595 = vadd.f32 0.0, %v5594
        %v5596 = vpop.f32.mrf.mxu0
        %v5597 = vadd.f32 0.0, %v5596
        %5598 = vmatmul.bf16.gmra.mxu0 %v4650
        %v5599 = vpop.f32.mrf.mxu0
        %v5600 = vadd.f32 0.0, %v5599
        %v5601 = vpop.f32.mrf.mxu0
        %v5602 = vadd.f32 0.0, %v5601
        %5603 = vmatmul.bf16.gmra.mxu0 %v4654
        %v5604 = vpop.f32.mrf.mxu0
        %v5605 = vadd.f32 0.0, %v5604
        %v5606 = vpop.f32.mrf.mxu0
        %v5607 = vadd.f32 0.0, %v5606
        %5608 = vmatmul.bf16.gmra.mxu0 %v4658
        %v5609 = vpop.f32.mrf.mxu0
        %v5610 = vadd.f32 0.0, %v5609
        %v5611 = vpop.f32.mrf.mxu0
        %v5612 = vadd.f32 0.0, %v5611
        %5613 = vmatmul.bf16.gmra.mxu0 %v4662
        %v5614 = vpop.f32.mrf.mxu0
        %v5615 = vadd.f32 0.0, %v5614
        %v5616 = vpop.f32.mrf.mxu0
        %v5617 = vadd.f32 0.0, %v5616
        %5618 = vmatmul.bf16.gmra.mxu0 %v4666
        %v5619 = vpop.f32.mrf.mxu0
        %v5620 = vadd.f32 0.0, %v5619
        %v5621 = vpop.f32.mrf.mxu0
        %v5622 = vadd.f32 0.0, %v5621
        %5623 = vmatmul.bf16.gmra.mxu0 %v4670
        %v5624 = vpop.f32.mrf.mxu0
        %v5625 = vadd.f32 0.0, %v5624
        %v5626 = vpop.f32.mrf.mxu0
        %v5627 = vadd.f32 0.0, %v5626
        %5628 = vmatmul.bf16.gmra.mxu0 %v4674
        %v5629 = vpop.f32.mrf.mxu0
        %v5630 = vadd.f32 0.0, %v5629
        %v5631 = vpop.f32.mrf.mxu0
        %v5632 = vadd.f32 0.0, %v5631
        %5633 = vmatmul.bf16.gmra.mxu0 %v4678
        %v5634 = vpop.f32.mrf.mxu0
        %v5635 = vadd.f32 0.0, %v5634
        %v5636 = vpop.f32.mrf.mxu0
        %v5637 = vadd.f32 0.0, %v5636
        %5638 = vmatmul.bf16.gmra.mxu0 %v4682
        %v5639 = vpop.f32.mrf.mxu0
        %v5640 = vadd.f32 0.0, %v5639
        %v5641 = vpop.f32.mrf.mxu0
        %v5642 = vadd.f32 0.0, %v5641
        %5643 = vmatmul.bf16.gmra.mxu0 %v4686
        %v5644 = vpop.f32.mrf.mxu0
        %v5645 = vadd.f32 0.0, %v5644
        %v5646 = vpop.f32.mrf.mxu0
        %v5647 = vadd.f32 0.0, %v5646
        %5648 = vmatmul.bf16.gmra.mxu0 %v4690
        %v5649 = vpop.f32.mrf.mxu0
        %v5650 = vadd.f32 0.0, %v5649
        %v5651 = vpop.f32.mrf.mxu0
        %v5652 = vadd.f32 0.0, %v5651
        %5653 = vmatmul.bf16.gmra.mxu0 %v4694
        %v5654 = vpop.f32.mrf.mxu0
        %v5655 = vadd.f32 0.0, %v5654
        %v5656 = vpop.f32.mrf.mxu0
        %v5657 = vadd.f32 0.0, %v5656
        %5658 = vmatmul.bf16.gmra.mxu0 %v4693
        %v5659 = vpop.f32.mrf.mxu0
        %v5660 = vadd.f32 0.0, %v5659
        %v5661 = vpop.f32.mrf.mxu0
        %v5662 = vadd.f32 0.0, %v5661
        %5663 = vdwg.mxu0
        %5664 = vmatpush.bf16.msra.mxu0 0
        %5665 = vmatpush.bf16.msra.mxu0 0
        %5666 = vmatpush.bf16.msra.mxu0 %v4936
        %5667 = vmatpush.bf16.msra.mxu0 %v4932
        %5668 = vmatpush.bf16.msra.mxu0 %v4928
        %5669 = vmatpush.bf16.msra.mxu0 %v4924
        %5670 = vmatpush.bf16.msra.mxu0 %v4920
        %5671 = vmatpush.bf16.msra.mxu0 %v4916
        %5672 = vmatmul.bf16.gmra.mxu0 %v4994
        %v5673 = vpop.f32.mrf.mxu0
        %v5674 = vadd.f32 %v5585, %v5673
        %v5675 = vpop.f32.mrf.mxu0
        %v5676 = vadd.f32 %v5587, %v5675
        %5677 = vmatmul.bf16.gmra.mxu0 %v4997
        %v5678 = vpop.f32.mrf.mxu0
        %v5679 = vadd.f32 %v5590, %v5678
        %v5680 = vpop.f32.mrf.mxu0
        %v5681 = vadd.f32 %v5592, %v5680
        %5682 = vmatmul.bf16.gmra.mxu0 %v5000
        %v5683 = vpop.f32.mrf.mxu0
        %v5684 = vadd.f32 %v5595, %v5683
        %v5685 = vpop.f32.mrf.mxu0
        %v5686 = vadd.f32 %v5597, %v5685
        %5687 = vmatmul.bf16.gmra.mxu0 %v5003
        %v5688 = vpop.f32.mrf.mxu0
        %v5689 = vadd.f32 %v5600, %v5688
        %v5690 = vpop.f32.mrf.mxu0
        %v5691 = vadd.f32 %v5602, %v5690
        %5692 = vmatmul.bf16.gmra.mxu0 %v5006
        %v5693 = vpop.f32.mrf.mxu0
        %v5694 = vadd.f32 %v5605, %v5693
        %v5695 = vpop.f32.mrf.mxu0
        %v5696 = vadd.f32 %v5607, %v5695
        %5697 = vmatmul.bf16.gmra.mxu0 %v5009
        %v5698 = vpop.f32.mrf.mxu0
        %v5699 = vadd.f32 %v5610, %v5698
        %v5700 = vpop.f32.mrf.mxu0
        %v5701 = vadd.f32 %v5612, %v5700
        %5702 = vmatmul.bf16.gmra.mxu0 %v5012
        %v5703 = vpop.f32.mrf.mxu0
        %v5704 = vadd.f32 %v5615, %v5703
        %v5705 = vpop.f32.mrf.mxu0
        %v5706 = vadd.f32 %v5617, %v5705
        %5707 = vmatmul.bf16.gmra.mxu0 %v5015
        %v5708 = vpop.f32.mrf.mxu0
        %v5709 = vadd.f32 %v5620, %v5708
        %v5710 = vpop.f32.mrf.mxu0
        %v5711 = vadd.f32 %v5622, %v5710
        %5712 = vmatmul.bf16.gmra.mxu0 %v5018
        %v5713 = vpop.f32.mrf.mxu0
        %v5714 = vadd.f32 %v5625, %v5713
        %v5715 = vpop.f32.mrf.mxu0
        %v5716 = vadd.f32 %v5627, %v5715
        %5717 = vmatmul.bf16.gmra.mxu0 %v5021
        %v5718 = vpop.f32.mrf.mxu0
        %v5719 = vadd.f32 %v5630, %v5718
        %v5720 = vpop.f32.mrf.mxu0
        %v5721 = vadd.f32 %v5632, %v5720
        %5722 = vmatmul.bf16.gmra.mxu0 %v5024
        %v5723 = vpop.f32.mrf.mxu0
        %v5724 = vadd.f32 %v5635, %v5723
        %v5725 = vpop.f32.mrf.mxu0
        %v5726 = vadd.f32 %v5637, %v5725
        %5727 = vmatmul.bf16.gmra.mxu0 %v5027
        %v5728 = vpop.f32.mrf.mxu0
        %v5729 = vadd.f32 %v5640, %v5728
        %v5730 = vpop.f32.mrf.mxu0
        %v5731 = vadd.f32 %v5642, %v5730
        %5732 = vmatmul.bf16.gmra.mxu0 %v5030
        %v5733 = vpop.f32.mrf.mxu0
        %v5734 = vadd.f32 %v5645, %v5733
        %v5735 = vpop.f32.mrf.mxu0
        %v5736 = vadd.f32 %v5647, %v5735
        %5737 = vmatmul.bf16.gmra.mxu0 %v5033
        %v5738 = vpop.f32.mrf.mxu0
        %v5739 = vadd.f32 %v5650, %v5738
        %v5740 = vpop.f32.mrf.mxu0
        %v5741 = vadd.f32 %v5652, %v5740
        %5742 = vmatmul.bf16.gmra.mxu0 %v5036
        %v5743 = vpop.f32.mrf.mxu0
        %v5744 = vadd.f32 %v5655, %v5743
        %v5745 = vpop.f32.mrf.mxu0
        %v5746 = vadd.f32 %v5657, %v5745
        %5747 = vmatmul.bf16.gmra.mxu0 %v5039
        %v5748 = vpop.f32.mrf.mxu0
        %v5749 = vadd.f32 %v5660, %v5748
        %v5750 = vpop.f32.mrf.mxu0
        %v5751 = vadd.f32 %v5662, %v5750
        %5752 = vdwg.mxu0
        %v5753 = vadd.f32 %v3924, %v5140
        %v5754 = vadd.f32 %v4102, %v5318
        %v5755 = vadd.f32 %v4280, %v5496
        %v5756 = vadd.f32 %v4458, %v5674
        %v5757 = vadd.f32 %v3926, %v5142
        %v5758 = vadd.f32 %v4104, %v5320
        %v5759 = vadd.f32 %v4282, %v5498
        %v5760 = vadd.f32 %v4460, %v5676
        %v5761 = vadd.f32 %v3929, %v5145
        %v5762 = vadd.f32 %v4107, %v5323
        %v5763 = vadd.f32 %v4285, %v5501
        %v5764 = vadd.f32 %v4463, %v5679
        %v5765 = vadd.f32 %v3931, %v5147
        %v5766 = vadd.f32 %v4109, %v5325
        %v5767 = vadd.f32 %v4287, %v5503
        %v5768 = vadd.f32 %v4465, %v5681
        %v5769 = vadd.f32 %v3934, %v5150
        %v5770 = vadd.f32 %v4112, %v5328
        %v5771 = vadd.f32 %v4290, %v5506
        %v5772 = vadd.f32 %v4468, %v5684
        %v5773 = vadd.f32 %v3936, %v5152
        %v5774 = vadd.f32 %v4114, %v5330
        %v5775 = vadd.f32 %v4292, %v5508
        %v5776 = vadd.f32 %v4470, %v5686
        %v5777 = vadd.f32 %v3939, %v5155
        %v5778 = vadd.f32 %v4117, %v5333
        %v5779 = vadd.f32 %v4295, %v5511
        %v5780 = vadd.f32 %v4473, %v5689
        %v5781 = vadd.f32 %v3941, %v5157
        %v5782 = vadd.f32 %v4119, %v5335
        %v5783 = vadd.f32 %v4297, %v5513
        %v5784 = vadd.f32 %v4475, %v5691
        %v5785 = vadd.f32 %v3944, %v5160
        %v5786 = vadd.f32 %v4122, %v5338
        %v5787 = vadd.f32 %v4300, %v5516
        %v5788 = vadd.f32 %v4478, %v5694
        %v5789 = vadd.f32 %v3946, %v5162
        %v5790 = vadd.f32 %v4124, %v5340
        %v5791 = vadd.f32 %v4302, %v5518
        %v5792 = vadd.f32 %v4480, %v5696
        %v5793 = vadd.f32 %v3949, %v5165
        %v5794 = vadd.f32 %v4127, %v5343
        %v5795 = vadd.f32 %v4305, %v5521
        %v5796 = vadd.f32 %v4483, %v5699
        %v5797 = vadd.f32 %v3951, %v5167
        %v5798 = vadd.f32 %v4129, %v5345
        %v5799 = vadd.f32 %v4307, %v5523
        %v5800 = vadd.f32 %v4485, %v5701
        %v5801 = vadd.f32 %v3954, %v5170
        %v5802 = vadd.f32 %v4132, %v5348
        %v5803 = vadd.f32 %v4310, %v5526
        %v5804 = vadd.f32 %v4488, %v5704
        %v5805 = vadd.f32 %v3956, %v5172
        %v5806 = vadd.f32 %v4134, %v5350
        %v5807 = vadd.f32 %v4312, %v5528
        %v5808 = vadd.f32 %v4490, %v5706
        %v5809 = vadd.f32 %v3959, %v5175
        %v5810 = vadd.f32 %v4137, %v5353
        %v5811 = vadd.f32 %v4315, %v5531
        %v5812 = vadd.f32 %v4493, %v5709
        %v5813 = vadd.f32 %v3961, %v5177
        %v5814 = vadd.f32 %v4139, %v5355
        %v5815 = vadd.f32 %v4317, %v5533
        %v5816 = vadd.f32 %v4495, %v5711
        %v5817 = vadd.f32 %v3964, %v5180
        %v5818 = vadd.f32 %v4142, %v5358
        %v5819 = vadd.f32 %v4320, %v5536
        %v5820 = vadd.f32 %v4498, %v5714
        %v5821 = vadd.f32 %v3966, %v5182
        %v5822 = vadd.f32 %v4144, %v5360
        %v5823 = vadd.f32 %v4322, %v5538
        %v5824 = vadd.f32 %v4500, %v5716
        %v5825 = vadd.f32 %v3969, %v5185
        %v5826 = vadd.f32 %v4147, %v5363
        %v5827 = vadd.f32 %v4325, %v5541
        %v5828 = vadd.f32 %v4503, %v5719
        %v5829 = vadd.f32 %v3971, %v5187
        %v5830 = vadd.f32 %v4149, %v5365
        %v5831 = vadd.f32 %v4327, %v5543
        %v5832 = vadd.f32 %v4505, %v5721
        %v5833 = vadd.f32 %v3974, %v5190
        %v5834 = vadd.f32 %v4152, %v5368
        %v5835 = vadd.f32 %v4330, %v5546
        %v5836 = vadd.f32 %v4508, %v5724
        %v5837 = vadd.f32 %v3976, %v5192
        %v5838 = vadd.f32 %v4154, %v5370
        %v5839 = vadd.f32 %v4332, %v5548
        %v5840 = vadd.f32 %v4510, %v5726
        %v5841 = vadd.f32 %v3979, %v5195
        %v5842 = vadd.f32 %v4157, %v5373
        %v5843 = vadd.f32 %v4335, %v5551
        %v5844 = vadd.f32 %v4513, %v5729
        %v5845 = vadd.f32 %v3981, %v5197
        %v5846 = vadd.f32 %v4159, %v5375
        %v5847 = vadd.f32 %v4337, %v5553
        %v5848 = vadd.f32 %v4515, %v5731
        %v5849 = vadd.f32 %v3984, %v5200
        %v5850 = vadd.f32 %v4162, %v5378
        %v5851 = vadd.f32 %v4340, %v5556
        %v5852 = vadd.f32 %v4518, %v5734
        %v5853 = vadd.f32 %v3986, %v5202
        %v5854 = vadd.f32 %v4164, %v5380
        %v5855 = vadd.f32 %v4342, %v5558
        %v5856 = vadd.f32 %v4520, %v5736
        %v5857 = vadd.f32 %v3989, %v5205
        %v5858 = vadd.f32 %v4167, %v5383
        %v5859 = vadd.f32 %v4345, %v5561
        %v5860 = vadd.f32 %v4523, %v5739
        %v5861 = vadd.f32 %v3991, %v5207
        %v5862 = vadd.f32 %v4169, %v5385
        %v5863 = vadd.f32 %v4347, %v5563
        %v5864 = vadd.f32 %v4525, %v5741
        %v5865 = vadd.f32 %v3994, %v5210
        %v5866 = vadd.f32 %v4172, %v5388
        %v5867 = vadd.f32 %v4350, %v5566
        %v5868 = vadd.f32 %v4528, %v5744
        %v5869 = vadd.f32 %v3996, %v5212
        %v5870 = vadd.f32 %v4174, %v5390
        %v5871 = vadd.f32 %v4352, %v5568
        %v5872 = vadd.f32 %v4530, %v5746
        %v5873 = vadd.f32 %v3999, %v5215
        %v5874 = vadd.f32 %v4177, %v5393
        %v5875 = vadd.f32 %v4355, %v5571
        %v5876 = vadd.f32 %v4533, %v5749
        %v5877 = vadd.f32 %v4001, %v5217
        %v5878 = vadd.f32 %v4179, %v5395
        %v5879 = vadd.f32 %v4357, %v5573
        %v5880 = vadd.f32 %v4535, %v5751
        %v5881 = vld [vmem:[%s4] sm:$0xf]
        %v5883 = vperm.slane %v5881, 0
        %v5884 = vperm.slane %v5881, 1
        %v5885 = vperm.slane %v5881, 2
        %v5886 = vperm.slane %v5881, 3
        %v5891 = vadd.f32 %v5753, %v5883
        %v5892 = vadd.f32 %v5754, %v5884
        %v5893 = vadd.f32 %v5755, %v5885
        %v5894 = vadd.f32 %v5756, %v5886
        %v5895 = vadd.f32 %v5757, %v5883
        %v5896 = vadd.f32 %v5758, %v5884
        %v5897 = vadd.f32 %v5759, %v5885
        %v5898 = vadd.f32 %v5760, %v5886
        %v5899 = vadd.f32 %v5761, %v5883
        %v5900 = vadd.f32 %v5762, %v5884
        %v5901 = vadd.f32 %v5763, %v5885
        %v5902 = vadd.f32 %v5764, %v5886
        %v5903 = vadd.f32 %v5765, %v5883
        %v5904 = vadd.f32 %v5766, %v5884
        %v5905 = vadd.f32 %v5767, %v5885
        %v5906 = vadd.f32 %v5768, %v5886
        %v5907 = vadd.f32 %v5769, %v5883
        %v5908 = vadd.f32 %v5770, %v5884
        %v5909 = vadd.f32 %v5771, %v5885
        %v5910 = vadd.f32 %v5772, %v5886
        %v5911 = vadd.f32 %v5773, %v5883
        %v5912 = vadd.f32 %v5774, %v5884
        %v5913 = vadd.f32 %v5775, %v5885
        %v5914 = vadd.f32 %v5776, %v5886
        %v5915 = vadd.f32 %v5777, %v5883
        %v5916 = vadd.f32 %v5778, %v5884
        %v5917 = vadd.f32 %v5779, %v5885
        %v5918 = vadd.f32 %v5780, %v5886
        %v5919 = vadd.f32 %v5781, %v5883
        %v5920 = vadd.f32 %v5782, %v5884
        %v5921 = vadd.f32 %v5783, %v5885
        %v5922 = vadd.f32 %v5784, %v5886
        %v5923 = vadd.f32 %v5785, %v5883
        %v5924 = vadd.f32 %v5786, %v5884
        %v5925 = vadd.f32 %v5787, %v5885
        %v5926 = vadd.f32 %v5788, %v5886
        %v5927 = vadd.f32 %v5789, %v5883
        %v5928 = vadd.f32 %v5790, %v5884
        %v5929 = vadd.f32 %v5791, %v5885
        %v5930 = vadd.f32 %v5792, %v5886
        %v5931 = vadd.f32 %v5793, %v5883
        %v5932 = vadd.f32 %v5794, %v5884
        %v5933 = vadd.f32 %v5795, %v5885
        %v5934 = vadd.f32 %v5796, %v5886
        %v5935 = vadd.f32 %v5797, %v5883
        %v5936 = vadd.f32 %v5798, %v5884
        %v5937 = vadd.f32 %v5799, %v5885
        %v5938 = vadd.f32 %v5800, %v5886
        %v5939 = vadd.f32 %v5801, %v5883
        %v5940 = vadd.f32 %v5802, %v5884
        %v5941 = vadd.f32 %v5803, %v5885
        %v5942 = vadd.f32 %v5804, %v5886
        %v5943 = vadd.f32 %v5805, %v5883
        %v5944 = vadd.f32 %v5806, %v5884
        %v5945 = vadd.f32 %v5807, %v5885
        %v5946 = vadd.f32 %v5808, %v5886
        %v5947 = vadd.f32 %v5809, %v5883
        %v5948 = vadd.f32 %v5810, %v5884
        %v5949 = vadd.f32 %v5811, %v5885
        %v5950 = vadd.f32 %v5812, %v5886
        %v5951 = vadd.f32 %v5813, %v5883
        %v5952 = vadd.f32 %v5814, %v5884
        %v5953 = vadd.f32 %v5815, %v5885
        %v5954 = vadd.f32 %v5816, %v5886
        %v5955 = vadd.f32 %v5817, %v5883
        %v5956 = vadd.f32 %v5818, %v5884
        %v5957 = vadd.f32 %v5819, %v5885
        %v5958 = vadd.f32 %v5820, %v5886
        %v5959 = vadd.f32 %v5821, %v5883
        %v5960 = vadd.f32 %v5822, %v5884
        %v5961 = vadd.f32 %v5823, %v5885
        %v5962 = vadd.f32 %v5824, %v5886
        %v5963 = vadd.f32 %v5825, %v5883
        %v5964 = vadd.f32 %v5826, %v5884
        %v5965 = vadd.f32 %v5827, %v5885
        %v5966 = vadd.f32 %v5828, %v5886
        %v5967 = vadd.f32 %v5829, %v5883
        %v5968 = vadd.f32 %v5830, %v5884
        %v5969 = vadd.f32 %v5831, %v5885
        %v5970 = vadd.f32 %v5832, %v5886
        %v5971 = vadd.f32 %v5833, %v5883
        %v5972 = vadd.f32 %v5834, %v5884
        %v5973 = vadd.f32 %v5835, %v5885
        %v5974 = vadd.f32 %v5836, %v5886
        %v5975 = vadd.f32 %v5837, %v5883
        %v5976 = vadd.f32 %v5838, %v5884
        %v5977 = vadd.f32 %v5839, %v5885
        %v5978 = vadd.f32 %v5840, %v5886
        %v5979 = vadd.f32 %v5841, %v5883
        %v5980 = vadd.f32 %v5842, %v5884
        %v5981 = vadd.f32 %v5843, %v5885
        %v5982 = vadd.f32 %v5844, %v5886
        %v5983 = vadd.f32 %v5845, %v5883
        %v5984 = vadd.f32 %v5846, %v5884
        %v5985 = vadd.f32 %v5847, %v5885
        %v5986 = vadd.f32 %v5848, %v5886
        %v5987 = vadd.f32 %v5849, %v5883
        %v5988 = vadd.f32 %v5850, %v5884
        %v5989 = vadd.f32 %v5851, %v5885
        %v5990 = vadd.f32 %v5852, %v5886
        %v5991 = vadd.f32 %v5853, %v5883
        %v5992 = vadd.f32 %v5854, %v5884
        %v5993 = vadd.f32 %v5855, %v5885
        %v5994 = vadd.f32 %v5856, %v5886
        %v5995 = vadd.f32 %v5857, %v5883
        %v5996 = vadd.f32 %v5858, %v5884
        %v5997 = vadd.f32 %v5859, %v5885
        %v5998 = vadd.f32 %v5860, %v5886
        %v5999 = vadd.f32 %v5861, %v5883
        %v6000 = vadd.f32 %v5862, %v5884
        %v6001 = vadd.f32 %v5863, %v5885
        %v6002 = vadd.f32 %v5864, %v5886
        %v6003 = vadd.f32 %v5865, %v5883
        %v6004 = vadd.f32 %v5866, %v5884
        %v6005 = vadd.f32 %v5867, %v5885
        %v6006 = vadd.f32 %v5868, %v5886
        %v6007 = vadd.f32 %v5869, %v5883
        %v6008 = vadd.f32 %v5870, %v5884
        %v6009 = vadd.f32 %v5871, %v5885
        %v6010 = vadd.f32 %v5872, %v5886
        %v6011 = vadd.f32 %v5873, %v5883
        %v6012 = vadd.f32 %v5874, %v5884
        %v6013 = vadd.f32 %v5875, %v5885
        %v6014 = vadd.f32 %v5876, %v5886
        %v6015 = vadd.f32 %v5877, %v5883
        %v6016 = vadd.f32 %v5878, %v5884
        %v6017 = vadd.f32 %v5879, %v5885
        %v6018 = vadd.f32 %v5880, %v5886
        %v6019 = vmax.f32 %v5891, 0.0
        %v6020 = vmax.f32 %v5892, 0.0
        %v6021 = vmax.f32 %v5893, 0.0
        %v6022 = vmax.f32 %v5894, 0.0
        %v6023 = vmax.f32 %v5895, 0.0
        %v6024 = vmax.f32 %v5896, 0.0
        %v6025 = vmax.f32 %v5897, 0.0
        %v6026 = vmax.f32 %v5898, 0.0
        %v6027 = vmax.f32 %v5899, 0.0
        %v6028 = vmax.f32 %v5900, 0.0
        %v6029 = vmax.f32 %v5901, 0.0
        %v6030 = vmax.f32 %v5902, 0.0
        %v6031 = vmax.f32 %v5903, 0.0
        %v6032 = vmax.f32 %v5904, 0.0
        %v6033 = vmax.f32 %v5905, 0.0
        %v6034 = vmax.f32 %v5906, 0.0
        %v6035 = vmax.f32 %v5907, 0.0
        %v6036 = vmax.f32 %v5908, 0.0
        %v6037 = vmax.f32 %v5909, 0.0
        %v6038 = vmax.f32 %v5910, 0.0
        %v6039 = vmax.f32 %v5911, 0.0
        %v6040 = vmax.f32 %v5912, 0.0
        %v6041 = vmax.f32 %v5913, 0.0
        %v6042 = vmax.f32 %v5914, 0.0
        %v6043 = vmax.f32 %v5915, 0.0
        %v6044 = vmax.f32 %v5916, 0.0
        %v6045 = vmax.f32 %v5917, 0.0
        %v6046 = vmax.f32 %v5918, 0.0
        %v6047 = vmax.f32 %v5919, 0.0
        %v6048 = vmax.f32 %v5920, 0.0
        %v6049 = vmax.f32 %v5921, 0.0
        %v6050 = vmax.f32 %v5922, 0.0
        %v6051 = vmax.f32 %v5923, 0.0
        %v6052 = vmax.f32 %v5924, 0.0
        %v6053 = vmax.f32 %v5925, 0.0
        %v6054 = vmax.f32 %v5926, 0.0
        %v6055 = vmax.f32 %v5927, 0.0
        %v6056 = vmax.f32 %v5928, 0.0
        %v6057 = vmax.f32 %v5929, 0.0
        %v6058 = vmax.f32 %v5930, 0.0
        %v6059 = vmax.f32 %v5931, 0.0
        %v6060 = vmax.f32 %v5932, 0.0
        %v6061 = vmax.f32 %v5933, 0.0
        %v6062 = vmax.f32 %v5934, 0.0
        %v6063 = vmax.f32 %v5935, 0.0
        %v6064 = vmax.f32 %v5936, 0.0
        %v6065 = vmax.f32 %v5937, 0.0
        %v6066 = vmax.f32 %v5938, 0.0
        %v6067 = vmax.f32 %v5939, 0.0
        %v6068 = vmax.f32 %v5940, 0.0
        %v6069 = vmax.f32 %v5941, 0.0
        %v6070 = vmax.f32 %v5942, 0.0
        %v6071 = vmax.f32 %v5943, 0.0
        %v6072 = vmax.f32 %v5944, 0.0
        %v6073 = vmax.f32 %v5945, 0.0
        %v6074 = vmax.f32 %v5946, 0.0
        %v6075 = vmax.f32 %v5947, 0.0
        %v6076 = vmax.f32 %v5948, 0.0
        %v6077 = vmax.f32 %v5949, 0.0
        %v6078 = vmax.f32 %v5950, 0.0
        %v6079 = vmax.f32 %v5951, 0.0
        %v6080 = vmax.f32 %v5952, 0.0
        %v6081 = vmax.f32 %v5953, 0.0
        %v6082 = vmax.f32 %v5954, 0.0
        %v6083 = vmax.f32 %v5955, 0.0
        %v6084 = vmax.f32 %v5956, 0.0
        %v6085 = vmax.f32 %v5957, 0.0
        %v6086 = vmax.f32 %v5958, 0.0
        %v6087 = vmax.f32 %v5959, 0.0
        %v6088 = vmax.f32 %v5960, 0.0
        %v6089 = vmax.f32 %v5961, 0.0
        %v6090 = vmax.f32 %v5962, 0.0
        %v6091 = vmax.f32 %v5963, 0.0
        %v6092 = vmax.f32 %v5964, 0.0
        %v6093 = vmax.f32 %v5965, 0.0
        %v6094 = vmax.f32 %v5966, 0.0
        %v6095 = vmax.f32 %v5967, 0.0
        %v6096 = vmax.f32 %v5968, 0.0
        %v6097 = vmax.f32 %v5969, 0.0
        %v6098 = vmax.f32 %v5970, 0.0
        %v6099 = vmax.f32 %v5971, 0.0
        %v6100 = vmax.f32 %v5972, 0.0
        %v6101 = vmax.f32 %v5973, 0.0
        %v6102 = vmax.f32 %v5974, 0.0
        %v6103 = vmax.f32 %v5975, 0.0
        %v6104 = vmax.f32 %v5976, 0.0
        %v6105 = vmax.f32 %v5977, 0.0
        %v6106 = vmax.f32 %v5978, 0.0
        %v6107 = vmax.f32 %v5979, 0.0
        %v6108 = vmax.f32 %v5980, 0.0
        %v6109 = vmax.f32 %v5981, 0.0
        %v6110 = vmax.f32 %v5982, 0.0
        %v6111 = vmax.f32 %v5983, 0.0
        %v6112 = vmax.f32 %v5984, 0.0
        %v6113 = vmax.f32 %v5985, 0.0
        %v6114 = vmax.f32 %v5986, 0.0
        %v6115 = vmax.f32 %v5987, 0.0
        %v6116 = vmax.f32 %v5988, 0.0
        %v6117 = vmax.f32 %v5989, 0.0
        %v6118 = vmax.f32 %v5990, 0.0
        %v6119 = vmax.f32 %v5991, 0.0
        %v6120 = vmax.f32 %v5992, 0.0
        %v6121 = vmax.f32 %v5993, 0.0
        %v6122 = vmax.f32 %v5994, 0.0
        %v6123 = vmax.f32 %v5995, 0.0
        %v6124 = vmax.f32 %v5996, 0.0
        %v6125 = vmax.f32 %v5997, 0.0
        %v6126 = vmax.f32 %v5998, 0.0
        %v6127 = vmax.f32 %v5999, 0.0
        %v6128 = vmax.f32 %v6000, 0.0
        %v6129 = vmax.f32 %v6001, 0.0
        %v6130 = vmax.f32 %v6002, 0.0
        %v6131 = vmax.f32 %v6003, 0.0
        %v6132 = vmax.f32 %v6004, 0.0
        %v6133 = vmax.f32 %v6005, 0.0
        %v6134 = vmax.f32 %v6006, 0.0
        %v6135 = vmax.f32 %v6007, 0.0
        %v6136 = vmax.f32 %v6008, 0.0
        %v6137 = vmax.f32 %v6009, 0.0
        %v6138 = vmax.f32 %v6010, 0.0
        %v6139 = vmax.f32 %v6011, 0.0
        %v6140 = vmax.f32 %v6012, 0.0
        %v6141 = vmax.f32 %v6013, 0.0
        %v6142 = vmax.f32 %v6014, 0.0
        %v6143 = vmax.f32 %v6015, 0.0
        %v6144 = vmax.f32 %v6016, 0.0
        %v6145 = vmax.f32 %v6017, 0.0
        %v6146 = vmax.f32 %v6018, 0.0
        %vm6275 = vcmask 1046528
        %v6276 = vrot.slane %v6019, 1
        %v6277 = vrot.slane %v6023, 1
        %v6278 = vsel %vm6275, %v6276, %v6277
        %v6279 = vrot.slane %v6020, 1
        %v6280 = vrot.slane %v6024, 1
        %v6281 = vsel %vm6275, %v6279, %v6280
        %v6282 = vrot.slane %v6021, 1
        %v6283 = vrot.slane %v6025, 1
        %v6284 = vsel %vm6275, %v6282, %v6283
        %v6285 = vrot.slane %v6022, 1
        %v6286 = vrot.slane %v6026, 1
        %v6287 = vsel %vm6275, %v6285, %v6286
        %v6288 = vrot.slane %v6027, 1
        %v6289 = vsel %vm6275, %v6277, %v6288
        %v6290 = vrot.slane %v6028, 1
        %v6291 = vsel %vm6275, %v6280, %v6290
        %v6292 = vrot.slane %v6029, 1
        %v6293 = vsel %vm6275, %v6283, %v6292
        %v6294 = vrot.slane %v6030, 1
        %v6295 = vsel %vm6275, %v6286, %v6294
        %v6296 = vrot.slane %v6031, 1
        %v6297 = vsel %vm6275, %v6288, %v6296
        %v6298 = vrot.slane %v6032, 1
        %v6299 = vsel %vm6275, %v6290, %v6298
        %v6300 = vrot.slane %v6033, 1
        %v6301 = vsel %vm6275, %v6292, %v6300
        %v6302 = vrot.slane %v6034, 1
        %v6303 = vsel %vm6275, %v6294, %v6302
        %v6304 = vrot.slane %v6035, 1
        %v6305 = vsel %vm6275, %v6296, %v6304
        %v6306 = vrot.slane %v6036, 1
        %v6307 = vsel %vm6275, %v6298, %v6306
        %v6308 = vrot.slane %v6037, 1
        %v6309 = vsel %vm6275, %v6300, %v6308
        %v6310 = vrot.slane %v6038, 1
        %v6311 = vsel %vm6275, %v6302, %v6310
        %v6312 = vrot.slane %v6039, 1
        %v6313 = vsel %vm6275, %v6304, %v6312
        %v6314 = vrot.slane %v6040, 1
        %v6315 = vsel %vm6275, %v6306, %v6314
        %v6316 = vrot.slane %v6041, 1
        %v6317 = vsel %vm6275, %v6308, %v6316
        %v6318 = vrot.slane %v6042, 1
        %v6319 = vsel %vm6275, %v6310, %v6318
        %v6320 = vrot.slane %v6043, 1
        %v6321 = vsel %vm6275, %v6312, %v6320
        %v6322 = vrot.slane %v6044, 1
        %v6323 = vsel %vm6275, %v6314, %v6322
        %v6324 = vrot.slane %v6045, 1
        %v6325 = vsel %vm6275, %v6316, %v6324
        %v6326 = vrot.slane %v6046, 1
        %v6327 = vsel %vm6275, %v6318, %v6326
        %v6328 = vrot.slane %v6047, 1
        %v6329 = vsel %vm6275, %v6320, %v6328
        %v6330 = vrot.slane %v6048, 1
        %v6331 = vsel %vm6275, %v6322, %v6330
        %v6332 = vrot.slane %v6049, 1
        %v6333 = vsel %vm6275, %v6324, %v6332
        %v6334 = vrot.slane %v6050, 1
        %v6335 = vsel %vm6275, %v6326, %v6334
        %v6336 = vrot.slane %v6051, 1
        %v6337 = vsel %vm6275, %v6328, %v6336
        %v6338 = vrot.slane %v6052, 1
        %v6339 = vsel %vm6275, %v6330, %v6338
        %v6340 = vrot.slane %v6053, 1
        %v6341 = vsel %vm6275, %v6332, %v6340
        %v6342 = vrot.slane %v6054, 1
        %v6343 = vsel %vm6275, %v6334, %v6342
        %v6344 = vrot.slane %v6055, 1
        %v6345 = vsel %vm6275, %v6336, %v6344
        %v6346 = vrot.slane %v6056, 1
        %v6347 = vsel %vm6275, %v6338, %v6346
        %v6348 = vrot.slane %v6057, 1
        %v6349 = vsel %vm6275, %v6340, %v6348
        %v6350 = vrot.slane %v6058, 1
        %v6351 = vsel %vm6275, %v6342, %v6350
        %v6352 = vrot.slane %v6059, 1
        %v6353 = vsel %vm6275, %v6344, %v6352
        %v6354 = vrot.slane %v6060, 1
        %v6355 = vsel %vm6275, %v6346, %v6354
        %v6356 = vrot.slane %v6061, 1
        %v6357 = vsel %vm6275, %v6348, %v6356
        %v6358 = vrot.slane %v6062, 1
        %v6359 = vsel %vm6275, %v6350, %v6358
        %v6360 = vrot.slane %v6063, 1
        %v6361 = vsel %vm6275, %v6352, %v6360
        %v6362 = vrot.slane %v6064, 1
        %v6363 = vsel %vm6275, %v6354, %v6362
        %v6364 = vrot.slane %v6065, 1
        %v6365 = vsel %vm6275, %v6356, %v6364
        %v6366 = vrot.slane %v6066, 1
        %v6367 = vsel %vm6275, %v6358, %v6366
        %v6368 = vrot.slane %v6067, 1
        %v6369 = vsel %vm6275, %v6360, %v6368
        %v6370 = vrot.slane %v6068, 1
        %v6371 = vsel %vm6275, %v6362, %v6370
        %v6372 = vrot.slane %v6069, 1
        %v6373 = vsel %vm6275, %v6364, %v6372
        %v6374 = vrot.slane %v6070, 1
        %v6375 = vsel %vm6275, %v6366, %v6374
        %v6376 = vrot.slane %v6071, 1
        %v6377 = vsel %vm6275, %v6368, %v6376
        %v6378 = vrot.slane %v6072, 1
        %v6379 = vsel %vm6275, %v6370, %v6378
        %v6380 = vrot.slane %v6073, 1
        %v6381 = vsel %vm6275, %v6372, %v6380
        %v6382 = vrot.slane %v6074, 1
        %v6383 = vsel %vm6275, %v6374, %v6382
        %v6384 = vrot.slane %v6075, 1
        %v6385 = vsel %vm6275, %v6376, %v6384
        %v6386 = vrot.slane %v6076, 1
        %v6387 = vsel %vm6275, %v6378, %v6386
        %v6388 = vrot.slane %v6077, 1
        %v6389 = vsel %vm6275, %v6380, %v6388
        %v6390 = vrot.slane %v6078, 1
        %v6391 = vsel %vm6275, %v6382, %v6390
        %v6392 = vrot.slane %v6079, 1
        %v6393 = vsel %vm6275, %v6384, %v6392
        %v6394 = vrot.slane %v6080, 1
        %v6395 = vsel %vm6275, %v6386, %v6394
        %v6396 = vrot.slane %v6081, 1
        %v6397 = vsel %vm6275, %v6388, %v6396
        %v6398 = vrot.slane %v6082, 1
        %v6399 = vsel %vm6275, %v6390, %v6398
        %v6400 = vrot.slane %v6083, 1
        %v6401 = vsel %vm6275, %v6392, %v6400
        %v6402 = vrot.slane %v6084, 1
        %v6403 = vsel %vm6275, %v6394, %v6402
        %v6404 = vrot.slane %v6085, 1
        %v6405 = vsel %vm6275, %v6396, %v6404
        %v6406 = vrot.slane %v6086, 1
        %v6407 = vsel %vm6275, %v6398, %v6406
        %v6408 = vrot.slane %v6087, 1
        %v6409 = vsel %vm6275, %v6400, %v6408
        %v6410 = vrot.slane %v6088, 1
        %v6411 = vsel %vm6275, %v6402, %v6410
        %v6412 = vrot.slane %v6089, 1
        %v6413 = vsel %vm6275, %v6404, %v6412
        %v6414 = vrot.slane %v6090, 1
        %v6415 = vsel %vm6275, %v6406, %v6414
        %v6416 = vrot.slane %v6091, 1
        %v6417 = vsel %vm6275, %v6408, %v6416
        %v6418 = vrot.slane %v6092, 1
        %v6419 = vsel %vm6275, %v6410, %v6418
        %v6420 = vrot.slane %v6093, 1
        %v6421 = vsel %vm6275, %v6412, %v6420
        %v6422 = vrot.slane %v6094, 1
        %v6423 = vsel %vm6275, %v6414, %v6422
        %v6424 = vrot.slane %v6095, 1
        %v6425 = vsel %vm6275, %v6416, %v6424
        %v6426 = vrot.slane %v6096, 1
        %v6427 = vsel %vm6275, %v6418, %v6426
        %v6428 = vrot.slane %v6097, 1
        %v6429 = vsel %vm6275, %v6420, %v6428
        %v6430 = vrot.slane %v6098, 1
        %v6431 = vsel %vm6275, %v6422, %v6430
        %v6432 = vrot.slane %v6099, 1
        %v6433 = vsel %vm6275, %v6424, %v6432
        %v6434 = vrot.slane %v6100, 1
        %v6435 = vsel %vm6275, %v6426, %v6434
        %v6436 = vrot.slane %v6101, 1
        %v6437 = vsel %vm6275, %v6428, %v6436
        %v6438 = vrot.slane %v6102, 1
        %v6439 = vsel %vm6275, %v6430, %v6438
        %v6440 = vrot.slane %v6103, 1
        %v6441 = vsel %vm6275, %v6432, %v6440
        %v6442 = vrot.slane %v6104, 1
        %v6443 = vsel %vm6275, %v6434, %v6442
        %v6444 = vrot.slane %v6105, 1
        %v6445 = vsel %vm6275, %v6436, %v6444
        %v6446 = vrot.slane %v6106, 1
        %v6447 = vsel %vm6275, %v6438, %v6446
        %v6448 = vrot.slane %v6107, 1
        %v6449 = vsel %vm6275, %v6440, %v6448
        %v6450 = vrot.slane %v6108, 1
        %v6451 = vsel %vm6275, %v6442, %v6450
        %v6452 = vrot.slane %v6109, 1
        %v6453 = vsel %vm6275, %v6444, %v6452
        %v6454 = vrot.slane %v6110, 1
        %v6455 = vsel %vm6275, %v6446, %v6454
        %v6456 = vrot.slane %v6111, 1
        %v6457 = vsel %vm6275, %v6448, %v6456
        %v6458 = vrot.slane %v6112, 1
        %v6459 = vsel %vm6275, %v6450, %v6458
        %v6460 = vrot.slane %v6113, 1
        %v6461 = vsel %vm6275, %v6452, %v6460
        %v6462 = vrot.slane %v6114, 1
        %v6463 = vsel %vm6275, %v6454, %v6462
        %v6464 = vrot.slane %v6115, 1
        %v6465 = vsel %vm6275, %v6456, %v6464
        %v6466 = vrot.slane %v6116, 1
        %v6467 = vsel %vm6275, %v6458, %v6466
        %v6468 = vrot.slane %v6117, 1
        %v6469 = vsel %vm6275, %v6460, %v6468
        %v6470 = vrot.slane %v6118, 1
        %v6471 = vsel %vm6275, %v6462, %v6470
        %v6472 = vrot.slane %v6119, 1
        %v6473 = vsel %vm6275, %v6464, %v6472
        %v6474 = vrot.slane %v6120, 1
        %v6475 = vsel %vm6275, %v6466, %v6474
        %v6476 = vrot.slane %v6121, 1
        %v6477 = vsel %vm6275, %v6468, %v6476
        %v6478 = vrot.slane %v6122, 1
        %v6479 = vsel %vm6275, %v6470, %v6478
        %v6480 = vrot.slane %v6123, 1
        %v6481 = vsel %vm6275, %v6472, %v6480
        %v6482 = vrot.slane %v6124, 1
        %v6483 = vsel %vm6275, %v6474, %v6482
        %v6484 = vrot.slane %v6125, 1
        %v6485 = vsel %vm6275, %v6476, %v6484
        %v6486 = vrot.slane %v6126, 1
        %v6487 = vsel %vm6275, %v6478, %v6486
        %v6488 = vrot.slane %v6127, 1
        %v6489 = vsel %vm6275, %v6480, %v6488
        %v6490 = vrot.slane %v6128, 1
        %v6491 = vsel %vm6275, %v6482, %v6490
        %v6492 = vrot.slane %v6129, 1
        %v6493 = vsel %vm6275, %v6484, %v6492
        %v6494 = vrot.slane %v6130, 1
        %v6495 = vsel %vm6275, %v6486, %v6494
        %v6496 = vrot.slane %v6131, 1
        %v6497 = vsel %vm6275, %v6488, %v6496
        %v6498 = vrot.slane %v6132, 1
        %v6499 = vsel %vm6275, %v6490, %v6498
        %v6500 = vrot.slane %v6133, 1
        %v6501 = vsel %vm6275, %v6492, %v6500
        %v6502 = vrot.slane %v6134, 1
        %v6503 = vsel %vm6275, %v6494, %v6502
        %v6504 = vrot.slane %v6135, 1
        %v6505 = vsel %vm6275, %v6496, %v6504
        %v6506 = vrot.slane %v6136, 1
        %v6507 = vsel %vm6275, %v6498, %v6506
        %v6508 = vrot.slane %v6137, 1
        %v6509 = vsel %vm6275, %v6500, %v6508
        %v6510 = vrot.slane %v6138, 1
        %v6511 = vsel %vm6275, %v6502, %v6510
        %v6512 = vrot.slane %v6139, 1
        %v6513 = vsel %vm6275, %v6504, %v6512
        %v6514 = vrot.slane %v6140, 1
        %v6515 = vsel %vm6275, %v6506, %v6514
        %v6516 = vrot.slane %v6141, 1
        %v6517 = vsel %vm6275, %v6508, %v6516
        %v6518 = vrot.slane %v6142, 1
        %v6519 = vsel %vm6275, %v6510, %v6518
        %v6520 = vrot.slane %v6143, 1
        %v6521 = vsel %vm6275, %v6512, %v6520
        %v6522 = vrot.slane %v6144, 1
        %v6523 = vsel %vm6275, %v6514, %v6522
        %v6524 = vrot.slane %v6145, 1
        %v6525 = vsel %vm6275, %v6516, %v6524
        %v6526 = vrot.slane %v6146, 1
        %v6527 = vsel %vm6275, %v6518, %v6526
        %v6656 = vmax.f32 %v6019, %v6278
        %v6657 = vmax.f32 %v6020, %v6281
        %v6658 = vmax.f32 %v6021, %v6284
        %v6659 = vmax.f32 %v6022, %v6287
        %v6660 = vmax.f32 %v6023, %v6289
        %v6661 = vmax.f32 %v6024, %v6291
        %v6662 = vmax.f32 %v6025, %v6293
        %v6663 = vmax.f32 %v6026, %v6295
        %v6664 = vmax.f32 %v6027, %v6297
        %v6665 = vmax.f32 %v6028, %v6299
        %v6666 = vmax.f32 %v6029, %v6301
        %v6667 = vmax.f32 %v6030, %v6303
        %v6668 = vmax.f32 %v6031, %v6305
        %v6669 = vmax.f32 %v6032, %v6307
        %v6670 = vmax.f32 %v6033, %v6309
        %v6671 = vmax.f32 %v6034, %v6311
        %v6672 = vmax.f32 %v6035, %v6313
        %v6673 = vmax.f32 %v6036, %v6315
        %v6674 = vmax.f32 %v6037, %v6317
        %v6675 = vmax.f32 %v6038, %v6319
        %v6676 = vmax.f32 %v6039, %v6321
        %v6677 = vmax.f32 %v6040, %v6323
        %v6678 = vmax.f32 %v6041, %v6325
        %v6679 = vmax.f32 %v6042, %v6327
        %v6680 = vmax.f32 %v6043, %v6329
        %v6681 = vmax.f32 %v6044, %v6331
        %v6682 = vmax.f32 %v6045, %v6333
        %v6683 = vmax.f32 %v6046, %v6335
        %v6684 = vmax.f32 %v6047, %v6337
        %v6685 = vmax.f32 %v6048, %v6339
        %v6686 = vmax.f32 %v6049, %v6341
        %v6687 = vmax.f32 %v6050, %v6343
        %v6688 = vmax.f32 %v6051, %v6345
        %v6689 = vmax.f32 %v6052, %v6347
        %v6690 = vmax.f32 %v6053, %v6349
        %v6691 = vmax.f32 %v6054, %v6351
        %v6692 = vmax.f32 %v6055, %v6353
        %v6693 = vmax.f32 %v6056, %v6355
        %v6694 = vmax.f32 %v6057, %v6357
        %v6695 = vmax.f32 %v6058, %v6359
        %v6696 = vmax.f32 %v6059, %v6361
        %v6697 = vmax.f32 %v6060, %v6363
        %v6698 = vmax.f32 %v6061, %v6365
        %v6699 = vmax.f32 %v6062, %v6367
        %v6700 = vmax.f32 %v6063, %v6369
        %v6701 = vmax.f32 %v6064, %v6371
        %v6702 = vmax.f32 %v6065, %v6373
        %v6703 = vmax.f32 %v6066, %v6375
        %v6704 = vmax.f32 %v6067, %v6377
        %v6705 = vmax.f32 %v6068, %v6379
        %v6706 = vmax.f32 %v6069, %v6381
        %v6707 = vmax.f32 %v6070, %v6383
        %v6708 = vmax.f32 %v6071, %v6385
        %v6709 = vmax.f32 %v6072, %v6387
        %v6710 = vmax.f32 %v6073, %v6389
        %v6711 = vmax.f32 %v6074, %v6391
        %v6712 = vmax.f32 %v6075, %v6393
        %v6713 = vmax.f32 %v6076, %v6395
        %v6714 = vmax.f32 %v6077, %v6397
        %v6715 = vmax.f32 %v6078, %v6399
        %v6716 = vmax.f32 %v6079, %v6401
        %v6717 = vmax.f32 %v6080, %v6403
        %v6718 = vmax.f32 %v6081, %v6405
        %v6719 = vmax.f32 %v6082, %v6407
        %v6720 = vmax.f32 %v6083, %v6409
        %v6721 = vmax.f32 %v6084, %v6411
        %v6722 = vmax.f32 %v6085, %v6413
        %v6723 = vmax.f32 %v6086, %v6415
        %v6724 = vmax.f32 %v6087, %v6417
        %v6725 = vmax.f32 %v6088, %v6419
        %v6726 = vmax.f32 %v6089, %v6421
        %v6727 = vmax.f32 %v6090, %v6423
        %v6728 = vmax.f32 %v6091, %v6425
        %v6729 = vmax.f32 %v6092, %v6427
        %v6730 = vmax.f32 %v6093, %v6429
        %v6731 = vmax.f32 %v6094, %v6431
        %v6732 = vmax.f32 %v6095, %v6433
        %v6733 = vmax.f32 %v6096, %v6435
        %v6734 = vmax.f32 %v6097, %v6437
        %v6735 = vmax.f32 %v6098, %v6439
        %v6736 = vmax.f32 %v6099, %v6441
        %v6737 = vmax.f32 %v6100, %v6443
        %v6738 = vmax.f32 %v6101, %v6445
        %v6739 = vmax.f32 %v6102, %v6447
        %v6740 = vmax.f32 %v6103, %v6449
        %v6741 = vmax.f32 %v6104, %v6451
        %v6742 = vmax.f32 %v6105, %v6453
        %v6743 = vmax.f32 %v6106, %v6455
        %v6744 = vmax.f32 %v6107, %v6457
        %v6745 = vmax.f32 %v6108, %v6459
        %v6746 = vmax.f32 %v6109, %v6461
        %v6747 = vmax.f32 %v6110, %v6463
        %v6748 = vmax.f32 %v6111, %v6465
        %v6749 = vmax.f32 %v6112, %v6467
        %v6750 = vmax.f32 %v6113, %v6469
        %v6751 = vmax.f32 %v6114, %v6471
        %v6752 = vmax.f32 %v6115, %v6473
        %v6753 = vmax.f32 %v6116, %v6475
        %v6754 = vmax.f32 %v6117, %v6477
        %v6755 = vmax.f32 %v6118, %v6479
        %v6756 = vmax.f32 %v6119, %v6481
        %v6757 = vmax.f32 %v6120, %v6483
        %v6758 = vmax.f32 %v6121, %v6485
        %v6759 = vmax.f32 %v6122, %v6487
        %v6760 = vmax.f32 %v6123, %v6489
        %v6761 = vmax.f32 %v6124, %v6491
        %v6762 = vmax.f32 %v6125, %v6493
        %v6763 = vmax.f32 %v6126, %v6495
        %v6764 = vmax.f32 %v6127, %v6497
        %v6765 = vmax.f32 %v6128, %v6499
        %v6766 = vmax.f32 %v6129, %v6501
        %v6767 = vmax.f32 %v6130, %v6503
        %v6768 = vmax.f32 %v6131, %v6505
        %v6769 = vmax.f32 %v6132, %v6507
        %v6770 = vmax.f32 %v6133, %v6509
        %v6771 = vmax.f32 %v6134, %v6511
        %v6772 = vmax.f32 %v6135, %v6513
        %v6773 = vmax.f32 %v6136, %v6515
        %v6774 = vmax.f32 %v6137, %v6517
        %v6775 = vmax.f32 %v6138, %v6519
        %v6776 = vmax.f32 %v6139, %v6521
        %v6777 = vmax.f32 %v6140, %v6523
        %v6778 = vmax.f32 %v6141, %v6525
        %v6779 = vmax.f32 %v6142, %v6527
        %v6780 = vmax.f32 %v6143, %v6520
        %v6781 = vmax.f32 %v6144, %v6522
        %v6782 = vmax.f32 %v6145, %v6524
        %v6783 = vmax.f32 %v6146, %v6526
        %6912 = vrot.lane.b32.xlu0 %v6656, 112
        %v6913 = vpop.permute.xlu0 %6912
        %6914 = vrot.lane.b32.xlu0 %v6657, 112
        %v6915 = vpop.permute.xlu0 %6914
        %6916 = vrot.lane.b32.xlu0 %v6658, 112
        %v6917 = vpop.permute.xlu0 %6916
        %6918 = vrot.lane.b32.xlu0 %v6659, 112
        %v6919 = vpop.permute.xlu0 %6918
        %6920 = vrot.lane.b32.xlu0 %v6660, 112
        %v6921 = vpop.permute.xlu0 %6920
        %6922 = vrot.lane.b32.xlu0 %v6661, 112
        %v6923 = vpop.permute.xlu0 %6922
        %6924 = vrot.lane.b32.xlu0 %v6662, 112
        %v6925 = vpop.permute.xlu0 %6924
        %6926 = vrot.lane.b32.xlu0 %v6663, 112
        %v6927 = vpop.permute.xlu0 %6926
        %6928 = vrot.lane.b32.xlu0 %v6664, 112
        %v6929 = vpop.permute.xlu0 %6928
        %6930 = vrot.lane.b32.xlu0 %v6665, 112
        %v6931 = vpop.permute.xlu0 %6930
        %6932 = vrot.lane.b32.xlu0 %v6666, 112
        %v6933 = vpop.permute.xlu0 %6932
        %6934 = vrot.lane.b32.xlu0 %v6667, 112
        %v6935 = vpop.permute.xlu0 %6934
        %6936 = vrot.lane.b32.xlu0 %v6668, 112
        %v6937 = vpop.permute.xlu0 %6936
        %6938 = vrot.lane.b32.xlu0 %v6669, 112
        %v6939 = vpop.permute.xlu0 %6938
        %6940 = vrot.lane.b32.xlu0 %v6670, 112
        %v6941 = vpop.permute.xlu0 %6940
        %6942 = vrot.lane.b32.xlu0 %v6671, 112
        %v6943 = vpop.permute.xlu0 %6942
        %6944 = vrot.lane.b32.xlu0 %v6672, 112
        %v6945 = vpop.permute.xlu0 %6944
        %6946 = vrot.lane.b32.xlu0 %v6673, 112
        %v6947 = vpop.permute.xlu0 %6946
        %6948 = vrot.lane.b32.xlu0 %v6674, 112
        %v6949 = vpop.permute.xlu0 %6948
        %6950 = vrot.lane.b32.xlu0 %v6675, 112
        %v6951 = vpop.permute.xlu0 %6950
        %6952 = vrot.lane.b32.xlu0 %v6676, 112
        %v6953 = vpop.permute.xlu0 %6952
        %6954 = vrot.lane.b32.xlu0 %v6677, 112
        %v6955 = vpop.permute.xlu0 %6954
        %6956 = vrot.lane.b32.xlu0 %v6678, 112
        %v6957 = vpop.permute.xlu0 %6956
        %6958 = vrot.lane.b32.xlu0 %v6679, 112
        %v6959 = vpop.permute.xlu0 %6958
        %6960 = vrot.lane.b32.xlu0 %v6680, 112
        %v6961 = vpop.permute.xlu0 %6960
        %6962 = vrot.lane.b32.xlu0 %v6681, 112
        %v6963 = vpop.permute.xlu0 %6962
        %6964 = vrot.lane.b32.xlu0 %v6682, 112
        %v6965 = vpop.permute.xlu0 %6964
        %6966 = vrot.lane.b32.xlu0 %v6683, 112
        %v6967 = vpop.permute.xlu0 %6966
        %6968 = vrot.lane.b32.xlu0 %v6684, 112
        %v6969 = vpop.permute.xlu0 %6968
        %6970 = vrot.lane.b32.xlu0 %v6685, 112
        %v6971 = vpop.permute.xlu0 %6970
        %6972 = vrot.lane.b32.xlu0 %v6686, 112
        %v6973 = vpop.permute.xlu0 %6972
        %6974 = vrot.lane.b32.xlu0 %v6687, 112
        %v6975 = vpop.permute.xlu0 %6974
        %6976 = vrot.lane.b32.xlu0 %v6688, 112
        %v6977 = vpop.permute.xlu0 %6976
        %6978 = vrot.lane.b32.xlu0 %v6689, 112
        %v6979 = vpop.permute.xlu0 %6978
        %6980 = vrot.lane.b32.xlu0 %v6690, 112
        %v6981 = vpop.permute.xlu0 %6980
        %6982 = vrot.lane.b32.xlu0 %v6691, 112
        %v6983 = vpop.permute.xlu0 %6982
        %6984 = vrot.lane.b32.xlu0 %v6692, 112
        %v6985 = vpop.permute.xlu0 %6984
        %6986 = vrot.lane.b32.xlu0 %v6693, 112
        %v6987 = vpop.permute.xlu0 %6986
        %6988 = vrot.lane.b32.xlu0 %v6694, 112
        %v6989 = vpop.permute.xlu0 %6988
        %6990 = vrot.lane.b32.xlu0 %v6695, 112
        %v6991 = vpop.permute.xlu0 %6990
        %6992 = vrot.lane.b32.xlu0 %v6696, 112
        %v6993 = vpop.permute.xlu0 %6992
        %6994 = vrot.lane.b32.xlu0 %v6697, 112
        %v6995 = vpop.permute.xlu0 %6994
        %6996 = vrot.lane.b32.xlu0 %v6698, 112
        %v6997 = vpop.permute.xlu0 %6996
        %6998 = vrot.lane.b32.xlu0 %v6699, 112
        %v6999 = vpop.permute.xlu0 %6998
        %7000 = vrot.lane.b32.xlu0 %v6700, 112
        %v7001 = vpop.permute.xlu0 %7000
        %7002 = vrot.lane.b32.xlu0 %v6701, 112
        %v7003 = vpop.permute.xlu0 %7002
        %7004 = vrot.lane.b32.xlu0 %v6702, 112
        %v7005 = vpop.permute.xlu0 %7004
        %7006 = vrot.lane.b32.xlu0 %v6703, 112
        %v7007 = vpop.permute.xlu0 %7006
        %7008 = vrot.lane.b32.xlu0 %v6704, 112
        %v7009 = vpop.permute.xlu0 %7008
        %7010 = vrot.lane.b32.xlu0 %v6705, 112
        %v7011 = vpop.permute.xlu0 %7010
        %7012 = vrot.lane.b32.xlu0 %v6706, 112
        %v7013 = vpop.permute.xlu0 %7012
        %7014 = vrot.lane.b32.xlu0 %v6707, 112
        %v7015 = vpop.permute.xlu0 %7014
        %7016 = vrot.lane.b32.xlu0 %v6708, 112
        %v7017 = vpop.permute.xlu0 %7016
        %7018 = vrot.lane.b32.xlu0 %v6709, 112
        %v7019 = vpop.permute.xlu0 %7018
        %7020 = vrot.lane.b32.xlu0 %v6710, 112
        %v7021 = vpop.permute.xlu0 %7020
        %7022 = vrot.lane.b32.xlu0 %v6711, 112
        %v7023 = vpop.permute.xlu0 %7022
        %7024 = vrot.lane.b32.xlu0 %v6712, 112
        %v7025 = vpop.permute.xlu0 %7024
        %7026 = vrot.lane.b32.xlu0 %v6713, 112
        %v7027 = vpop.permute.xlu0 %7026
        %7028 = vrot.lane.b32.xlu0 %v6714, 112
        %v7029 = vpop.permute.xlu0 %7028
        %7030 = vrot.lane.b32.xlu0 %v6715, 112
        %v7031 = vpop.permute.xlu0 %7030
        %7032 = vrot.lane.b32.xlu0 %v6716, 112
        %v7033 = vpop.permute.xlu0 %7032
        %7034 = vrot.lane.b32.xlu0 %v6717, 112
        %v7035 = vpop.permute.xlu0 %7034
        %7036 = vrot.lane.b32.xlu0 %v6718, 112
        %v7037 = vpop.permute.xlu0 %7036
        %7038 = vrot.lane.b32.xlu0 %v6719, 112
        %v7039 = vpop.permute.xlu0 %7038
        %7040 = vrot.lane.b32.xlu0 %v6720, 112
        %v7041 = vpop.permute.xlu0 %7040
        %7042 = vrot.lane.b32.xlu0 %v6721, 112
        %v7043 = vpop.permute.xlu0 %7042
        %7044 = vrot.lane.b32.xlu0 %v6722, 112
        %v7045 = vpop.permute.xlu0 %7044
        %7046 = vrot.lane.b32.xlu0 %v6723, 112
        %v7047 = vpop.permute.xlu0 %7046
        %7048 = vrot.lane.b32.xlu0 %v6724, 112
        %v7049 = vpop.permute.xlu0 %7048
        %7050 = vrot.lane.b32.xlu0 %v6725, 112
        %v7051 = vpop.permute.xlu0 %7050
        %7052 = vrot.lane.b32.xlu0 %v6726, 112
        %v7053 = vpop.permute.xlu0 %7052
        %7054 = vrot.lane.b32.xlu0 %v6727, 112
        %v7055 = vpop.permute.xlu0 %7054
        %7056 = vrot.lane.b32.xlu0 %v6728, 112
        %v7057 = vpop.permute.xlu0 %7056
        %7058 = vrot.lane.b32.xlu0 %v6729, 112
        %v7059 = vpop.permute.xlu0 %7058
        %7060 = vrot.lane.b32.xlu0 %v6730, 112
        %v7061 = vpop.permute.xlu0 %7060
        %7062 = vrot.lane.b32.xlu0 %v6731, 112
        %v7063 = vpop.permute.xlu0 %7062
        %7064 = vrot.lane.b32.xlu0 %v6732, 112
        %v7065 = vpop.permute.xlu0 %7064
        %7066 = vrot.lane.b32.xlu0 %v6733, 112
        %v7067 = vpop.permute.xlu0 %7066
        %7068 = vrot.lane.b32.xlu0 %v6734, 112
        %v7069 = vpop.permute.xlu0 %7068
        %7070 = vrot.lane.b32.xlu0 %v6735, 112
        %v7071 = vpop.permute.xlu0 %7070
        %7072 = vrot.lane.b32.xlu0 %v6736, 112
        %v7073 = vpop.permute.xlu0 %7072
        %7074 = vrot.lane.b32.xlu0 %v6737, 112
        %v7075 = vpop.permute.xlu0 %7074
        %7076 = vrot.lane.b32.xlu0 %v6738, 112
        %v7077 = vpop.permute.xlu0 %7076
        %7078 = vrot.lane.b32.xlu0 %v6739, 112
        %v7079 = vpop.permute.xlu0 %7078
        %7080 = vrot.lane.b32.xlu0 %v6740, 112
        %v7081 = vpop.permute.xlu0 %7080
        %7082 = vrot.lane.b32.xlu0 %v6741, 112
        %v7083 = vpop.permute.xlu0 %7082
        %7084 = vrot.lane.b32.xlu0 %v6742, 112
        %v7085 = vpop.permute.xlu0 %7084
        %7086 = vrot.lane.b32.xlu0 %v6743, 112
        %v7087 = vpop.permute.xlu0 %7086
        %7088 = vrot.lane.b32.xlu0 %v6744, 112
        %v7089 = vpop.permute.xlu0 %7088
        %7090 = vrot.lane.b32.xlu0 %v6745, 112
        %v7091 = vpop.permute.xlu0 %7090
        %7092 = vrot.lane.b32.xlu0 %v6746, 112
        %v7093 = vpop.permute.xlu0 %7092
        %7094 = vrot.lane.b32.xlu0 %v6747, 112
        %v7095 = vpop.permute.xlu0 %7094
        %7096 = vrot.lane.b32.xlu0 %v6748, 112
        %v7097 = vpop.permute.xlu0 %7096
        %7098 = vrot.lane.b32.xlu0 %v6749, 112
        %v7099 = vpop.permute.xlu0 %7098
        %7100 = vrot.lane.b32.xlu0 %v6750, 112
        %v7101 = vpop.permute.xlu0 %7100
        %7102 = vrot.lane.b32.xlu0 %v6751, 112
        %v7103 = vpop.permute.xlu0 %7102
        %7104 = vrot.lane.b32.xlu0 %v6752, 112
        %v7105 = vpop.permute.xlu0 %7104
        %7106 = vrot.lane.b32.xlu0 %v6753, 112
        %v7107 = vpop.permute.xlu0 %7106
        %7108 = vrot.lane.b32.xlu0 %v6754, 112
        %v7109 = vpop.permute.xlu0 %7108
        %7110 = vrot.lane.b32.xlu0 %v6755, 112
        %v7111 = vpop.permute.xlu0 %7110
        %7112 = vrot.lane.b32.xlu0 %v6756, 112
        %v7113 = vpop.permute.xlu0 %7112
        %7114 = vrot.lane.b32.xlu0 %v6757, 112
        %v7115 = vpop.permute.xlu0 %7114
        %7116 = vrot.lane.b32.xlu0 %v6758, 112
        %v7117 = vpop.permute.xlu0 %7116
        %7118 = vrot.lane.b32.xlu0 %v6759, 112
        %v7119 = vpop.permute.xlu0 %7118
        %7120 = vrot.lane.b32.xlu0 %v6760, 112
        %v7121 = vpop.permute.xlu0 %7120
        %7122 = vrot.lane.b32.xlu0 %v6761, 112
        %v7123 = vpop.permute.xlu0 %7122
        %7124 = vrot.lane.b32.xlu0 %v6762, 112
        %v7125 = vpop.permute.xlu0 %7124
        %7126 = vrot.lane.b32.xlu0 %v6763, 112
        %v7127 = vpop.permute.xlu0 %7126
        %7128 = vrot.lane.b32.xlu0 %v6764, 112
        %v7129 = vpop.permute.xlu0 %7128
        %7130 = vrot.lane.b32.xlu0 %v6765, 112
        %v7131 = vpop.permute.xlu0 %7130
        %7132 = vrot.lane.b32.xlu0 %v6766, 112
        %v7133 = vpop.permute.xlu0 %7132
        %7134 = vrot.lane.b32.xlu0 %v6767, 112
        %v7135 = vpop.permute.xlu0 %7134
        %7136 = vrot.lane.b32.xlu0 %v6768, 112
        %v7137 = vpop.permute.xlu0 %7136
        %7138 = vrot.lane.b32.xlu0 %v6769, 112
        %v7139 = vpop.permute.xlu0 %7138
        %7140 = vrot.lane.b32.xlu0 %v6770, 112
        %v7141 = vpop.permute.xlu0 %7140
        %7142 = vrot.lane.b32.xlu0 %v6771, 112
        %v7143 = vpop.permute.xlu0 %7142
        %7144 = vrot.lane.b32.xlu0 %v6772, 112
        %v7145 = vpop.permute.xlu0 %7144
        %7146 = vrot.lane.b32.xlu0 %v6773, 112
        %v7147 = vpop.permute.xlu0 %7146
        %7148 = vrot.lane.b32.xlu0 %v6774, 112
        %v7149 = vpop.permute.xlu0 %7148
        %7150 = vrot.lane.b32.xlu0 %v6775, 112
        %v7151 = vpop.permute.xlu0 %7150
        %7152 = vrot.lane.b32.xlu0 %v6776, 112
        %v7153 = vpop.permute.xlu0 %7152
        %7154 = vrot.lane.b32.xlu0 %v6777, 112
        %v7155 = vpop.permute.xlu0 %7154
        %7156 = vrot.lane.b32.xlu0 %v6778, 112
        %v7157 = vpop.permute.xlu0 %7156
        %7158 = vrot.lane.b32.xlu0 %v6779, 112
        %v7159 = vpop.permute.xlu0 %7158
        %7160 = vrot.lane.b32.xlu0 %v6780, 112
        %v7161 = vpop.permute.xlu0 %7160
        %7162 = vrot.lane.b32.xlu0 %v6781, 112
        %v7163 = vpop.permute.xlu0 %7162
        %7164 = vrot.lane.b32.xlu0 %v6782, 112
        %v7165 = vpop.permute.xlu0 %7164
        %7166 = vrot.lane.b32.xlu0 %v6783, 112
        %v7167 = vpop.permute.xlu0 %7166
        %vm7168 = vcmask 916480
        %v7169 = vsel %vm7168, %v6913, %v6915
        %v7170 = vsel %vm7168, %v6915, %v6917
        %v7171 = vsel %vm7168, %v6917, %v6919
        %v7172 = vsel %vm7168, %v6921, %v6923
        %v7173 = vsel %vm7168, %v6923, %v6925
        %v7174 = vsel %vm7168, %v6925, %v6927
        %v7175 = vsel %vm7168, %v6929, %v6931
        %v7176 = vsel %vm7168, %v6931, %v6933
        %v7177 = vsel %vm7168, %v6933, %v6935
        %v7178 = vsel %vm7168, %v6937, %v6939
        %v7179 = vsel %vm7168, %v6939, %v6941
        %v7180 = vsel %vm7168, %v6941, %v6943
        %v7181 = vsel %vm7168, %v6945, %v6947
        %v7182 = vsel %vm7168, %v6947, %v6949
        %v7183 = vsel %vm7168, %v6949, %v6951
        %v7184 = vsel %vm7168, %v6953, %v6955
        %v7185 = vsel %vm7168, %v6955, %v6957
        %v7186 = vsel %vm7168, %v6957, %v6959
        %v7187 = vsel %vm7168, %v6961, %v6963
        %v7188 = vsel %vm7168, %v6963, %v6965
        %v7189 = vsel %vm7168, %v6965, %v6967
        %v7190 = vsel %vm7168, %v6969, %v6971
        %v7191 = vsel %vm7168, %v6971, %v6973
        %v7192 = vsel %vm7168, %v6973, %v6975
        %v7193 = vsel %vm7168, %v6977, %v6979
        %v7194 = vsel %vm7168, %v6979, %v6981
        %v7195 = vsel %vm7168, %v6981, %v6983
        %v7196 = vsel %vm7168, %v6985, %v6987
        %v7197 = vsel %vm7168, %v6987, %v6989
        %v7198 = vsel %vm7168, %v6989, %v6991
        %v7199 = vsel %vm7168, %v6993, %v6995
        %v7200 = vsel %vm7168, %v6995, %v6997
        %v7201 = vsel %vm7168, %v6997, %v6999
        %v7202 = vsel %vm7168, %v7001, %v7003
        %v7203 = vsel %vm7168, %v7003, %v7005
        %v7204 = vsel %vm7168, %v7005, %v7007
        %v7205 = vsel %vm7168, %v7009, %v7011
        %v7206 = vsel %vm7168, %v7011, %v7013
        %v7207 = vsel %vm7168, %v7013, %v7015
        %v7208 = vsel %vm7168, %v7017, %v7019
        %v7209 = vsel %vm7168, %v7019, %v7021
        %v7210 = vsel %vm7168, %v7021, %v7023
        %v7211 = vsel %vm7168, %v7025, %v7027
        %v7212 = vsel %vm7168, %v7027, %v7029
        %v7213 = vsel %vm7168, %v7029, %v7031
        %v7214 = vsel %vm7168, %v7033, %v7035
        %v7215 = vsel %vm7168, %v7035, %v7037
        %v7216 = vsel %vm7168, %v7037, %v7039
        %v7217 = vsel %vm7168, %v7041, %v7043
        %v7218 = vsel %vm7168, %v7043, %v7045
        %v7219 = vsel %vm7168, %v7045, %v7047
        %v7220 = vsel %vm7168, %v7049, %v7051
        %v7221 = vsel %vm7168, %v7051, %v7053
        %v7222 = vsel %vm7168, %v7053, %v7055
        %v7223 = vsel %vm7168, %v7057, %v7059
        %v7224 = vsel %vm7168, %v7059, %v7061
        %v7225 = vsel %vm7168, %v7061, %v7063
        %v7226 = vsel %vm7168, %v7065, %v7067
        %v7227 = vsel %vm7168, %v7067, %v7069
        %v7228 = vsel %vm7168, %v7069, %v7071
        %v7229 = vsel %vm7168, %v7073, %v7075
        %v7230 = vsel %vm7168, %v7075, %v7077
        %v7231 = vsel %vm7168, %v7077, %v7079
        %v7232 = vsel %vm7168, %v7081, %v7083
        %v7233 = vsel %vm7168, %v7083, %v7085
        %v7234 = vsel %vm7168, %v7085, %v7087
        %v7235 = vsel %vm7168, %v7089, %v7091
        %v7236 = vsel %vm7168, %v7091, %v7093
        %v7237 = vsel %vm7168, %v7093, %v7095
        %v7238 = vsel %vm7168, %v7097, %v7099
        %v7239 = vsel %vm7168, %v7099, %v7101
        %v7240 = vsel %vm7168, %v7101, %v7103
        %v7241 = vsel %vm7168, %v7105, %v7107
        %v7242 = vsel %vm7168, %v7107, %v7109
        %v7243 = vsel %vm7168, %v7109, %v7111
        %v7244 = vsel %vm7168, %v7113, %v7115
        %v7245 = vsel %vm7168, %v7115, %v7117
        %v7246 = vsel %vm7168, %v7117, %v7119
        %v7247 = vsel %vm7168, %v7121, %v7123
        %v7248 = vsel %vm7168, %v7123, %v7125
        %v7249 = vsel %vm7168, %v7125, %v7127
        %v7250 = vsel %vm7168, %v7129, %v7131
        %v7251 = vsel %vm7168, %v7131, %v7133
        %v7252 = vsel %vm7168, %v7133, %v7135
        %v7253 = vsel %vm7168, %v7137, %v7139
        %v7254 = vsel %vm7168, %v7139, %v7141
        %v7255 = vsel %vm7168, %v7141, %v7143
        %v7256 = vsel %vm7168, %v7145, %v7147
        %v7257 = vsel %vm7168, %v7147, %v7149
        %v7258 = vsel %vm7168, %v7149, %v7151
        %v7259 = vsel %vm7168, %v7153, %v7155
        %v7260 = vsel %vm7168, %v7155, %v7157
        %v7261 = vsel %vm7168, %v7157, %v7159
        %v7262 = vsel %vm7168, %v7161, %v7163
        %v7263 = vsel %vm7168, %v7163, %v7165
        %v7264 = vsel %vm7168, %v7165, %v7167
        %v7393 = vmax.f32 %v6656, %v7169
        %v7394 = vmax.f32 %v6657, %v7170
        %v7395 = vmax.f32 %v6658, %v7171
        %v7396 = vmax.f32 %v6659, %v6919
        %v7397 = vmax.f32 %v6660, %v7172
        %v7398 = vmax.f32 %v6661, %v7173
        %v7399 = vmax.f32 %v6662, %v7174
        %v7400 = vmax.f32 %v6663, %v6927
        %v7401 = vmax.f32 %v6664, %v7175
        %v7402 = vmax.f32 %v6665, %v7176
        %v7403 = vmax.f32 %v6666, %v7177
        %v7404 = vmax.f32 %v6667, %v6935
        %v7405 = vmax.f32 %v6668, %v7178
        %v7406 = vmax.f32 %v6669, %v7179
        %v7407 = vmax.f32 %v6670, %v7180
        %v7408 = vmax.f32 %v6671, %v6943
        %v7409 = vmax.f32 %v6672, %v7181
        %v7410 = vmax.f32 %v6673, %v7182
        %v7411 = vmax.f32 %v6674, %v7183
        %v7412 = vmax.f32 %v6675, %v6951
        %v7413 = vmax.f32 %v6676, %v7184
        %v7414 = vmax.f32 %v6677, %v7185
        %v7415 = vmax.f32 %v6678, %v7186
        %v7416 = vmax.f32 %v6679, %v6959
        %v7417 = vmax.f32 %v6680, %v7187
        %v7418 = vmax.f32 %v6681, %v7188
        %v7419 = vmax.f32 %v6682, %v7189
        %v7420 = vmax.f32 %v6683, %v6967
        %v7421 = vmax.f32 %v6684, %v7190
        %v7422 = vmax.f32 %v6685, %v7191
        %v7423 = vmax.f32 %v6686, %v7192
        %v7424 = vmax.f32 %v6687, %v6975
        %v7425 = vmax.f32 %v6688, %v7193
        %v7426 = vmax.f32 %v6689, %v7194
        %v7427 = vmax.f32 %v6690, %v7195
        %v7428 = vmax.f32 %v6691, %v6983
        %v7429 = vmax.f32 %v6692, %v7196
        %v7430 = vmax.f32 %v6693, %v7197
        %v7431 = vmax.f32 %v6694, %v7198
        %v7432 = vmax.f32 %v6695, %v6991
        %v7433 = vmax.f32 %v6696, %v7199
        %v7434 = vmax.f32 %v6697, %v7200
        %v7435 = vmax.f32 %v6698, %v7201
        %v7436 = vmax.f32 %v6699, %v6999
        %v7437 = vmax.f32 %v6700, %v7202
        %v7438 = vmax.f32 %v6701, %v7203
        %v7439 = vmax.f32 %v6702, %v7204
        %v7440 = vmax.f32 %v6703, %v7007
        %v7441 = vmax.f32 %v6704, %v7205
        %v7442 = vmax.f32 %v6705, %v7206
        %v7443 = vmax.f32 %v6706, %v7207
        %v7444 = vmax.f32 %v6707, %v7015
        %v7445 = vmax.f32 %v6708, %v7208
        %v7446 = vmax.f32 %v6709, %v7209
        %v7447 = vmax.f32 %v6710, %v7210
        %v7448 = vmax.f32 %v6711, %v7023
        %v7449 = vmax.f32 %v6712, %v7211
        %v7450 = vmax.f32 %v6713, %v7212
        %v7451 = vmax.f32 %v6714, %v7213
        %v7452 = vmax.f32 %v6715, %v7031
        %v7453 = vmax.f32 %v6716, %v7214
        %v7454 = vmax.f32 %v6717, %v7215
        %v7455 = vmax.f32 %v6718, %v7216
        %v7456 = vmax.f32 %v6719, %v7039
        %v7457 = vmax.f32 %v6720, %v7217
        %v7458 = vmax.f32 %v6721, %v7218
        %v7459 = vmax.f32 %v6722, %v7219
        %v7460 = vmax.f32 %v6723, %v7047
        %v7461 = vmax.f32 %v6724, %v7220
        %v7462 = vmax.f32 %v6725, %v7221
        %v7463 = vmax.f32 %v6726, %v7222
        %v7464 = vmax.f32 %v6727, %v7055
        %v7465 = vmax.f32 %v6728, %v7223
        %v7466 = vmax.f32 %v6729, %v7224
        %v7467 = vmax.f32 %v6730, %v7225
        %v7468 = vmax.f32 %v6731, %v7063
        %v7469 = vmax.f32 %v6732, %v7226
        %v7470 = vmax.f32 %v6733, %v7227
        %v7471 = vmax.f32 %v6734, %v7228
        %v7472 = vmax.f32 %v6735, %v7071
        %v7473 = vmax.f32 %v6736, %v7229
        %v7474 = vmax.f32 %v6737, %v7230
        %v7475 = vmax.f32 %v6738, %v7231
        %v7476 = vmax.f32 %v6739, %v7079
        %v7477 = vmax.f32 %v6740, %v7232
        %v7478 = vmax.f32 %v6741, %v7233
        %v7479 = vmax.f32 %v6742, %v7234
        %v7480 = vmax.f32 %v6743, %v7087
        %v7481 = vmax.f32 %v6744, %v7235
        %v7482 = vmax.f32 %v6745, %v7236
        %v7483 = vmax.f32 %v6746, %v7237
        %v7484 = vmax.f32 %v6747, %v7095
        %v7485 = vmax.f32 %v6748, %v7238
        %v7486 = vmax.f32 %v6749, %v7239
        %v7487 = vmax.f32 %v6750, %v7240
        %v7488 = vmax.f32 %v6751, %v7103
        %v7489 = vmax.f32 %v6752, %v7241
        %v7490 = vmax.f32 %v6753, %v7242
        %v7491 = vmax.f32 %v6754, %v7243
        %v7492 = vmax.f32 %v6755, %v7111
        %v7493 = vmax.f32 %v6756, %v7244
        %v7494 = vmax.f32 %v6757, %v7245
        %v7495 = vmax.f32 %v6758, %v7246
        %v7496 = vmax.f32 %v6759, %v7119
        %v7497 = vmax.f32 %v6760, %v7247
        %v7498 = vmax.f32 %v6761, %v7248
        %v7499 = vmax.f32 %v6762, %v7249
        %v7500 = vmax.f32 %v6763, %v7127
        %v7501 = vmax.f32 %v6764, %v7250
        %v7502 = vmax.f32 %v6765, %v7251
        %v7503 = vmax.f32 %v6766, %v7252
        %v7504 = vmax.f32 %v6767, %v7135
        %v7505 = vmax.f32 %v6768, %v7253
        %v7506 = vmax.f32 %v6769, %v7254
        %v7507 = vmax.f32 %v6770, %v7255
        %v7508 = vmax.f32 %v6771, %v7143
        %v7509 = vmax.f32 %v6772, %v7256
        %v7510 = vmax.f32 %v6773, %v7257
        %v7511 = vmax.f32 %v6774, %v7258
        %v7512 = vmax.f32 %v6775, %v7151
        %v7513 = vmax.f32 %v6776, %v7259
        %v7514 = vmax.f32 %v6777, %v7260
        %v7515 = vmax.f32 %v6778, %v7261
        %v7516 = vmax.f32 %v6779, %v7159
        %v7517 = vmax.f32 %v6780, %v7262
        %v7518 = vmax.f32 %v6781, %v7263
        %v7519 = vmax.f32 %v6782, %v7264
        %v7520 = vmax.f32 %v6783, %v7167
        %v7521 = vpack.c.bf16 %v7397, %v7393
        %v7522 = vpack.c.bf16 %v7398, %v7394
        %v7523 = vpack.c.bf16 %v7399, %v7395
        %v7524 = vpack.c.bf16 %v7400, %v7396
        %v7525 = vpack.c.bf16 %v7405, %v7401
        %v7526 = vpack.c.bf16 %v7406, %v7402
        %v7527 = vpack.c.bf16 %v7407, %v7403
        %v7528 = vpack.c.bf16 %v7408, %v7404
        %v7529 = vpack.c.bf16 %v7413, %v7409
        %v7530 = vpack.c.bf16 %v7414, %v7410
        %v7531 = vpack.c.bf16 %v7415, %v7411
        %v7532 = vpack.c.bf16 %v7416, %v7412
        %v7533 = vpack.c.bf16 %v7421, %v7417
        %v7534 = vpack.c.bf16 %v7422, %v7418
        %v7535 = vpack.c.bf16 %v7423, %v7419
        %v7536 = vpack.c.bf16 %v7424, %v7420
        %v7537 = vpack.c.bf16 %v7429, %v7425
        %v7538 = vpack.c.bf16 %v7430, %v7426
        %v7539 = vpack.c.bf16 %v7431, %v7427
        %v7540 = vpack.c.bf16 %v7432, %v7428
        %v7541 = vpack.c.bf16 %v7437, %v7433
        %v7542 = vpack.c.bf16 %v7438, %v7434
        %v7543 = vpack.c.bf16 %v7439, %v7435
        %v7544 = vpack.c.bf16 %v7440, %v7436
        %v7545 = vpack.c.bf16 %v7445, %v7441
        %v7546 = vpack.c.bf16 %v7446, %v7442
        %v7547 = vpack.c.bf16 %v7447, %v7443
        %v7548 = vpack.c.bf16 %v7448, %v7444
        %v7549 = vpack.c.bf16 %v7453, %v7449
        %v7550 = vpack.c.bf16 %v7454, %v7450
        %v7551 = vpack.c.bf16 %v7455, %v7451
        %v7552 = vpack.c.bf16 %v7456, %v7452
        %v7553 = vpack.c.bf16 %v7461, %v7457
        %v7554 = vpack.c.bf16 %v7462, %v7458
        %v7555 = vpack.c.bf16 %v7463, %v7459
        %v7556 = vpack.c.bf16 %v7464, %v7460
        %v7557 = vpack.c.bf16 %v7469, %v7465
        %v7558 = vpack.c.bf16 %v7470, %v7466
        %v7559 = vpack.c.bf16 %v7471, %v7467
        %v7560 = vpack.c.bf16 %v7472, %v7468
        %v7561 = vpack.c.bf16 %v7477, %v7473
        %v7562 = vpack.c.bf16 %v7478, %v7474
        %v7563 = vpack.c.bf16 %v7479, %v7475
        %v7564 = vpack.c.bf16 %v7480, %v7476
        %v7565 = vpack.c.bf16 %v7485, %v7481
        %v7566 = vpack.c.bf16 %v7486, %v7482
        %v7567 = vpack.c.bf16 %v7487, %v7483
        %v7568 = vpack.c.bf16 %v7488, %v7484
        %v7569 = vpack.c.bf16 %v7493, %v7489
        %v7570 = vpack.c.bf16 %v7494, %v7490
        %v7571 = vpack.c.bf16 %v7495, %v7491
        %v7572 = vpack.c.bf16 %v7496, %v7492
        %v7573 = vpack.c.bf16 %v7501, %v7497
        %v7574 = vpack.c.bf16 %v7502, %v7498
        %v7575 = vpack.c.bf16 %v7503, %v7499
        %v7576 = vpack.c.bf16 %v7504, %v7500
        %v7577 = vpack.c.bf16 %v7509, %v7505
        %v7578 = vpack.c.bf16 %v7510, %v7506
        %v7579 = vpack.c.bf16 %v7511, %v7507
        %v7580 = vpack.c.bf16 %v7512, %v7508
        %v7581 = vpack.c.bf16 %v7517, %v7513
        %v7582 = vpack.c.bf16 %v7518, %v7514
        %v7583 = vpack.c.bf16 %v7519, %v7515
        %v7584 = vpack.c.bf16 %v7520, %v7516
        %v7585 = vld [vmem:[%s5] sm:$0xf]
        %v7586 = vld [vmem:[%s5 + $0x4] sm:$0xf]
        %v7587 = vld [vmem:[%s5 + $0x8] sm:$0xf]
        %v7588 = vld [vmem:[%s5 + $0xc] sm:$0xf]
        %v7589 = vld [vmem:[%s5 + $0x10] sm:$0xf]
        %v7590 = vld [vmem:[%s5 + $0x14] sm:$0xf]
        %v7591 = vld [vmem:[%s5 + $0x18] sm:$0xf]
        %v7592 = vld [vmem:[%s5 + $0x1c] sm:$0xf]
        %v7593 = vld [vmem:[%s5 + $0x20] sm:$0xf]
        %v7594 = vld [vmem:[%s5 + $0x24] sm:$0xf]
        %v7595 = vld [vmem:[%s5 + $0x28] sm:$0xf]
        %v7596 = vld [vmem:[%s5 + $0x2c] sm:$0xf]
        %v7597 = vld [vmem:[%s5 + $0x30] sm:$0xf]
        %v7598 = vld [vmem:[%s5 + $0x34] sm:$0xf]
        %v7599 = vld [vmem:[%s5 + $0x38] sm:$0xf]
        %v7600 = vld [vmem:[%s5 + $0x3c] sm:$0xf]
        %v7601 = vld [vmem:[%s5 + $0x40] sm:$0xf]
        %v7602 = vld [vmem:[%s5 + $0x44] sm:$0xf]
        %v7603 = vld [vmem:[%s5 + $0x48] sm:$0xf]
        %v7604 = vld [vmem:[%s5 + $0x4c] sm:$0xf]
        %v7605 = vld [vmem:[%s5 + $0x50] sm:$0xf]
        %v7606 = vld [vmem:[%s5 + $0x54] sm:$0xf]
        %v7607 = vld [vmem:[%s5 + $0x58] sm:$0xf]
        %v7608 = vld [vmem:[%s5 + $0x5c] sm:$0xf]
        %v7609 = vld [vmem:[%s5 + $0x60] sm:$0xf]
        %v7610 = vld [vmem:[%s5 + $0x64] sm:$0xf]
        %v7611 = vld [vmem:[%s5 + $0x68] sm:$0xf]
        %v7612 = vld [vmem:[%s5 + $0x6c] sm:$0xf]
        %v7613 = vld [vmem:[%s5 + $0x70] sm:$0xf]
        %v7614 = vld [vmem:[%s5 + $0x74] sm:$0xf]
        %v7615 = vld [vmem:[%s5 + $0x78] sm:$0xf]
        %v7616 = vld [vmem:[%s5 + $0x7c] sm:$0xf]
        %v7617 = vld [vmem:[%s5 + $0x80] sm:$0xf]
        %v7618 = vld [vmem:[%s5 + $0x84] sm:$0xf]
        %v7619 = vld [vmem:[%s5 + $0x88] sm:$0xf]
        %v7620 = vld [vmem:[%s5 + $0x8c] sm:$0xf]
        %v7621 = vld [vmem:[%s5 + $0x90] sm:$0xf]
        %v7622 = vld [vmem:[%s5 + $0x94] sm:$0xf]
        %v7623 = vld [vmem:[%s5 + $0x98] sm:$0xf]
        %v7624 = vld [vmem:[%s5 + $0x9c] sm:$0xf]
        %v7625 = vld [vmem:[%s5 + $0xa0] sm:$0xf]
        %v7626 = vld [vmem:[%s5 + $0xa4] sm:$0xf]
        %v7627 = vld [vmem:[%s5 + $0xa8] sm:$0xf]
        %v7628 = vld [vmem:[%s5 + $0xac] sm:$0xf]
        %v7629 = vld [vmem:[%s5 + $0xb0] sm:$0xf]
        %v7630 = vld [vmem:[%s5 + $0xb4] sm:$0xf]
        %v7631 = vld [vmem:[%s5 + $0xb8] sm:$0xf]
        %v7632 = vld [vmem:[%s5 + $0xbc] sm:$0xf]
        %v7633 = vld [vmem:[%s5 + $0xc0] sm:$0xf]
        %v7634 = vld [vmem:[%s5 + $0xc4] sm:$0xf]
        %v7635 = vld [vmem:[%s5 + $0xc8] sm:$0xf]
        %v7636 = vld [vmem:[%s5 + $0xcc] sm:$0xf]
        %v7637 = vld [vmem:[%s5 + $0xd0] sm:$0xf]
        %v7638 = vld [vmem:[%s5 + $0xd4] sm:$0xf]
        %v7693 = vunpack.c.l.b16 %v7585
        %v7694 = vunpack.c.l.b16 %v7586
        %v7695 = vunpack.c.l.b16 %v7587
        %v7696 = vunpack.c.l.b16 %v7588
        %v7697 = vunpack.c.l.b16 %v7589
        %v7698 = vunpack.c.l.b16 %v7590
        %v7699 = vunpack.c.l.b16 %v7591
        %v7700 = vunpack.c.l.b16 %v7592
        %v7701 = vunpack.c.l.b16 %v7593
        %v7702 = vunpack.c.l.b16 %v7594
        %v7703 = vunpack.c.l.b16 %v7595
        %v7704 = vunpack.c.l.b16 %v7596
        %v7705 = vunpack.c.l.b16 %v7597
        %v7706 = vunpack.c.l.b16 %v7598
        %v7707 = vunpack.c.l.b16 %v7599
        %v7708 = vunpack.c.l.b16 %v7600
        %v7709 = vunpack.c.l.b16 %v7601
        %v7710 = vunpack.c.l.b16 %v7602
        %v7711 = vunpack.c.l.b16 %v7603
        %v7712 = vunpack.c.l.b16 %v7604
        %v7713 = vunpack.c.l.b16 %v7605
        %v7714 = vunpack.c.l.b16 %v7606
        %v7715 = vunpack.c.l.b16 %v7607
        %v7716 = vunpack.c.l.b16 %v7608
        %v7717 = vunpack.c.l.b16 %v7609
        %v7718 = vunpack.c.l.b16 %v7610
        %v7719 = vunpack.c.l.b16 %v7611
        %v7720 = vunpack.c.l.b16 %v7612
        %v7721 = vunpack.c.l.b16 %v7613
        %v7722 = vunpack.c.l.b16 %v7614
        %v7723 = vunpack.c.l.b16 %v7615
        %v7724 = vunpack.c.l.b16 %v7616
        %v7725 = vunpack.c.l.b16 %v7617
        %v7726 = vunpack.c.l.b16 %v7618
        %v7727 = vunpack.c.l.b16 %v7619
        %v7728 = vunpack.c.l.b16 %v7620
        %v7729 = vunpack.c.l.b16 %v7621
        %v7730 = vunpack.c.l.b16 %v7622
        %v7731 = vunpack.c.l.b16 %v7623
        %v7732 = vunpack.c.l.b16 %v7624
        %v7733 = vunpack.c.l.b16 %v7625
        %v7734 = vunpack.c.l.b16 %v7626
        %v7735 = vunpack.c.l.b16 %v7627
        %v7736 = vunpack.c.l.b16 %v7628
        %v7737 = vunpack.c.l.b16 %v7629
        %v7738 = vunpack.c.l.b16 %v7630
        %v7739 = vunpack.c.l.b16 %v7631
        %v7740 = vunpack.c.l.b16 %v7632
        %v7741 = vunpack.c.l.b16 %v7633
        %v7742 = vunpack.c.l.b16 %v7634
        %v7743 = vunpack.c.l.b16 %v7635
        %v7744 = vunpack.c.l.b16 %v7636
        %v7745 = vunpack.c.l.b16 %v7637
        %v7746 = vunpack.c.l.b16 %v7638
        %v7747 = vpack.c.b16 %v7694, %v7693
        %v7748 = vpack.c.b16 %v7696, %v7695
        %v7749 = vpack.c.b16 %v7698, %v7697
        %v7750 = vpack.c.b16 %v7700, %v7699
        %v7751 = vpack.c.b16 %v7702, %v7701
        %v7752 = vpack.c.b16 %v7704, %v7703
        %v7753 = vpack.c.b16 %v7706, %v7705
        %v7754 = vpack.c.b16 %v7708, %v7707
        %v7755 = vpack.c.b16 %v7710, %v7709
        %v7756 = vpack.c.b16 %v7712, %v7711
        %v7757 = vpack.c.b16 %v7714, %v7713
        %v7758 = vpack.c.b16 %v7716, %v7715
        %v7759 = vpack.c.b16 %v7718, %v7717
        %v7760 = vpack.c.b16 %v7720, %v7719
        %v7761 = vpack.c.b16 %v7722, %v7721
        %v7762 = vpack.c.b16 %v7724, %v7723
        %v7763 = vpack.c.b16 %v7726, %v7725
        %v7764 = vpack.c.b16 %v7728, %v7727
        %v7765 = vpack.c.b16 %v7730, %v7729
        %v7766 = vpack.c.b16 %v7732, %v7731
        %v7767 = vpack.c.b16 %v7734, %v7733
        %v7768 = vpack.c.b16 %v7736, %v7735
        %v7769 = vpack.c.b16 %v7738, %v7737
        %v7770 = vpack.c.b16 %v7740, %v7739
        %v7771 = vpack.c.b16 %v7742, %v7741
        %v7772 = vpack.c.b16 %v7744, %v7743
        %v7773 = vpack.c.b16 %v7746, %v7745
        %vm7801 = vcmask 392192
        %v7803 = vsel %vm7801, %v7524, 0
        %v7806 = vsel %vm7801, %v7528, 0
        %v7809 = vsel %vm7801, %v7532, 0
        %v7812 = vsel %vm7801, %v7536, 0
        %v7815 = vsel %vm7801, %v7540, 0
        %v7818 = vsel %vm7801, %v7544, 0
        %v7821 = vsel %vm7801, %v7548, 0
        %v7824 = vsel %vm7801, %v7552, 0
        %v7827 = vsel %vm7801, %v7556, 0
        %v7830 = vsel %vm7801, %v7560, 0
        %v7833 = vsel %vm7801, %v7564, 0
        %v7836 = vsel %vm7801, %v7568, 0
        %v7839 = vsel %vm7801, %v7572, 0
        %v7842 = vsel %vm7801, %v7576, 0
        %v7845 = vsel %vm7801, %v7580, 0
        %v7848 = vsel %vm7801, %v7584, 0
        %7850 = vmatpush.bf16.msra.mxu0 %v7754
        %7851 = vmatpush.bf16.msra.mxu0 %v7753
        %7852 = vmatpush.bf16.msra.mxu0 %v7752
        %7853 = vmatpush.bf16.msra.mxu0 %v7751
        %7854 = vmatpush.bf16.msra.mxu0 %v7750
        %7855 = vmatpush.bf16.msra.mxu0 %v7749
        %7856 = vmatpush.bf16.msra.mxu0 %v7748
        %7857 = vmatpush.bf16.msra.mxu0 %v7747
        %7858 = vmatmul.bf16.gmra.mxu0 %v7521
        %v7859 = vpop.f32.mrf.mxu0
        %v7860 = vadd.f32 0.0, %v7859
        %v7861 = vpop.f32.mrf.mxu0
        %v7862 = vadd.f32 0.0, %v7861
        %7863 = vmatmul.bf16.gmra.mxu0 %v7525
        %v7864 = vpop.f32.mrf.mxu0
        %v7865 = vadd.f32 0.0, %v7864
        %v7866 = vpop.f32.mrf.mxu0
        %v7867 = vadd.f32 0.0, %v7866
        %7868 = vmatmul.bf16.gmra.mxu0 %v7529
        %v7869 = vpop.f32.mrf.mxu0
        %v7870 = vadd.f32 0.0, %v7869
        %v7871 = vpop.f32.mrf.mxu0
        %v7872 = vadd.f32 0.0, %v7871
        %7873 = vmatmul.bf16.gmra.mxu0 %v7533
        %v7874 = vpop.f32.mrf.mxu0
        %v7875 = vadd.f32 0.0, %v7874
        %v7876 = vpop.f32.mrf.mxu0
        %v7877 = vadd.f32 0.0, %v7876
        %7878 = vmatmul.bf16.gmra.mxu0 %v7537
        %v7879 = vpop.f32.mrf.mxu0
        %v7880 = vadd.f32 0.0, %v7879
        %v7881 = vpop.f32.mrf.mxu0
        %v7882 = vadd.f32 0.0, %v7881
        %7883 = vmatmul.bf16.gmra.mxu0 %v7541
        %v7884 = vpop.f32.mrf.mxu0
        %v7885 = vadd.f32 0.0, %v7884
        %v7886 = vpop.f32.mrf.mxu0
        %v7887 = vadd.f32 0.0, %v7886
        %7888 = vmatmul.bf16.gmra.mxu0 %v7545
        %v7889 = vpop.f32.mrf.mxu0
        %v7890 = vadd.f32 0.0, %v7889
        %v7891 = vpop.f32.mrf.mxu0
        %v7892 = vadd.f32 0.0, %v7891
        %7893 = vmatmul.bf16.gmra.mxu0 %v7549
        %v7894 = vpop.f32.mrf.mxu0
        %v7895 = vadd.f32 0.0, %v7894
        %v7896 = vpop.f32.mrf.mxu0
        %v7897 = vadd.f32 0.0, %v7896
        %7898 = vmatmul.bf16.gmra.mxu0 %v7553
        %v7899 = vpop.f32.mrf.mxu0
        %v7900 = vadd.f32 0.0, %v7899
        %v7901 = vpop.f32.mrf.mxu0
        %v7902 = vadd.f32 0.0, %v7901
        %7903 = vmatmul.bf16.gmra.mxu0 %v7557
        %v7904 = vpop.f32.mrf.mxu0
        %v7905 = vadd.f32 0.0, %v7904
        %v7906 = vpop.f32.mrf.mxu0
        %v7907 = vadd.f32 0.0, %v7906
        %7908 = vmatmul.bf16.gmra.mxu0 %v7561
        %v7909 = vpop.f32.mrf.mxu0
        %v7910 = vadd.f32 0.0, %v7909
        %v7911 = vpop.f32.mrf.mxu0
        %v7912 = vadd.f32 0.0, %v7911
        %7913 = vmatmul.bf16.gmra.mxu0 %v7565
        %v7914 = vpop.f32.mrf.mxu0
        %v7915 = vadd.f32 0.0, %v7914
        %v7916 = vpop.f32.mrf.mxu0
        %v7917 = vadd.f32 0.0, %v7916
        %7918 = vmatmul.bf16.gmra.mxu0 %v7569
        %v7919 = vpop.f32.mrf.mxu0
        %v7920 = vadd.f32 0.0, %v7919
        %v7921 = vpop.f32.mrf.mxu0
        %v7922 = vadd.f32 0.0, %v7921
        %7923 = vmatmul.bf16.gmra.mxu0 %v7573
        %v7924 = vpop.f32.mrf.mxu0
        %v7925 = vadd.f32 0.0, %v7924
        %v7926 = vpop.f32.mrf.mxu0
        %v7927 = vadd.f32 0.0, %v7926
        %7928 = vmatmul.bf16.gmra.mxu0 %v7577
        %v7929 = vpop.f32.mrf.mxu0
        %v7930 = vadd.f32 0.0, %v7929
        %v7931 = vpop.f32.mrf.mxu0
        %v7932 = vadd.f32 0.0, %v7931
        %7933 = vmatmul.bf16.gmra.mxu0 %v7581
        %v7934 = vpop.f32.mrf.mxu0
        %v7935 = vadd.f32 0.0, %v7934
        %v7936 = vpop.f32.mrf.mxu0
        %v7937 = vadd.f32 0.0, %v7936
        %7938 = vdwg.mxu0
        %7939 = vmatpush.bf16.msra.mxu0 %v7762
        %7940 = vmatpush.bf16.msra.mxu0 %v7761
        %7941 = vmatpush.bf16.msra.mxu0 %v7760
        %7942 = vmatpush.bf16.msra.mxu0 %v7759
        %7943 = vmatpush.bf16.msra.mxu0 %v7758
        %7944 = vmatpush.bf16.msra.mxu0 %v7757
        %7945 = vmatpush.bf16.msra.mxu0 %v7756
        %7946 = vmatpush.bf16.msra.mxu0 %v7755
        %7947 = vmatmul.bf16.gmra.mxu0 %v7522
        %v7948 = vpop.f32.mrf.mxu0
        %v7949 = vadd.f32 %v7860, %v7948
        %v7950 = vpop.f32.mrf.mxu0
        %v7951 = vadd.f32 %v7862, %v7950
        %7952 = vmatmul.bf16.gmra.mxu0 %v7526
        %v7953 = vpop.f32.mrf.mxu0
        %v7954 = vadd.f32 %v7865, %v7953
        %v7955 = vpop.f32.mrf.mxu0
        %v7956 = vadd.f32 %v7867, %v7955
        %7957 = vmatmul.bf16.gmra.mxu0 %v7530
        %v7958 = vpop.f32.mrf.mxu0
        %v7959 = vadd.f32 %v7870, %v7958
        %v7960 = vpop.f32.mrf.mxu0
        %v7961 = vadd.f32 %v7872, %v7960
        %7962 = vmatmul.bf16.gmra.mxu0 %v7534
        %v7963 = vpop.f32.mrf.mxu0
        %v7964 = vadd.f32 %v7875, %v7963
        %v7965 = vpop.f32.mrf.mxu0
        %v7966 = vadd.f32 %v7877, %v7965
        %7967 = vmatmul.bf16.gmra.mxu0 %v7538
        %v7968 = vpop.f32.mrf.mxu0
        %v7969 = vadd.f32 %v7880, %v7968
        %v7970 = vpop.f32.mrf.mxu0
        %v7971 = vadd.f32 %v7882, %v7970
        %7972 = vmatmul.bf16.gmra.mxu0 %v7542
        %v7973 = vpop.f32.mrf.mxu0
        %v7974 = vadd.f32 %v7885, %v7973
        %v7975 = vpop.f32.mrf.mxu0
        %v7976 = vadd.f32 %v7887, %v7975
        %7977 = vmatmul.bf16.gmra.mxu0 %v7546
        %v7978 = vpop.f32.mrf.mxu0
        %v7979 = vadd.f32 %v7890, %v7978
        %v7980 = vpop.f32.mrf.mxu0
        %v7981 = vadd.f32 %v7892, %v7980
        %7982 = vmatmul.bf16.gmra.mxu0 %v7550
        %v7983 = vpop.f32.mrf.mxu0
        %v7984 = vadd.f32 %v7895, %v7983
        %v7985 = vpop.f32.mrf.mxu0
        %v7986 = vadd.f32 %v7897, %v7985
        %7987 = vmatmul.bf16.gmra.mxu0 %v7554
        %v7988 = vpop.f32.mrf.mxu0
        %v7989 = vadd.f32 %v7900, %v7988
        %v7990 = vpop.f32.mrf.mxu0
        %v7991 = vadd.f32 %v7902, %v7990
        %7992 = vmatmul.bf16.gmra.mxu0 %v7558
        %v7993 = vpop.f32.mrf.mxu0
        %v7994 = vadd.f32 %v7905, %v7993
        %v7995 = vpop.f32.mrf.mxu0
        %v7996 = vadd.f32 %v7907, %v7995
        %7997 = vmatmul.bf16.gmra.mxu0 %v7562
        %v7998 = vpop.f32.mrf.mxu0
        %v7999 = vadd.f32 %v7910, %v7998
        %v8000 = vpop.f32.mrf.mxu0
        %v8001 = vadd.f32 %v7912, %v8000
        %8002 = vmatmul.bf16.gmra.mxu0 %v7566
        %v8003 = vpop.f32.mrf.mxu0
        %v8004 = vadd.f32 %v7915, %v8003
        %v8005 = vpop.f32.mrf.mxu0
        %v8006 = vadd.f32 %v7917, %v8005
        %8007 = vmatmul.bf16.gmra.mxu0 %v7570
        %v8008 = vpop.f32.mrf.mxu0
        %v8009 = vadd.f32 %v7920, %v8008
        %v8010 = vpop.f32.mrf.mxu0
        %v8011 = vadd.f32 %v7922, %v8010
        %8012 = vmatmul.bf16.gmra.mxu0 %v7574
        %v8013 = vpop.f32.mrf.mxu0
        %v8014 = vadd.f32 %v7925, %v8013
        %v8015 = vpop.f32.mrf.mxu0
        %v8016 = vadd.f32 %v7927, %v8015
        %8017 = vmatmul.bf16.gmra.mxu0 %v7578
        %v8018 = vpop.f32.mrf.mxu0
        %v8019 = vadd.f32 %v7930, %v8018
        %v8020 = vpop.f32.mrf.mxu0
        %v8021 = vadd.f32 %v7932, %v8020
        %8022 = vmatmul.bf16.gmra.mxu0 %v7582
        %v8023 = vpop.f32.mrf.mxu0
        %v8024 = vadd.f32 %v7935, %v8023
        %v8025 = vpop.f32.mrf.mxu0
        %v8026 = vadd.f32 %v7937, %v8025
        %8027 = vdwg.mxu0
        %8028 = vmatpush.bf16.msra.mxu0 %v7770
        %8029 = vmatpush.bf16.msra.mxu0 %v7769
        %8030 = vmatpush.bf16.msra.mxu0 %v7768
        %8031 = vmatpush.bf16.msra.mxu0 %v7767
        %8032 = vmatpush.bf16.msra.mxu0 %v7766
        %8033 = vmatpush.bf16.msra.mxu0 %v7765
        %8034 = vmatpush.bf16.msra.mxu0 %v7764
        %8035 = vmatpush.bf16.msra.mxu0 %v7763
        %8036 = vmatmul.bf16.gmra.mxu0 %v7523
        %v8037 = vpop.f32.mrf.mxu0
        %v8038 = vadd.f32 %v7949, %v8037
        %v8039 = vpop.f32.mrf.mxu0
        %v8040 = vadd.f32 %v7951, %v8039
        %8041 = vmatmul.bf16.gmra.mxu0 %v7527
        %v8042 = vpop.f32.mrf.mxu0
        %v8043 = vadd.f32 %v7954, %v8042
        %v8044 = vpop.f32.mrf.mxu0
        %v8045 = vadd.f32 %v7956, %v8044
        %8046 = vmatmul.bf16.gmra.mxu0 %v7531
        %v8047 = vpop.f32.mrf.mxu0
        %v8048 = vadd.f32 %v7959, %v8047
        %v8049 = vpop.f32.mrf.mxu0
        %v8050 = vadd.f32 %v7961, %v8049
        %8051 = vmatmul.bf16.gmra.mxu0 %v7535
        %v8052 = vpop.f32.mrf.mxu0
        %v8053 = vadd.f32 %v7964, %v8052
        %v8054 = vpop.f32.mrf.mxu0
        %v8055 = vadd.f32 %v7966, %v8054
        %8056 = vmatmul.bf16.gmra.mxu0 %v7539
        %v8057 = vpop.f32.mrf.mxu0
        %v8058 = vadd.f32 %v7969, %v8057
        %v8059 = vpop.f32.mrf.mxu0
        %v8060 = vadd.f32 %v7971, %v8059
        %8061 = vmatmul.bf16.gmra.mxu0 %v7543
        %v8062 = vpop.f32.mrf.mxu0
        %v8063 = vadd.f32 %v7974, %v8062
        %v8064 = vpop.f32.mrf.mxu0
        %v8065 = vadd.f32 %v7976, %v8064
        %8066 = vmatmul.bf16.gmra.mxu0 %v7547
        %v8067 = vpop.f32.mrf.mxu0
        %v8068 = vadd.f32 %v7979, %v8067
        %v8069 = vpop.f32.mrf.mxu0
        %v8070 = vadd.f32 %v7981, %v8069
        %8071 = vmatmul.bf16.gmra.mxu0 %v7551
        %v8072 = vpop.f32.mrf.mxu0
        %v8073 = vadd.f32 %v7984, %v8072
        %v8074 = vpop.f32.mrf.mxu0
        %v8075 = vadd.f32 %v7986, %v8074
        %8076 = vmatmul.bf16.gmra.mxu0 %v7555
        %v8077 = vpop.f32.mrf.mxu0
        %v8078 = vadd.f32 %v7989, %v8077
        %v8079 = vpop.f32.mrf.mxu0
        %v8080 = vadd.f32 %v7991, %v8079
        %8081 = vmatmul.bf16.gmra.mxu0 %v7559
        %v8082 = vpop.f32.mrf.mxu0
        %v8083 = vadd.f32 %v7994, %v8082
        %v8084 = vpop.f32.mrf.mxu0
        %v8085 = vadd.f32 %v7996, %v8084
        %8086 = vmatmul.bf16.gmra.mxu0 %v7563
        %v8087 = vpop.f32.mrf.mxu0
        %v8088 = vadd.f32 %v7999, %v8087
        %v8089 = vpop.f32.mrf.mxu0
        %v8090 = vadd.f32 %v8001, %v8089
        %8091 = vmatmul.bf16.gmra.mxu0 %v7567
        %v8092 = vpop.f32.mrf.mxu0
        %v8093 = vadd.f32 %v8004, %v8092
        %v8094 = vpop.f32.mrf.mxu0
        %v8095 = vadd.f32 %v8006, %v8094
        %8096 = vmatmul.bf16.gmra.mxu0 %v7571
        %v8097 = vpop.f32.mrf.mxu0
        %v8098 = vadd.f32 %v8009, %v8097
        %v8099 = vpop.f32.mrf.mxu0
        %v8100 = vadd.f32 %v8011, %v8099
        %8101 = vmatmul.bf16.gmra.mxu0 %v7575
        %v8102 = vpop.f32.mrf.mxu0
        %v8103 = vadd.f32 %v8014, %v8102
        %v8104 = vpop.f32.mrf.mxu0
        %v8105 = vadd.f32 %v8016, %v8104
        %8106 = vmatmul.bf16.gmra.mxu0 %v7579
        %v8107 = vpop.f32.mrf.mxu0
        %v8108 = vadd.f32 %v8019, %v8107
        %v8109 = vpop.f32.mrf.mxu0
        %v8110 = vadd.f32 %v8021, %v8109
        %8111 = vmatmul.bf16.gmra.mxu0 %v7583
        %v8112 = vpop.f32.mrf.mxu0
        %v8113 = vadd.f32 %v8024, %v8112
        %v8114 = vpop.f32.mrf.mxu0
        %v8115 = vadd.f32 %v8026, %v8114
        %8116 = vdwg.mxu0
        %8117 = vmatpush.bf16.msra.mxu0 0
        %8118 = vmatpush.bf16.msra.mxu0 0
        %8119 = vmatpush.bf16.msra.mxu0 0
        %8120 = vmatpush.bf16.msra.mxu0 0
        %8121 = vmatpush.bf16.msra.mxu0 0
        %8122 = vmatpush.bf16.msra.mxu0 %v7773
        %8123 = vmatpush.bf16.msra.mxu0 %v7772
        %8124 = vmatpush.bf16.msra.mxu0 %v7771
        %8125 = vmatmul.bf16.gmra.mxu0 %v7803
        %v8126 = vpop.f32.mrf.mxu0
        %v8127 = vadd.f32 %v8038, %v8126
        %v8128 = vpop.f32.mrf.mxu0
        %v8129 = vadd.f32 %v8040, %v8128
        %8130 = vmatmul.bf16.gmra.mxu0 %v7806
        %v8131 = vpop.f32.mrf.mxu0
        %v8132 = vadd.f32 %v8043, %v8131
        %v8133 = vpop.f32.mrf.mxu0
        %v8134 = vadd.f32 %v8045, %v8133
        %8135 = vmatmul.bf16.gmra.mxu0 %v7809
        %v8136 = vpop.f32.mrf.mxu0
        %v8137 = vadd.f32 %v8048, %v8136
        %v8138 = vpop.f32.mrf.mxu0
        %v8139 = vadd.f32 %v8050, %v8138
        %8140 = vmatmul.bf16.gmra.mxu0 %v7812
        %v8141 = vpop.f32.mrf.mxu0
        %v8142 = vadd.f32 %v8053, %v8141
        %v8143 = vpop.f32.mrf.mxu0
        %v8144 = vadd.f32 %v8055, %v8143
        %8145 = vmatmul.bf16.gmra.mxu0 %v7815
        %v8146 = vpop.f32.mrf.mxu0
        %v8147 = vadd.f32 %v8058, %v8146
        %v8148 = vpop.f32.mrf.mxu0
        %v8149 = vadd.f32 %v8060, %v8148
        %8150 = vmatmul.bf16.gmra.mxu0 %v7818
        %v8151 = vpop.f32.mrf.mxu0
        %v8152 = vadd.f32 %v8063, %v8151
        %v8153 = vpop.f32.mrf.mxu0
        %v8154 = vadd.f32 %v8065, %v8153
        %8155 = vmatmul.bf16.gmra.mxu0 %v7821
        %v8156 = vpop.f32.mrf.mxu0
        %v8157 = vadd.f32 %v8068, %v8156
        %v8158 = vpop.f32.mrf.mxu0
        %v8159 = vadd.f32 %v8070, %v8158
        %8160 = vmatmul.bf16.gmra.mxu0 %v7824
        %v8161 = vpop.f32.mrf.mxu0
        %v8162 = vadd.f32 %v8073, %v8161
        %v8163 = vpop.f32.mrf.mxu0
        %v8164 = vadd.f32 %v8075, %v8163
        %8165 = vmatmul.bf16.gmra.mxu0 %v7827
        %v8166 = vpop.f32.mrf.mxu0
        %v8167 = vadd.f32 %v8078, %v8166
        %v8168 = vpop.f32.mrf.mxu0
        %v8169 = vadd.f32 %v8080, %v8168
        %8170 = vmatmul.bf16.gmra.mxu0 %v7830
        %v8171 = vpop.f32.mrf.mxu0
        %v8172 = vadd.f32 %v8083, %v8171
        %v8173 = vpop.f32.mrf.mxu0
        %v8174 = vadd.f32 %v8085, %v8173
        %8175 = vmatmul.bf16.gmra.mxu0 %v7833
        %v8176 = vpop.f32.mrf.mxu0
        %v8177 = vadd.f32 %v8088, %v8176
        %v8178 = vpop.f32.mrf.mxu0
        %v8179 = vadd.f32 %v8090, %v8178
        %8180 = vmatmul.bf16.gmra.mxu0 %v7836
        %v8181 = vpop.f32.mrf.mxu0
        %v8182 = vadd.f32 %v8093, %v8181
        %v8183 = vpop.f32.mrf.mxu0
        %v8184 = vadd.f32 %v8095, %v8183
        %8185 = vmatmul.bf16.gmra.mxu0 %v7839
        %v8186 = vpop.f32.mrf.mxu0
        %v8187 = vadd.f32 %v8098, %v8186
        %v8188 = vpop.f32.mrf.mxu0
        %v8189 = vadd.f32 %v8100, %v8188
        %8190 = vmatmul.bf16.gmra.mxu0 %v7842
        %v8191 = vpop.f32.mrf.mxu0
        %v8192 = vadd.f32 %v8103, %v8191
        %v8193 = vpop.f32.mrf.mxu0
        %v8194 = vadd.f32 %v8105, %v8193
        %8195 = vmatmul.bf16.gmra.mxu0 %v7845
        %v8196 = vpop.f32.mrf.mxu0
        %v8197 = vadd.f32 %v8108, %v8196
        %v8198 = vpop.f32.mrf.mxu0
        %v8199 = vadd.f32 %v8110, %v8198
        %8200 = vmatmul.bf16.gmra.mxu0 %v7848
        %v8201 = vpop.f32.mrf.mxu0
        %v8202 = vadd.f32 %v8113, %v8201
        %v8203 = vpop.f32.mrf.mxu0
        %v8204 = vadd.f32 %v8115, %v8203
        %8205 = vdwg.mxu0
        %v8206 = vld [vmem:[%s7] sm:$0xff]
        %v8207 = vld [vmem:[%s7 + $0x8] sm:$0xff]
        %v8208 = vld [vmem:[%s7 + $0x10] sm:$0xff]
        %v8209 = vld [vmem:[%s7 + $0x18] sm:$0xff]
        %v8210 = vld [vmem:[%s7 + $0x20] sm:$0xff]
        %v8211 = vld [vmem:[%s7 + $0x28] sm:$0xff]
        %v8212 = vld [vmem:[%s7 + $0x30] sm:$0xff]
        %v8213 = vld [vmem:[%s7 + $0x38] sm:$0xff]
        %v8214 = vld [vmem:[%s7 + $0x40] sm:$0xff]
        %v8215 = vld [vmem:[%s7 + $0x48] sm:$0xff]
        %v8216 = vld [vmem:[%s7 + $0x50] sm:$0xff]
        %v8217 = vld [vmem:[%s7 + $0x58] sm:$0xff]
        %v8218 = vld [vmem:[%s7 + $0x60] sm:$0xff]
        %v8219 = vld [vmem:[%s7 + $0x68] sm:$0xff]
        %v8220 = vld [vmem:[%s7 + $0x70] sm:$0xff]
        %v8221 = vld [vmem:[%s7 + $0x78] sm:$0xff]
        %v8222 = vpack.c.bf16 %v8129, %v8127
        %v8223 = vpack.c.bf16 %v8134, %v8132
        %v8224 = vpack.c.bf16 %v8139, %v8137
        %v8225 = vpack.c.bf16 %v8144, %v8142
        %v8226 = vpack.c.bf16 %v8149, %v8147
        %v8227 = vpack.c.bf16 %v8154, %v8152
        %v8228 = vpack.c.bf16 %v8159, %v8157
        %v8229 = vpack.c.bf16 %v8164, %v8162
        %v8230 = vpack.c.bf16 %v8169, %v8167
        %v8231 = vpack.c.bf16 %v8174, %v8172
        %v8232 = vpack.c.bf16 %v8179, %v8177
        %v8233 = vpack.c.bf16 %v8184, %v8182
        %v8234 = vpack.c.bf16 %v8189, %v8187
        %v8235 = vpack.c.bf16 %v8194, %v8192
        %v8236 = vpack.c.bf16 %v8199, %v8197
        %v8237 = vpack.c.bf16 %v8204, %v8202
        %v8238 = vld [vmem:[%s6] sm:$0x1]
        %v8240 = vperm.slane %v8238, 0
        %v8258 = vunpack.c.l.b16 %v8206
        %v8259 = vunpack.c.h.b16 %v8206
        %v8260 = vunpack.c.l.b16 %v8207
        %v8261 = vunpack.c.h.b16 %v8207
        %v8262 = vunpack.c.l.b16 %v8208
        %v8263 = vunpack.c.h.b16 %v8208
        %v8264 = vunpack.c.l.b16 %v8209
        %v8265 = vunpack.c.h.b16 %v8209
        %v8266 = vunpack.c.l.b16 %v8210
        %v8267 = vunpack.c.h.b16 %v8210
        %v8268 = vunpack.c.l.b16 %v8211
        %v8269 = vunpack.c.h.b16 %v8211
        %v8270 = vunpack.c.l.b16 %v8212
        %v8271 = vunpack.c.h.b16 %v8212
        %v8272 = vunpack.c.l.b16 %v8213
        %v8273 = vunpack.c.h.b16 %v8213
        %v8274 = vunpack.c.l.b16 %v8214
        %v8275 = vunpack.c.h.b16 %v8214
        %v8276 = vunpack.c.l.b16 %v8215
        %v8277 = vunpack.c.h.b16 %v8215
        %v8278 = vunpack.c.l.b16 %v8216
        %v8279 = vunpack.c.h.b16 %v8216
        %v8280 = vunpack.c.l.b16 %v8217
        %v8281 = vunpack.c.h.b16 %v8217
        %v8282 = vunpack.c.l.b16 %v8218
        %v8283 = vunpack.c.h.b16 %v8218
        %v8284 = vunpack.c.l.b16 %v8219
        %v8285 = vunpack.c.h.b16 %v8219
        %v8286 = vunpack.c.l.b16 %v8220
        %v8287 = vunpack.c.h.b16 %v8220
        %v8288 = vunpack.c.l.b16 %v8221
        %v8289 = vunpack.c.h.b16 %v8221
        %v8290 = vpack.c.b16 %v8260, %v8258
        %v8291 = vpack.c.b16 %v8261, %v8259
        %v8292 = vpack.c.b16 %v8264, %v8262
        %v8293 = vpack.c.b16 %v8265, %v8263
        %v8294 = vpack.c.b16 %v8268, %v8266
        %v8295 = vpack.c.b16 %v8269, %v8267
        %v8296 = vpack.c.b16 %v8272, %v8270
        %v8297 = vpack.c.b16 %v8273, %v8271
        %v8298 = vpack.c.b16 %v8276, %v8274
        %v8299 = vpack.c.b16 %v8277, %v8275
        %v8300 = vpack.c.b16 %v8280, %v8278
        %v8301 = vpack.c.b16 %v8281, %v8279
        %v8302 = vpack.c.b16 %v8284, %v8282
        %v8303 = vpack.c.b16 %v8285, %v8283
        %v8304 = vpack.c.b16 %v8288, %v8286
        %v8305 = vpack.c.b16 %v8289, %v8287
        %vm8314 = vcmask 1022976
        %v8316 = vsel %vm8314, %v8291, 0
        %v8319 = vsel %vm8314, %v8293, 0
        %v8322 = vsel %vm8314, %v8295, 0
        %v8325 = vsel %vm8314, %v8297, 0
        %v8328 = vsel %vm8314, %v8299, 0
        %v8331 = vsel %vm8314, %v8301, 0
        %v8334 = vsel %vm8314, %v8303, 0
        %v8337 = vsel %vm8314, %v8305, 0
        %v8339 = vsel %vm695, 4294967295, 65535
        %v8340 = vsel %vm6275, %v8339, 0
        %v8342 = vand.u32 %v8237, %v8340
        %8344 = vmatpush.bf16.msra.mxu0 %v8229
        %8345 = vmatpush.bf16.msra.mxu0 %v8228
        %8346 = vmatpush.bf16.msra.mxu0 %v8227
        %8347 = vmatpush.bf16.msra.mxu0 %v8226
        %8348 = vmatpush.bf16.msra.mxu0 %v8225
        %8349 = vmatpush.bf16.msra.mxu0 %v8224
        %8350 = vmatpush.bf16.msra.mxu0 %v8223
        %8351 = vmatpush.bf16.msra.mxu0 %v8222
        %8352 = vmatmul.bf16.gmra.mxu0 %v8290
        %v8353 = vpop.f32.mrf.mxu0
        %v8354 = vadd.f32 %v8240, %v8353
        %v8355 = vpop.f32.mrf.mxu0
        %v8356 = vadd.f32 %v8240, %v8355
        %8357 = vmatmul.bf16.gmra.mxu0 %v8292
        %v8358 = vpop.f32.mrf.mxu0
        %v8359 = vadd.f32 %v8240, %v8358
        %v8360 = vpop.f32.mrf.mxu0
        %v8361 = vadd.f32 %v8240, %v8360
        %8362 = vmatmul.bf16.gmra.mxu0 %v8294
        %v8363 = vpop.f32.mrf.mxu0
        %v8364 = vadd.f32 %v8240, %v8363
        %v8365 = vpop.f32.mrf.mxu0
        %v8366 = vadd.f32 %v8240, %v8365
        %8367 = vmatmul.bf16.gmra.mxu0 %v8296
        %v8368 = vpop.f32.mrf.mxu0
        %v8369 = vadd.f32 %v8240, %v8368
        %v8370 = vpop.f32.mrf.mxu0
        %v8371 = vadd.f32 %v8240, %v8370
        %8372 = vmatmul.bf16.gmra.mxu0 %v8298
        %v8373 = vpop.f32.mrf.mxu0
        %v8374 = vadd.f32 %v8240, %v8373
        %v8375 = vpop.f32.mrf.mxu0
        %v8376 = vadd.f32 %v8240, %v8375
        %8377 = vmatmul.bf16.gmra.mxu0 %v8300
        %v8378 = vpop.f32.mrf.mxu0
        %v8379 = vadd.f32 %v8240, %v8378
        %v8380 = vpop.f32.mrf.mxu0
        %v8381 = vadd.f32 %v8240, %v8380
        %8382 = vmatmul.bf16.gmra.mxu0 %v8302
        %v8383 = vpop.f32.mrf.mxu0
        %v8384 = vadd.f32 %v8240, %v8383
        %v8385 = vpop.f32.mrf.mxu0
        %v8386 = vadd.f32 %v8240, %v8385
        %8387 = vmatmul.bf16.gmra.mxu0 %v8304
        %v8388 = vpop.f32.mrf.mxu0
        %v8389 = vadd.f32 %v8240, %v8388
        %v8390 = vpop.f32.mrf.mxu0
        %v8391 = vadd.f32 %v8240, %v8390
        %8392 = vdwg.mxu0
        %8393 = vmatpush.bf16.msra.mxu0 %v8342
        %8394 = vmatpush.bf16.msra.mxu0 %v8236
        %8395 = vmatpush.bf16.msra.mxu0 %v8235
        %8396 = vmatpush.bf16.msra.mxu0 %v8234
        %8397 = vmatpush.bf16.msra.mxu0 %v8233
        %8398 = vmatpush.bf16.msra.mxu0 %v8232
        %8399 = vmatpush.bf16.msra.mxu0 %v8231
        %8400 = vmatpush.bf16.msra.mxu0 %v8230
        %8401 = vmatmul.bf16.gmra.mxu0 %v8316
        %v8402 = vpop.f32.mrf.mxu0
        %v8403 = vadd.f32 %v8354, %v8402
        %v8404 = vpop.f32.mrf.mxu0
        %v8405 = vadd.f32 %v8356, %v8404
        %8406 = vmatmul.bf16.gmra.mxu0 %v8319
        %v8407 = vpop.f32.mrf.mxu0
        %v8408 = vadd.f32 %v8359, %v8407
        %v8409 = vpop.f32.mrf.mxu0
        %v8410 = vadd.f32 %v8361, %v8409
        %8411 = vmatmul.bf16.gmra.mxu0 %v8322
        %v8412 = vpop.f32.mrf.mxu0
        %v8413 = vadd.f32 %v8364, %v8412
        %v8414 = vpop.f32.mrf.mxu0
        %v8415 = vadd.f32 %v8366, %v8414
        %8416 = vmatmul.bf16.gmra.mxu0 %v8325
        %v8417 = vpop.f32.mrf.mxu0
        %v8418 = vadd.f32 %v8369, %v8417
        %v8419 = vpop.f32.mrf.mxu0
        %v8420 = vadd.f32 %v8371, %v8419
        %8421 = vmatmul.bf16.gmra.mxu0 %v8328
        %v8422 = vpop.f32.mrf.mxu0
        %v8423 = vadd.f32 %v8374, %v8422
        %v8424 = vpop.f32.mrf.mxu0
        %v8425 = vadd.f32 %v8376, %v8424
        %8426 = vmatmul.bf16.gmra.mxu0 %v8331
        %v8427 = vpop.f32.mrf.mxu0
        %v8428 = vadd.f32 %v8379, %v8427
        %v8429 = vpop.f32.mrf.mxu0
        %v8430 = vadd.f32 %v8381, %v8429
        %8431 = vmatmul.bf16.gmra.mxu0 %v8334
        %v8432 = vpop.f32.mrf.mxu0
        %v8433 = vadd.f32 %v8384, %v8432
        %v8434 = vpop.f32.mrf.mxu0
        %v8435 = vadd.f32 %v8386, %v8434
        %8436 = vmatmul.bf16.gmra.mxu0 %v8337
        %v8437 = vpop.f32.mrf.mxu0
        %v8438 = vadd.f32 %v8389, %v8437
        %v8439 = vpop.f32.mrf.mxu0
        %v8440 = vadd.f32 %v8391, %v8439
        %8441 = vdwg.mxu0
        %v8442 = vmax.f32 %v8403, 0.0
        %v8443 = vmax.f32 %v8405, 0.0
        %v8444 = vmax.f32 %v8408, 0.0
        %v8445 = vmax.f32 %v8410, 0.0
        %v8446 = vmax.f32 %v8413, 0.0
        %v8447 = vmax.f32 %v8415, 0.0
        %v8448 = vmax.f32 %v8418, 0.0
        %v8449 = vmax.f32 %v8420, 0.0
        %v8450 = vmax.f32 %v8423, 0.0
        %v8451 = vmax.f32 %v8425, 0.0
        %v8452 = vmax.f32 %v8428, 0.0
        %v8453 = vmax.f32 %v8430, 0.0
        %v8454 = vmax.f32 %v8433, 0.0
        %v8455 = vmax.f32 %v8435, 0.0
        %v8456 = vmax.f32 %v8438, 0.0
        %v8457 = vmax.f32 %v8440, 0.0
        %v8458 = vpack.c.bf16 %v8443, %v8442
        %v8459 = vpack.c.bf16 %v8445, %v8444
        %v8460 = vpack.c.bf16 %v8447, %v8446
        %v8461 = vpack.c.bf16 %v8449, %v8448
        %v8462 = vpack.c.bf16 %v8451, %v8450
        %v8463 = vpack.c.bf16 %v8453, %v8452
        %v8464 = vpack.c.bf16 %v8455, %v8454
        %v8465 = vpack.c.bf16 %v8457, %v8456
        %v8466 = vld [vmem:[%s8] sm:$0xf]
        %v8467 = vld [vmem:[%s8 + $0x4] sm:$0xf]
        %v8468 = vld [vmem:[%s8 + $0x8] sm:$0xf]
        %v8469 = vld [vmem:[%s8 + $0xc] sm:$0xf]
        %v8470 = vld [vmem:[%s8 + $0x10] sm:$0xf]
        %v8471 = vld [vmem:[%s8 + $0x14] sm:$0xf]
        %v8472 = vld [vmem:[%s8 + $0x18] sm:$0xf]
        %s8473 = scalar_lea.vmem %s8, 28
        %v8474 = vld [vmem:[%s8473] sm:$0xf]
        %v8475 = vld [vmem:[%s8473 + $0x4] sm:$0xf]
        %v8476 = vld [vmem:[%s8473 + $0x8] sm:$0xf]
        %v8477 = vld [vmem:[%s8473 + $0xc] sm:$0xf]
        %v8478 = vld [vmem:[%s8473 + $0x10] sm:$0xf]
        %v8479 = vld [vmem:[%s8473 + $0x14] sm:$0xf]
        %v8480 = vld [vmem:[%s8473 + $0x18] sm:$0xf]
        %v8482 = vshrl.u32 %v8458, 16
        %v8484 = vshll.u32 %v8458, 16
        %v8486 = vrot.slane %v8484, 1
        %v8487 = vor.u32 %v8482, %v8486
        %v8489 = vshll.u32 %v8459, 16
        %v8491 = vrot.slane %v8489, 1
        %v8492 = vsel %vm2200, %v8487, %v8491
        %v8493 = vshrl.u32 %v8459, 16
        %v8495 = vor.u32 %v8493, %v8491
        %v8497 = vshll.u32 %v8460, 16
        %v8499 = vrot.slane %v8497, 1
        %v8500 = vsel %vm2200, %v8495, %v8499
        %v8501 = vshrl.u32 %v8460, 16
        %v8503 = vor.u32 %v8501, %v8499
        %v8505 = vshll.u32 %v8461, 16
        %v8507 = vrot.slane %v8505, 1
        %v8508 = vsel %vm2200, %v8503, %v8507
        %v8509 = vshrl.u32 %v8461, 16
        %v8511 = vor.u32 %v8509, %v8507
        %v8513 = vshll.u32 %v8462, 16
        %v8515 = vrot.slane %v8513, 1
        %v8516 = vsel %vm2200, %v8511, %v8515
        %v8517 = vshrl.u32 %v8462, 16
        %v8519 = vor.u32 %v8517, %v8515
        %v8521 = vshll.u32 %v8463, 16
        %v8523 = vrot.slane %v8521, 1
        %v8524 = vsel %vm2200, %v8519, %v8523
        %v8525 = vshrl.u32 %v8463, 16
        %v8527 = vor.u32 %v8525, %v8523
        %v8529 = vshll.u32 %v8464, 16
        %v8531 = vrot.slane %v8529, 1
        %v8532 = vsel %vm2200, %v8527, %v8531
        %v8533 = vshrl.u32 %v8464, 16
        %v8535 = vor.u32 %v8533, %v8531
        %v8537 = vshll.u32 %v8465, 16
        %v8539 = vrot.slane %v8537, 1
        %v8540 = vsel %vm2200, %v8535, %v8539
        %v8541 = vshrl.u32 %v8465, 16
        %v8543 = vor.u32 %v8541, %v8539
        %v8551 = vunpack.c.l.b16 %v8474
        %v8552 = vunpack.c.l.b16 %v8475
        %v8553 = vunpack.c.l.b16 %v8476
        %v8554 = vunpack.c.l.b16 %v8477
        %v8555 = vunpack.c.l.b16 %v8478
        %v8556 = vunpack.c.l.b16 %v8479
        %v8557 = vunpack.c.l.b16 %v8480
        %v8558 = vpack.c.b16 %v8552, %v8551
        %v8559 = vpack.c.b16 %v8554, %v8553
        %v8560 = vpack.c.b16 %v8556, %v8555
        %v8561 = vpack.c.b16 %v8557, %v8557
        %vm8565 = vcmask 457728
        %v8567 = vsel %vm8565, %v8492, 0
        %v8570 = vsel %vm8565, %v8500, 0
        %v8573 = vsel %vm8565, %v8508, 0
        %v8576 = vsel %vm8565, %v8516, 0
        %v8579 = vsel %vm8565, %v8524, 0
        %v8582 = vsel %vm8565, %v8532, 0
        %v8585 = vsel %vm8565, %v8540, 0
        %v8588 = vsel %vm8565, %v8543, 0
        %vm8590 = vcmask 1043456
        %v8592 = vsel %vm8590, %v8561, 0
        %8594 = vmatpush.bf16.msra.mxu0 0
        %8595 = vmatpush.bf16.msra.mxu0 0
        %8596 = vmatpush.bf16.msra.mxu0 0
        %8597 = vmatpush.bf16.msra.mxu0 0
        %8598 = vmatpush.bf16.msra.mxu0 %v8592
        %8599 = vmatpush.bf16.msra.mxu0 %v8560
        %8600 = vmatpush.bf16.msra.mxu0 %v8559
        %8601 = vmatpush.bf16.msra.mxu0 %v8558
        %8602 = vmatmul.bf16.gmra.mxu0 %v8567
        %v8603 = vpop.f32.mrf.mxu0
        %v8604 = vadd.f32 0.0, %v8603
        %v8605 = vpop.f32.mrf.mxu0
        %v8606 = vadd.f32 0.0, %v8605
        %8607 = vmatmul.bf16.gmra.mxu0 %v8570
        %v8608 = vpop.f32.mrf.mxu0
        %v8609 = vadd.f32 0.0, %v8608
        %v8610 = vpop.f32.mrf.mxu0
        %v8611 = vadd.f32 0.0, %v8610
        %8612 = vmatmul.bf16.gmra.mxu0 %v8573
        %v8613 = vpop.f32.mrf.mxu0
        %v8614 = vadd.f32 0.0, %v8613
        %v8615 = vpop.f32.mrf.mxu0
        %v8616 = vadd.f32 0.0, %v8615
        %8617 = vmatmul.bf16.gmra.mxu0 %v8576
        %v8618 = vpop.f32.mrf.mxu0
        %v8619 = vadd.f32 0.0, %v8618
        %v8620 = vpop.f32.mrf.mxu0
        %v8621 = vadd.f32 0.0, %v8620
        %8622 = vmatmul.bf16.gmra.mxu0 %v8579
        %v8623 = vpop.f32.mrf.mxu0
        %v8624 = vadd.f32 0.0, %v8623
        %v8625 = vpop.f32.mrf.mxu0
        %v8626 = vadd.f32 0.0, %v8625
        %8627 = vmatmul.bf16.gmra.mxu0 %v8582
        %v8628 = vpop.f32.mrf.mxu0
        %v8629 = vadd.f32 0.0, %v8628
        %v8630 = vpop.f32.mrf.mxu0
        %v8631 = vadd.f32 0.0, %v8630
        %8632 = vmatmul.bf16.gmra.mxu0 %v8585
        %v8633 = vpop.f32.mrf.mxu0
        %v8634 = vadd.f32 0.0, %v8633
        %v8635 = vpop.f32.mrf.mxu0
        %v8636 = vadd.f32 0.0, %v8635
        %8637 = vmatmul.bf16.gmra.mxu0 %v8588
        %v8638 = vpop.f32.mrf.mxu0
        %v8639 = vadd.f32 0.0, %v8638
        %v8640 = vpop.f32.mrf.mxu0
        %v8641 = vadd.f32 0.0, %v8640
        %8642 = vdwg.mxu0
        %v8650 = vunpack.c.l.b16 %v8466
        %v8651 = vunpack.c.l.b16 %v8467
        %v8652 = vunpack.c.l.b16 %v8468
        %v8653 = vunpack.c.l.b16 %v8469
        %v8654 = vunpack.c.l.b16 %v8470
        %v8655 = vunpack.c.l.b16 %v8471
        %v8656 = vunpack.c.l.b16 %v8472
        %v8657 = vpack.c.b16 %v8651, %v8650
        %v8658 = vpack.c.b16 %v8653, %v8652
        %v8659 = vpack.c.b16 %v8655, %v8654
        %v8660 = vpack.c.b16 %v8656, %v8656
        %v8664 = vsel %vm8565, %v8458, 0
        %v8666 = vsel %vm8565, %v8459, 0
        %v8668 = vsel %vm8565, %v8460, 0
        %v8670 = vsel %vm8565, %v8461, 0
        %v8672 = vsel %vm8565, %v8462, 0
        %v8674 = vsel %vm8565, %v8463, 0
        %v8676 = vsel %vm8565, %v8464, 0
        %v8678 = vsel %vm8565, %v8465, 0
        %v8681 = vsel %vm8590, %v8660, 0
        %8683 = vmatpush.bf16.msra.mxu0 0
        %8684 = vmatpush.bf16.msra.mxu0 0
        %8685 = vmatpush.bf16.msra.mxu0 0
        %8686 = vmatpush.bf16.msra.mxu0 0
        %8687 = vmatpush.bf16.msra.mxu0 %v8681
        %8688 = vmatpush.bf16.msra.mxu0 %v8659
        %8689 = vmatpush.bf16.msra.mxu0 %v8658
        %8690 = vmatpush.bf16.msra.mxu0 %v8657
        %8691 = vmatmul.bf16.gmra.mxu0 %v8664
        %v8692 = vpop.f32.mrf.mxu0
        %v8693 = vadd.f32 %v8604, %v8692
        %v8694 = vpop.f32.mrf.mxu0
        %v8695 = vadd.f32 %v8606, %v8694
        %8696 = vmatmul.bf16.gmra.mxu0 %v8666
        %v8697 = vpop.f32.mrf.mxu0
        %v8698 = vadd.f32 %v8609, %v8697
        %v8699 = vpop.f32.mrf.mxu0
        %v8700 = vadd.f32 %v8611, %v8699
        %8701 = vmatmul.bf16.gmra.mxu0 %v8668
        %v8702 = vpop.f32.mrf.mxu0
        %v8703 = vadd.f32 %v8614, %v8702
        %v8704 = vpop.f32.mrf.mxu0
        %v8705 = vadd.f32 %v8616, %v8704
        %8706 = vmatmul.bf16.gmra.mxu0 %v8670
        %v8707 = vpop.f32.mrf.mxu0
        %v8708 = vadd.f32 %v8619, %v8707
        %v8709 = vpop.f32.mrf.mxu0
        %v8710 = vadd.f32 %v8621, %v8709
        %8711 = vmatmul.bf16.gmra.mxu0 %v8672
        %v8712 = vpop.f32.mrf.mxu0
        %v8713 = vadd.f32 %v8624, %v8712
        %v8714 = vpop.f32.mrf.mxu0
        %v8715 = vadd.f32 %v8626, %v8714
        %8716 = vmatmul.bf16.gmra.mxu0 %v8674
        %v8717 = vpop.f32.mrf.mxu0
        %v8718 = vadd.f32 %v8629, %v8717
        %v8719 = vpop.f32.mrf.mxu0
        %v8720 = vadd.f32 %v8631, %v8719
        %8721 = vmatmul.bf16.gmra.mxu0 %v8676
        %v8722 = vpop.f32.mrf.mxu0
        %v8723 = vadd.f32 %v8634, %v8722
        %v8724 = vpop.f32.mrf.mxu0
        %v8725 = vadd.f32 %v8636, %v8724
        %8726 = vmatmul.bf16.gmra.mxu0 %v8678
        %v8727 = vpop.f32.mrf.mxu0
        %v8728 = vadd.f32 %v8639, %v8727
        %v8729 = vpop.f32.mrf.mxu0
        %v8730 = vadd.f32 %v8641, %v8729
        %8731 = vdwg.mxu0
        %s8732 = scalar_lea.vmem %s8, 56
        %v8733 = vld [vmem:[%s8732] sm:$0xf]
        %v8734 = vld [vmem:[%s8732 + $0x4] sm:$0xf]
        %v8735 = vld [vmem:[%s8732 + $0x8] sm:$0xf]
        %v8736 = vld [vmem:[%s8732 + $0xc] sm:$0xf]
        %v8737 = vld [vmem:[%s8732 + $0x10] sm:$0xf]
        %v8738 = vld [vmem:[%s8732 + $0x14] sm:$0xf]
        %v8739 = vld [vmem:[%s8732 + $0x18] sm:$0xf]
        %v8748 = vrot.slane %v8458, 1
        %v8749 = vrot.slane %v8459, 1
        %v8750 = vsel %vm4634, %v8748, %v8749
        %v8751 = vrot.slane %v8460, 1
        %v8752 = vsel %vm4634, %v8749, %v8751
        %v8753 = vrot.slane %v8461, 1
        %v8754 = vsel %vm4634, %v8751, %v8753
        %v8755 = vrot.slane %v8462, 1
        %v8756 = vsel %vm4634, %v8753, %v8755
        %v8757 = vrot.slane %v8463, 1
        %v8758 = vsel %vm4634, %v8755, %v8757
        %v8759 = vrot.slane %v8464, 1
        %v8760 = vsel %vm4634, %v8757, %v8759
        %v8761 = vrot.slane %v8465, 1
        %v8762 = vsel %vm4634, %v8759, %v8761
        %v8770 = vunpack.c.l.b16 %v8733
        %v8771 = vunpack.c.l.b16 %v8734
        %v8772 = vunpack.c.l.b16 %v8735
        %v8773 = vunpack.c.l.b16 %v8736
        %v8774 = vunpack.c.l.b16 %v8737
        %v8775 = vunpack.c.l.b16 %v8738
        %v8776 = vunpack.c.l.b16 %v8739
        %v8777 = vpack.c.b16 %v8771, %v8770
        %v8778 = vpack.c.b16 %v8773, %v8772
        %v8779 = vpack.c.b16 %v8775, %v8774
        %v8780 = vpack.c.b16 %v8776, %v8776
        %v8785 = vsel %vm8565, %v8750, 0
        %v8788 = vsel %vm8565, %v8752, 0
        %v8791 = vsel %vm8565, %v8754, 0
        %v8794 = vsel %vm8565, %v8756, 0
        %v8797 = vsel %vm8565, %v8758, 0
        %v8800 = vsel %vm8565, %v8760, 0
        %v8803 = vsel %vm8565, %v8762, 0
        %v8806 = vsel %vm8565, %v8761, 0
        %v8809 = vsel %vm8590, %v8780, 0
        %8811 = vmatpush.bf16.msra.mxu0 0
        %8812 = vmatpush.bf16.msra.mxu0 0
        %8813 = vmatpush.bf16.msra.mxu0 0
        %8814 = vmatpush.bf16.msra.mxu0 0
        %8815 = vmatpush.bf16.msra.mxu0 %v8809
        %8816 = vmatpush.bf16.msra.mxu0 %v8779
        %8817 = vmatpush.bf16.msra.mxu0 %v8778
        %8818 = vmatpush.bf16.msra.mxu0 %v8777
        %8819 = vmatmul.bf16.gmra.mxu0 %v8785
        %v8820 = vpop.f32.mrf.mxu0
        %v8821 = vadd.f32 0.0, %v8820
        %v8822 = vpop.f32.mrf.mxu0
        %v8823 = vadd.f32 0.0, %v8822
        %8824 = vmatmul.bf16.gmra.mxu0 %v8788
        %v8825 = vpop.f32.mrf.mxu0
        %v8826 = vadd.f32 0.0, %v8825
        %v8827 = vpop.f32.mrf.mxu0
        %v8828 = vadd.f32 0.0, %v8827
        %8829 = vmatmul.bf16.gmra.mxu0 %v8791
        %v8830 = vpop.f32.mrf.mxu0
        %v8831 = vadd.f32 0.0, %v8830
        %v8832 = vpop.f32.mrf.mxu0
        %v8833 = vadd.f32 0.0, %v8832
        %8834 = vmatmul.bf16.gmra.mxu0 %v8794
        %v8835 = vpop.f32.mrf.mxu0
        %v8836 = vadd.f32 0.0, %v8835
        %v8837 = vpop.f32.mrf.mxu0
        %v8838 = vadd.f32 0.0, %v8837
        %8839 = vmatmul.bf16.gmra.mxu0 %v8797
        %v8840 = vpop.f32.mrf.mxu0
        %v8841 = vadd.f32 0.0, %v8840
        %v8842 = vpop.f32.mrf.mxu0
        %v8843 = vadd.f32 0.0, %v8842
        %8844 = vmatmul.bf16.gmra.mxu0 %v8800
        %v8845 = vpop.f32.mrf.mxu0
        %v8846 = vadd.f32 0.0, %v8845
        %v8847 = vpop.f32.mrf.mxu0
        %v8848 = vadd.f32 0.0, %v8847
        %8849 = vmatmul.bf16.gmra.mxu0 %v8803
        %v8850 = vpop.f32.mrf.mxu0
        %v8851 = vadd.f32 0.0, %v8850
        %v8852 = vpop.f32.mrf.mxu0
        %v8853 = vadd.f32 0.0, %v8852
        %8854 = vmatmul.bf16.gmra.mxu0 %v8806
        %v8855 = vpop.f32.mrf.mxu0
        %v8856 = vadd.f32 0.0, %v8855
        %v8857 = vpop.f32.mrf.mxu0
        %v8858 = vadd.f32 0.0, %v8857
        %8859 = vdwg.mxu0
        %v8860 = vadd.f32 %v8693, %v8821
        %v8861 = vadd.f32 %v8695, %v8823
        %v8862 = vadd.f32 %v8698, %v8826
        %v8863 = vadd.f32 %v8700, %v8828
        %v8864 = vadd.f32 %v8703, %v8831
        %v8865 = vadd.f32 %v8705, %v8833
        %v8866 = vadd.f32 %v8708, %v8836
        %v8867 = vadd.f32 %v8710, %v8838
        %v8868 = vadd.f32 %v8713, %v8841
        %v8869 = vadd.f32 %v8715, %v8843
        %v8870 = vadd.f32 %v8718, %v8846
        %v8871 = vadd.f32 %v8720, %v8848
        %v8872 = vadd.f32 %v8723, %v8851
        %v8873 = vadd.f32 %v8725, %v8853
        %v8874 = vadd.f32 %v8728, %v8856
        %v8875 = vadd.f32 %v8730, %v8858
        %v8876 = vld [vmem:[%s9] sm:$0x1]
        %v8878 = vperm.slane %v8876, 0
        %v8880 = vadd.f32 %v8860, %v8878
        %v8881 = vadd.f32 %v8861, %v8878
        %v8882 = vadd.f32 %v8862, %v8878
        %v8883 = vadd.f32 %v8863, %v8878
        %v8884 = vadd.f32 %v8864, %v8878
        %v8885 = vadd.f32 %v8865, %v8878
        %v8886 = vadd.f32 %v8866, %v8878
        %v8887 = vadd.f32 %v8867, %v8878
        %v8888 = vadd.f32 %v8868, %v8878
        %v8889 = vadd.f32 %v8869, %v8878
        %v8890 = vadd.f32 %v8870, %v8878
        %v8891 = vadd.f32 %v8871, %v8878
        %v8892 = vadd.f32 %v8872, %v8878
        %v8893 = vadd.f32 %v8873, %v8878
        %v8894 = vadd.f32 %v8874, %v8878
        %v8895 = vadd.f32 %v8875, %v8878
        %v8896 = vmax.f32 %v8880, 0.0
        %v8897 = vmax.f32 %v8881, 0.0
        %v8898 = vmax.f32 %v8882, 0.0
        %v8899 = vmax.f32 %v8883, 0.0
        %v8900 = vmax.f32 %v8884, 0.0
        %v8901 = vmax.f32 %v8885, 0.0
        %v8902 = vmax.f32 %v8886, 0.0
        %v8903 = vmax.f32 %v8887, 0.0
        %v8904 = vmax.f32 %v8888, 0.0
        %v8905 = vmax.f32 %v8889, 0.0
        %v8906 = vmax.f32 %v8890, 0.0
        %v8907 = vmax.f32 %v8891, 0.0
        %v8908 = vmax.f32 %v8892, 0.0
        %v8909 = vmax.f32 %v8893, 0.0
        %v8910 = vmax.f32 %v8894, 0.0
        %v8911 = vmax.f32 %v8895, 0.0
        %v8912 = vpack.c.bf16 %v8897, %v8896
        %v8913 = vpack.c.bf16 %v8899, %v8898
        %v8914 = vpack.c.bf16 %v8901, %v8900
        %v8915 = vpack.c.bf16 %v8903, %v8902
        %v8916 = vpack.c.bf16 %v8905, %v8904
        %v8917 = vpack.c.bf16 %v8907, %v8906
        %v8918 = vpack.c.bf16 %v8909, %v8908
        %v8919 = vpack.c.bf16 %v8911, %v8910
        %v8920 = vld [vmem:[%s10] sm:$0xff]
        %v8921 = vld [vmem:[%s10 + $0x8] sm:$0xff]
        %v8922 = vld [vmem:[%s10 + $0x10] sm:$0xff]
        %v8923 = vld [vmem:[%s10 + $0x18] sm:$0xff]
        %v8924 = vld [vmem:[%s10 + $0x20] sm:$0xff]
        %v8925 = vld [vmem:[%s10 + $0x28] sm:$0xff]
        %v8926 = vld [vmem:[%s10 + $0x30] sm:$0xff]
        %v8927 = vld [vmem:[%s10 + $0x38] sm:$0xff]
        %v8928 = vld [vmem:[%s10 + $0x40] sm:$0xff]
        %v8929 = vld [vmem:[%s10 + $0x48] sm:$0xff]
        %v8930 = vld [vmem:[%s10 + $0x50] sm:$0xff]
        %v8931 = vld [vmem:[%s10 + $0x58] sm:$0xff]
        %s8932 = scalar_lea.vmem %s10, 96
        %v8933 = vld [vmem:[%s8932] sm:$0xff]
        %v8934 = vld [vmem:[%s8932 + $0x8] sm:$0xff]
        %v8935 = vld [vmem:[%s8932 + $0x10] sm:$0xff]
        %v8936 = vld [vmem:[%s8932 + $0x18] sm:$0xff]
        %v8937 = vld [vmem:[%s8932 + $0x20] sm:$0xff]
        %v8938 = vld [vmem:[%s8932 + $0x28] sm:$0xff]
        %v8939 = vld [vmem:[%s8932 + $0x30] sm:$0xff]
        %v8940 = vld [vmem:[%s8932 + $0x38] sm:$0xff]
        %v8941 = vld [vmem:[%s8932 + $0x40] sm:$0xff]
        %v8942 = vld [vmem:[%s8932 + $0x48] sm:$0xff]
        %v8943 = vld [vmem:[%s8932 + $0x50] sm:$0xff]
        %v8944 = vld [vmem:[%s8932 + $0x58] sm:$0xff]
        %v8946 = vshrl.u32 %v8912, 16
        %v8948 = vshll.u32 %v8912, 16
        %v8950 = vrot.slane %v8948, 1
        %v8951 = vor.u32 %v8946, %v8950
        %v8953 = vshll.u32 %v8913, 16
        %v8955 = vrot.slane %v8953, 1
        %v8956 = vsel %vm2200, %v8951, %v8955
        %v8957 = vshrl.u32 %v8913, 16
        %v8959 = vor.u32 %v8957, %v8955
        %v8961 = vshll.u32 %v8914, 16
        %v8963 = vrot.slane %v8961, 1
        %v8964 = vsel %vm2200, %v8959, %v8963
        %v8965 = vshrl.u32 %v8914, 16
        %v8967 = vor.u32 %v8965, %v8963
        %v8969 = vshll.u32 %v8915, 16
        %v8971 = vrot.slane %v8969, 1
        %v8972 = vsel %vm2200, %v8967, %v8971
        %v8973 = vshrl.u32 %v8915, 16
        %v8975 = vor.u32 %v8973, %v8971
        %v8977 = vshll.u32 %v8916, 16
        %v8979 = vrot.slane %v8977, 1
        %v8980 = vsel %vm2200, %v8975, %v8979
        %v8981 = vshrl.u32 %v8916, 16
        %v8983 = vor.u32 %v8981, %v8979
        %v8985 = vshll.u32 %v8917, 16
        %v8987 = vrot.slane %v8985, 1
        %v8988 = vsel %vm2200, %v8983, %v8987
        %v8989 = vshrl.u32 %v8917, 16
        %v8991 = vor.u32 %v8989, %v8987
        %v8993 = vshll.u32 %v8918, 16
        %v8995 = vrot.slane %v8993, 1
        %v8996 = vsel %vm2200, %v8991, %v8995
        %v8997 = vshrl.u32 %v8918, 16
        %v8999 = vor.u32 %v8997, %v8995
        %v9001 = vshll.u32 %v8919, 16
        %v9003 = vrot.slane %v9001, 1
        %v9004 = vsel %vm2200, %v8999, %v9003
        %v9005 = vshrl.u32 %v8919, 16
        %v9007 = vor.u32 %v9005, %v9003
        %v9020 = vunpack.c.l.b16 %v8933
        %v9021 = vunpack.c.h.b16 %v8933
        %v9022 = vunpack.c.l.b16 %v8934
        %v9023 = vunpack.c.h.b16 %v8934
        %v9024 = vunpack.c.l.b16 %v8935
        %v9025 = vunpack.c.h.b16 %v8935
        %v9026 = vunpack.c.l.b16 %v8936
        %v9027 = vunpack.c.h.b16 %v8936
        %v9028 = vunpack.c.l.b16 %v8937
        %v9029 = vunpack.c.h.b16 %v8937
        %v9030 = vunpack.c.l.b16 %v8938
        %v9031 = vunpack.c.h.b16 %v8938
        %v9032 = vunpack.c.l.b16 %v8939
        %v9033 = vunpack.c.h.b16 %v8939
        %v9034 = vunpack.c.l.b16 %v8940
        %v9035 = vunpack.c.h.b16 %v8940
        %v9036 = vunpack.c.l.b16 %v8941
        %v9037 = vunpack.c.h.b16 %v8941
        %v9038 = vunpack.c.l.b16 %v8942
        %v9039 = vunpack.c.h.b16 %v8942
        %v9040 = vunpack.c.l.b16 %v8943
        %v9041 = vunpack.c.h.b16 %v8943
        %v9042 = vunpack.c.l.b16 %v8944
        %v9043 = vunpack.c.h.b16 %v8944
        %v9044 = vpack.c.b16 %v9022, %v9020
        %v9045 = vpack.c.b16 %v9023, %v9021
        %v9046 = vpack.c.b16 %v9026, %v9024
        %v9047 = vpack.c.b16 %v9027, %v9025
        %v9048 = vpack.c.b16 %v9030, %v9028
        %v9049 = vpack.c.b16 %v9031, %v9029
        %v9050 = vpack.c.b16 %v9034, %v9032
        %v9051 = vpack.c.b16 %v9035, %v9033
        %v9052 = vpack.c.b16 %v9038, %v9036
        %v9053 = vpack.c.b16 %v9039, %v9037
        %v9054 = vpack.c.b16 %v9042, %v9040
        %v9055 = vpack.c.b16 %v9043, %v9041
        %v9069 = vsel %vm1672, %v8956, 0
        %v9072 = vsel %vm1672, %v8964, 0
        %v9075 = vsel %vm1672, %v8972, 0
        %v9078 = vsel %vm1672, %v8980, 0
        %v9081 = vsel %vm1672, %v8988, 0
        %v9084 = vsel %vm1672, %v8996, 0
        %v9087 = vsel %vm1672, %v9004, 0
        %v9090 = vsel %vm1672, %v9007, 0
        %9092 = vmatpush.bf16.msra.mxu0 0
        %9093 = vmatpush.bf16.msra.mxu0 0
        %9094 = vmatpush.bf16.msra.mxu0 %v9054
        %9095 = vmatpush.bf16.msra.mxu0 %v9052
        %9096 = vmatpush.bf16.msra.mxu0 %v9050
        %9097 = vmatpush.bf16.msra.mxu0 %v9048
        %9098 = vmatpush.bf16.msra.mxu0 %v9046
        %9099 = vmatpush.bf16.msra.mxu0 %v9044
        %9100 = vmatmul.bf16.gmra.mxu0 %v9069
        %v9101 = vpop.f32.mrf.mxu0
        %v9102 = vadd.f32 0.0, %v9101
        %v9103 = vpop.f32.mrf.mxu0
        %v9104 = vadd.f32 0.0, %v9103
        %9105 = vmatmul.bf16.gmra.mxu0 %v9072
        %v9106 = vpop.f32.mrf.mxu0
        %v9107 = vadd.f32 0.0, %v9106
        %v9108 = vpop.f32.mrf.mxu0
        %v9109 = vadd.f32 0.0, %v9108
        %9110 = vmatmul.bf16.gmra.mxu0 %v9075
        %v9111 = vpop.f32.mrf.mxu0
        %v9112 = vadd.f32 0.0, %v9111
        %v9113 = vpop.f32.mrf.mxu0
        %v9114 = vadd.f32 0.0, %v9113
        %9115 = vmatmul.bf16.gmra.mxu0 %v9078
        %v9116 = vpop.f32.mrf.mxu0
        %v9117 = vadd.f32 0.0, %v9116
        %v9118 = vpop.f32.mrf.mxu0
        %v9119 = vadd.f32 0.0, %v9118
        %9120 = vmatmul.bf16.gmra.mxu0 %v9081
        %v9121 = vpop.f32.mrf.mxu0
        %v9122 = vadd.f32 0.0, %v9121
        %v9123 = vpop.f32.mrf.mxu0
        %v9124 = vadd.f32 0.0, %v9123
        %9125 = vmatmul.bf16.gmra.mxu0 %v9084
        %v9126 = vpop.f32.mrf.mxu0
        %v9127 = vadd.f32 0.0, %v9126
        %v9128 = vpop.f32.mrf.mxu0
        %v9129 = vadd.f32 0.0, %v9128
        %9130 = vmatmul.bf16.gmra.mxu0 %v9087
        %v9131 = vpop.f32.mrf.mxu0
        %v9132 = vadd.f32 0.0, %v9131
        %v9133 = vpop.f32.mrf.mxu0
        %v9134 = vadd.f32 0.0, %v9133
        %9135 = vmatmul.bf16.gmra.mxu0 %v9090
        %v9136 = vpop.f32.mrf.mxu0
        %v9137 = vadd.f32 0.0, %v9136
        %v9138 = vpop.f32.mrf.mxu0
        %v9139 = vadd.f32 0.0, %v9138
        %9140 = vdwg.mxu0
        %9141 = vmatpush.bf16.msra.mxu0 0
        %9142 = vmatpush.bf16.msra.mxu0 0
        %9143 = vmatpush.bf16.msra.mxu0 %v9055
        %9144 = vmatpush.bf16.msra.mxu0 %v9053
        %9145 = vmatpush.bf16.msra.mxu0 %v9051
        %9146 = vmatpush.bf16.msra.mxu0 %v9049
        %9147 = vmatpush.bf16.msra.mxu0 %v9047
        %9148 = vmatpush.bf16.msra.mxu0 %v9045
        %9149 = vmatmul.bf16.gmra.mxu0 %v9069
        %v9150 = vpop.f32.mrf.mxu0
        %v9151 = vadd.f32 0.0, %v9150
        %v9152 = vpop.f32.mrf.mxu0
        %v9153 = vadd.f32 0.0, %v9152
        %9154 = vmatmul.bf16.gmra.mxu0 %v9072
        %v9155 = vpop.f32.mrf.mxu0
        %v9156 = vadd.f32 0.0, %v9155
        %v9157 = vpop.f32.mrf.mxu0
        %v9158 = vadd.f32 0.0, %v9157
        %9159 = vmatmul.bf16.gmra.mxu0 %v9075
        %v9160 = vpop.f32.mrf.mxu0
        %v9161 = vadd.f32 0.0, %v9160
        %v9162 = vpop.f32.mrf.mxu0
        %v9163 = vadd.f32 0.0, %v9162
        %9164 = vmatmul.bf16.gmra.mxu0 %v9078
        %v9165 = vpop.f32.mrf.mxu0
        %v9166 = vadd.f32 0.0, %v9165
        %v9167 = vpop.f32.mrf.mxu0
        %v9168 = vadd.f32 0.0, %v9167
        %9169 = vmatmul.bf16.gmra.mxu0 %v9081
        %v9170 = vpop.f32.mrf.mxu0
        %v9171 = vadd.f32 0.0, %v9170
        %v9172 = vpop.f32.mrf.mxu0
        %v9173 = vadd.f32 0.0, %v9172
        %9174 = vmatmul.bf16.gmra.mxu0 %v9084
        %v9175 = vpop.f32.mrf.mxu0
        %v9176 = vadd.f32 0.0, %v9175
        %v9177 = vpop.f32.mrf.mxu0
        %v9178 = vadd.f32 0.0, %v9177
        %9179 = vmatmul.bf16.gmra.mxu0 %v9087
        %v9180 = vpop.f32.mrf.mxu0
        %v9181 = vadd.f32 0.0, %v9180
        %v9182 = vpop.f32.mrf.mxu0
        %v9183 = vadd.f32 0.0, %v9182
        %9184 = vmatmul.bf16.gmra.mxu0 %v9090
        %v9185 = vpop.f32.mrf.mxu0
        %v9186 = vadd.f32 0.0, %v9185
        %v9187 = vpop.f32.mrf.mxu0
        %v9188 = vadd.f32 0.0, %v9187
        %9189 = vdwg.mxu0
        %v9202 = vunpack.c.l.b16 %v8920
        %v9203 = vunpack.c.h.b16 %v8920
        %v9204 = vunpack.c.l.b16 %v8921
        %v9205 = vunpack.c.h.b16 %v8921
        %v9206 = vunpack.c.l.b16 %v8922
        %v9207 = vunpack.c.h.b16 %v8922
        %v9208 = vunpack.c.l.b16 %v8923
        %v9209 = vunpack.c.h.b16 %v8923
        %v9210 = vunpack.c.l.b16 %v8924
        %v9211 = vunpack.c.h.b16 %v8924
        %v9212 = vunpack.c.l.b16 %v8925
        %v9213 = vunpack.c.h.b16 %v8925
        %v9214 = vunpack.c.l.b16 %v8926
        %v9215 = vunpack.c.h.b16 %v8926
        %v9216 = vunpack.c.l.b16 %v8927
        %v9217 = vunpack.c.h.b16 %v8927
        %v9218 = vunpack.c.l.b16 %v8928
        %v9219 = vunpack.c.h.b16 %v8928
        %v9220 = vunpack.c.l.b16 %v8929
        %v9221 = vunpack.c.h.b16 %v8929
        %v9222 = vunpack.c.l.b16 %v8930
        %v9223 = vunpack.c.h.b16 %v8930
        %v9224 = vunpack.c.l.b16 %v8931
        %v9225 = vunpack.c.h.b16 %v8931
        %v9226 = vpack.c.b16 %v9204, %v9202
        %v9227 = vpack.c.b16 %v9205, %v9203
        %v9228 = vpack.c.b16 %v9208, %v9206
        %v9229 = vpack.c.b16 %v9209, %v9207
        %v9230 = vpack.c.b16 %v9212, %v9210
        %v9231 = vpack.c.b16 %v9213, %v9211
        %v9232 = vpack.c.b16 %v9216, %v9214
        %v9233 = vpack.c.b16 %v9217, %v9215
        %v9234 = vpack.c.b16 %v9220, %v9218
        %v9235 = vpack.c.b16 %v9221, %v9219
        %v9236 = vpack.c.b16 %v9224, %v9222
        %v9237 = vpack.c.b16 %v9225, %v9223
        %v9250 = vsel %vm1672, %v8912, 0
        %v9252 = vsel %vm1672, %v8913, 0
        %v9254 = vsel %vm1672, %v8914, 0
        %v9256 = vsel %vm1672, %v8915, 0
        %v9258 = vsel %vm1672, %v8916, 0
        %v9260 = vsel %vm1672, %v8917, 0
        %v9262 = vsel %vm1672, %v8918, 0
        %v9264 = vsel %vm1672, %v8919, 0
        %9266 = vmatpush.bf16.msra.mxu0 0
        %9267 = vmatpush.bf16.msra.mxu0 0
        %9268 = vmatpush.bf16.msra.mxu0 %v9236
        %9269 = vmatpush.bf16.msra.mxu0 %v9234
        %9270 = vmatpush.bf16.msra.mxu0 %v9232
        %9271 = vmatpush.bf16.msra.mxu0 %v9230
        %9272 = vmatpush.bf16.msra.mxu0 %v9228
        %9273 = vmatpush.bf16.msra.mxu0 %v9226
        %9274 = vmatmul.bf16.gmra.mxu0 %v9250
        %v9275 = vpop.f32.mrf.mxu0
        %v9276 = vadd.f32 %v9102, %v9275
        %v9277 = vpop.f32.mrf.mxu0
        %v9278 = vadd.f32 %v9104, %v9277
        %9279 = vmatmul.bf16.gmra.mxu0 %v9252
        %v9280 = vpop.f32.mrf.mxu0
        %v9281 = vadd.f32 %v9107, %v9280
        %v9282 = vpop.f32.mrf.mxu0
        %v9283 = vadd.f32 %v9109, %v9282
        %9284 = vmatmul.bf16.gmra.mxu0 %v9254
        %v9285 = vpop.f32.mrf.mxu0
        %v9286 = vadd.f32 %v9112, %v9285
        %v9287 = vpop.f32.mrf.mxu0
        %v9288 = vadd.f32 %v9114, %v9287
        %9289 = vmatmul.bf16.gmra.mxu0 %v9256
        %v9290 = vpop.f32.mrf.mxu0
        %v9291 = vadd.f32 %v9117, %v9290
        %v9292 = vpop.f32.mrf.mxu0
        %v9293 = vadd.f32 %v9119, %v9292
        %9294 = vmatmul.bf16.gmra.mxu0 %v9258
        %v9295 = vpop.f32.mrf.mxu0
        %v9296 = vadd.f32 %v9122, %v9295
        %v9297 = vpop.f32.mrf.mxu0
        %v9298 = vadd.f32 %v9124, %v9297
        %9299 = vmatmul.bf16.gmra.mxu0 %v9260
        %v9300 = vpop.f32.mrf.mxu0
        %v9301 = vadd.f32 %v9127, %v9300
        %v9302 = vpop.f32.mrf.mxu0
        %v9303 = vadd.f32 %v9129, %v9302
        %9304 = vmatmul.bf16.gmra.mxu0 %v9262
        %v9305 = vpop.f32.mrf.mxu0
        %v9306 = vadd.f32 %v9132, %v9305
        %v9307 = vpop.f32.mrf.mxu0
        %v9308 = vadd.f32 %v9134, %v9307
        %9309 = vmatmul.bf16.gmra.mxu0 %v9264
        %v9310 = vpop.f32.mrf.mxu0
        %v9311 = vadd.f32 %v9137, %v9310
        %v9312 = vpop.f32.mrf.mxu0
        %v9313 = vadd.f32 %v9139, %v9312
        %9314 = vdwg.mxu0
        %9315 = vmatpush.bf16.msra.mxu0 0
        %9316 = vmatpush.bf16.msra.mxu0 0
        %9317 = vmatpush.bf16.msra.mxu0 %v9237
        %9318 = vmatpush.bf16.msra.mxu0 %v9235
        %9319 = vmatpush.bf16.msra.mxu0 %v9233
        %9320 = vmatpush.bf16.msra.mxu0 %v9231
        %9321 = vmatpush.bf16.msra.mxu0 %v9229
        %9322 = vmatpush.bf16.msra.mxu0 %v9227
        %9323 = vmatmul.bf16.gmra.mxu0 %v9250
        %v9324 = vpop.f32.mrf.mxu0
        %v9325 = vadd.f32 %v9151, %v9324
        %v9326 = vpop.f32.mrf.mxu0
        %v9327 = vadd.f32 %v9153, %v9326
        %9328 = vmatmul.bf16.gmra.mxu0 %v9252
        %v9329 = vpop.f32.mrf.mxu0
        %v9330 = vadd.f32 %v9156, %v9329
        %v9331 = vpop.f32.mrf.mxu0
        %v9332 = vadd.f32 %v9158, %v9331
        %9333 = vmatmul.bf16.gmra.mxu0 %v9254
        %v9334 = vpop.f32.mrf.mxu0
        %v9335 = vadd.f32 %v9161, %v9334
        %v9336 = vpop.f32.mrf.mxu0
        %v9337 = vadd.f32 %v9163, %v9336
        %9338 = vmatmul.bf16.gmra.mxu0 %v9256
        %v9339 = vpop.f32.mrf.mxu0
        %v9340 = vadd.f32 %v9166, %v9339
        %v9341 = vpop.f32.mrf.mxu0
        %v9342 = vadd.f32 %v9168, %v9341
        %9343 = vmatmul.bf16.gmra.mxu0 %v9258
        %v9344 = vpop.f32.mrf.mxu0
        %v9345 = vadd.f32 %v9171, %v9344
        %v9346 = vpop.f32.mrf.mxu0
        %v9347 = vadd.f32 %v9173, %v9346
        %9348 = vmatmul.bf16.gmra.mxu0 %v9260
        %v9349 = vpop.f32.mrf.mxu0
        %v9350 = vadd.f32 %v9176, %v9349
        %v9351 = vpop.f32.mrf.mxu0
        %v9352 = vadd.f32 %v9178, %v9351
        %9353 = vmatmul.bf16.gmra.mxu0 %v9262
        %v9354 = vpop.f32.mrf.mxu0
        %v9355 = vadd.f32 %v9181, %v9354
        %v9356 = vpop.f32.mrf.mxu0
        %v9357 = vadd.f32 %v9183, %v9356
        %9358 = vmatmul.bf16.gmra.mxu0 %v9264
        %v9359 = vpop.f32.mrf.mxu0
        %v9360 = vadd.f32 %v9186, %v9359
        %v9361 = vpop.f32.mrf.mxu0
        %v9362 = vadd.f32 %v9188, %v9361
        %9363 = vdwg.mxu0
        %s9364 = scalar_lea.vmem %s10, 192
        %v9365 = vld [vmem:[%s9364] sm:$0xff]
        %v9366 = vld [vmem:[%s9364 + $0x8] sm:$0xff]
        %v9367 = vld [vmem:[%s9364 + $0x10] sm:$0xff]
        %v9368 = vld [vmem:[%s9364 + $0x18] sm:$0xff]
        %v9369 = vld [vmem:[%s9364 + $0x20] sm:$0xff]
        %v9370 = vld [vmem:[%s9364 + $0x28] sm:$0xff]
        %v9371 = vld [vmem:[%s9364 + $0x30] sm:$0xff]
        %v9372 = vld [vmem:[%s9364 + $0x38] sm:$0xff]
        %v9373 = vld [vmem:[%s9364 + $0x40] sm:$0xff]
        %v9374 = vld [vmem:[%s9364 + $0x48] sm:$0xff]
        %v9375 = vld [vmem:[%s9364 + $0x50] sm:$0xff]
        %v9376 = vld [vmem:[%s9364 + $0x58] sm:$0xff]
        %v9385 = vrot.slane %v8912, 1
        %v9386 = vrot.slane %v8913, 1
        %v9387 = vsel %vm4634, %v9385, %v9386
        %v9388 = vrot.slane %v8914, 1
        %v9389 = vsel %vm4634, %v9386, %v9388
        %v9390 = vrot.slane %v8915, 1
        %v9391 = vsel %vm4634, %v9388, %v9390
        %v9392 = vrot.slane %v8916, 1
        %v9393 = vsel %vm4634, %v9390, %v9392
        %v9394 = vrot.slane %v8917, 1
        %v9395 = vsel %vm4634, %v9392, %v9394
        %v9396 = vrot.slane %v8918, 1
        %v9397 = vsel %vm4634, %v9394, %v9396
        %v9398 = vrot.slane %v8919, 1
        %v9399 = vsel %vm4634, %v9396, %v9398
        %v9412 = vunpack.c.l.b16 %v9365
        %v9413 = vunpack.c.h.b16 %v9365
        %v9414 = vunpack.c.l.b16 %v9366
        %v9415 = vunpack.c.h.b16 %v9366
        %v9416 = vunpack.c.l.b16 %v9367
        %v9417 = vunpack.c.h.b16 %v9367
        %v9418 = vunpack.c.l.b16 %v9368
        %v9419 = vunpack.c.h.b16 %v9368
        %v9420 = vunpack.c.l.b16 %v9369
        %v9421 = vunpack.c.h.b16 %v9369
        %v9422 = vunpack.c.l.b16 %v9370
        %v9423 = vunpack.c.h.b16 %v9370
        %v9424 = vunpack.c.l.b16 %v9371
        %v9425 = vunpack.c.h.b16 %v9371
        %v9426 = vunpack.c.l.b16 %v9372
        %v9427 = vunpack.c.h.b16 %v9372
        %v9428 = vunpack.c.l.b16 %v9373
        %v9429 = vunpack.c.h.b16 %v9373
        %v9430 = vunpack.c.l.b16 %v9374
        %v9431 = vunpack.c.h.b16 %v9374
        %v9432 = vunpack.c.l.b16 %v9375
        %v9433 = vunpack.c.h.b16 %v9375
        %v9434 = vunpack.c.l.b16 %v9376
        %v9435 = vunpack.c.h.b16 %v9376
        %v9436 = vpack.c.b16 %v9414, %v9412
        %v9437 = vpack.c.b16 %v9415, %v9413
        %v9438 = vpack.c.b16 %v9418, %v9416
        %v9439 = vpack.c.b16 %v9419, %v9417
        %v9440 = vpack.c.b16 %v9422, %v9420
        %v9441 = vpack.c.b16 %v9423, %v9421
        %v9442 = vpack.c.b16 %v9426, %v9424
        %v9443 = vpack.c.b16 %v9427, %v9425
        %v9444 = vpack.c.b16 %v9430, %v9428
        %v9445 = vpack.c.b16 %v9431, %v9429
        %v9446 = vpack.c.b16 %v9434, %v9432
        %v9447 = vpack.c.b16 %v9435, %v9433
        %v9461 = vsel %vm1672, %v9387, 0
        %v9464 = vsel %vm1672, %v9389, 0
        %v9467 = vsel %vm1672, %v9391, 0
        %v9470 = vsel %vm1672, %v9393, 0
        %v9473 = vsel %vm1672, %v9395, 0
        %v9476 = vsel %vm1672, %v9397, 0
        %v9479 = vsel %vm1672, %v9399, 0
        %v9482 = vsel %vm1672, %v9398, 0
        %9484 = vmatpush.bf16.msra.mxu0 0
        %9485 = vmatpush.bf16.msra.mxu0 0
        %9486 = vmatpush.bf16.msra.mxu0 %v9446
        %9487 = vmatpush.bf16.msra.mxu0 %v9444
        %9488 = vmatpush.bf16.msra.mxu0 %v9442
        %9489 = vmatpush.bf16.msra.mxu0 %v9440
        %9490 = vmatpush.bf16.msra.mxu0 %v9438
        %9491 = vmatpush.bf16.msra.mxu0 %v9436
        %9492 = vmatmul.bf16.gmra.mxu0 %v9461
        %v9493 = vpop.f32.mrf.mxu0
        %v9494 = vadd.f32 0.0, %v9493
        %v9495 = vpop.f32.mrf.mxu0
        %v9496 = vadd.f32 0.0, %v9495
        %9497 = vmatmul.bf16.gmra.mxu0 %v9464
        %v9498 = vpop.f32.mrf.mxu0
        %v9499 = vadd.f32 0.0, %v9498
        %v9500 = vpop.f32.mrf.mxu0
        %v9501 = vadd.f32 0.0, %v9500
        %9502 = vmatmul.bf16.gmra.mxu0 %v9467
        %v9503 = vpop.f32.mrf.mxu0
        %v9504 = vadd.f32 0.0, %v9503
        %v9505 = vpop.f32.mrf.mxu0
        %v9506 = vadd.f32 0.0, %v9505
        %9507 = vmatmul.bf16.gmra.mxu0 %v9470
        %v9508 = vpop.f32.mrf.mxu0
        %v9509 = vadd.f32 0.0, %v9508
        %v9510 = vpop.f32.mrf.mxu0
        %v9511 = vadd.f32 0.0, %v9510
        %9512 = vmatmul.bf16.gmra.mxu0 %v9473
        %v9513 = vpop.f32.mrf.mxu0
        %v9514 = vadd.f32 0.0, %v9513
        %v9515 = vpop.f32.mrf.mxu0
        %v9516 = vadd.f32 0.0, %v9515
        %9517 = vmatmul.bf16.gmra.mxu0 %v9476
        %v9518 = vpop.f32.mrf.mxu0
        %v9519 = vadd.f32 0.0, %v9518
        %v9520 = vpop.f32.mrf.mxu0
        %v9521 = vadd.f32 0.0, %v9520
        %9522 = vmatmul.bf16.gmra.mxu0 %v9479
        %v9523 = vpop.f32.mrf.mxu0
        %v9524 = vadd.f32 0.0, %v9523
        %v9525 = vpop.f32.mrf.mxu0
        %v9526 = vadd.f32 0.0, %v9525
        %9527 = vmatmul.bf16.gmra.mxu0 %v9482
        %v9528 = vpop.f32.mrf.mxu0
        %v9529 = vadd.f32 0.0, %v9528
        %v9530 = vpop.f32.mrf.mxu0
        %v9531 = vadd.f32 0.0, %v9530
        %9532 = vdwg.mxu0
        %9533 = vmatpush.bf16.msra.mxu0 0
        %9534 = vmatpush.bf16.msra.mxu0 0
        %9535 = vmatpush.bf16.msra.mxu0 %v9447
        %9536 = vmatpush.bf16.msra.mxu0 %v9445
        %9537 = vmatpush.bf16.msra.mxu0 %v9443
        %9538 = vmatpush.bf16.msra.mxu0 %v9441
        %9539 = vmatpush.bf16.msra.mxu0 %v9439
        %9540 = vmatpush.bf16.msra.mxu0 %v9437
        %9541 = vmatmul.bf16.gmra.mxu0 %v9461
        %v9542 = vpop.f32.mrf.mxu0
        %v9543 = vadd.f32 0.0, %v9542
        %v9544 = vpop.f32.mrf.mxu0
        %v9545 = vadd.f32 0.0, %v9544
        %9546 = vmatmul.bf16.gmra.mxu0 %v9464
        %v9547 = vpop.f32.mrf.mxu0
        %v9548 = vadd.f32 0.0, %v9547
        %v9549 = vpop.f32.mrf.mxu0
        %v9550 = vadd.f32 0.0, %v9549
        %9551 = vmatmul.bf16.gmra.mxu0 %v9467
        %v9552 = vpop.f32.mrf.mxu0
        %v9553 = vadd.f32 0.0, %v9552
        %v9554 = vpop.f32.mrf.mxu0
        %v9555 = vadd.f32 0.0, %v9554
        %9556 = vmatmul.bf16.gmra.mxu0 %v9470
        %v9557 = vpop.f32.mrf.mxu0
        %v9558 = vadd.f32 0.0, %v9557
        %v9559 = vpop.f32.mrf.mxu0
        %v9560 = vadd.f32 0.0, %v9559
        %9561 = vmatmul.bf16.gmra.mxu0 %v9473
        %v9562 = vpop.f32.mrf.mxu0
        %v9563 = vadd.f32 0.0, %v9562
        %v9564 = vpop.f32.mrf.mxu0
        %v9565 = vadd.f32 0.0, %v9564
        %9566 = vmatmul.bf16.gmra.mxu0 %v9476
        %v9567 = vpop.f32.mrf.mxu0
        %v9568 = vadd.f32 0.0, %v9567
        %v9569 = vpop.f32.mrf.mxu0
        %v9570 = vadd.f32 0.0, %v9569
        %9571 = vmatmul.bf16.gmra.mxu0 %v9479
        %v9572 = vpop.f32.mrf.mxu0
        %v9573 = vadd.f32 0.0, %v9572
        %v9574 = vpop.f32.mrf.mxu0
        %v9575 = vadd.f32 0.0, %v9574
        %9576 = vmatmul.bf16.gmra.mxu0 %v9482
        %v9577 = vpop.f32.mrf.mxu0
        %v9578 = vadd.f32 0.0, %v9577
        %v9579 = vpop.f32.mrf.mxu0
        %v9580 = vadd.f32 0.0, %v9579
        %9581 = vdwg.mxu0
        %v9582 = vadd.f32 %v9276, %v9494
        %v9583 = vadd.f32 %v9325, %v9543
        %v9584 = vadd.f32 %v9278, %v9496
        %v9585 = vadd.f32 %v9327, %v9545
        %v9586 = vadd.f32 %v9281, %v9499
        %v9587 = vadd.f32 %v9330, %v9548
        %v9588 = vadd.f32 %v9283, %v9501
        %v9589 = vadd.f32 %v9332, %v9550
        %v9590 = vadd.f32 %v9286, %v9504
        %v9591 = vadd.f32 %v9335, %v9553
        %v9592 = vadd.f32 %v9288, %v9506
        %v9593 = vadd.f32 %v9337, %v9555
        %v9594 = vadd.f32 %v9291, %v9509
        %v9595 = vadd.f32 %v9340, %v9558
        %v9596 = vadd.f32 %v9293, %v9511
        %v9597 = vadd.f32 %v9342, %v9560
        %v9598 = vadd.f32 %v9296, %v9514
        %v9599 = vadd.f32 %v9345, %v9563
        %v9600 = vadd.f32 %v9298, %v9516
        %v9601 = vadd.f32 %v9347, %v9565
        %v9602 = vadd.f32 %v9301, %v9519
        %v9603 = vadd.f32 %v9350, %v9568
        %v9604 = vadd.f32 %v9303, %v9521
        %v9605 = vadd.f32 %v9352, %v9570
        %v9606 = vadd.f32 %v9306, %v9524
        %v9607 = vadd.f32 %v9355, %v9573
        %v9608 = vadd.f32 %v9308, %v9526
        %v9609 = vadd.f32 %v9357, %v9575
        %v9610 = vadd.f32 %v9311, %v9529
        %v9611 = vadd.f32 %v9360, %v9578
        %v9612 = vadd.f32 %v9313, %v9531
        %v9613 = vadd.f32 %v9362, %v9580
        %v9614 = vld [vmem:[%s11] sm:$0x3]
        %v9616 = vperm.slane %v9614, 0
        %v9617 = vperm.slane %v9614, 1
        %v9620 = vadd.f32 %v9582, %v9616
        %v9621 = vadd.f32 %v9583, %v9617
        %v9622 = vadd.f32 %v9584, %v9616
        %v9623 = vadd.f32 %v9585, %v9617
        %v9624 = vadd.f32 %v9586, %v9616
        %v9625 = vadd.f32 %v9587, %v9617
        %v9626 = vadd.f32 %v9588, %v9616
        %v9627 = vadd.f32 %v9589, %v9617
        %v9628 = vadd.f32 %v9590, %v9616
        %v9629 = vadd.f32 %v9591, %v9617
        %v9630 = vadd.f32 %v9592, %v9616
        %v9631 = vadd.f32 %v9593, %v9617
        %v9632 = vadd.f32 %v9594, %v9616
        %v9633 = vadd.f32 %v9595, %v9617
        %v9634 = vadd.f32 %v9596, %v9616
        %v9635 = vadd.f32 %v9597, %v9617
        %v9636 = vadd.f32 %v9598, %v9616
        %v9637 = vadd.f32 %v9599, %v9617
        %v9638 = vadd.f32 %v9600, %v9616
        %v9639 = vadd.f32 %v9601, %v9617
        %v9640 = vadd.f32 %v9602, %v9616
        %v9641 = vadd.f32 %v9603, %v9617
        %v9642 = vadd.f32 %v9604, %v9616
        %v9643 = vadd.f32 %v9605, %v9617
        %v9644 = vadd.f32 %v9606, %v9616
        %v9645 = vadd.f32 %v9607, %v9617
        %v9646 = vadd.f32 %v9608, %v9616
        %v9647 = vadd.f32 %v9609, %v9617
        %v9648 = vadd.f32 %v9610, %v9616
        %v9649 = vadd.f32 %v9611, %v9617
        %v9650 = vadd.f32 %v9612, %v9616
        %v9651 = vadd.f32 %v9613, %v9617
        %v9652 = vmax.f32 %v9620, 0.0
        %v9653 = vmax.f32 %v9621, 0.0
        %v9654 = vmax.f32 %v9622, 0.0
        %v9655 = vmax.f32 %v9623, 0.0
        %v9656 = vmax.f32 %v9624, 0.0
        %v9657 = vmax.f32 %v9625, 0.0
        %v9658 = vmax.f32 %v9626, 0.0
        %v9659 = vmax.f32 %v9627, 0.0
        %v9660 = vmax.f32 %v9628, 0.0
        %v9661 = vmax.f32 %v9629, 0.0
        %v9662 = vmax.f32 %v9630, 0.0
        %v9663 = vmax.f32 %v9631, 0.0
        %v9664 = vmax.f32 %v9632, 0.0
        %v9665 = vmax.f32 %v9633, 0.0
        %v9666 = vmax.f32 %v9634, 0.0
        %v9667 = vmax.f32 %v9635, 0.0
        %v9668 = vmax.f32 %v9636, 0.0
        %v9669 = vmax.f32 %v9637, 0.0
        %v9670 = vmax.f32 %v9638, 0.0
        %v9671 = vmax.f32 %v9639, 0.0
        %v9672 = vmax.f32 %v9640, 0.0
        %v9673 = vmax.f32 %v9641, 0.0
        %v9674 = vmax.f32 %v9642, 0.0
        %v9675 = vmax.f32 %v9643, 0.0
        %v9676 = vmax.f32 %v9644, 0.0
        %v9677 = vmax.f32 %v9645, 0.0
        %v9678 = vmax.f32 %v9646, 0.0
        %v9679 = vmax.f32 %v9647, 0.0
        %v9680 = vmax.f32 %v9648, 0.0
        %v9681 = vmax.f32 %v9649, 0.0
        %v9682 = vmax.f32 %v9650, 0.0
        %v9683 = vmax.f32 %v9651, 0.0
        %v9684 = vpack.c.bf16 %v9654, %v9652
        %v9685 = vpack.c.bf16 %v9655, %v9653
        %v9686 = vpack.c.bf16 %v9658, %v9656
        %v9687 = vpack.c.bf16 %v9659, %v9657
        %v9688 = vpack.c.bf16 %v9662, %v9660
        %v9689 = vpack.c.bf16 %v9663, %v9661
        %v9690 = vpack.c.bf16 %v9666, %v9664
        %v9691 = vpack.c.bf16 %v9667, %v9665
        %v9692 = vpack.c.bf16 %v9670, %v9668
        %v9693 = vpack.c.bf16 %v9671, %v9669
        %v9694 = vpack.c.bf16 %v9674, %v9672
        %v9695 = vpack.c.bf16 %v9675, %v9673
        %v9696 = vpack.c.bf16 %v9678, %v9676
        %v9697 = vpack.c.bf16 %v9679, %v9677
        %v9698 = vpack.c.bf16 %v9682, %v9680
        %v9699 = vpack.c.bf16 %v9683, %v9681
        %v9700 = vld [vmem:[%s12] sm:$0xf]
        %v9701 = vld [vmem:[%s12 + $0x4] sm:$0xf]
        %v9702 = vld [vmem:[%s12 + $0x8] sm:$0xf]
        %v9703 = vld [vmem:[%s12 + $0xc] sm:$0xf]
        %v9704 = vld [vmem:[%s12 + $0x10] sm:$0xf]
        %v9705 = vld [vmem:[%s12 + $0x14] sm:$0xf]
        %v9706 = vld [vmem:[%s12 + $0x18] sm:$0xf]
        %v9707 = vld [vmem:[%s12 + $0x1c] sm:$0xf]
        %v9708 = vld [vmem:[%s12 + $0x20] sm:$0xf]
        %v9709 = vld [vmem:[%s12 + $0x24] sm:$0xf]
        %v9710 = vld [vmem:[%s12 + $0x28] sm:$0xf]
        %v9711 = vld [vmem:[%s12 + $0x2c] sm:$0xf]
        %v9712 = vld [vmem:[%s12 + $0x30] sm:$0xf]
        %v9713 = vld [vmem:[%s12 + $0x34] sm:$0xf]
        %v9714 = vld [vmem:[%s12 + $0x38] sm:$0xf]
        %v9715 = vld [vmem:[%s12 + $0x3c] sm:$0xf]
        %v9716 = vld [vmem:[%s12 + $0x40] sm:$0xf]
        %v9717 = vld [vmem:[%s12 + $0x44] sm:$0xf]
        %v9718 = vld [vmem:[%s12 + $0x48] sm:$0xf]
        %v9719 = vld [vmem:[%s12 + $0x4c] sm:$0xf]
        %s9720 = scalar_lea.vmem %s12, 80
        %v9721 = vld [vmem:[%s9720] sm:$0xf]
        %v9722 = vld [vmem:[%s9720 + $0x4] sm:$0xf]
        %v9723 = vld [vmem:[%s9720 + $0x8] sm:$0xf]
        %v9724 = vld [vmem:[%s9720 + $0xc] sm:$0xf]
        %v9725 = vld [vmem:[%s9720 + $0x10] sm:$0xf]
        %v9726 = vld [vmem:[%s9720 + $0x14] sm:$0xf]
        %v9727 = vld [vmem:[%s9720 + $0x18] sm:$0xf]
        %v9728 = vld [vmem:[%s9720 + $0x1c] sm:$0xf]
        %v9729 = vld [vmem:[%s9720 + $0x20] sm:$0xf]
        %v9730 = vld [vmem:[%s9720 + $0x24] sm:$0xf]
        %v9731 = vld [vmem:[%s9720 + $0x28] sm:$0xf]
        %v9732 = vld [vmem:[%s9720 + $0x2c] sm:$0xf]
        %v9733 = vld [vmem:[%s9720 + $0x30] sm:$0xf]
        %v9734 = vld [vmem:[%s9720 + $0x34] sm:$0xf]
        %v9735 = vld [vmem:[%s9720 + $0x38] sm:$0xf]
        %v9736 = vld [vmem:[%s9720 + $0x3c] sm:$0xf]
        %v9737 = vld [vmem:[%s9720 + $0x40] sm:$0xf]
        %v9738 = vld [vmem:[%s9720 + $0x44] sm:$0xf]
        %v9739 = vld [vmem:[%s9720 + $0x48] sm:$0xf]
        %v9740 = vld [vmem:[%s9720 + $0x4c] sm:$0xf]
        %v9742 = vshrl.u32 %v9684, 16
        %v9744 = vshll.u32 %v9684, 16
        %v9746 = vrot.slane %v9744, 1
        %v9747 = vor.u32 %v9742, %v9746
        %v9749 = vshll.u32 %v9686, 16
        %v9751 = vrot.slane %v9749, 1
        %v9752 = vsel %vm2200, %v9747, %v9751
        %v9754 = vshrl.u32 %v9685, 16
        %v9756 = vshll.u32 %v9685, 16
        %v9758 = vrot.slane %v9756, 1
        %v9759 = vor.u32 %v9754, %v9758
        %v9761 = vshll.u32 %v9687, 16
        %v9763 = vrot.slane %v9761, 1
        %v9764 = vsel %vm2200, %v9759, %v9763
        %v9765 = vshrl.u32 %v9686, 16
        %v9767 = vor.u32 %v9765, %v9751
        %v9769 = vshll.u32 %v9688, 16
        %v9771 = vrot.slane %v9769, 1
        %v9772 = vsel %vm2200, %v9767, %v9771
        %v9773 = vshrl.u32 %v9687, 16
        %v9775 = vor.u32 %v9773, %v9763
        %v9777 = vshll.u32 %v9689, 16
        %v9779 = vrot.slane %v9777, 1
        %v9780 = vsel %vm2200, %v9775, %v9779
        %v9781 = vshrl.u32 %v9688, 16
        %v9783 = vor.u32 %v9781, %v9771
        %v9785 = vshll.u32 %v9690, 16
        %v9787 = vrot.slane %v9785, 1
        %v9788 = vsel %vm2200, %v9783, %v9787
        %v9789 = vshrl.u32 %v9689, 16
        %v9791 = vor.u32 %v9789, %v9779
        %v9793 = vshll.u32 %v9691, 16
        %v9795 = vrot.slane %v9793, 1
        %v9796 = vsel %vm2200, %v9791, %v9795
        %v9797 = vshrl.u32 %v9690, 16
        %v9799 = vor.u32 %v9797, %v9787
        %v9801 = vshll.u32 %v9692, 16
        %v9803 = vrot.slane %v9801, 1
        %v9804 = vsel %vm2200, %v9799, %v9803
        %v9805 = vshrl.u32 %v9691, 16
        %v9807 = vor.u32 %v9805, %v9795
        %v9809 = vshll.u32 %v9693, 16
        %v9811 = vrot.slane %v9809, 1
        %v9812 = vsel %vm2200, %v9807, %v9811
        %v9813 = vshrl.u32 %v9692, 16
        %v9815 = vor.u32 %v9813, %v9803
        %v9817 = vshll.u32 %v9694, 16
        %v9819 = vrot.slane %v9817, 1
        %v9820 = vsel %vm2200, %v9815, %v9819
        %v9821 = vshrl.u32 %v9693, 16
        %v9823 = vor.u32 %v9821, %v9811
        %v9825 = vshll.u32 %v9695, 16
        %v9827 = vrot.slane %v9825, 1
        %v9828 = vsel %vm2200, %v9823, %v9827
        %v9829 = vshrl.u32 %v9694, 16
        %v9831 = vor.u32 %v9829, %v9819
        %v9833 = vshll.u32 %v9696, 16
        %v9835 = vrot.slane %v9833, 1
        %v9836 = vsel %vm2200, %v9831, %v9835
        %v9837 = vshrl.u32 %v9695, 16
        %v9839 = vor.u32 %v9837, %v9827
        %v9841 = vshll.u32 %v9697, 16
        %v9843 = vrot.slane %v9841, 1
        %v9844 = vsel %vm2200, %v9839, %v9843
        %v9845 = vshrl.u32 %v9696, 16
        %v9847 = vor.u32 %v9845, %v9835
        %v9849 = vshll.u32 %v9698, 16
        %v9851 = vrot.slane %v9849, 1
        %v9852 = vsel %vm2200, %v9847, %v9851
        %v9853 = vshrl.u32 %v9697, 16
        %v9855 = vor.u32 %v9853, %v9843
        %v9857 = vshll.u32 %v9699, 16
        %v9859 = vrot.slane %v9857, 1
        %v9860 = vsel %vm2200, %v9855, %v9859
        %v9861 = vshrl.u32 %v9698, 16
        %v9863 = vor.u32 %v9861, %v9851
        %v9864 = vshrl.u32 %v9699, 16
        %v9866 = vor.u32 %v9864, %v9859
        %v9895 = vunpack.c.l.b16 %v9721
        %v9896 = vunpack.c.l.b16 %v9722
        %v9897 = vunpack.c.l.b16 %v9723
        %v9898 = vunpack.c.l.b16 %v9724
        %v9899 = vunpack.c.l.b16 %v9725
        %v9900 = vunpack.c.l.b16 %v9726
        %v9901 = vunpack.c.l.b16 %v9727
        %v9902 = vunpack.c.l.b16 %v9728
        %v9903 = vunpack.c.l.b16 %v9729
        %v9904 = vunpack.c.l.b16 %v9730
        %v9905 = vunpack.c.l.b16 %v9731
        %v9906 = vunpack.c.l.b16 %v9732
        %v9907 = vunpack.c.l.b16 %v9733
        %v9908 = vunpack.c.l.b16 %v9734
        %v9909 = vunpack.c.l.b16 %v9735
        %v9910 = vunpack.c.l.b16 %v9736
        %v9911 = vunpack.c.l.b16 %v9737
        %v9912 = vunpack.c.l.b16 %v9738
        %v9913 = vunpack.c.l.b16 %v9739
        %v9914 = vunpack.c.l.b16 %v9740
        %v9915 = vpack.c.b16 %v9896, %v9895
        %v9916 = vpack.c.b16 %v9898, %v9897
        %v9917 = vpack.c.b16 %v9900, %v9899
        %v9918 = vpack.c.b16 %v9902, %v9901
        %v9919 = vpack.c.b16 %v9904, %v9903
        %v9920 = vpack.c.b16 %v9906, %v9905
        %v9921 = vpack.c.b16 %v9908, %v9907
        %v9922 = vpack.c.b16 %v9910, %v9909
        %v9923 = vpack.c.b16 %v9912, %v9911
        %v9924 = vpack.c.b16 %v9914, %v9913
        %vm9935 = vcmask 261120
        %v9937 = vsel %vm9935, %v9764, 0
        %v9940 = vsel %vm9935, %v9780, 0
        %v9943 = vsel %vm9935, %v9796, 0
        %v9946 = vsel %vm9935, %v9812, 0
        %v9949 = vsel %vm9935, %v9828, 0
        %v9952 = vsel %vm9935, %v9844, 0
        %v9955 = vsel %vm9935, %v9860, 0
        %v9958 = vsel %vm9935, %v9866, 0
        %9960 = vmatpush.bf16.msra.mxu0 %v9922
        %9961 = vmatpush.bf16.msra.mxu0 %v9921
        %9962 = vmatpush.bf16.msra.mxu0 %v9920
        %9963 = vmatpush.bf16.msra.mxu0 %v9919
        %9964 = vmatpush.bf16.msra.mxu0 %v9918
        %9965 = vmatpush.bf16.msra.mxu0 %v9917
        %9966 = vmatpush.bf16.msra.mxu0 %v9916
        %9967 = vmatpush.bf16.msra.mxu0 %v9915
        %9968 = vmatmul.bf16.gmra.mxu0 %v9752
        %v9969 = vpop.f32.mrf.mxu0
        %v9970 = vadd.f32 0.0, %v9969
        %v9971 = vpop.f32.mrf.mxu0
        %v9972 = vadd.f32 0.0, %v9971
        %9973 = vmatmul.bf16.gmra.mxu0 %v9772
        %v9974 = vpop.f32.mrf.mxu0
        %v9975 = vadd.f32 0.0, %v9974
        %v9976 = vpop.f32.mrf.mxu0
        %v9977 = vadd.f32 0.0, %v9976
        %9978 = vmatmul.bf16.gmra.mxu0 %v9788
        %v9979 = vpop.f32.mrf.mxu0
        %v9980 = vadd.f32 0.0, %v9979
        %v9981 = vpop.f32.mrf.mxu0
        %v9982 = vadd.f32 0.0, %v9981
        %9983 = vmatmul.bf16.gmra.mxu0 %v9804
        %v9984 = vpop.f32.mrf.mxu0
        %v9985 = vadd.f32 0.0, %v9984
        %v9986 = vpop.f32.mrf.mxu0
        %v9987 = vadd.f32 0.0, %v9986
        %9988 = vmatmul.bf16.gmra.mxu0 %v9820
        %v9989 = vpop.f32.mrf.mxu0
        %v9990 = vadd.f32 0.0, %v9989
        %v9991 = vpop.f32.mrf.mxu0
        %v9992 = vadd.f32 0.0, %v9991
        %9993 = vmatmul.bf16.gmra.mxu0 %v9836
        %v9994 = vpop.f32.mrf.mxu0
        %v9995 = vadd.f32 0.0, %v9994
        %v9996 = vpop.f32.mrf.mxu0
        %v9997 = vadd.f32 0.0, %v9996
        %9998 = vmatmul.bf16.gmra.mxu0 %v9852
        %v9999 = vpop.f32.mrf.mxu0
        %v10000 = vadd.f32 0.0, %v9999
        %v10001 = vpop.f32.mrf.mxu0
        %v10002 = vadd.f32 0.0, %v10001
        %10003 = vmatmul.bf16.gmra.mxu0 %v9863
        %v10004 = vpop.f32.mrf.mxu0
        %v10005 = vadd.f32 0.0, %v10004
        %v10006 = vpop.f32.mrf.mxu0
        %v10007 = vadd.f32 0.0, %v10006
        %10008 = vdwg.mxu0
        %10009 = vmatpush.bf16.msra.mxu0 0
        %10010 = vmatpush.bf16.msra.mxu0 0
        %10011 = vmatpush.bf16.msra.mxu0 0
        %10012 = vmatpush.bf16.msra.mxu0 0
        %10013 = vmatpush.bf16.msra.mxu0 0
        %10014 = vmatpush.bf16.msra.mxu0 0
        %10015 = vmatpush.bf16.msra.mxu0 %v9924
        %10016 = vmatpush.bf16.msra.mxu0 %v9923
        %10017 = vmatmul.bf16.gmra.mxu0 %v9937
        %v10018 = vpop.f32.mrf.mxu0
        %v10019 = vadd.f32 %v9970, %v10018
        %v10020 = vpop.f32.mrf.mxu0
        %v10021 = vadd.f32 %v9972, %v10020
        %10022 = vmatmul.bf16.gmra.mxu0 %v9940
        %v10023 = vpop.f32.mrf.mxu0
        %v10024 = vadd.f32 %v9975, %v10023
        %v10025 = vpop.f32.mrf.mxu0
        %v10026 = vadd.f32 %v9977, %v10025
        %10027 = vmatmul.bf16.gmra.mxu0 %v9943
        %v10028 = vpop.f32.mrf.mxu0
        %v10029 = vadd.f32 %v9980, %v10028
        %v10030 = vpop.f32.mrf.mxu0
        %v10031 = vadd.f32 %v9982, %v10030
        %10032 = vmatmul.bf16.gmra.mxu0 %v9946
        %v10033 = vpop.f32.mrf.mxu0
        %v10034 = vadd.f32 %v9985, %v10033
        %v10035 = vpop.f32.mrf.mxu0
        %v10036 = vadd.f32 %v9987, %v10035
        %10037 = vmatmul.bf16.gmra.mxu0 %v9949
        %v10038 = vpop.f32.mrf.mxu0
        %v10039 = vadd.f32 %v9990, %v10038
        %v10040 = vpop.f32.mrf.mxu0
        %v10041 = vadd.f32 %v9992, %v10040
        %10042 = vmatmul.bf16.gmra.mxu0 %v9952
        %v10043 = vpop.f32.mrf.mxu0
        %v10044 = vadd.f32 %v9995, %v10043
        %v10045 = vpop.f32.mrf.mxu0
        %v10046 = vadd.f32 %v9997, %v10045
        %10047 = vmatmul.bf16.gmra.mxu0 %v9955
        %v10048 = vpop.f32.mrf.mxu0
        %v10049 = vadd.f32 %v10000, %v10048
        %v10050 = vpop.f32.mrf.mxu0
        %v10051 = vadd.f32 %v10002, %v10050
        %10052 = vmatmul.bf16.gmra.mxu0 %v9958
        %v10053 = vpop.f32.mrf.mxu0
        %v10054 = vadd.f32 %v10005, %v10053
        %v10055 = vpop.f32.mrf.mxu0
        %v10056 = vadd.f32 %v10007, %v10055
        %10057 = vdwg.mxu0
        %v10078 = vunpack.c.l.b16 %v9700
        %v10079 = vunpack.c.l.b16 %v9701
        %v10080 = vunpack.c.l.b16 %v9702
        %v10081 = vunpack.c.l.b16 %v9703
        %v10082 = vunpack.c.l.b16 %v9704
        %v10083 = vunpack.c.l.b16 %v9705
        %v10084 = vunpack.c.l.b16 %v9706
        %v10085 = vunpack.c.l.b16 %v9707
        %v10086 = vunpack.c.l.b16 %v9708
        %v10087 = vunpack.c.l.b16 %v9709
        %v10088 = vunpack.c.l.b16 %v9710
        %v10089 = vunpack.c.l.b16 %v9711
        %v10090 = vunpack.c.l.b16 %v9712
        %v10091 = vunpack.c.l.b16 %v9713
        %v10092 = vunpack.c.l.b16 %v9714
        %v10093 = vunpack.c.l.b16 %v9715
        %v10094 = vunpack.c.l.b16 %v9716
        %v10095 = vunpack.c.l.b16 %v9717
        %v10096 = vunpack.c.l.b16 %v9718
        %v10097 = vunpack.c.l.b16 %v9719
        %v10098 = vpack.c.b16 %v10079, %v10078
        %v10099 = vpack.c.b16 %v10081, %v10080
        %v10100 = vpack.c.b16 %v10083, %v10082
        %v10101 = vpack.c.b16 %v10085, %v10084
        %v10102 = vpack.c.b16 %v10087, %v10086
        %v10103 = vpack.c.b16 %v10089, %v10088
        %v10104 = vpack.c.b16 %v10091, %v10090
        %v10105 = vpack.c.b16 %v10093, %v10092
        %v10106 = vpack.c.b16 %v10095, %v10094
        %v10107 = vpack.c.b16 %v10097, %v10096
        %v10118 = vsel %vm9935, %v9685, 0
        %v10120 = vsel %vm9935, %v9687, 0
        %v10122 = vsel %vm9935, %v9689, 0
        %v10124 = vsel %vm9935, %v9691, 0
        %v10126 = vsel %vm9935, %v9693, 0
        %v10128 = vsel %vm9935, %v9695, 0
        %v10130 = vsel %vm9935, %v9697, 0
        %v10132 = vsel %vm9935, %v9699, 0
        %10134 = vmatpush.bf16.msra.mxu0 %v10105
        %10135 = vmatpush.bf16.msra.mxu0 %v10104
        %10136 = vmatpush.bf16.msra.mxu0 %v10103
        %10137 = vmatpush.bf16.msra.mxu0 %v10102
        %10138 = vmatpush.bf16.msra.mxu0 %v10101
        %10139 = vmatpush.bf16.msra.mxu0 %v10100
        %10140 = vmatpush.bf16.msra.mxu0 %v10099
        %10141 = vmatpush.bf16.msra.mxu0 %v10098
        %10142 = vmatmul.bf16.gmra.mxu0 %v9684
        %v10143 = vpop.f32.mrf.mxu0
        %v10144 = vadd.f32 %v10019, %v10143
        %v10145 = vpop.f32.mrf.mxu0
        %v10146 = vadd.f32 %v10021, %v10145
        %10147 = vmatmul.bf16.gmra.mxu0 %v9686
        %v10148 = vpop.f32.mrf.mxu0
        %v10149 = vadd.f32 %v10024, %v10148
        %v10150 = vpop.f32.mrf.mxu0
        %v10151 = vadd.f32 %v10026, %v10150
        %10152 = vmatmul.bf16.gmra.mxu0 %v9688
        %v10153 = vpop.f32.mrf.mxu0
        %v10154 = vadd.f32 %v10029, %v10153
        %v10155 = vpop.f32.mrf.mxu0
        %v10156 = vadd.f32 %v10031, %v10155
        %10157 = vmatmul.bf16.gmra.mxu0 %v9690
        %v10158 = vpop.f32.mrf.mxu0
        %v10159 = vadd.f32 %v10034, %v10158
        %v10160 = vpop.f32.mrf.mxu0
        %v10161 = vadd.f32 %v10036, %v10160
        %10162 = vmatmul.bf16.gmra.mxu0 %v9692
        %v10163 = vpop.f32.mrf.mxu0
        %v10164 = vadd.f32 %v10039, %v10163
        %v10165 = vpop.f32.mrf.mxu0
        %v10166 = vadd.f32 %v10041, %v10165
        %10167 = vmatmul.bf16.gmra.mxu0 %v9694
        %v10168 = vpop.f32.mrf.mxu0
        %v10169 = vadd.f32 %v10044, %v10168
        %v10170 = vpop.f32.mrf.mxu0
        %v10171 = vadd.f32 %v10046, %v10170
        %10172 = vmatmul.bf16.gmra.mxu0 %v9696
        %v10173 = vpop.f32.mrf.mxu0
        %v10174 = vadd.f32 %v10049, %v10173
        %v10175 = vpop.f32.mrf.mxu0
        %v10176 = vadd.f32 %v10051, %v10175
        %10177 = vmatmul.bf16.gmra.mxu0 %v9698
        %v10178 = vpop.f32.mrf.mxu0
        %v10179 = vadd.f32 %v10054, %v10178
        %v10180 = vpop.f32.mrf.mxu0
        %v10181 = vadd.f32 %v10056, %v10180
        %10182 = vdwg.mxu0
        %10183 = vmatpush.bf16.msra.mxu0 0
        %10184 = vmatpush.bf16.msra.mxu0 0
        %10185 = vmatpush.bf16.msra.mxu0 0
        %10186 = vmatpush.bf16.msra.mxu0 0
        %10187 = vmatpush.bf16.msra.mxu0 0
        %10188 = vmatpush.bf16.msra.mxu0 0
        %10189 = vmatpush.bf16.msra.mxu0 %v10107
        %10190 = vmatpush.bf16.msra.mxu0 %v10106
        %10191 = vmatmul.bf16.gmra.mxu0 %v10118
        %v10192 = vpop.f32.mrf.mxu0
        %v10193 = vadd.f32 %v10144, %v10192
        %v10194 = vpop.f32.mrf.mxu0
        %v10195 = vadd.f32 %v10146, %v10194
        %10196 = vmatmul.bf16.gmra.mxu0 %v10120
        %v10197 = vpop.f32.mrf.mxu0
        %v10198 = vadd.f32 %v10149, %v10197
        %v10199 = vpop.f32.mrf.mxu0
        %v10200 = vadd.f32 %v10151, %v10199
        %10201 = vmatmul.bf16.gmra.mxu0 %v10122
        %v10202 = vpop.f32.mrf.mxu0
        %v10203 = vadd.f32 %v10154, %v10202
        %v10204 = vpop.f32.mrf.mxu0
        %v10205 = vadd.f32 %v10156, %v10204
        %10206 = vmatmul.bf16.gmra.mxu0 %v10124
        %v10207 = vpop.f32.mrf.mxu0
        %v10208 = vadd.f32 %v10159, %v10207
        %v10209 = vpop.f32.mrf.mxu0
        %v10210 = vadd.f32 %v10161, %v10209
        %10211 = vmatmul.bf16.gmra.mxu0 %v10126
        %v10212 = vpop.f32.mrf.mxu0
        %v10213 = vadd.f32 %v10164, %v10212
        %v10214 = vpop.f32.mrf.mxu0
        %v10215 = vadd.f32 %v10166, %v10214
        %10216 = vmatmul.bf16.gmra.mxu0 %v10128
        %v10217 = vpop.f32.mrf.mxu0
        %v10218 = vadd.f32 %v10169, %v10217
        %v10219 = vpop.f32.mrf.mxu0
        %v10220 = vadd.f32 %v10171, %v10219
        %10221 = vmatmul.bf16.gmra.mxu0 %v10130
        %v10222 = vpop.f32.mrf.mxu0
        %v10223 = vadd.f32 %v10174, %v10222
        %v10224 = vpop.f32.mrf.mxu0
        %v10225 = vadd.f32 %v10176, %v10224
        %10226 = vmatmul.bf16.gmra.mxu0 %v10132
        %v10227 = vpop.f32.mrf.mxu0
        %v10228 = vadd.f32 %v10179, %v10227
        %v10229 = vpop.f32.mrf.mxu0
        %v10230 = vadd.f32 %v10181, %v10229
        %10231 = vdwg.mxu0
        %s10232 = scalar_lea.vmem %s12, 160
        %v10233 = vld [vmem:[%s10232] sm:$0xf]
        %v10234 = vld [vmem:[%s10232 + $0x4] sm:$0xf]
        %v10235 = vld [vmem:[%s10232 + $0x8] sm:$0xf]
        %v10236 = vld [vmem:[%s10232 + $0xc] sm:$0xf]
        %v10237 = vld [vmem:[%s10232 + $0x10] sm:$0xf]
        %v10238 = vld [vmem:[%s10232 + $0x14] sm:$0xf]
        %v10239 = vld [vmem:[%s10232 + $0x18] sm:$0xf]
        %v10240 = vld [vmem:[%s10232 + $0x1c] sm:$0xf]
        %v10241 = vld [vmem:[%s10232 + $0x20] sm:$0xf]
        %v10242 = vld [vmem:[%s10232 + $0x24] sm:$0xf]
        %v10243 = vld [vmem:[%s10232 + $0x28] sm:$0xf]
        %v10244 = vld [vmem:[%s10232 + $0x2c] sm:$0xf]
        %v10245 = vld [vmem:[%s10232 + $0x30] sm:$0xf]
        %v10246 = vld [vmem:[%s10232 + $0x34] sm:$0xf]
        %v10247 = vld [vmem:[%s10232 + $0x38] sm:$0xf]
        %v10248 = vld [vmem:[%s10232 + $0x3c] sm:$0xf]
        %v10249 = vld [vmem:[%s10232 + $0x40] sm:$0xf]
        %v10250 = vld [vmem:[%s10232 + $0x44] sm:$0xf]
        %v10251 = vld [vmem:[%s10232 + $0x48] sm:$0xf]
        %v10252 = vld [vmem:[%s10232 + $0x4c] sm:$0xf]
        %v10269 = vrot.slane %v9684, 1
        %v10270 = vrot.slane %v9686, 1
        %v10271 = vsel %vm4634, %v10269, %v10270
        %v10272 = vrot.slane %v9685, 1
        %v10273 = vrot.slane %v9687, 1
        %v10274 = vsel %vm4634, %v10272, %v10273
        %v10275 = vrot.slane %v9688, 1
        %v10276 = vsel %vm4634, %v10270, %v10275
        %v10277 = vrot.slane %v9689, 1
        %v10278 = vsel %vm4634, %v10273, %v10277
        %v10279 = vrot.slane %v9690, 1
        %v10280 = vsel %vm4634, %v10275, %v10279
        %v10281 = vrot.slane %v9691, 1
        %v10282 = vsel %vm4634, %v10277, %v10281
        %v10283 = vrot.slane %v9692, 1
        %v10284 = vsel %vm4634, %v10279, %v10283
        %v10285 = vrot.slane %v9693, 1
        %v10286 = vsel %vm4634, %v10281, %v10285
        %v10287 = vrot.slane %v9694, 1
        %v10288 = vsel %vm4634, %v10283, %v10287
        %v10289 = vrot.slane %v9695, 1
        %v10290 = vsel %vm4634, %v10285, %v10289
        %v10291 = vrot.slane %v9696, 1
        %v10292 = vsel %vm4634, %v10287, %v10291
        %v10293 = vrot.slane %v9697, 1
        %v10294 = vsel %vm4634, %v10289, %v10293
        %v10295 = vrot.slane %v9698, 1
        %v10296 = vsel %vm4634, %v10291, %v10295
        %v10297 = vrot.slane %v9699, 1
        %v10298 = vsel %vm4634, %v10293, %v10297
        %v10327 = vunpack.c.l.b16 %v10233
        %v10328 = vunpack.c.l.b16 %v10234
        %v10329 = vunpack.c.l.b16 %v10235
        %v10330 = vunpack.c.l.b16 %v10236
        %v10331 = vunpack.c.l.b16 %v10237
        %v10332 = vunpack.c.l.b16 %v10238
        %v10333 = vunpack.c.l.b16 %v10239
        %v10334 = vunpack.c.l.b16 %v10240
        %v10335 = vunpack.c.l.b16 %v10241
        %v10336 = vunpack.c.l.b16 %v10242
        %v10337 = vunpack.c.l.b16 %v10243
        %v10338 = vunpack.c.l.b16 %v10244
        %v10339 = vunpack.c.l.b16 %v10245
        %v10340 = vunpack.c.l.b16 %v10246
        %v10341 = vunpack.c.l.b16 %v10247
        %v10342 = vunpack.c.l.b16 %v10248
        %v10343 = vunpack.c.l.b16 %v10249
        %v10344 = vunpack.c.l.b16 %v10250
        %v10345 = vunpack.c.l.b16 %v10251
        %v10346 = vunpack.c.l.b16 %v10252
        %v10347 = vpack.c.b16 %v10328, %v10327
        %v10348 = vpack.c.b16 %v10330, %v10329
        %v10349 = vpack.c.b16 %v10332, %v10331
        %v10350 = vpack.c.b16 %v10334, %v10333
        %v10351 = vpack.c.b16 %v10336, %v10335
        %v10352 = vpack.c.b16 %v10338, %v10337
        %v10353 = vpack.c.b16 %v10340, %v10339
        %v10354 = vpack.c.b16 %v10342, %v10341
        %v10355 = vpack.c.b16 %v10344, %v10343
        %v10356 = vpack.c.b16 %v10346, %v10345
        %v10368 = vsel %vm9935, %v10274, 0
        %v10371 = vsel %vm9935, %v10278, 0
        %v10374 = vsel %vm9935, %v10282, 0
        %v10377 = vsel %vm9935, %v10286, 0
        %v10380 = vsel %vm9935, %v10290, 0
        %v10383 = vsel %vm9935, %v10294, 0
        %v10386 = vsel %vm9935, %v10298, 0
        %v10389 = vsel %vm9935, %v10297, 0
        %10391 = vmatpush.bf16.msra.mxu0 %v10354
        %10392 = vmatpush.bf16.msra.mxu0 %v10353
        %10393 = vmatpush.bf16.msra.mxu0 %v10352
        %10394 = vmatpush.bf16.msra.mxu0 %v10351
        %10395 = vmatpush.bf16.msra.mxu0 %v10350
        %10396 = vmatpush.bf16.msra.mxu0 %v10349
        %10397 = vmatpush.bf16.msra.mxu0 %v10348
        %10398 = vmatpush.bf16.msra.mxu0 %v10347
        %10399 = vmatmul.bf16.gmra.mxu0 %v10271
        %v10400 = vpop.f32.mrf.mxu0
        %v10401 = vadd.f32 0.0, %v10400
        %v10402 = vpop.f32.mrf.mxu0
        %v10403 = vadd.f32 0.0, %v10402
        %10404 = vmatmul.bf16.gmra.mxu0 %v10276
        %v10405 = vpop.f32.mrf.mxu0
        %v10406 = vadd.f32 0.0, %v10405
        %v10407 = vpop.f32.mrf.mxu0
        %v10408 = vadd.f32 0.0, %v10407
        %10409 = vmatmul.bf16.gmra.mxu0 %v10280
        %v10410 = vpop.f32.mrf.mxu0
        %v10411 = vadd.f32 0.0, %v10410
        %v10412 = vpop.f32.mrf.mxu0
        %v10413 = vadd.f32 0.0, %v10412
        %10414 = vmatmul.bf16.gmra.mxu0 %v10284
        %v10415 = vpop.f32.mrf.mxu0
        %v10416 = vadd.f32 0.0, %v10415
        %v10417 = vpop.f32.mrf.mxu0
        %v10418 = vadd.f32 0.0, %v10417
        %10419 = vmatmul.bf16.gmra.mxu0 %v10288
        %v10420 = vpop.f32.mrf.mxu0
        %v10421 = vadd.f32 0.0, %v10420
        %v10422 = vpop.f32.mrf.mxu0
        %v10423 = vadd.f32 0.0, %v10422
        %10424 = vmatmul.bf16.gmra.mxu0 %v10292
        %v10425 = vpop.f32.mrf.mxu0
        %v10426 = vadd.f32 0.0, %v10425
        %v10427 = vpop.f32.mrf.mxu0
        %v10428 = vadd.f32 0.0, %v10427
        %10429 = vmatmul.bf16.gmra.mxu0 %v10296
        %v10430 = vpop.f32.mrf.mxu0
        %v10431 = vadd.f32 0.0, %v10430
        %v10432 = vpop.f32.mrf.mxu0
        %v10433 = vadd.f32 0.0, %v10432
        %10434 = vmatmul.bf16.gmra.mxu0 %v10295
        %v10435 = vpop.f32.mrf.mxu0
        %v10436 = vadd.f32 0.0, %v10435
        %v10437 = vpop.f32.mrf.mxu0
        %v10438 = vadd.f32 0.0, %v10437
        %10439 = vdwg.mxu0
        %10440 = vmatpush.bf16.msra.mxu0 0
        %10441 = vmatpush.bf16.msra.mxu0 0
        %10442 = vmatpush.bf16.msra.mxu0 0
        %10443 = vmatpush.bf16.msra.mxu0 0
        %10444 = vmatpush.bf16.msra.mxu0 0
        %10445 = vmatpush.bf16.msra.mxu0 0
        %10446 = vmatpush.bf16.msra.mxu0 %v10356
        %10447 = vmatpush.bf16.msra.mxu0 %v10355
        %10448 = vmatmul.bf16.gmra.mxu0 %v10368
        %v10449 = vpop.f32.mrf.mxu0
        %v10450 = vadd.f32 %v10401, %v10449
        %v10451 = vpop.f32.mrf.mxu0
        %v10452 = vadd.f32 %v10403, %v10451
        %10453 = vmatmul.bf16.gmra.mxu0 %v10371
        %v10454 = vpop.f32.mrf.mxu0
        %v10455 = vadd.f32 %v10406, %v10454
        %v10456 = vpop.f32.mrf.mxu0
        %v10457 = vadd.f32 %v10408, %v10456
        %10458 = vmatmul.bf16.gmra.mxu0 %v10374
        %v10459 = vpop.f32.mrf.mxu0
        %v10460 = vadd.f32 %v10411, %v10459
        %v10461 = vpop.f32.mrf.mxu0
        %v10462 = vadd.f32 %v10413, %v10461
        %10463 = vmatmul.bf16.gmra.mxu0 %v10377
        %v10464 = vpop.f32.mrf.mxu0
        %v10465 = vadd.f32 %v10416, %v10464
        %v10466 = vpop.f32.mrf.mxu0
        %v10467 = vadd.f32 %v10418, %v10466
        %10468 = vmatmul.bf16.gmra.mxu0 %v10380
        %v10469 = vpop.f32.mrf.mxu0
        %v10470 = vadd.f32 %v10421, %v10469
        %v10471 = vpop.f32.mrf.mxu0
        %v10472 = vadd.f32 %v10423, %v10471
        %10473 = vmatmul.bf16.gmra.mxu0 %v10383
        %v10474 = vpop.f32.mrf.mxu0
        %v10475 = vadd.f32 %v10426, %v10474
        %v10476 = vpop.f32.mrf.mxu0
        %v10477 = vadd.f32 %v10428, %v10476
        %10478 = vmatmul.bf16.gmra.mxu0 %v10386
        %v10479 = vpop.f32.mrf.mxu0
        %v10480 = vadd.f32 %v10431, %v10479
        %v10481 = vpop.f32.mrf.mxu0
        %v10482 = vadd.f32 %v10433, %v10481
        %10483 = vmatmul.bf16.gmra.mxu0 %v10389
        %v10484 = vpop.f32.mrf.mxu0
        %v10485 = vadd.f32 %v10436, %v10484
        %v10486 = vpop.f32.mrf.mxu0
        %v10487 = vadd.f32 %v10438, %v10486
        %10488 = vdwg.mxu0
        %v10489 = vadd.f32 %v10193, %v10450
        %v10490 = vadd.f32 %v10195, %v10452
        %v10491 = vadd.f32 %v10198, %v10455
        %v10492 = vadd.f32 %v10200, %v10457
        %v10493 = vadd.f32 %v10203, %v10460
        %v10494 = vadd.f32 %v10205, %v10462
        %v10495 = vadd.f32 %v10208, %v10465
        %v10496 = vadd.f32 %v10210, %v10467
        %v10497 = vadd.f32 %v10213, %v10470
        %v10498 = vadd.f32 %v10215, %v10472
        %v10499 = vadd.f32 %v10218, %v10475
        %v10500 = vadd.f32 %v10220, %v10477
        %v10501 = vadd.f32 %v10223, %v10480
        %v10502 = vadd.f32 %v10225, %v10482
        %v10503 = vadd.f32 %v10228, %v10485
        %v10504 = vadd.f32 %v10230, %v10487
        %v10505 = vld [vmem:[%s13] sm:$0x1]
        %v10507 = vperm.slane %v10505, 0
        %v10509 = vadd.f32 %v10489, %v10507
        %v10510 = vadd.f32 %v10490, %v10507
        %v10511 = vadd.f32 %v10491, %v10507
        %v10512 = vadd.f32 %v10492, %v10507
        %v10513 = vadd.f32 %v10493, %v10507
        %v10514 = vadd.f32 %v10494, %v10507
        %v10515 = vadd.f32 %v10495, %v10507
        %v10516 = vadd.f32 %v10496, %v10507
        %v10517 = vadd.f32 %v10497, %v10507
        %v10518 = vadd.f32 %v10498, %v10507
        %v10519 = vadd.f32 %v10499, %v10507
        %v10520 = vadd.f32 %v10500, %v10507
        %v10521 = vadd.f32 %v10501, %v10507
        %v10522 = vadd.f32 %v10502, %v10507
        %v10523 = vadd.f32 %v10503, %v10507
        %v10524 = vadd.f32 %v10504, %v10507
        %v10525 = vmax.f32 %v10509, 0.0
        %v10526 = vmax.f32 %v10510, 0.0
        %v10527 = vmax.f32 %v10511, 0.0
        %v10528 = vmax.f32 %v10512, 0.0
        %v10529 = vmax.f32 %v10513, 0.0
        %v10530 = vmax.f32 %v10514, 0.0
        %v10531 = vmax.f32 %v10515, 0.0
        %v10532 = vmax.f32 %v10516, 0.0
        %v10533 = vmax.f32 %v10517, 0.0
        %v10534 = vmax.f32 %v10518, 0.0
        %v10535 = vmax.f32 %v10519, 0.0
        %v10536 = vmax.f32 %v10520, 0.0
        %v10537 = vmax.f32 %v10521, 0.0
        %v10538 = vmax.f32 %v10522, 0.0
        %v10539 = vmax.f32 %v10523, 0.0
        %v10540 = vmax.f32 %v10524, 0.0
        %v10541 = vld [vmem:[%s14] sm:$0xf]
        %v10542 = vpack.c.bf16 %v10526, %v10525
        %v10543 = vpack.c.bf16 %v10528, %v10527
        %v10544 = vpack.c.bf16 %v10530, %v10529
        %v10545 = vpack.c.bf16 %v10532, %v10531
        %v10546 = vpack.c.bf16 %v10534, %v10533
        %v10547 = vpack.c.bf16 %v10536, %v10535
        %v10548 = vpack.c.bf16 %v10538, %v10537
        %v10549 = vpack.c.bf16 %v10540, %v10539
        %vm10550 = vcmask 998400
        %v10552 = vsel %vm10550, %v10541, 0
        %vm10554 = vcmask 1044480
        %v10556 = vsel %vm10554, %v10549, 0
        %10558 = vmatpush.bf16.msra.mxu0 %v10556
        %10559 = vmatpush.bf16.msra.mxu0 %v10548
        %10560 = vmatpush.bf16.msra.mxu0 %v10547
        %10561 = vmatpush.bf16.msra.mxu0 %v10546
        %10562 = vmatpush.bf16.msra.mxu0 %v10545
        %10563 = vmatpush.bf16.msra.mxu0 %v10544
        %10564 = vmatpush.bf16.msra.mxu0 %v10543
        %10565 = vmatpush.bf16.msra.mxu0 %v10542
        %10566 = vmatmul.bf16.gmra.mxu0 %v10552
        %v10567 = vpop.f32.mrf.mxu0
        %v10568 = vadd.f32 0.0, %v10567
        %v10569 = vpop.f32.mrf.mxu0
        %10570 = vdwg.mxu0
        %v10571 = vpack.c.bf16 %v10568, %v10568
        %v10572 = vld [vmem:[%s15] sm:$0xf]
        %v10573 = vld [vmem:[%s15 + $0x4] sm:$0xf]
        %v10574 = vld [vmem:[%s15 + $0x8] sm:$0xf]
        %v10575 = vld [vmem:[%s15 + $0xc] sm:$0xf]
        %v10576 = vld [vmem:[%s15 + $0x10] sm:$0xf]
        %v10577 = vld [vmem:[%s15 + $0x14] sm:$0xf]
        %v10578 = vld [vmem:[%s15 + $0x18] sm:$0xf]
        %v10579 = vld [vmem:[%s15 + $0x1c] sm:$0xf]
        %v10580 = vld [vmem:[%s15 + $0x20] sm:$0xf]
        %v10581 = vld [vmem:[%s15 + $0x24] sm:$0xf]
        %v10582 = vld [vmem:[%s15 + $0x28] sm:$0xf]
        %v10583 = vld [vmem:[%s15 + $0x2c] sm:$0xf]
        %v10584 = vld [vmem:[%s15 + $0x30] sm:$0xf]
        %v10585 = vld [vmem:[%s15 + $0x34] sm:$0xf]
        %v10586 = vld [vmem:[%s15 + $0x38] sm:$0xf]
        %v10587 = vld [vmem:[%s15 + $0x3c] sm:$0xf]
        %v10604 = vunpack.c.l.b16 %v10572
        %v10605 = vunpack.c.l.b16 %v10573
        %v10606 = vunpack.c.l.b16 %v10574
        %v10607 = vunpack.c.l.b16 %v10575
        %v10608 = vunpack.c.l.b16 %v10576
        %v10609 = vunpack.c.l.b16 %v10577
        %v10610 = vunpack.c.l.b16 %v10578
        %v10611 = vunpack.c.l.b16 %v10579
        %v10612 = vunpack.c.l.b16 %v10580
        %v10613 = vunpack.c.l.b16 %v10581
        %v10614 = vunpack.c.l.b16 %v10582
        %v10615 = vunpack.c.l.b16 %v10583
        %v10616 = vunpack.c.l.b16 %v10584
        %v10617 = vunpack.c.l.b16 %v10585
        %v10618 = vunpack.c.l.b16 %v10586
        %v10619 = vunpack.c.l.b16 %v10587
        %v10620 = vpack.c.b16 %v10605, %v10604
        %v10621 = vpack.c.b16 %v10607, %v10606
        %v10622 = vpack.c.b16 %v10609, %v10608
        %v10623 = vpack.c.b16 %v10611, %v10610
        %v10624 = vpack.c.b16 %v10613, %v10612
        %v10625 = vpack.c.b16 %v10615, %v10614
        %v10626 = vpack.c.b16 %v10617, %v10616
        %v10627 = vpack.c.b16 %v10619, %v10618
        %10636 = vmatpush.bf16.msra.mxu0 %v10627
        %10637 = vmatpush.bf16.msra.mxu0 %v10626
        %10638 = vmatpush.bf16.msra.mxu0 %v10625
        %10639 = vmatpush.bf16.msra.mxu0 %v10624
        %10640 = vmatpush.bf16.msra.mxu0 %v10623
        %10641 = vmatpush.bf16.msra.mxu0 %v10622
        %10642 = vmatpush.bf16.msra.mxu0 %v10621
        %10643 = vmatpush.bf16.msra.mxu0 %v10620
        %10644 = vmatmul.bf16.gmra.mxu0 %v10571
        %v10645 = vpop.f32.mrf.mxu0
        %v10646 = vadd.f32 0.0, %v10645
        %v10647 = vpop.f32.mrf.mxu0
        %10648 = vdwg.mxu0
        %vm10649 = vcmask 80896
        %v10650 = vsel %vm10649, %v10646, -inf
        %10651 = vmax.xlane.f32.xlu0 %v10650
        %v10652 = vpop.xlane.xlu0 %10651
        %v10653 = vsub.f32 %v10646, %v10652
        %v10654 = vmul.f32 %v10653, 1.442695
        %v10655 = vpow.pop %v10654
        %v10656 = vsel %vm10649, %v10655, 0.0
        %10657 = vadd.xlane.f32.xlu0 %v10656
        %v10658 = vpop.xlane.xlu0 %10657
        %v10659 = vlog2.pop %v10658
        %v10660 = vmul.f32 %v10659, 0.6931472
        %v10661 = vsub.f32 %v10653, %v10660
        %10662 = vst.msk [vmem:[%s515] sm:$0xff] %vm10649, %v10661
        %s10663 = sand.u32 %s379, 1
        %s10664 = scalar_lea.sflag [#allocation4], %s10663
        %s10665 = sand.u32 %s379, 1
        %s10666 = smul.addr %s10665, 8
        %s10667 = scalar_lea.vmem [#allocation3], %s10666
        // Predicated region
        $region85: #{net1_forward.1} parent=83 // pred_check
          %p10668 = pneg %p389
        $region86: #{net1_forward.1} parent=83 // pred_check_branch
          %10670 = sbr.rel (%p10668) target = $region88
        $region87: #{net1_forward.1} parent=83 // pred_region
          %10672 = vsyncadd %s10664, 0
          %s10673 = smul.addr %s30, 8
          %s10674 = scalar_lea.hbm %s16, %s10673
          %s10676 = sshll.u32 %s10667, 4
          %s10677 = int_to_ptr.vmem [resolvable:$true] %s10676
          %s10678 = sshll.u32 %s10674, 4
          %s10679 = int_to_ptr.hbm [resolvable:$true] %s10678
          %10681 = dma.vmem_to_hbm [thread:$0]  %s10677, 128, %s10679, %s10664
        $region88: #{net1_forward.1} parent=83 // pred_fallthru
          _
      $region84: #{net1_forward.1} parent=5 // pred_fallthru
        _
      %p10682 = scmp.le.s32.totalorder 2, %s25
      // Predicated region
      $region89: #{net1_forward.1} parent=5 // pred_check
        %p10683 = pneg %p10682
      $region90: #{net1_forward.1} parent=5 // pred_check_branch
        %10685 = sbr.rel (%p10683) target = $region92
      $region91: #{net1_forward.1} parent=5 // pred_region
        %s10686 = ssub.s32 %s25, 2
        // Predicated region
        $region93: #{net1_forward.1} parent=91 // pred_check
          %p10687 = pneg %p395
        $region94: #{net1_forward.1} parent=91 // pred_check_branch
          %10689 = sbr.rel (%p10687) target = $region96
        $region95: #{net1_forward.1} parent=91 // pred_region
          %s10690 = sand.u32 %s380, 1
          %s10691 = scalar_lea.sflag [#allocation4], %s10690
          %s10692 = sand.u32 %s380, 1
          %s10693 = smul.addr %s10692, 8
          %s10694 = scalar_lea.vmem [#allocation3], %s10693
          %10696 = dma.done %s10691, 128
        $region96: #{net1_forward.1} parent=91 // pred_fallthru
          _
      $region92: #{net1_forward.1} parent=5 // pred_fallthru
        _
    $region6: #{net1_forward.1} parent=1 // loop_footer
      %s29 = sadd.s32 1, %s25
    $region7: #{net1_forward.1} parent=1 // loop_footer_branch
      %24 = sbr.rel target = $region3
    $region8: #{net1_forward.1} parent=1 // loop_exit
      _
    %10697 = vsyncpa [#allocation4], 1
    %s10698 = scalar_lea.sflag [#allocation4], 1
    %10699 = vsyncpa %s10698, 1

</llo_original>
